<compile_context>
chip_gen: v7x
topology: tpu7x:2x2x1
jax: 0.10.0
libtpu: 0.0.40
codegen_flags: <defaults>
</compile_context>

<pallas_src>
import math

import jax
import jax.numpy as jnp
from jax.experimental import pallas as pl
from jax.experimental.pallas import tpu as pltpu

# ----------------------------- configuration --------------------------------
B = 8              # batch size (drug/protein pairs per call)
A = 8              # atoms per drug graph
DRUG_DIM = 16      # hp.drug_embedding_dim
PROT_DIM = 24      # hp.protein_embedding_dim
H = 32             # hp.hidden_dim
L = 16             # hp.protein_max_length
K = 3              # hp.protein_kernels[0] (odd)
BA = B * A
BL = B * L
SIM_THRESHOLD = 0.8
SCALE = math.sqrt(0.5)     # ProteinEncoderLayer.scale = sqrt(1/2)
NEG_SLOPE = 0.01           # nn.LeakyReLU default
EPS = 1e-8                 # cosine-similarity eps


# ------------------------------- fused kernel --------------------------------
def geodti_kernel(node_ref, prot_ref,
                  w_atom_ref, b_atom_ref,
                  w_map_ref, b_map_ref,
                  w_cprev_ref, w_ccen_ref, w_cnext_ref, b_conv_ref,
                  w_gin1_ref, b_gin1_ref, w_gin2_ref, b_gin2_ref,
                  w_att1d_ref, w_att1p_ref, b_att1_ref, w_att2_ref, b_att2_ref,
                  w_fc1_hbm, w_fc2_hbm, w_fc3_hbm,
                  b_fc1_ref, b_fc2_ref, b_fc3_ref, w_out_ref, b_out_ref,
                  predict_ref, sim_ref,
                  fc1_buf, fc2_buf, fc3_buf, dma_sem):
    f32 = jnp.float32
    bf16 = jnp.bfloat16

    # -- kick off the dominant head-weight stream so it overlaps encoder compute
    cp1 = pltpu.make_async_copy(w_fc1_hbm, fc1_buf, dma_sem.at[0]); cp1.start()
    cp2 = pltpu.make_async_copy(w_fc2_hbm, fc2_buf, dma_sem.at[1]); cp2.start()
    cp3 = pltpu.make_async_copy(w_fc3_hbm, fc3_buf, dma_sem.at[2]); cp3.start()

    # ---------------- drug branch: atom_proj + mean readout ------------------
    h_atoms = jnp.dot(node_ref[...], w_atom_ref[...],
                      preferred_element_type=f32) + b_atom_ref[...]      # [B*A, H]
    drug_repr = jnp.mean(h_atoms.reshape(B, A, H), axis=1)               # [B, H]

    # -------------- protein branch (whole batch, rows = B*L) -----------------
    row = jax.lax.broadcasted_iota(jnp.int32, (BL, 1), 0)
    first_mask = (row % L) == 0          # first residue of its protein
    last_mask = (row % L) == (L - 1)     # last residue of its protein

    # ProteinEncoder.map (Linear)
    h = jnp.dot(prot_ref[...], w_map_ref[...],
                preferred_element_type=f32) + b_map_ref[...]             # [B*L, H]

    # Conv1d(H, 2H, k=3, padding=1): neighbours via XLU rolls + boundary masks,
    # three tap slabs summed in f32, then GLU + residual * sqrt(1/2).
    h_prev = jnp.where(first_mask, 0.0, pltpu.roll(h, shift=1, axis=0))
    h_next = jnp.where(last_mask, 0.0, pltpu.roll(h, shift=BL - 1, axis=0))
    conv = (jnp.dot(h_prev, w_cprev_ref[...], preferred_element_type=f32)
            + jnp.dot(h, w_ccen_ref[...], preferred_element_type=f32)
            + jnp.dot(h_next, w_cnext_ref[...], preferred_element_type=f32)
            + b_conv_ref[...])                                           # [B*L, 2H]
    glu = conv[:, :H] * jax.nn.sigmoid(conv[:, H:])                      # F.glu(dim=channel)
    cnn = (glu + h) * SCALE

    # ProteinGIN: GINConv('sum', eps=0) on the chain graph -> MLP -> ReLU
    c_prev = jnp.where(first_mask, 0.0, pltpu.roll(cnn, shift=1, axis=0))
    c_next = jnp.where(last_mask, 0.0, pltpu.roll(cnn, shift=BL - 1, axis=0))
    gin_in = cnn + c_prev + c_next                                       # self + sum(neighbours)
    g1 = jnp.maximum(jnp.dot(gin_in, w_gin1_ref[...],
                             preferred_element_type=f32) + b_gin1_ref[...], 0.0)
    gnn = jnp.maximum(jnp.dot(g1, w_gin2_ref[...],
                              preferred_element_type=f32) + b_gin2_ref[...], 0.0)
    protein_hidden = (gnn + cnn) * SCALE                                 # [B*L, H]

    # ---------------------- SimLoss on the chain edges -----------------------
    p_next = pltpu.roll(protein_hidden, shift=BL - 1, axis=0)            # row i -> row i+1
    num = jnp.sum(protein_hidden * p_next, axis=-1, keepdims=True)
    n_src = jnp.maximum(jnp.sqrt(jnp.sum(protein_hidden * protein_hidden,
                                         axis=-1, keepdims=True)), EPS)
    n_dst = jnp.maximum(jnp.sqrt(jnp.sum(p_next * p_next,
                                         axis=-1, keepdims=True)), EPS)
    cos = num / (n_src * n_dst)                                          # [B*L, 1]
    masked = jnp.where(cos > SIM_THRESHOLD, 0.0, cos)
    pos = jnp.logical_and(jnp.logical_not(last_mask), masked > 0)        # valid chain edge
    contrib = jnp.where(pos, jnp.exp(-masked), 0.0)                      # 1/exp(cos)
    loss_sum = jnp.sum(contrib, axis=0, keepdims=True)                   # [1, 1]
    count = jnp.sum(pos.astype(f32), axis=0, keepdims=True)              # [1, 1]
    sim_ref[...] = loss_sum / (count + 1e-6)

    # ------------------ GateAtt + global max pool over L ---------------------
    # drug half of the 1x1 conv is constant over L: compute at [B, 2H] and
    # broadcast into the [B, L, 2H] protein half (no [BL, 2H] concat needed).
    att_d = jnp.dot(drug_repr, w_att1d_ref[...],
                    preferred_element_type=f32)                          # [B, 2H]
    att_p = jnp.dot(protein_hidden, w_att1p_ref[...],
                    preferred_element_type=f32)                          # [B*L, 2H]
    att_h = att_p.reshape(B, L, 2 * H) + att_d[:, None, :] + b_att1_ref[...]
    att_glu = att_h[..., :H] * jax.nn.sigmoid(att_h[..., H:])            # [B, L, H]
    # Conv1d(H, 1, 1) as VPU multiply + lane reduce (avoids an N=1 MXU matmul).
    att = jax.nn.sigmoid(jnp.sum(att_glu * w_att2_ref[...],
                                 axis=-1, keepdims=True) + b_att2_ref[...])  # [B, L, 1]
    ph3 = protein_hidden.reshape(B, L, H)
    p_gated = att * ph3 * 0.5 + ph3 * 0.5
    protein_feature = jnp.max(p_gated, axis=1)                           # [B, H]

    # ---------------------------- prediction head ----------------------------
    def lrelu(v):
        return jnp.where(v > 0, v, NEG_SLOPE * v)

    # fc1 input concat([drug, protein]) folded into two dots against the two
    # row-halves of the fc1 weight slab.
    cp1.wait()
    w1 = fc1_buf[...]                                                    # [2H, 1024] bf16
    h1 = lrelu(jnp.dot(drug_repr.astype(bf16), w1[:H, :],
                       preferred_element_type=f32)
               + jnp.dot(protein_feature.astype(bf16), w1[H:, :],
                         preferred_element_type=f32)
               + b_fc1_ref[...])                                         # [B, 1024]
    cp2.wait()
    h2 = lrelu(jnp.dot(h1.astype(bf16), fc2_buf[...],
                       preferred_element_type=f32) + b_fc2_ref[...])     # [B, 1024]
    cp3.wait()
    h3 = lrelu(jnp.dot(h2.astype(bf16), fc3_buf[...],
                       preferred_element_type=f32) + b_fc3_ref[...])     # [B, 512]
    predict_ref[...] = (jnp.dot(h3.astype(bf16), w_out_ref[...],
                                preferred_element_type=f32) + b_out_ref[...])  # [B, 2]


# --------------------------- parameter creation ------------------------------
def init_params(key):
    keys = jax.random.split(key, 24)

    def nrm(k, shape, scale=0.1):
        return (scale * jax.random.normal(k, shape)).astype(jnp.float32)

    p = {}
    # DrugEncoder.atom_proj
    p['w_atom'] = nrm(keys[0], (DRUG_DIM, H))
    p['b_atom'] = nrm(keys[1], (1, H))
    # ProteinEncoder.map
    p['w_map'] = nrm(keys[2], (PROT_DIM, H))
    p['b_map'] = nrm(keys[3], (1, H))
    # ProteinEncoderLayer.conv: torch weight [2H, H, K]; tap0 sees x[i-1], tap1 x[i],
    # tap2 x[i+1]; stored as three [H_in, 2H_out] slabs (cols: [GLU value | gate]).
    w_conv = nrm(keys[4], (2 * H, H, K))
    p['w_conv_prev'] = jnp.transpose(w_conv[:, :, 0])
    p['w_conv_cen'] = jnp.transpose(w_conv[:, :, 1])
    p['w_conv_next'] = jnp.transpose(w_conv[:, :, 2])
    p['b_conv'] = nrm(keys[5], (2 * H,)).reshape(1, 2 * H)
    # ProteinGIN MLP
    p['w_gin1'] = nrm(keys[6], (H, H));  p['b_gin1'] = nrm(keys[7], (1, H))
    p['w_gin2'] = nrm(keys[8], (H, H));  p['b_gin2'] = nrm(keys[9], (1, H))
    # GateAtt.att first Conv1d(2H, 2H, 1): torch weight [2H_out, 2H_in];
    # input rows ordered [drug; protein] -> two [H_in, 2H_out] slabs.
    w_att1 = nrm(keys[10], (2 * H, 2 * H))
    p['w_att1_d'] = jnp.transpose(w_att1[:, :H])
    p['w_att1_p'] = jnp.transpose(w_att1[:, H:])
    p['b_att1'] = nrm(keys[11], (2 * H,)).reshape(1, 2 * H)
    # GateAtt.att Conv1d(H, 1, 1): kept as a [1, H] row (VPU mul + lane reduce).
    p['w_att2'] = nrm(keys[12], (1, H))
    p['b_att2'] = nrm(keys[13], (1, 1))
    # MLP head: bf16 weights (dominant weight stream, streamed async), f32 bias/acc.
    p['w_fc1'] = nrm(keys[14], (2 * H, 1024)).astype(jnp.bfloat16)
    p['b_fc1'] = nrm(keys[15], (1, 1024))
    p['w_fc2'] = nrm(keys[16], (1024, 1024)).astype(jnp.bfloat16)
    p['b_fc2'] = nrm(keys[17], (1, 1024))
    p['w_fc3'] = nrm(keys[18], (1024, 512)).astype(jnp.bfloat16)
    p['b_fc3'] = nrm(keys[19], (1, 512))
    p['w_out'] = nrm(keys[20], (512, 2)).astype(jnp.bfloat16)
    p['b_out'] = nrm(keys[21], (1, 2))
    return p


# ------------------------------ forward glue ---------------------------------
_VMEM_SPEC = pl.BlockSpec(memory_space=pltpu.MemorySpace.VMEM)
_HBM_SPEC = pl.BlockSpec(memory_space=pl.ANY)

_HEAD_BYTES = 2 * (2 * H * 1024 + 1024 * 1024 + 1024 * 512 + 512 * 2)   # bf16 weights
_COST = pl.CostEstimate(
    flops=(2 * B * (2 * H * 1024 + 1024 * 1024 + 1024 * 512 + 512 * 2)
           + 2 * BL * (PROT_DIM * H + 3 * H * 2 * H + 2 * H * H + H * 2 * H)
           + 2 * BA * DRUG_DIM * H),
    transcendentals=BL * (3 * H + 2),
    bytes_accessed=(_HEAD_BYTES
                    + 4 * (BL * PROT_DIM + BA * DRUG_DIM + 16 * H * H + B * 2)),
)


@jax.jit
def geodti_forward(params, node_hidden, edge_hidden, protein_seq):
    del edge_hidden  # TODO(synk): edge path unused because GEMConv source is unavailable.
    node_flat = node_hidden.reshape(BA, DRUG_DIM)
    prot_flat = protein_seq.reshape(BL, PROT_DIM)

    predict, sim = pl.pallas_call(
        geodti_kernel,
        out_shape=(jax.ShapeDtypeStruct((B, 2), jnp.float32),
                   jax.ShapeDtypeStruct((1, 1), jnp.float32)),
        in_specs=[_VMEM_SPEC] * 19 + [_HBM_SPEC] * 3 + [_VMEM_SPEC] * 5,
        out_specs=(_VMEM_SPEC, _VMEM_SPEC),
        scratch_shapes=[
            pltpu.VMEM((2 * H, 1024), jnp.bfloat16),   # fc1 weight landing buffer
            pltpu.VMEM((1024, 1024), jnp.bfloat16),    # fc2
            pltpu.VMEM((1024, 512), jnp.bfloat16),     # fc3
            pltpu.SemaphoreType.DMA((3,)),
        ],
        cost_estimate=_COST,
    )(node_flat, prot_flat,
      params['w_atom'], params['b_atom'],
      params['w_map'], params['b_map'],
      params['w_conv_prev'], params['w_conv_cen'], params['w_conv_next'], params['b_conv'],
      params['w_gin1'], params['b_gin1'], params['w_gin2'], params['b_gin2'],
      params['w_att1_d'], params['w_att1_p'], params['b_att1'],
      params['w_att2'], params['b_att2'],
      params['w_fc1'], params['w_fc2'], params['w_fc3'],
      params['b_fc1'], params['b_fc2'], params['b_fc3'],
      params['w_out'], params['b_out'])

    return predict, sim[0, 0]


# ---------------------------------- main --------------------------------------
if __name__ == "__main__":
    key = jax.random.PRNGKey(0)
    kp, k1, k2, k3 = jax.random.split(key, 4)
    params = init_params(kp)

    node_hidden = jax.random.normal(k1, (B, A, DRUG_DIM), dtype=jnp.float32)
    edge_hidden = jax.random.normal(k2, (B, A, DRUG_DIM), dtype=jnp.float32)
    protein_seq = jax.random.normal(k3, (B, L, PROT_DIM), dtype=jnp.float32)

    predict, sim = geodti_forward(params, node_hidden, edge_hidden, protein_seq)
    jax.block_until_ready((predict, sim))
    assert predict.shape == (B, 2)
    assert sim.shape == ()
    print("KERNEL_OK")
</pallas_src>

<mosaic_0001>
module attributes {stable_mosaic.version = 11 : i64} {
  func.func @geodti_kernel(%arg0: memref<64x16xf32, #tpu.memory_space<vmem>>, %arg1: memref<128x24xf32, #tpu.memory_space<vmem>>, %arg2: memref<16x32xf32, #tpu.memory_space<vmem>>, %arg3: memref<1x32xf32, #tpu.memory_space<vmem>>, %arg4: memref<24x32xf32, #tpu.memory_space<vmem>>, %arg5: memref<1x32xf32, #tpu.memory_space<vmem>>, %arg6: memref<32x64xf32, #tpu.memory_space<vmem>>, %arg7: memref<32x64xf32, #tpu.memory_space<vmem>>, %arg8: memref<32x64xf32, #tpu.memory_space<vmem>>, %arg9: memref<1x64xf32, #tpu.memory_space<vmem>>, %arg10: memref<32x32xf32, #tpu.memory_space<vmem>>, %arg11: memref<1x32xf32, #tpu.memory_space<vmem>>, %arg12: memref<32x32xf32, #tpu.memory_space<vmem>>, %arg13: memref<1x32xf32, #tpu.memory_space<vmem>>, %arg14: memref<32x64xf32, #tpu.memory_space<vmem>>, %arg15: memref<32x64xf32, #tpu.memory_space<vmem>>, %arg16: memref<1x64xf32, #tpu.memory_space<vmem>>, %arg17: memref<1x32xf32, #tpu.memory_space<vmem>>, %arg18: memref<1x1xf32, #tpu.memory_space<vmem>>, %arg19: memref<64x1024xbf16, #tpu.memory_space<any>>, %arg20: memref<1024x1024xbf16, #tpu.memory_space<any>>, %arg21: memref<1024x512xbf16, #tpu.memory_space<any>>, %arg22: memref<1x1024xf32, #tpu.memory_space<vmem>>, %arg23: memref<1x1024xf32, #tpu.memory_space<vmem>>, %arg24: memref<1x512xf32, #tpu.memory_space<vmem>>, %arg25: memref<512x2xbf16, #tpu.memory_space<vmem>>, %arg26: memref<1x2xf32, #tpu.memory_space<vmem>>, %arg27: memref<8x2xf32, #tpu.memory_space<vmem>>, %arg28: memref<1x1xf32, #tpu.memory_space<vmem>>, %arg29: memref<64x1024xbf16, #tpu.memory_space<vmem>>, %arg30: memref<1024x1024xbf16, #tpu.memory_space<vmem>>, %arg31: memref<1024x512xbf16, #tpu.memory_space<vmem>>, %arg32: memref<3x!tpu.dma_semaphore, #tpu.memory_space<semaphore_mem>>) attributes {dimension_semantics = [], scalar_prefetch = 0 : i64, scratch_operands = 4 : i64, tpu.core_type = #tpu.core_type<tc>} {
    %c0_i32 = arith.constant 0 : i32
    %0 = tpu.memref_slice %arg32[%c0_i32] : memref<3x!tpu.dma_semaphore, #tpu.memory_space<semaphore_mem>> -> memref<1x!tpu.dma_semaphore, #tpu.memory_space<semaphore_mem>>
    %1 = tpu.memref_squeeze %0 : memref<1x!tpu.dma_semaphore, #tpu.memory_space<semaphore_mem>> -> memref<!tpu.dma_semaphore, #tpu.memory_space<semaphore_mem>>
    tpu.enqueue_dma source(%arg19 : memref<64x1024xbf16, #tpu.memory_space<any>>) target(%arg29 : memref<64x1024xbf16, #tpu.memory_space<vmem>>) target_semaphore(%1 : memref<!tpu.dma_semaphore, #tpu.memory_space<semaphore_mem>>)
    %c1_i32 = arith.constant 1 : i32
    %2 = tpu.memref_slice %arg32[%c1_i32] : memref<3x!tpu.dma_semaphore, #tpu.memory_space<semaphore_mem>> -> memref<1x!tpu.dma_semaphore, #tpu.memory_space<semaphore_mem>>
    %3 = tpu.memref_squeeze %2 : memref<1x!tpu.dma_semaphore, #tpu.memory_space<semaphore_mem>> -> memref<!tpu.dma_semaphore, #tpu.memory_space<semaphore_mem>>
    tpu.enqueue_dma source(%arg20 : memref<1024x1024xbf16, #tpu.memory_space<any>>) target(%arg30 : memref<1024x1024xbf16, #tpu.memory_space<vmem>>) target_semaphore(%3 : memref<!tpu.dma_semaphore, #tpu.memory_space<semaphore_mem>>)
    %c2_i32 = arith.constant 2 : i32
    %4 = tpu.memref_slice %arg32[%c2_i32] : memref<3x!tpu.dma_semaphore, #tpu.memory_space<semaphore_mem>> -> memref<1x!tpu.dma_semaphore, #tpu.memory_space<semaphore_mem>>
    %5 = tpu.memref_squeeze %4 : memref<1x!tpu.dma_semaphore, #tpu.memory_space<semaphore_mem>> -> memref<!tpu.dma_semaphore, #tpu.memory_space<semaphore_mem>>
    tpu.enqueue_dma source(%arg21 : memref<1024x512xbf16, #tpu.memory_space<any>>) target(%arg31 : memref<1024x512xbf16, #tpu.memory_space<vmem>>) target_semaphore(%5 : memref<!tpu.dma_semaphore, #tpu.memory_space<semaphore_mem>>)
    %c0 = arith.constant 0 : index
    %c0_0 = arith.constant 0 : index
    %6 = vector.load %arg0[%c0, %c0_0] : memref<64x16xf32, #tpu.memory_space<vmem>>, vector<64x16xf32>
    %c0_1 = arith.constant 0 : index
    %c0_2 = arith.constant 0 : index
    %7 = vector.load %arg2[%c0_1, %c0_2] : memref<16x32xf32, #tpu.memory_space<vmem>>, vector<16x32xf32>
    %cst = arith.constant dense<0.000000e+00> : vector<64x32xf32>
    %8 = tpu.matmul %6, %7, %cst {dimension_numbers = #tpu.dot_dimension_numbers<[1], [0], [0], [1], [0, 0, 1, 1], [], []>} : vector<64x16xf32>, vector<16x32xf32>, vector<64x32xf32> -> vector<64x32xf32>
    %c0_3 = arith.constant 0 : index
    %c0_4 = arith.constant 0 : index
    %9 = vector.load %arg3[%c0_3, %c0_4] : memref<1x32xf32, #tpu.memory_space<vmem>>, vector<1x32xf32>
    %10 = vector.broadcast %9 : vector<1x32xf32> to vector<64x32xf32>
    %11 = arith.addf %8, %10 : vector<64x32xf32>
    %12 = vector.shape_cast %11 : vector<64x32xf32> to vector<8x8x32xf32>
    %cst_5 = arith.constant dense<0.000000e+00> : vector<8x32xf32>
    %13 = vector.multi_reduction <add>, %12, %cst_5 [1] : vector<8x8x32xf32> to vector<8x32xf32>
    %cst_6 = arith.constant 8.000000e+00 : f32
    %14 = vector.broadcast %cst_6 : f32 to vector<8x32xf32>
    %15 = arith.divf %13, %14 : vector<8x32xf32>
    %16 = tpu.iota {dimensions = array<i32: 0>} : vector<128x1xi32>
    %c16_i32 = arith.constant 16 : i32
    %c0_i32_7 = arith.constant 0 : i32
    %17 = arith.cmpi eq, %c16_i32, %c0_i32_7 : i32
    %c1_i32_8 = arith.constant 1 : i32
    %18 = arith.select %17, %c1_i32_8, %c16_i32 : i32
    %19 = vector.broadcast %18 : i32 to vector<128x1xi32>
    %20 = arith.remsi %16, %19 : vector<128x1xi32>
    %c0_i32_9 = arith.constant 0 : i32
    %21 = vector.broadcast %c0_i32_9 : i32 to vector<128x1xi32>
    %22 = arith.cmpi ne, %20, %21 : vector<128x1xi32>
    %c0_i32_10 = arith.constant 0 : i32
    %23 = vector.broadcast %c0_i32_10 : i32 to vector<128x1xi32>
    %24 = arith.cmpi slt, %20, %23 : vector<128x1xi32>
    %c0_i32_11 = arith.constant 0 : i32
    %25 = arith.cmpi slt, %18, %c0_i32_11 : i32
    %26 = vector.broadcast %25 : i1 to vector<128x1xi1>
    %27 = vector.broadcast %26 : vector<128x1xi1> to vector<128x1xi1>
    %28 = arith.xori %24, %27 : vector<128x1xi1>
    %29 = arith.andi %28, %22 : vector<128x1xi1>
    %30 = vector.broadcast %18 : i32 to vector<128x1xi32>
    %31 = arith.addi %20, %30 : vector<128x1xi32>
    %32 = arith.select %29, %31, %20 : vector<128x1xi1>, vector<128x1xi32>
    %c0_i32_12 = arith.constant 0 : i32
    %33 = vector.broadcast %c0_i32_12 : i32 to vector<128x1xi32>
    %34 = arith.cmpi eq, %32, %33 : vector<128x1xi32>
    %c16_i32_13 = arith.constant 16 : i32
    %c0_i32_14 = arith.constant 0 : i32
    %35 = arith.cmpi eq, %c16_i32_13, %c0_i32_14 : i32
    %c1_i32_15 = arith.constant 1 : i32
    %36 = arith.select %35, %c1_i32_15, %c16_i32_13 : i32
    %37 = vector.broadcast %36 : i32 to vector<128x1xi32>
    %38 = arith.remsi %16, %37 : vector<128x1xi32>
    %c0_i32_16 = arith.constant 0 : i32
    %39 = vector.broadcast %c0_i32_16 : i32 to vector<128x1xi32>
    %40 = arith.cmpi ne, %38, %39 : vector<128x1xi32>
    %c0_i32_17 = arith.constant 0 : i32
    %41 = vector.broadcast %c0_i32_17 : i32 to vector<128x1xi32>
    %42 = arith.cmpi slt, %38, %41 : vector<128x1xi32>
    %c0_i32_18 = arith.constant 0 : i32
    %43 = arith.cmpi slt, %36, %c0_i32_18 : i32
    %44 = vector.broadcast %43 : i1 to vector<128x1xi1>
    %45 = vector.broadcast %44 : vector<128x1xi1> to vector<128x1xi1>
    %46 = arith.xori %42, %45 : vector<128x1xi1>
    %47 = arith.andi %46, %40 : vector<128x1xi1>
    %48 = vector.broadcast %36 : i32 to vector<128x1xi32>
    %49 = arith.addi %38, %48 : vector<128x1xi32>
    %50 = arith.select %47, %49, %38 : vector<128x1xi1>, vector<128x1xi32>
    %c15_i32 = arith.constant 15 : i32
    %51 = vector.broadcast %c15_i32 : i32 to vector<128x1xi32>
    %52 = arith.cmpi eq, %50, %51 : vector<128x1xi32>
    %c0_19 = arith.constant 0 : index
    %c0_20 = arith.constant 0 : index
    %53 = vector.load %arg1[%c0_19, %c0_20] : memref<128x24xf32, #tpu.memory_space<vmem>>, vector<128x24xf32>
    %c0_21 = arith.constant 0 : index
    %c0_22 = arith.constant 0 : index
    %54 = vector.load %arg4[%c0_21, %c0_22] : memref<24x32xf32, #tpu.memory_space<vmem>>, vector<24x32xf32>
    %cst_23 = arith.constant dense<0.000000e+00> : vector<128x32xf32>
    %55 = tpu.matmul %53, %54, %cst_23 {dimension_numbers = #tpu.dot_dimension_numbers<[1], [0], [0], [1], [0, 0, 1, 1], [], []>} : vector<128x24xf32>, vector<24x32xf32>, vector<128x32xf32> -> vector<128x32xf32>
    %c0_24 = arith.constant 0 : index
    %c0_25 = arith.constant 0 : index
    %56 = vector.load %arg5[%c0_24, %c0_25] : memref<1x32xf32, #tpu.memory_space<vmem>>, vector<1x32xf32>
    %57 = vector.broadcast %56 : vector<1x32xf32> to vector<128x32xf32>
    %58 = arith.addf %55, %57 : vector<128x32xf32>
    %c1_i32_26 = arith.constant 1 : i32
    %59 = tpu.dynamic_rotate %58 by %c1_i32_26 dim 0 : vector<128x32xf32>, i32 -> vector<128x32xf32>
    %cst_27 = arith.constant 0.000000e+00 : f32
    %60 = vector.shape_cast %34 : vector<128x1xi1> to vector<128x1xi1>
    %61 = vector.broadcast %60 : vector<128x1xi1> to vector<128x32xi1>
    %62 = vector.broadcast %cst_27 : f32 to vector<128x32xf32>
    %63 = arith.select %61, %62, %59 : vector<128x32xi1>, vector<128x32xf32>
    %c127_i32 = arith.constant 127 : i32
    %64 = tpu.dynamic_rotate %58 by %c127_i32 dim 0 : vector<128x32xf32>, i32 -> vector<128x32xf32>
    %cst_28 = arith.constant 0.000000e+00 : f32
    %65 = vector.shape_cast %52 : vector<128x1xi1> to vector<128x1xi1>
    %66 = vector.broadcast %65 : vector<128x1xi1> to vector<128x32xi1>
    %67 = vector.broadcast %cst_28 : f32 to vector<128x32xf32>
    %68 = arith.select %66, %67, %64 : vector<128x32xi1>, vector<128x32xf32>
    %c0_29 = arith.constant 0 : index
    %c0_30 = arith.constant 0 : index
    %69 = vector.load %arg6[%c0_29, %c0_30] : memref<32x64xf32, #tpu.memory_space<vmem>>, vector<32x64xf32>
    %cst_31 = arith.constant dense<0.000000e+00> : vector<128x64xf32>
    %70 = tpu.matmul %63, %69, %cst_31 {dimension_numbers = #tpu.dot_dimension_numbers<[1], [0], [0], [1], [0, 0, 1, 1], [], []>} : vector<128x32xf32>, vector<32x64xf32>, vector<128x64xf32> -> vector<128x64xf32>
    %c0_32 = arith.constant 0 : index
    %c0_33 = arith.constant 0 : index
    %71 = vector.load %arg7[%c0_32, %c0_33] : memref<32x64xf32, #tpu.memory_space<vmem>>, vector<32x64xf32>
    %cst_34 = arith.constant dense<0.000000e+00> : vector<128x64xf32>
    %72 = tpu.matmul %58, %71, %cst_34 {dimension_numbers = #tpu.dot_dimension_numbers<[1], [0], [0], [1], [0, 0, 1, 1], [], []>} : vector<128x32xf32>, vector<32x64xf32>, vector<128x64xf32> -> vector<128x64xf32>
    %73 = arith.addf %70, %72 : vector<128x64xf32>
    %c0_35 = arith.constant 0 : index
    %c0_36 = arith.constant 0 : index
    %74 = vector.load %arg8[%c0_35, %c0_36] : memref<32x64xf32, #tpu.memory_space<vmem>>, vector<32x64xf32>
    %cst_37 = arith.constant dense<0.000000e+00> : vector<128x64xf32>
    %75 = tpu.matmul %68, %74, %cst_37 {dimension_numbers = #tpu.dot_dimension_numbers<[1], [0], [0], [1], [0, 0, 1, 1], [], []>} : vector<128x32xf32>, vector<32x64xf32>, vector<128x64xf32> -> vector<128x64xf32>
    %76 = arith.addf %73, %75 : vector<128x64xf32>
    %c0_38 = arith.constant 0 : index
    %c0_39 = arith.constant 0 : index
    %77 = vector.load %arg9[%c0_38, %c0_39] : memref<1x64xf32, #tpu.memory_space<vmem>>, vector<1x64xf32>
    %78 = vector.broadcast %77 : vector<1x64xf32> to vector<128x64xf32>
    %79 = arith.addf %76, %78 : vector<128x64xf32>
    %80 = vector.extract_strided_slice %79 {offsets = [0, 0], sizes = [128, 32], strides = [1, 1]} : vector<128x64xf32> to vector<128x32xf32>
    %81 = vector.extract_strided_slice %79 {offsets = [0, 32], sizes = [128, 32], strides = [1, 1]} : vector<128x64xf32> to vector<128x32xf32>
    %82 = arith.negf %81 : vector<128x32xf32>
    %83 = math.exp %82 : vector<128x32xf32>
    %cst_40 = arith.constant 1.000000e+00 : f32
    %84 = vector.broadcast %cst_40 : f32 to vector<128x32xf32>
    %85 = arith.addf %84, %83 : vector<128x32xf32>
    %86 = arith.divf %84, %85 : vector<128x32xf32>
    %87 = arith.mulf %80, %86 : vector<128x32xf32>
    %88 = arith.addf %87, %58 : vector<128x32xf32>
    %cst_41 = arith.constant 0.707106769 : f32
    %89 = vector.broadcast %cst_41 : f32 to vector<128x32xf32>
    %90 = arith.mulf %88, %89 : vector<128x32xf32>
    %c1_i32_42 = arith.constant 1 : i32
    %91 = tpu.dynamic_rotate %90 by %c1_i32_42 dim 0 : vector<128x32xf32>, i32 -> vector<128x32xf32>
    %cst_43 = arith.constant 0.000000e+00 : f32
    %92 = vector.shape_cast %34 : vector<128x1xi1> to vector<128x1xi1>
    %93 = vector.broadcast %92 : vector<128x1xi1> to vector<128x32xi1>
    %94 = vector.broadcast %cst_43 : f32 to vector<128x32xf32>
    %95 = arith.select %93, %94, %91 : vector<128x32xi1>, vector<128x32xf32>
    %c127_i32_44 = arith.constant 127 : i32
    %96 = tpu.dynamic_rotate %90 by %c127_i32_44 dim 0 : vector<128x32xf32>, i32 -> vector<128x32xf32>
    %cst_45 = arith.constant 0.000000e+00 : f32
    %97 = vector.shape_cast %52 : vector<128x1xi1> to vector<128x1xi1>
    %98 = vector.broadcast %97 : vector<128x1xi1> to vector<128x32xi1>
    %99 = vector.broadcast %cst_45 : f32 to vector<128x32xf32>
    %100 = arith.select %98, %99, %96 : vector<128x32xi1>, vector<128x32xf32>
    %101 = arith.addf %90, %95 : vector<128x32xf32>
    %102 = arith.addf %101, %100 : vector<128x32xf32>
    %c0_46 = arith.constant 0 : index
    %c0_47 = arith.constant 0 : index
    %103 = vector.load %arg10[%c0_46, %c0_47] : memref<32x32xf32, #tpu.memory_space<vmem>>, vector<32x32xf32>
    %cst_48 = arith.constant dense<0.000000e+00> : vector<128x32xf32>
    %104 = tpu.matmul %102, %103, %cst_48 {dimension_numbers = #tpu.dot_dimension_numbers<[1], [0], [0], [1], [0, 0, 1, 1], [], []>} : vector<128x32xf32>, vector<32x32xf32>, vector<128x32xf32> -> vector<128x32xf32>
    %c0_49 = arith.constant 0 : index
    %c0_50 = arith.constant 0 : index
    %105 = vector.load %arg11[%c0_49, %c0_50] : memref<1x32xf32, #tpu.memory_space<vmem>>, vector<1x32xf32>
    %106 = vector.broadcast %105 : vector<1x32xf32> to vector<128x32xf32>
    %107 = arith.addf %104, %106 : vector<128x32xf32>
    %cst_51 = arith.constant 0.000000e+00 : f32
    %108 = vector.broadcast %cst_51 : f32 to vector<128x32xf32>
    %109 = arith.maximumf %107, %108 : vector<128x32xf32>
    %c0_52 = arith.constant 0 : index
    %c0_53 = arith.constant 0 : index
    %110 = vector.load %arg12[%c0_52, %c0_53] : memref<32x32xf32, #tpu.memory_space<vmem>>, vector<32x32xf32>
    %cst_54 = arith.constant dense<0.000000e+00> : vector<128x32xf32>
    %111 = tpu.matmul %109, %110, %cst_54 {dimension_numbers = #tpu.dot_dimension_numbers<[1], [0], [0], [1], [0, 0, 1, 1], [], []>} : vector<128x32xf32>, vector<32x32xf32>, vector<128x32xf32> -> vector<128x32xf32>
    %c0_55 = arith.constant 0 : index
    %c0_56 = arith.constant 0 : index
    %112 = vector.load %arg13[%c0_55, %c0_56] : memref<1x32xf32, #tpu.memory_space<vmem>>, vector<1x32xf32>
    %113 = vector.broadcast %112 : vector<1x32xf32> to vector<128x32xf32>
    %114 = arith.addf %111, %113 : vector<128x32xf32>
    %cst_57 = arith.constant 0.000000e+00 : f32
    %115 = vector.broadcast %cst_57 : f32 to vector<128x32xf32>
    %116 = arith.maximumf %114, %115 : vector<128x32xf32>
    %117 = arith.addf %116, %90 : vector<128x32xf32>
    %cst_58 = arith.constant 0.707106769 : f32
    %118 = vector.broadcast %cst_58 : f32 to vector<128x32xf32>
    %119 = arith.mulf %117, %118 : vector<128x32xf32>
    %c127_i32_59 = arith.constant 127 : i32
    %120 = tpu.dynamic_rotate %119 by %c127_i32_59 dim 0 : vector<128x32xf32>, i32 -> vector<128x32xf32>
    %121 = arith.mulf %119, %120 : vector<128x32xf32>
    %cst_60 = arith.constant dense<0.000000e+00> : vector<128xf32>
    %122 = vector.multi_reduction <add>, %121, %cst_60 [1] : vector<128x32xf32> to vector<128xf32>
    %123 = vector.shape_cast %122 : vector<128xf32> to vector<128x1xf32>
    %124 = arith.mulf %119, %119 : vector<128x32xf32>
    %cst_61 = arith.constant dense<0.000000e+00> : vector<128xf32>
    %125 = vector.multi_reduction <add>, %124, %cst_61 [1] : vector<128x32xf32> to vector<128xf32>
    %126 = vector.shape_cast %125 : vector<128xf32> to vector<128x1xf32>
    %127 = math.sqrt %126 : vector<128x1xf32>
    %cst_62 = arith.constant 9.99999993E-9 : f32
    %128 = vector.broadcast %cst_62 : f32 to vector<128x1xf32>
    %129 = arith.maximumf %127, %128 : vector<128x1xf32>
    %130 = arith.mulf %120, %120 : vector<128x32xf32>
    %cst_63 = arith.constant dense<0.000000e+00> : vector<128xf32>
    %131 = vector.multi_reduction <add>, %130, %cst_63 [1] : vector<128x32xf32> to vector<128xf32>
    %132 = vector.shape_cast %131 : vector<128xf32> to vector<128x1xf32>
    %133 = math.sqrt %132 : vector<128x1xf32>
    %cst_64 = arith.constant 9.99999993E-9 : f32
    %134 = vector.broadcast %cst_64 : f32 to vector<128x1xf32>
    %135 = arith.maximumf %133, %134 : vector<128x1xf32>
    %136 = arith.mulf %129, %135 : vector<128x1xf32>
    %137 = arith.divf %123, %136 : vector<128x1xf32>
    %cst_65 = arith.constant 8.000000e-01 : f32
    %138 = vector.broadcast %cst_65 : f32 to vector<128x1xf32>
    %139 = arith.cmpf ogt, %137, %138 : vector<128x1xf32>
    %cst_66 = arith.constant 0.000000e+00 : f32
    %140 = vector.broadcast %cst_66 : f32 to vector<128x1xf32>
    %141 = arith.select %139, %140, %137 : vector<128x1xi1>, vector<128x1xf32>
    %cst_67 = arith.constant dense<true> : vector<128x1xi1>
    %142 = arith.xori %52, %cst_67 : vector<128x1xi1>
    %cst_68 = arith.constant 0.000000e+00 : f32
    %143 = vector.broadcast %cst_68 : f32 to vector<128x1xf32>
    %144 = arith.cmpf ogt, %141, %143 : vector<128x1xf32>
    %145 = arith.andi %142, %144 : vector<128x1xi1>
    %cst_69 = arith.constant 0.000000e+00 : f32
    %146 = vector.broadcast %cst_69 : f32 to vector<128x1xf32>
    %147 = arith.subf %146, %141 : vector<128x1xf32>
    %148 = math.exp %147 : vector<128x1xf32>
    %cst_70 = arith.constant 0.000000e+00 : f32
    %149 = vector.broadcast %cst_70 : f32 to vector<128x1xf32>
    %150 = arith.select %145, %148, %149 : vector<128x1xi1>, vector<128x1xf32>
    %cst_71 = arith.constant dense<0.000000e+00> : vector<1xf32>
    %151 = vector.multi_reduction <add>, %150, %cst_71 [0] : vector<128x1xf32> to vector<1xf32>
    %152 = vector.shape_cast %151 : vector<1xf32> to vector<1x1xf32>
    %153 = arith.extui %145 : vector<128x1xi1> to vector<128x1xi32>
    %154 = arith.sitofp %153 : vector<128x1xi32> to vector<128x1xf32>
    %cst_72 = arith.constant dense<0.000000e+00> : vector<1xf32>
    %155 = vector.multi_reduction <add>, %154, %cst_72 [0] : vector<128x1xf32> to vector<1xf32>
    %156 = vector.shape_cast %155 : vector<1xf32> to vector<1x1xf32>
    %cst_73 = arith.constant 9.99999997E-7 : f32
    %157 = vector.broadcast %cst_73 : f32 to vector<1x1xf32>
    %158 = arith.addf %156, %157 : vector<1x1xf32>
    %159 = arith.divf %152, %158 : vector<1x1xf32>
    %c0_74 = arith.constant 0 : index
    %c0_75 = arith.constant 0 : index
    %160 = vector.load %arg28[%c0_74, %c0_75] : memref<1x1xf32, #tpu.memory_space<vmem>>, vector<1x1xf32>
    tpu.vector_store %arg28[%c0_74, %c0_75], %159 {strides = array<i32>} : memref<1x1xf32, #tpu.memory_space<vmem>>, vector<1x1xf32>,
    %c0_76 = arith.constant 0 : index
    %c0_77 = arith.constant 0 : index
    %161 = vector.load %arg14[%c0_76, %c0_77] : memref<32x64xf32, #tpu.memory_space<vmem>>, vector<32x64xf32>
    %cst_78 = arith.constant dense<0.000000e+00> : vector<8x64xf32>
    %162 = tpu.matmul %15, %161, %cst_78 {dimension_numbers = #tpu.dot_dimension_numbers<[1], [0], [0], [1], [0, 0, 1, 1], [], []>} : vector<8x32xf32>, vector<32x64xf32>, vector<8x64xf32> -> vector<8x64xf32>
    %c0_79 = arith.constant 0 : index
    %c0_80 = arith.constant 0 : index
    %163 = vector.load %arg15[%c0_79, %c0_80] : memref<32x64xf32, #tpu.memory_space<vmem>>, vector<32x64xf32>
    %cst_81 = arith.constant dense<0.000000e+00> : vector<128x64xf32>
    %164 = tpu.matmul %119, %163, %cst_81 {dimension_numbers = #tpu.dot_dimension_numbers<[1], [0], [0], [1], [0, 0, 1, 1], [], []>} : vector<128x32xf32>, vector<32x64xf32>, vector<128x64xf32> -> vector<128x64xf32>
    %165 = vector.shape_cast %164 : vector<128x64xf32> to vector<8x16x64xf32>
    %166 = vector.shape_cast %162 : vector<8x64xf32> to vector<8x1x64xf32>
    %167 = vector.broadcast %166 : vector<8x1x64xf32> to vector<8x16x64xf32>
    %168 = arith.addf %165, %167 : vector<8x16x64xf32>
    %c0_82 = arith.constant 0 : index
    %c0_83 = arith.constant 0 : index
    %169 = vector.load %arg16[%c0_82, %c0_83] : memref<1x64xf32, #tpu.memory_space<vmem>>, vector<1x64xf32>
    %170 = vector.shape_cast %169 : vector<1x64xf32> to vector<1x1x64xf32>
    %171 = vector.broadcast %170 : vector<1x1x64xf32> to vector<8x16x64xf32>
    %172 = arith.addf %168, %171 : vector<8x16x64xf32>
    %173 = vector.extract_strided_slice %172 {offsets = [0, 0, 0], sizes = [8, 16, 32], strides = [1, 1, 1]} : vector<8x16x64xf32> to vector<8x16x32xf32>
    %174 = vector.extract_strided_slice %172 {offsets = [0, 0, 32], sizes = [8, 16, 32], strides = [1, 1, 1]} : vector<8x16x64xf32> to vector<8x16x32xf32>
    %175 = arith.negf %174 : vector<8x16x32xf32>
    %176 = math.exp %175 : vector<8x16x32xf32>
    %cst_84 = arith.constant 1.000000e+00 : f32
    %177 = vector.broadcast %cst_84 : f32 to vector<8x16x32xf32>
    %178 = arith.addf %177, %176 : vector<8x16x32xf32>
    %179 = arith.divf %177, %178 : vector<8x16x32xf32>
    %180 = arith.mulf %173, %179 : vector<8x16x32xf32>
    %c0_85 = arith.constant 0 : index
    %c0_86 = arith.constant 0 : index
    %181 = vector.load %arg17[%c0_85, %c0_86] : memref<1x32xf32, #tpu.memory_space<vmem>>, vector<1x32xf32>
    %182 = vector.shape_cast %181 : vector<1x32xf32> to vector<1x1x32xf32>
    %183 = vector.broadcast %182 : vector<1x1x32xf32> to vector<8x16x32xf32>
    %184 = arith.mulf %180, %183 : vector<8x16x32xf32>
    %cst_87 = arith.constant dense<0.000000e+00> : vector<8x16xf32>
    %185 = vector.multi_reduction <add>, %184, %cst_87 [2] : vector<8x16x32xf32> to vector<8x16xf32>
    %186 = vector.shape_cast %185 : vector<8x16xf32> to vector<8x16x1xf32>
    %c0_88 = arith.constant 0 : index
    %c0_89 = arith.constant 0 : index
    %187 = vector.load %arg18[%c0_88, %c0_89] : memref<1x1xf32, #tpu.memory_space<vmem>>, vector<1x1xf32>
    %188 = vector.shape_cast %187 : vector<1x1xf32> to vector<1x1x1xf32>
    %189 = vector.broadcast %188 : vector<1x1x1xf32> to vector<8x16x1xf32>
    %190 = arith.addf %186, %189 : vector<8x16x1xf32>
    %191 = arith.negf %190 : vector<8x16x1xf32>
    %192 = math.exp %191 : vector<8x16x1xf32>
    %cst_90 = arith.constant 1.000000e+00 : f32
    %193 = vector.broadcast %cst_90 : f32 to vector<8x16x1xf32>
    %194 = arith.addf %193, %192 : vector<8x16x1xf32>
    %195 = arith.divf %193, %194 : vector<8x16x1xf32>
    %196 = vector.shape_cast %119 : vector<128x32xf32> to vector<8x16x32xf32>
    %197 = vector.broadcast %195 : vector<8x16x1xf32> to vector<8x16x32xf32>
    %198 = arith.mulf %197, %196 : vector<8x16x32xf32>
    %cst_91 = arith.constant 5.000000e-01 : f32
    %199 = vector.broadcast %cst_91 : f32 to vector<8x16x32xf32>
    %200 = arith.mulf %198, %199 : vector<8x16x32xf32>
    %cst_92 = arith.constant 5.000000e-01 : f32
    %201 = vector.broadcast %cst_92 : f32 to vector<8x16x32xf32>
    %202 = arith.mulf %196, %201 : vector<8x16x32xf32>
    %203 = arith.addf %200, %202 : vector<8x16x32xf32>
    %cst_93 = arith.constant dense<0xFF800000> : vector<8x32xf32>
    %204 = vector.multi_reduction <maximumf>, %203, %cst_93 [1] : vector<8x16x32xf32> to vector<8x32xf32>
    %c0_i32_94 = arith.constant 0 : i32
    %205 = tpu.memref_slice %arg32[%c0_i32_94] : memref<3x!tpu.dma_semaphore, #tpu.memory_space<semaphore_mem>> -> memref<1x!tpu.dma_semaphore, #tpu.memory_space<semaphore_mem>>
    %206 = tpu.memref_squeeze %205 : memref<1x!tpu.dma_semaphore, #tpu.memory_space<semaphore_mem>> -> memref<!tpu.dma_semaphore, #tpu.memory_space<semaphore_mem>>
    tpu.wait_dma2 semaphore(%206 : memref<!tpu.dma_semaphore, #tpu.memory_space<semaphore_mem>>) src(%arg19 : memref<64x1024xbf16, #tpu.memory_space<any>>) dst(%arg29 : memref<64x1024xbf16, #tpu.memory_space<vmem>>)
    %c0_95 = arith.constant 0 : index
    %c0_96 = arith.constant 0 : index
    %207 = vector.load %arg29[%c0_95, %c0_96] : memref<64x1024xbf16, #tpu.memory_space<vmem>>, vector<64x1024xbf16>
    %208 = arith.truncf %15 : vector<8x32xf32> to vector<8x32xbf16>
    %209 = vector.extract_strided_slice %207 {offsets = [0, 0], sizes = [32, 1024], strides = [1, 1]} : vector<64x1024xbf16> to vector<32x1024xbf16>
    %cst_97 = arith.constant dense<0.000000e+00> : vector<8x1024xf32>
    %210 = tpu.matmul %208, %209, %cst_97 {dimension_numbers = #tpu.dot_dimension_numbers<[1], [0], [0], [1], [0, 0, 1, 1], [], []>} : vector<8x32xbf16>, vector<32x1024xbf16>, vector<8x1024xf32> -> vector<8x1024xf32>
    %211 = arith.truncf %204 : vector<8x32xf32> to vector<8x32xbf16>
    %212 = vector.extract_strided_slice %207 {offsets = [32, 0], sizes = [32, 1024], strides = [1, 1]} : vector<64x1024xbf16> to vector<32x1024xbf16>
    %cst_98 = arith.constant dense<0.000000e+00> : vector<8x1024xf32>
    %213 = tpu.matmul %211, %212, %cst_98 {dimension_numbers = #tpu.dot_dimension_numbers<[1], [0], [0], [1], [0, 0, 1, 1], [], []>} : vector<8x32xbf16>, vector<32x1024xbf16>, vector<8x1024xf32> -> vector<8x1024xf32>
    %214 = arith.addf %210, %213 : vector<8x1024xf32>
    %c0_99 = arith.constant 0 : index
    %c0_100 = arith.constant 0 : index
    %215 = vector.load %arg22[%c0_99, %c0_100] : memref<1x1024xf32, #tpu.memory_space<vmem>>, vector<1x1024xf32>
    %216 = vector.broadcast %215 : vector<1x1024xf32> to vector<8x1024xf32>
    %217 = arith.addf %214, %216 : vector<8x1024xf32>
    %cst_101 = arith.constant 0.000000e+00 : f32
    %218 = vector.broadcast %cst_101 : f32 to vector<8x1024xf32>
    %219 = arith.cmpf ogt, %217, %218 : vector<8x1024xf32>
    %cst_102 = arith.constant 0.00999999977 : f32
    %220 = vector.broadcast %cst_102 : f32 to vector<8x1024xf32>
    %221 = arith.mulf %220, %217 : vector<8x1024xf32>
    %222 = arith.select %219, %217, %221 : vector<8x1024xi1>, vector<8x1024xf32>
    %c1_i32_103 = arith.constant 1 : i32
    %223 = tpu.memref_slice %arg32[%c1_i32_103] : memref<3x!tpu.dma_semaphore, #tpu.memory_space<semaphore_mem>> -> memref<1x!tpu.dma_semaphore, #tpu.memory_space<semaphore_mem>>
    %224 = tpu.memref_squeeze %223 : memref<1x!tpu.dma_semaphore, #tpu.memory_space<semaphore_mem>> -> memref<!tpu.dma_semaphore, #tpu.memory_space<semaphore_mem>>
    tpu.wait_dma2 semaphore(%224 : memref<!tpu.dma_semaphore, #tpu.memory_space<semaphore_mem>>) src(%arg20 : memref<1024x1024xbf16, #tpu.memory_space<any>>) dst(%arg30 : memref<1024x1024xbf16, #tpu.memory_space<vmem>>)
    %225 = arith.truncf %222 : vector<8x1024xf32> to vector<8x1024xbf16>
    %c0_104 = arith.constant 0 : index
    %c0_105 = arith.constant 0 : index
    %226 = vector.load %arg30[%c0_104, %c0_105] : memref<1024x1024xbf16, #tpu.memory_space<vmem>>, vector<1024x1024xbf16>
    %cst_106 = arith.constant dense<0.000000e+00> : vector<8x1024xf32>
    %227 = tpu.matmul %225, %226, %cst_106 {dimension_numbers = #tpu.dot_dimension_numbers<[1], [0], [0], [1], [0, 0, 1, 1], [], []>} : vector<8x1024xbf16>, vector<1024x1024xbf16>, vector<8x1024xf32> -> vector<8x1024xf32>
    %c0_107 = arith.constant 0 : index
    %c0_108 = arith.constant 0 : index
    %228 = vector.load %arg23[%c0_107, %c0_108] : memref<1x1024xf32, #tpu.memory_space<vmem>>, vector<1x1024xf32>
    %229 = vector.broadcast %228 : vector<1x1024xf32> to vector<8x1024xf32>
    %230 = arith.addf %227, %229 : vector<8x1024xf32>
    %cst_109 = arith.constant 0.000000e+00 : f32
    %231 = vector.broadcast %cst_109 : f32 to vector<8x1024xf32>
    %232 = arith.cmpf ogt, %230, %231 : vector<8x1024xf32>
    %cst_110 = arith.constant 0.00999999977 : f32
    %233 = vector.broadcast %cst_110 : f32 to vector<8x1024xf32>
    %234 = arith.mulf %233, %230 : vector<8x1024xf32>
    %235 = arith.select %232, %230, %234 : vector<8x1024xi1>, vector<8x1024xf32>
    %c2_i32_111 = arith.constant 2 : i32
    %236 = tpu.memref_slice %arg32[%c2_i32_111] : memref<3x!tpu.dma_semaphore, #tpu.memory_space<semaphore_mem>> -> memref<1x!tpu.dma_semaphore, #tpu.memory_space<semaphore_mem>>
    %237 = tpu.memref_squeeze %236 : memref<1x!tpu.dma_semaphore, #tpu.memory_space<semaphore_mem>> -> memref<!tpu.dma_semaphore, #tpu.memory_space<semaphore_mem>>
    tpu.wait_dma2 semaphore(%237 : memref<!tpu.dma_semaphore, #tpu.memory_space<semaphore_mem>>) src(%arg21 : memref<1024x512xbf16, #tpu.memory_space<any>>) dst(%arg31 : memref<1024x512xbf16, #tpu.memory_space<vmem>>)
    %238 = arith.truncf %235 : vector<8x1024xf32> to vector<8x1024xbf16>
    %c0_112 = arith.constant 0 : index
    %c0_113 = arith.constant 0 : index
    %239 = vector.load %arg31[%c0_112, %c0_113] : memref<1024x512xbf16, #tpu.memory_space<vmem>>, vector<1024x512xbf16>
    %cst_114 = arith.constant dense<0.000000e+00> : vector<8x512xf32>
    %240 = tpu.matmul %238, %239, %cst_114 {dimension_numbers = #tpu.dot_dimension_numbers<[1], [0], [0], [1], [0, 0, 1, 1], [], []>} : vector<8x1024xbf16>, vector<1024x512xbf16>, vector<8x512xf32> -> vector<8x512xf32>
    %c0_115 = arith.constant 0 : index
    %c0_116 = arith.constant 0 : index
    %241 = vector.load %arg24[%c0_115, %c0_116] : memref<1x512xf32, #tpu.memory_space<vmem>>, vector<1x512xf32>
    %242 = vector.broadcast %241 : vector<1x512xf32> to vector<8x512xf32>
    %243 = arith.addf %240, %242 : vector<8x512xf32>
    %cst_117 = arith.constant 0.000000e+00 : f32
    %244 = vector.broadcast %cst_117 : f32 to vector<8x512xf32>
    %245 = arith.cmpf ogt, %243, %244 : vector<8x512xf32>
    %cst_118 = arith.constant 0.00999999977 : f32
    %246 = vector.broadcast %cst_118 : f32 to vector<8x512xf32>
    %247 = arith.mulf %246, %243 : vector<8x512xf32>
    %248 = arith.select %245, %243, %247 : vector<8x512xi1>, vector<8x512xf32>
    %249 = arith.truncf %248 : vector<8x512xf32> to vector<8x512xbf16>
    %c0_119 = arith.constant 0 : index
    %c0_120 = arith.constant 0 : index
    %250 = vector.load %arg25[%c0_119, %c0_120] : memref<512x2xbf16, #tpu.memory_space<vmem>>, vector<512x2xbf16>
    %cst_121 = arith.constant dense<0.000000e+00> : vector<8x2xf32>
    %251 = tpu.matmul %249, %250, %cst_121 {dimension_numbers = #tpu.dot_dimension_numbers<[1], [0], [0], [1], [0, 0, 1, 1], [], []>} : vector<8x512xbf16>, vector<512x2xbf16>, vector<8x2xf32> -> vector<8x2xf32>
    %c0_122 = arith.constant 0 : index
    %c0_123 = arith.constant 0 : index
    %252 = vector.load %arg26[%c0_122, %c0_123] : memref<1x2xf32, #tpu.memory_space<vmem>>, vector<1x2xf32>
    %253 = vector.broadcast %252 : vector<1x2xf32> to vector<8x2xf32>
    %254 = arith.addf %251, %253 : vector<8x2xf32>
    %c0_124 = arith.constant 0 : index
    %c0_125 = arith.constant 0 : index
    %255 = vector.load %arg27[%c0_124, %c0_125] : memref<8x2xf32, #tpu.memory_space<vmem>>, vector<8x2xf32>
    tpu.vector_store %arg27[%c0_124, %c0_125], %254 {strides = array<i32>} : memref<8x2xf32, #tpu.memory_space<vmem>>, vector<8x2xf32>,
    return
  }
}

</mosaic_0001>

<llo_original>
// kernel: geodti_forward.1
$region0: #{geodti_forward.1}
  #allocation0 [shape = 'u32[]', space=smem, size = 0x4, offset = 0x4, fixed_abs, tag = 'smem constant byte address 0x4 - core index']
  #allocation1 [shape = 'u32[144,128]{1,0:T(1,128)}', space=vmem, size = 0x12000, scoped, tag = 'internal scratch']
  #allocation2 [shape = 'bf16[64,1024]{1,0:T(16,128)(2,1)}', space=vmem, size = 0x20000, scoped, tag = 'scratch operand']
  #allocation3 [shape = 'bf16[1024,1024]{1,0:T(16,128)(2,1)}', space=vmem, size = 0x200000, scoped, tag = 'scratch operand']
  #allocation4 [shape = 'bf16[1024,512]{1,0:T(16,128)(2,1)}', space=vmem, size = 0x100000, scoped, tag = 'scratch operand']
  #allocation5 [shape = 's32[3]{0}', space=sflag, size = 0xc, scoped, tag = 'scratch operand']
  #allocation6 [shape = 'f32[1,1]{1,0:T(1,128)S(1)}', space=vmem, size = 0x200, scoped, tag = 'scoped memory for geodti_forward.1']
  #allocation43 [shape = 's32[]', space=sflag, size = 0x4, offset = 0, fixed_abs, tag = 'sflag constant byte address 0x0 - dummy sync flag']
  #allocation45 [shape = 's32[]', space=sflag, size = 0x4, offset = 0, fixed_abs, tag = 'sflag constant byte address 0x0 - dummy sync flag']
  #allocation47 [shape = 's32[]', space=sflag, size = 0x4, offset = 0, fixed_abs, tag = 'sflag constant byte address 0x0 - dummy sync flag']
  %s0 = inlined_call_operand.hbm [shape: f32[64,16], index: 0, kind: input, shape index: {}]
  %s1 = inlined_call_operand.hbm [shape: f32[128,24], index: 1, kind: input, shape index: {}]
  %s2 = inlined_call_operand.hbm [shape: f32[16,32], index: 2, kind: input, shape index: {}]
  %s3 = inlined_call_operand.hbm [shape: f32[1,32], index: 3, kind: input, shape index: {}]
  %s4 = inlined_call_operand.hbm [shape: f32[24,32], index: 4, kind: input, shape index: {}]
  %s5 = inlined_call_operand.hbm [shape: f32[1,32], index: 5, kind: input, shape index: {}]
  %s6 = inlined_call_operand.hbm [shape: f32[32,64], index: 6, kind: input, shape index: {}]
  %s7 = inlined_call_operand.hbm [shape: f32[32,64], index: 7, kind: input, shape index: {}]
  %s8 = inlined_call_operand.hbm [shape: f32[32,64], index: 8, kind: input, shape index: {}]
  %s9 = inlined_call_operand.hbm [shape: f32[1,64], index: 9, kind: input, shape index: {}]
  %s10 = inlined_call_operand.hbm [shape: f32[32,32], index: 10, kind: input, shape index: {}]
  %s11 = inlined_call_operand.hbm [shape: f32[1,32], index: 11, kind: input, shape index: {}]
  %s12 = inlined_call_operand.hbm [shape: f32[32,32], index: 12, kind: input, shape index: {}]
  %s13 = inlined_call_operand.hbm [shape: f32[1,32], index: 13, kind: input, shape index: {}]
  %s14 = inlined_call_operand.hbm [shape: f32[32,64], index: 14, kind: input, shape index: {}]
  %s15 = inlined_call_operand.hbm [shape: f32[32,64], index: 15, kind: input, shape index: {}]
  %s16 = inlined_call_operand.hbm [shape: f32[1,64], index: 16, kind: input, shape index: {}]
  %s17 = inlined_call_operand.hbm [shape: f32[1,32], index: 17, kind: input, shape index: {}]
  %s18 = inlined_call_operand.<no memory space> [shape: f32[1,1], index: 18, kind: input, shape index: {}]
  %s19 = inlined_call_operand.hbm [shape: bf16[64,1024], index: 19, kind: input, shape index: {}]
  %s20 = inlined_call_operand.hbm [shape: bf16[1024,1024], index: 20, kind: input, shape index: {}]
  %s21 = inlined_call_operand.hbm [shape: bf16[1024,512], index: 21, kind: input, shape index: {}]
  %s22 = inlined_call_operand.hbm [shape: f32[1,1024], index: 22, kind: input, shape index: {}]
  %s23 = inlined_call_operand.hbm [shape: f32[1,1024], index: 23, kind: input, shape index: {}]
  %s24 = inlined_call_operand.hbm [shape: f32[1,512], index: 24, kind: input, shape index: {}]
  %s25 = inlined_call_operand.vmem [shape: bf16[512,2], index: 25, kind: input, shape index: {}]
  %s26 = inlined_call_operand.hbm [shape: f32[1,2], index: 26, kind: input, shape index: {}]
  %s27 = inlined_call_operand.vmem [shape: f32[8,2], index: 27, kind: output, shape index: {0}]
  %s28 = inlined_call_operand.hbm [shape: f32[1,1], index: 28, kind: output, shape index: {1}]
  %29 = xla_tuple %s27, %s28
  %s30 = sld [smem:[#allocation0]]
  $region202: #{geodti_forward.1} parent=0
    _
  %s32 = ssub.s32 1, %s30
  %s33 = scalar_select 0, %s32, %s30
  %v34 = vstv %s18
  %35 = vst [vmem:[#allocation6] sm:$0x1] %v34
  $region1: #{geodti_forward.1} parent=0
    #allocation7 [shape = 'u8[32768]{0}', space=vmem, size = 0x8000, scoped, tag = 'input window, operand 0, single buffered']
    #allocation8 [shape = 's32[1]{0}', space=sflag, size = 0x4, scoped, tag = 'scoped memory for geodti_forward.1']
    #allocation9 [shape = 's32[1]{0}', space=sflag, size = 0x4, scoped, tag = 'scoped memory for geodti_forward.1']
    #allocation10 [shape = 'u8[65536]{0}', space=vmem, size = 0x10000, scoped, tag = 'input window, operand 1, single buffered']
    #allocation11 [shape = 's32[1]{0}', space=sflag, size = 0x4, scoped, tag = 'scoped memory for geodti_forward.1']
    #allocation12 [shape = 'u8[8192]{0}', space=vmem, size = 0x2000, scoped, tag = 'input window, operand 2, single buffered']
    #allocation13 [shape = 'u8[512]{0}', space=vmem, size = 0x400, scoped, tag = 'input window, operand 3, single buffered']
    #allocation14 [shape = 's32[1]{0}', space=sflag, size = 0x4, scoped, tag = 'scoped memory for geodti_forward.1']
    #allocation15 [shape = 'u8[12288]{0}', space=vmem, size = 0x3000, scoped, tag = 'input window, operand 4, single buffered']
    #allocation16 [shape = 'u8[512]{0}', space=vmem, size = 0x400, scoped, tag = 'input window, operand 5, single buffered']
    #allocation17 [shape = 's32[1]{0}', space=sflag, size = 0x4, scoped, tag = 'scoped memory for geodti_forward.1']
    #allocation18 [shape = 'u8[16384]{0}', space=vmem, size = 0x4000, scoped, tag = 'input window, operand 6, single buffered']
    #allocation19 [shape = 'u8[16384]{0}', space=vmem, size = 0x4000, scoped, tag = 'input window, operand 7, single buffered']
    #allocation20 [shape = 's32[1]{0}', space=sflag, size = 0x4, scoped, tag = 'scoped memory for geodti_forward.1']
    #allocation21 [shape = 'u8[16384]{0}', space=vmem, size = 0x4000, scoped, tag = 'input window, operand 8, single buffered']
    #allocation22 [shape = 'u8[512]{0}', space=vmem, size = 0x400, scoped, tag = 'input window, operand 9, single buffered']
    #allocation23 [shape = 's32[1]{0}', space=sflag, size = 0x4, scoped, tag = 'scoped memory for geodti_forward.1']
    #allocation24 [shape = 'u8[16384]{0}', space=vmem, size = 0x4000, scoped, tag = 'input window, operand 10, single buffered']
    #allocation25 [shape = 'u8[512]{0}', space=vmem, size = 0x400, scoped, tag = 'input window, operand 11, single buffered']
    #allocation26 [shape = 's32[1]{0}', space=sflag, size = 0x4, scoped, tag = 'scoped memory for geodti_forward.1']
    #allocation27 [shape = 'u8[16384]{0}', space=vmem, size = 0x4000, scoped, tag = 'input window, operand 12, single buffered']
    #allocation28 [shape = 'u8[512]{0}', space=vmem, size = 0x400, scoped, tag = 'input window, operand 13, single buffered']
    #allocation29 [shape = 's32[1]{0}', space=sflag, size = 0x4, scoped, tag = 'scoped memory for geodti_forward.1']
    #allocation30 [shape = 'u8[16384]{0}', space=vmem, size = 0x4000, scoped, tag = 'input window, operand 14, single buffered']
    #allocation31 [shape = 'u8[16384]{0}', space=vmem, size = 0x4000, scoped, tag = 'input window, operand 15, single buffered']
    #allocation32 [shape = 's32[1]{0}', space=sflag, size = 0x4, scoped, tag = 'scoped memory for geodti_forward.1']
    #allocation33 [shape = 'u8[512]{0}', space=vmem, size = 0x400, scoped, tag = 'input window, operand 16, single buffered']
    #allocation34 [shape = 'u8[512]{0}', space=vmem, size = 0x400, scoped, tag = 'input window, operand 17, single buffered']
    #allocation35 [shape = 's32[1]{0}', space=sflag, size = 0x4, scoped, tag = 'scoped memory for geodti_forward.1']
    #allocation36 [shape = 'u8[4096]{0}', space=vmem, size = 0x1000, scoped, tag = 'input window, operand 22, single buffered']
    #allocation37 [shape = 'u8[4096]{0}', space=vmem, size = 0x1000, scoped, tag = 'input window, operand 23, single buffered']
    #allocation38 [shape = 's32[1]{0}', space=sflag, size = 0x4, scoped, tag = 'scoped memory for geodti_forward.1']
    #allocation39 [shape = 'u8[2048]{0}', space=vmem, size = 0x800, scoped, tag = 'input window, operand 24, single buffered']
    #allocation40 [shape = 'u8[512]{0}', space=vmem, size = 0x400, scoped, tag = 'input window, operand 26, single buffered']
    #allocation41 [shape = 's32[1]{0}', space=sflag, size = 0x4, scoped, tag = 'scoped memory for geodti_forward.1']
    #allocation42 [shape = 'u8[512]{0}', space=vmem, size = 0x400, scoped, tag = 'output window, operand 1, single buffered']
    #allocation44 [shape = 'u32[9]{0}', space=smem, size = 0x24, scoped, tag = 'DMA stride descriptor']
    #allocation46 [shape = 'u32[9]{0}', space=smem, size = 0x24, scoped, tag = 'DMA stride descriptor']
    #allocation48 [shape = 'u32[9]{0}', space=smem, size = 0x24, scoped, tag = 'DMA stride descriptor']
    %36 = vsyncpa [#allocation8], 0
    %37 = vsyncpa [#allocation11], 0
    %38 = vsyncpa [#allocation14], 0
    %39 = vsyncpa [#allocation17], 0
    %40 = vsyncpa [#allocation20], 0
    %41 = vsyncpa [#allocation23], 0
    %42 = vsyncpa [#allocation26], 0
    %43 = vsyncpa [#allocation29], 0
    %44 = vsyncpa [#allocation32], 0
    %45 = vsyncpa [#allocation35], 0
    %46 = vsyncpa [#allocation38], 0
    %47 = vsyncpa [#allocation41], 0
    %48 = vsyncpa [#allocation9], 0
    // Predicated region
    $region2: #{geodti_forward.1} parent=1 // pred_check
      _
    $region3: #{geodti_forward.1} parent=1 // pred_check_branch
      %50 = sbr.rel (0) target = $region5
    $region4: #{geodti_forward.1} parent=1 // pred_region
      %s52 = ssub.s32 1024, 1024
      %53 = vsyncadd [#allocation8], %s52
      %s54 = sshll.u32 [#allocation7], 4
      %s55 = int_to_ptr.vmem [resolvable:$true] %s54
      %60 = dma.hbm_to_vmem [thread:$0]  %s0, 1024, %s55, [#allocation8], 128, 128, 8
    $region5: #{geodti_forward.1} parent=1 // pred_fallthru
      _
    // Predicated region
    $region6: #{geodti_forward.1} parent=1 // pred_check
      _
    $region7: #{geodti_forward.1} parent=1 // pred_check_branch
      %62 = sbr.rel (0) target = $region9
    $region8: #{geodti_forward.1} parent=1 // pred_region
      %s64 = ssub.s32 2048, 2048
      %65 = vsyncadd [#allocation11], %s64
      %s66 = sshll.u32 [#allocation10], 4
      %s67 = int_to_ptr.vmem [resolvable:$true] %s66
      %72 = dma.hbm_to_vmem [thread:$0]  %s1, 2048, %s67, [#allocation11], 128, 128, 8
    $region9: #{geodti_forward.1} parent=1 // pred_fallthru
      _
    // Predicated region
    $region10: #{geodti_forward.1} parent=1 // pred_check
      _
    $region11: #{geodti_forward.1} parent=1 // pred_check_branch
      %74 = sbr.rel (0) target = $region13
    $region12: #{geodti_forward.1} parent=1 // pred_region
      %s76 = ssub.s32 256, 256
      %77 = vsyncadd [#allocation11], %s76
      %s78 = sshll.u32 [#allocation12], 4
      %s79 = int_to_ptr.vmem [resolvable:$true] %s78
      %84 = dma.hbm_to_vmem [thread:$0]  %s2, 256, %s79, [#allocation11], 128, 128, 8
    $region13: #{geodti_forward.1} parent=1 // pred_fallthru
      _
    // Predicated region
    $region14: #{geodti_forward.1} parent=1 // pred_check
      _
    $region15: #{geodti_forward.1} parent=1 // pred_check_branch
      %86 = sbr.rel (0) target = $region17
    $region16: #{geodti_forward.1} parent=1 // pred_region
      %s88 = ssub.s32 16, 16
      %89 = vsyncadd [#allocation14], %s88
      %s91 = sshll.u32 [#allocation13], 4
      %s92 = int_to_ptr.vmem [resolvable:$true] %s91
      %94 = dma.hbm_to_vmem [thread:$0]  %s3, 16, %s92, [#allocation14]
    $region17: #{geodti_forward.1} parent=1 // pred_fallthru
      _
    // Predicated region
    $region18: #{geodti_forward.1} parent=1 // pred_check
      _
    $region19: #{geodti_forward.1} parent=1 // pred_check_branch
      %96 = sbr.rel (0) target = $region21
    $region20: #{geodti_forward.1} parent=1 // pred_region
      %s98 = ssub.s32 384, 384
      %99 = vsyncadd [#allocation14], %s98
      %s100 = sshll.u32 [#allocation15], 4
      %s101 = int_to_ptr.vmem [resolvable:$true] %s100
      %106 = dma.hbm_to_vmem [thread:$0]  %s4, 384, %s101, [#allocation14], 128, 128, 8
    $region21: #{geodti_forward.1} parent=1 // pred_fallthru
      _
    // Predicated region
    $region22: #{geodti_forward.1} parent=1 // pred_check
      _
    $region23: #{geodti_forward.1} parent=1 // pred_check_branch
      %108 = sbr.rel (0) target = $region25
    $region24: #{geodti_forward.1} parent=1 // pred_region
      %s110 = ssub.s32 16, 16
      %111 = vsyncadd [#allocation17], %s110
      %s113 = sshll.u32 [#allocation16], 4
      %s114 = int_to_ptr.vmem [resolvable:$true] %s113
      %116 = dma.hbm_to_vmem [thread:$0]  %s5, 16, %s114, [#allocation17]
    $region25: #{geodti_forward.1} parent=1 // pred_fallthru
      _
    // Predicated region
    $region26: #{geodti_forward.1} parent=1 // pred_check
      _
    $region27: #{geodti_forward.1} parent=1 // pred_check_branch
      %118 = sbr.rel (0) target = $region29
    $region28: #{geodti_forward.1} parent=1 // pred_region
      %s120 = ssub.s32 512, 512
      %121 = vsyncadd [#allocation17], %s120
      %s122 = sshll.u32 [#allocation18], 4
      %s123 = int_to_ptr.vmem [resolvable:$true] %s122
      %128 = dma.hbm_to_vmem [thread:$0]  %s6, 512, %s123, [#allocation17], 128, 128, 8
    $region29: #{geodti_forward.1} parent=1 // pred_fallthru
      _
    // Predicated region
    $region30: #{geodti_forward.1} parent=1 // pred_check
      _
    $region31: #{geodti_forward.1} parent=1 // pred_check_branch
      %130 = sbr.rel (0) target = $region33
    $region32: #{geodti_forward.1} parent=1 // pred_region
      %s132 = ssub.s32 512, 512
      %133 = vsyncadd [#allocation20], %s132
      %s134 = sshll.u32 [#allocation19], 4
      %s135 = int_to_ptr.vmem [resolvable:$true] %s134
      %140 = dma.hbm_to_vmem [thread:$0]  %s7, 512, %s135, [#allocation20], 128, 128, 8
    $region33: #{geodti_forward.1} parent=1 // pred_fallthru
      _
    // Predicated region
    $region34: #{geodti_forward.1} parent=1 // pred_check
      _
    $region35: #{geodti_forward.1} parent=1 // pred_check_branch
      %142 = sbr.rel (0) target = $region37
    $region36: #{geodti_forward.1} parent=1 // pred_region
      %s144 = ssub.s32 512, 512
      %145 = vsyncadd [#allocation20], %s144
      %s146 = sshll.u32 [#allocation21], 4
      %s147 = int_to_ptr.vmem [resolvable:$true] %s146
      %152 = dma.hbm_to_vmem [thread:$0]  %s8, 512, %s147, [#allocation20], 128, 128, 8
    $region37: #{geodti_forward.1} parent=1 // pred_fallthru
      _
    // Predicated region
    $region38: #{geodti_forward.1} parent=1 // pred_check
      _
    $region39: #{geodti_forward.1} parent=1 // pred_check_branch
      %154 = sbr.rel (0) target = $region41
    $region40: #{geodti_forward.1} parent=1 // pred_region
      %s156 = ssub.s32 16, 16
      %157 = vsyncadd [#allocation23], %s156
      %s159 = sshll.u32 [#allocation22], 4
      %s160 = int_to_ptr.vmem [resolvable:$true] %s159
      %162 = dma.hbm_to_vmem [thread:$0]  %s9, 16, %s160, [#allocation23]
    $region41: #{geodti_forward.1} parent=1 // pred_fallthru
      _
    // Predicated region
    $region42: #{geodti_forward.1} parent=1 // pred_check
      _
    $region43: #{geodti_forward.1} parent=1 // pred_check_branch
      %164 = sbr.rel (0) target = $region45
    $region44: #{geodti_forward.1} parent=1 // pred_region
      %s166 = ssub.s32 512, 512
      %167 = vsyncadd [#allocation23], %s166
      %s168 = sshll.u32 [#allocation24], 4
      %s169 = int_to_ptr.vmem [resolvable:$true] %s168
      %174 = dma.hbm_to_vmem [thread:$0]  %s10, 512, %s169, [#allocation23], 128, 128, 8
    $region45: #{geodti_forward.1} parent=1 // pred_fallthru
      _
    // Predicated region
    $region46: #{geodti_forward.1} parent=1 // pred_check
      _
    $region47: #{geodti_forward.1} parent=1 // pred_check_branch
      %176 = sbr.rel (0) target = $region49
    $region48: #{geodti_forward.1} parent=1 // pred_region
      %s178 = ssub.s32 16, 16
      %179 = vsyncadd [#allocation26], %s178
      %s181 = sshll.u32 [#allocation25], 4
      %s182 = int_to_ptr.vmem [resolvable:$true] %s181
      %184 = dma.hbm_to_vmem [thread:$0]  %s11, 16, %s182, [#allocation26]
    $region49: #{geodti_forward.1} parent=1 // pred_fallthru
      _
    // Predicated region
    $region50: #{geodti_forward.1} parent=1 // pred_check
      _
    $region51: #{geodti_forward.1} parent=1 // pred_check_branch
      %186 = sbr.rel (0) target = $region53
    $region52: #{geodti_forward.1} parent=1 // pred_region
      %s188 = ssub.s32 512, 512
      %189 = vsyncadd [#allocation26], %s188
      %s190 = sshll.u32 [#allocation27], 4
      %s191 = int_to_ptr.vmem [resolvable:$true] %s190
      %196 = dma.hbm_to_vmem [thread:$0]  %s12, 512, %s191, [#allocation26], 128, 128, 8
    $region53: #{geodti_forward.1} parent=1 // pred_fallthru
      _
    // Predicated region
    $region54: #{geodti_forward.1} parent=1 // pred_check
      _
    $region55: #{geodti_forward.1} parent=1 // pred_check_branch
      %198 = sbr.rel (0) target = $region57
    $region56: #{geodti_forward.1} parent=1 // pred_region
      %s200 = ssub.s32 16, 16
      %201 = vsyncadd [#allocation29], %s200
      %s203 = sshll.u32 [#allocation28], 4
      %s204 = int_to_ptr.vmem [resolvable:$true] %s203
      %206 = dma.hbm_to_vmem [thread:$0]  %s13, 16, %s204, [#allocation29]
    $region57: #{geodti_forward.1} parent=1 // pred_fallthru
      _
    // Predicated region
    $region58: #{geodti_forward.1} parent=1 // pred_check
      _
    $region59: #{geodti_forward.1} parent=1 // pred_check_branch
      %208 = sbr.rel (0) target = $region61
    $region60: #{geodti_forward.1} parent=1 // pred_region
      %s210 = ssub.s32 512, 512
      %211 = vsyncadd [#allocation29], %s210
      %s212 = sshll.u32 [#allocation30], 4
      %s213 = int_to_ptr.vmem [resolvable:$true] %s212
      %218 = dma.hbm_to_vmem [thread:$0]  %s14, 512, %s213, [#allocation29], 128, 128, 8
    $region61: #{geodti_forward.1} parent=1 // pred_fallthru
      _
    // Predicated region
    $region62: #{geodti_forward.1} parent=1 // pred_check
      _
    $region63: #{geodti_forward.1} parent=1 // pred_check_branch
      %220 = sbr.rel (0) target = $region65
    $region64: #{geodti_forward.1} parent=1 // pred_region
      %s222 = ssub.s32 512, 512
      %223 = vsyncadd [#allocation32], %s222
      %s224 = sshll.u32 [#allocation31], 4
      %s225 = int_to_ptr.vmem [resolvable:$true] %s224
      %230 = dma.hbm_to_vmem [thread:$0]  %s15, 512, %s225, [#allocation32], 128, 128, 8
    $region65: #{geodti_forward.1} parent=1 // pred_fallthru
      _
    // Predicated region
    $region66: #{geodti_forward.1} parent=1 // pred_check
      _
    $region67: #{geodti_forward.1} parent=1 // pred_check_branch
      %232 = sbr.rel (0) target = $region69
    $region68: #{geodti_forward.1} parent=1 // pred_region
      %s234 = ssub.s32 16, 16
      %235 = vsyncadd [#allocation32], %s234
      %s237 = sshll.u32 [#allocation33], 4
      %s238 = int_to_ptr.vmem [resolvable:$true] %s237
      %240 = dma.hbm_to_vmem [thread:$0]  %s16, 16, %s238, [#allocation32]
    $region69: #{geodti_forward.1} parent=1 // pred_fallthru
      _
    // Predicated region
    $region70: #{geodti_forward.1} parent=1 // pred_check
      _
    $region71: #{geodti_forward.1} parent=1 // pred_check_branch
      %242 = sbr.rel (0) target = $region73
    $region72: #{geodti_forward.1} parent=1 // pred_region
      %s244 = ssub.s32 16, 16
      %245 = vsyncadd [#allocation35], %s244
      %s247 = sshll.u32 [#allocation34], 4
      %s248 = int_to_ptr.vmem [resolvable:$true] %s247
      %250 = dma.hbm_to_vmem [thread:$0]  %s17, 16, %s248, [#allocation35]
    $region73: #{geodti_forward.1} parent=1 // pred_fallthru
      _
    // Predicated region
    $region74: #{geodti_forward.1} parent=1 // pred_check
      _
    $region75: #{geodti_forward.1} parent=1 // pred_check_branch
      %252 = sbr.rel (0) target = $region77
    $region76: #{geodti_forward.1} parent=1 // pred_region
      _
    $region77: #{geodti_forward.1} parent=1 // pred_fallthru
      _
    // Predicated region
    $region78: #{geodti_forward.1} parent=1 // pred_check
      _
    $region79: #{geodti_forward.1} parent=1 // pred_check_branch
      %254 = sbr.rel (0) target = $region81
    $region80: #{geodti_forward.1} parent=1 // pred_region
      %s256 = ssub.s32 128, 128
      %257 = vsyncadd [#allocation35], %s256
      %s259 = sshll.u32 [#allocation36], 4
      %s260 = int_to_ptr.vmem [resolvable:$true] %s259
      %262 = dma.hbm_to_vmem [thread:$0]  %s22, 128, %s260, [#allocation35]
    $region81: #{geodti_forward.1} parent=1 // pred_fallthru
      _
    // Predicated region
    $region82: #{geodti_forward.1} parent=1 // pred_check
      _
    $region83: #{geodti_forward.1} parent=1 // pred_check_branch
      %264 = sbr.rel (0) target = $region85
    $region84: #{geodti_forward.1} parent=1 // pred_region
      %s266 = ssub.s32 128, 128
      %267 = vsyncadd [#allocation38], %s266
      %s269 = sshll.u32 [#allocation37], 4
      %s270 = int_to_ptr.vmem [resolvable:$true] %s269
      %272 = dma.hbm_to_vmem [thread:$0]  %s23, 128, %s270, [#allocation38]
    $region85: #{geodti_forward.1} parent=1 // pred_fallthru
      _
    // Predicated region
    $region86: #{geodti_forward.1} parent=1 // pred_check
      _
    $region87: #{geodti_forward.1} parent=1 // pred_check_branch
      %274 = sbr.rel (0) target = $region89
    $region88: #{geodti_forward.1} parent=1 // pred_region
      %s276 = ssub.s32 64, 64
      %277 = vsyncadd [#allocation38], %s276
      %s279 = sshll.u32 [#allocation39], 4
      %s280 = int_to_ptr.vmem [resolvable:$true] %s279
      %282 = dma.hbm_to_vmem [thread:$0]  %s24, 64, %s280, [#allocation38]
    $region89: #{geodti_forward.1} parent=1 // pred_fallthru
      _
    // Predicated region
    $region90: #{geodti_forward.1} parent=1 // pred_check
      _
    $region91: #{geodti_forward.1} parent=1 // pred_check_branch
      %284 = sbr.rel (0) target = $region93
    $region92: #{geodti_forward.1} parent=1 // pred_region
      _
    $region93: #{geodti_forward.1} parent=1 // pred_fallthru
      _
    // Predicated region
    $region94: #{geodti_forward.1} parent=1 // pred_check
      _
    $region95: #{geodti_forward.1} parent=1 // pred_check_branch
      %286 = sbr.rel (0) target = $region97
    $region96: #{geodti_forward.1} parent=1 // pred_region
      %s288 = ssub.s32 16, 16
      %289 = vsyncadd [#allocation41], %s288
      %s291 = sshll.u32 [#allocation40], 4
      %s292 = int_to_ptr.vmem [resolvable:$true] %s291
      %294 = dma.hbm_to_vmem [thread:$0]  %s26, 16, %s292, [#allocation41]
    $region97: #{geodti_forward.1} parent=1 // pred_fallthru
      _
    // Predicated region
    $region98: #{geodti_forward.1} parent=1 // pred_check
      _
    $region99: #{geodti_forward.1} parent=1 // pred_check_branch
      %296 = sbr.rel (0) target = $region101
    $region100: #{geodti_forward.1} parent=1 // pred_region
      %297 = dma.done [#allocation8], 1024
    $region101: #{geodti_forward.1} parent=1 // pred_fallthru
      _
    // Predicated region
    $region102: #{geodti_forward.1} parent=1 // pred_check
      _
    $region103: #{geodti_forward.1} parent=1 // pred_check_branch
      %299 = sbr.rel (0) target = $region105
    $region104: #{geodti_forward.1} parent=1 // pred_region
      %300 = dma.done [#allocation11], 2048
    $region105: #{geodti_forward.1} parent=1 // pred_fallthru
      _
    // Predicated region
    $region106: #{geodti_forward.1} parent=1 // pred_check
      _
    $region107: #{geodti_forward.1} parent=1 // pred_check_branch
      %302 = sbr.rel (0) target = $region109
    $region108: #{geodti_forward.1} parent=1 // pred_region
      %303 = dma.done [#allocation11], 256
    $region109: #{geodti_forward.1} parent=1 // pred_fallthru
      _
    // Predicated region
    $region110: #{geodti_forward.1} parent=1 // pred_check
      _
    $region111: #{geodti_forward.1} parent=1 // pred_check_branch
      %305 = sbr.rel (0) target = $region113
    $region112: #{geodti_forward.1} parent=1 // pred_region
      %306 = dma.done [#allocation14], 16
    $region113: #{geodti_forward.1} parent=1 // pred_fallthru
      _
    // Predicated region
    $region114: #{geodti_forward.1} parent=1 // pred_check
      _
    $region115: #{geodti_forward.1} parent=1 // pred_check_branch
      %308 = sbr.rel (0) target = $region117
    $region116: #{geodti_forward.1} parent=1 // pred_region
      %309 = dma.done [#allocation14], 384
    $region117: #{geodti_forward.1} parent=1 // pred_fallthru
      _
    // Predicated region
    $region118: #{geodti_forward.1} parent=1 // pred_check
      _
    $region119: #{geodti_forward.1} parent=1 // pred_check_branch
      %311 = sbr.rel (0) target = $region121
    $region120: #{geodti_forward.1} parent=1 // pred_region
      %312 = dma.done [#allocation17], 16
    $region121: #{geodti_forward.1} parent=1 // pred_fallthru
      _
    // Predicated region
    $region122: #{geodti_forward.1} parent=1 // pred_check
      _
    $region123: #{geodti_forward.1} parent=1 // pred_check_branch
      %314 = sbr.rel (0) target = $region125
    $region124: #{geodti_forward.1} parent=1 // pred_region
      %315 = dma.done [#allocation17], 512
    $region125: #{geodti_forward.1} parent=1 // pred_fallthru
      _
    // Predicated region
    $region126: #{geodti_forward.1} parent=1 // pred_check
      _
    $region127: #{geodti_forward.1} parent=1 // pred_check_branch
      %317 = sbr.rel (0) target = $region129
    $region128: #{geodti_forward.1} parent=1 // pred_region
      %318 = dma.done [#allocation20], 512
    $region129: #{geodti_forward.1} parent=1 // pred_fallthru
      _
    // Predicated region
    $region130: #{geodti_forward.1} parent=1 // pred_check
      _
    $region131: #{geodti_forward.1} parent=1 // pred_check_branch
      %320 = sbr.rel (0) target = $region133
    $region132: #{geodti_forward.1} parent=1 // pred_region
      %321 = dma.done [#allocation20], 512
    $region133: #{geodti_forward.1} parent=1 // pred_fallthru
      _
    // Predicated region
    $region134: #{geodti_forward.1} parent=1 // pred_check
      _
    $region135: #{geodti_forward.1} parent=1 // pred_check_branch
      %323 = sbr.rel (0) target = $region137
    $region136: #{geodti_forward.1} parent=1 // pred_region
      %324 = dma.done [#allocation23], 16
    $region137: #{geodti_forward.1} parent=1 // pred_fallthru
      _
    // Predicated region
    $region138: #{geodti_forward.1} parent=1 // pred_check
      _
    $region139: #{geodti_forward.1} parent=1 // pred_check_branch
      %326 = sbr.rel (0) target = $region141
    $region140: #{geodti_forward.1} parent=1 // pred_region
      %327 = dma.done [#allocation23], 512
    $region141: #{geodti_forward.1} parent=1 // pred_fallthru
      _
    // Predicated region
    $region142: #{geodti_forward.1} parent=1 // pred_check
      _
    $region143: #{geodti_forward.1} parent=1 // pred_check_branch
      %329 = sbr.rel (0) target = $region145
    $region144: #{geodti_forward.1} parent=1 // pred_region
      %330 = dma.done [#allocation26], 16
    $region145: #{geodti_forward.1} parent=1 // pred_fallthru
      _
    // Predicated region
    $region146: #{geodti_forward.1} parent=1 // pred_check
      _
    $region147: #{geodti_forward.1} parent=1 // pred_check_branch
      %332 = sbr.rel (0) target = $region149
    $region148: #{geodti_forward.1} parent=1 // pred_region
      %333 = dma.done [#allocation26], 512
    $region149: #{geodti_forward.1} parent=1 // pred_fallthru
      _
    // Predicated region
    $region150: #{geodti_forward.1} parent=1 // pred_check
      _
    $region151: #{geodti_forward.1} parent=1 // pred_check_branch
      %335 = sbr.rel (0) target = $region153
    $region152: #{geodti_forward.1} parent=1 // pred_region
      %336 = dma.done [#allocation29], 16
    $region153: #{geodti_forward.1} parent=1 // pred_fallthru
      _
    // Predicated region
    $region154: #{geodti_forward.1} parent=1 // pred_check
      _
    $region155: #{geodti_forward.1} parent=1 // pred_check_branch
      %338 = sbr.rel (0) target = $region157
    $region156: #{geodti_forward.1} parent=1 // pred_region
      %339 = dma.done [#allocation29], 512
    $region157: #{geodti_forward.1} parent=1 // pred_fallthru
      _
    // Predicated region
    $region158: #{geodti_forward.1} parent=1 // pred_check
      _
    $region159: #{geodti_forward.1} parent=1 // pred_check_branch
      %341 = sbr.rel (0) target = $region161
    $region160: #{geodti_forward.1} parent=1 // pred_region
      %342 = dma.done [#allocation32], 512
    $region161: #{geodti_forward.1} parent=1 // pred_fallthru
      _
    // Predicated region
    $region162: #{geodti_forward.1} parent=1 // pred_check
      _
    $region163: #{geodti_forward.1} parent=1 // pred_check_branch
      %344 = sbr.rel (0) target = $region165
    $region164: #{geodti_forward.1} parent=1 // pred_region
      %345 = dma.done [#allocation32], 16
    $region165: #{geodti_forward.1} parent=1 // pred_fallthru
      _
    // Predicated region
    $region166: #{geodti_forward.1} parent=1 // pred_check
      _
    $region167: #{geodti_forward.1} parent=1 // pred_check_branch
      %347 = sbr.rel (0) target = $region169
    $region168: #{geodti_forward.1} parent=1 // pred_region
      %348 = dma.done [#allocation35], 16
    $region169: #{geodti_forward.1} parent=1 // pred_fallthru
      _
    // Predicated region
    $region170: #{geodti_forward.1} parent=1 // pred_check
      _
    $region171: #{geodti_forward.1} parent=1 // pred_check_branch
      %350 = sbr.rel (0) target = $region173
    $region172: #{geodti_forward.1} parent=1 // pred_region
      %351 = dma.done [#allocation35], 128
    $region173: #{geodti_forward.1} parent=1 // pred_fallthru
      _
    // Predicated region
    $region174: #{geodti_forward.1} parent=1 // pred_check
      _
    $region175: #{geodti_forward.1} parent=1 // pred_check_branch
      %353 = sbr.rel (0) target = $region177
    $region176: #{geodti_forward.1} parent=1 // pred_region
      %354 = dma.done [#allocation38], 128
    $region177: #{geodti_forward.1} parent=1 // pred_fallthru
      _
    // Predicated region
    $region178: #{geodti_forward.1} parent=1 // pred_check
      _
    $region179: #{geodti_forward.1} parent=1 // pred_check_branch
      %356 = sbr.rel (0) target = $region181
    $region180: #{geodti_forward.1} parent=1 // pred_region
      %357 = dma.done [#allocation38], 64
    $region181: #{geodti_forward.1} parent=1 // pred_fallthru
      _
    // Predicated region
    $region182: #{geodti_forward.1} parent=1 // pred_check
      _
    $region183: #{geodti_forward.1} parent=1 // pred_check_branch
      %359 = sbr.rel (0) target = $region185
    $region184: #{geodti_forward.1} parent=1 // pred_region
      %360 = dma.done [#allocation41], 16
    $region185: #{geodti_forward.1} parent=1 // pred_fallthru
      _
    %s363 = sshll.u32 1, 14
    %s364 = sxor.u32 4294967295, %s363
    %s366 = sld [smem:[#allocation0]]
    %s367 = sadd.s32 2, %s366
    %s369 = sshll.u32 7, 26
    %s370 = sxor.u32 4294967295, %s369
    %s371 = sand.u32 0, %s370
    %s372 = sshll.u32 %s367, 26
    %s373 = sor.u32 %s371, %s372
    %s374 = sshll.u32 [#allocation2], 4
    %s375 = int_to_ptr.vmem [resolvable:$true] %s374
    %378 = sst [smem:[#allocation44]] 1024
    %s379 = scalar_lea.smem [#allocation44], 1
    %380 = sst [smem:[%s379]] 1024
    %s381 = scalar_lea.smem [#allocation44], 2
    %382 = sst [smem:[%s381]] 8
    %s383 = scalar_lea.smem [#allocation44], 3
    %384 = sst [smem:[%s383]] 64
    %s385 = scalar_lea.smem [#allocation44], 4
    %386 = sst [smem:[%s385]] 128
    %s387 = scalar_lea.smem [#allocation44], 5
    %388 = sst [smem:[%s387]] 2
    %s389 = scalar_lea.smem [#allocation44], 6
    %390 = sst [smem:[%s389]] 512
    %s391 = scalar_lea.smem [#allocation44], 7
    %392 = sst [smem:[%s391]] 64
    %s393 = scalar_lea.smem [#allocation44], 8
    %394 = sst [smem:[%s393]] 4
    %396 = dma.general %s19, 4096, %s375, [#allocation5], [#allocation43], [#allocation44], %s373, 0
    %s397 = scalar_lea.sflag [#allocation5], 1
    %s399 = sshll.u32 1, 14
    %s400 = sxor.u32 4294967295, %s399
    %s402 = sadd.s32 2, %s366
    %s404 = sshll.u32 7, 26
    %s405 = sxor.u32 4294967295, %s404
    %s406 = sand.u32 0, %s405
    %s407 = sshll.u32 %s402, 26
    %s408 = sor.u32 %s406, %s407
    %s409 = sshll.u32 [#allocation3], 4
    %s410 = int_to_ptr.vmem [resolvable:$true] %s409
    %413 = sst [smem:[#allocation46]] 1024
    %s414 = scalar_lea.smem [#allocation46], 1
    %415 = sst [smem:[%s414]] 1024
    %s416 = scalar_lea.smem [#allocation46], 2
    %417 = sst [smem:[%s416]] 8
    %s418 = scalar_lea.smem [#allocation46], 3
    %419 = sst [smem:[%s418]] 64
    %s420 = scalar_lea.smem [#allocation46], 4
    %421 = sst [smem:[%s420]] 128
    %s422 = scalar_lea.smem [#allocation46], 5
    %423 = sst [smem:[%s422]] 2
    %s424 = scalar_lea.smem [#allocation46], 6
    %425 = sst [smem:[%s424]] 512
    %s426 = scalar_lea.smem [#allocation46], 7
    %427 = sst [smem:[%s426]] 64
    %s428 = scalar_lea.smem [#allocation46], 8
    %429 = sst [smem:[%s428]] 4
    %431 = dma.general %s20, 65536, %s410, %s397, [#allocation45], [#allocation46], %s408, 0
    %s432 = scalar_lea.sflag [#allocation5], 2
    %s434 = sshll.u32 1, 14
    %s435 = sxor.u32 4294967295, %s434
    %s437 = sadd.s32 2, %s366
    %s439 = sshll.u32 7, 26
    %s440 = sxor.u32 4294967295, %s439
    %s441 = sand.u32 0, %s440
    %s442 = sshll.u32 %s437, 26
    %s443 = sor.u32 %s441, %s442
    %s444 = sshll.u32 [#allocation4], 4
    %s445 = int_to_ptr.vmem [resolvable:$true] %s444
    %448 = sst [smem:[#allocation48]] 512
    %s449 = scalar_lea.smem [#allocation48], 1
    %450 = sst [smem:[%s449]] 512
    %s451 = scalar_lea.smem [#allocation48], 2
    %452 = sst [smem:[%s451]] 4
    %s453 = scalar_lea.smem [#allocation48], 3
    %454 = sst [smem:[%s453]] 64
    %s455 = scalar_lea.smem [#allocation48], 4
    %456 = sst [smem:[%s455]] 128
    %s457 = scalar_lea.smem [#allocation48], 5
    %458 = sst [smem:[%s457]] 2
    %s459 = scalar_lea.smem [#allocation48], 6
    %460 = sst [smem:[%s459]] 256
    %s461 = scalar_lea.smem [#allocation48], 7
    %462 = sst [smem:[%s461]] 64
    %s463 = scalar_lea.smem [#allocation48], 8
    %464 = sst [smem:[%s463]] 4
    %466 = dma.general %s21, 32768, %s445, %s432, [#allocation47], [#allocation48], %s443, 0
    %v467 = vld [vmem:[#allocation7] sm:$0xff]
    %v468 = vld [vmem:[#allocation7 + $0x8] sm:$0xff]
    %v469 = vld [vmem:[#allocation7 + $0x10] sm:$0xff]
    %v470 = vld [vmem:[#allocation7 + $0x18] sm:$0xff]
    %v471 = vld [vmem:[#allocation7 + $0x20] sm:$0xff]
    %v472 = vld [vmem:[#allocation7 + $0x28] sm:$0xff]
    %v473 = vld [vmem:[#allocation7 + $0x30] sm:$0xff]
    %v474 = vld [vmem:[#allocation7 + $0x38] sm:$0xff]
    %v475 = vld [vmem:[#allocation12] sm:$0xff]
    %v476 = vld [vmem:[#allocation12 + $0x8] sm:$0xff]
    %v477 = vld [vmem:[#allocation13] sm:$0x1]
    %v479 = vlaneseq
    %v480 = vshrl.u32 %v479, 7
    %v481 = vsub.s32 0, %v480
    %v482 = vrot.slane %v477, %v481
    %vm484 = vcmask 130048
    %v486 = vsel %vm484, %v467, 0
    %v489 = vsel %vm484, %v468, 0
    %v492 = vsel %vm484, %v469, 0
    %v495 = vsel %vm484, %v470, 0
    %v498 = vsel %vm484, %v471, 0
    %v501 = vsel %vm484, %v472, 0
    %v504 = vsel %vm484, %v473, 0
    %v507 = vsel %vm484, %v474, 0
    %509 = vmatprep.subr.mxu0 0.0
    %510 = vmatpush1.msra.mxu0 %v475
    %511 = vmatprep.subr.mxu0 0.0
    %512 = vmatpush1.msra.mxu0 %v476
    %513 = vmatprep.subr.mxu0 0.0
    %514 = vmatpush1.msra.mxu0 0.0
    %515 = vmatprep.subr.mxu0 0.0
    %516 = vmatpush1.msra.mxu0 0.0
    %517 = vmatprep.subr.mxu0 0.0
    %518 = vmatpush1.msra.mxu0 0.0
    %519 = vmatprep.subr.mxu0 0.0
    %520 = vmatpush1.msra.mxu0 0.0
    %521 = vmatprep.subr.mxu0 0.0
    %522 = vmatpush1.msra.mxu0 0.0
    %523 = vmatprep.subr.mxu0 0.0
    %524 = vmatpush1.msra.mxu0 0.0
    %525 = vmatprep.subr.mxu0 0.0
    %526 = vmatpush1.msra.mxu0 0.0
    %527 = vmatprep.subr.mxu0 0.0
    %528 = vmatpush1.msra.mxu0 0.0
    %529 = vmatprep.subr.mxu0 0.0
    %530 = vmatpush1.msra.mxu0 0.0
    %531 = vmatprep.subr.mxu0 0.0
    %532 = vmatpush1.msra.mxu0 0.0
    %533 = vmatprep.subr.mxu0 0.0
    %534 = vmatpush1.msra.mxu0 0.0
    %535 = vmatprep.subr.mxu0 0.0
    %536 = vmatpush1.msra.mxu0 0.0
    %537 = vmatprep.subr.mxu0 0.0
    %538 = vmatpush1.msra.mxu0 0.0
    %539 = vmatprep.subr.mxu0 0.0
    %540 = vmatpush1.msra.mxu0 0.0
    %541 = vmatprep.subr.mxu0 0.0
    %542 = vmatpush1.msra.mxu0 0.0
    %543 = vmatprep.subr.mxu0 0.0
    %544 = vmatpush1.msra.mxu0 0.0
    %545 = vmatprep.subr.mxu0 0.0
    %546 = vmatpush1.msra.mxu0 0.0
    %547 = vmatprep.subr.mxu0 0.0
    %548 = vmatpush1.msra.mxu0 0.0
    %549 = vmatprep.subr.mxu0 0.0
    %550 = vmatpush1.msra.mxu0 0.0
    %551 = vmatprep.subr.mxu0 0.0
    %552 = vmatpush1.msra.mxu0 0.0
    %553 = vmatprep.subr.mxu0 0.0
    %554 = vmatpush1.msra.mxu0 0.0
    %555 = vmatprep.subr.mxu0 0.0
    %556 = vmatpush1.msra.mxu0 0.0
    %557 = vmatprep.subr.mxu0 0.0
    %558 = vmatpush1.msra.mxu0 0.0
    %559 = vmatprep.subr.mxu0 0.0
    %560 = vmatpush1.msra.mxu0 0.0
    %561 = vmatprep.subr.mxu0 0.0
    %562 = vmatpush1.msra.mxu0 0.0
    %563 = vmatprep.subr.mxu0 0.0
    %564 = vmatpush1.msra.mxu0 0.0
    %565 = vmatprep.subr.mxu0 0.0
    %566 = vmatpush1.msra.mxu0 0.0
    %567 = vmatprep.subr.mxu0 0.0
    %568 = vmatpush1.msra.mxu0 0.0
    %569 = vmatprep.subr.mxu0 0.0
    %570 = vmatpush1.msra.mxu0 0.0
    %571 = vmatprep.subr.mxu0 0.0
    %572 = vmatpush1.msra.mxu0 0.0
    %573 = vmatprep.mubr.f32.mxu0 0.0
    %574 = vmatmul.mubr.f32.gmra.mrb[0].mxu0 %v486
    %v575 = vpop.f32.mrb[0].mxu0
    %v576 = vadd.f32 %v482, %v575
    %v577 = vpop.f32.mrb[0].mxu0
    %578 = vmatprep.mubr.f32.mxu0 0.0
    %579 = vmatmul.mubr.f32.gmra.mrb[0].mxu0 %v489
    %v580 = vpop.f32.mrb[0].mxu0
    %v581 = vadd.f32 %v482, %v580
    %v582 = vpop.f32.mrb[0].mxu0
    %583 = vmatprep.mubr.f32.mxu0 0.0
    %584 = vmatmul.mubr.f32.gmra.mrb[0].mxu0 %v492
    %v585 = vpop.f32.mrb[0].mxu0
    %v586 = vadd.f32 %v482, %v585
    %v587 = vpop.f32.mrb[0].mxu0
    %588 = vmatprep.mubr.f32.mxu0 0.0
    %589 = vmatmul.mubr.f32.gmra.mrb[0].mxu0 %v495
    %v590 = vpop.f32.mrb[0].mxu0
    %v591 = vadd.f32 %v482, %v590
    %v592 = vpop.f32.mrb[0].mxu0
    %593 = vmatprep.mubr.f32.mxu0 0.0
    %594 = vmatmul.mubr.f32.gmra.mrb[0].mxu0 %v498
    %v595 = vpop.f32.mrb[0].mxu0
    %v596 = vadd.f32 %v482, %v595
    %v597 = vpop.f32.mrb[0].mxu0
    %598 = vmatprep.mubr.f32.mxu0 0.0
    %599 = vmatmul.mubr.f32.gmra.mrb[0].mxu0 %v501
    %v600 = vpop.f32.mrb[0].mxu0
    %v601 = vadd.f32 %v482, %v600
    %v602 = vpop.f32.mrb[0].mxu0
    %603 = vmatprep.mubr.f32.mxu0 0.0
    %604 = vmatmul.mubr.f32.gmra.mrb[0].mxu0 %v504
    %v605 = vpop.f32.mrb[0].mxu0
    %v606 = vadd.f32 %v482, %v605
    %v607 = vpop.f32.mrb[0].mxu0
    %608 = vmatprep.mubr.f32.mxu0 0.0
    %609 = vmatmul.mubr.f32.gmra.mrb[0].mxu0 %v507
    %v610 = vpop.f32.mrb[0].mxu0
    %v611 = vadd.f32 %v482, %v610
    %v612 = vpop.f32.mrb[0].mxu0
    %613 = vdwg.mxu0
    %vm614 = vcmask 261120
    %v615 = vsel %vm614, %v576, 0.0
    %v616 = vrot.slane %v615, 4
    %v617 = vadd.f32 %v615, %v616
    %v618 = vrot.slane %v617, 2
    %v619 = vadd.f32 %v617, %v618
    %v620 = vrot.slane %v619, 1
    %v621 = vadd.f32 %v619, %v620
    %v622 = vsel %vm614, %v581, 0.0
    %v623 = vrot.slane %v622, 4
    %v624 = vadd.f32 %v622, %v623
    %v625 = vrot.slane %v624, 2
    %v626 = vadd.f32 %v624, %v625
    %v627 = vrot.slane %v626, 1
    %v628 = vadd.f32 %v626, %v627
    %v629 = vsel %vm614, %v586, 0.0
    %v630 = vrot.slane %v629, 4
    %v631 = vadd.f32 %v629, %v630
    %v632 = vrot.slane %v631, 2
    %v633 = vadd.f32 %v631, %v632
    %v634 = vrot.slane %v633, 1
    %v635 = vadd.f32 %v633, %v634
    %v636 = vsel %vm614, %v591, 0.0
    %v637 = vrot.slane %v636, 4
    %v638 = vadd.f32 %v636, %v637
    %v639 = vrot.slane %v638, 2
    %v640 = vadd.f32 %v638, %v639
    %v641 = vrot.slane %v640, 1
    %v642 = vadd.f32 %v640, %v641
    %v643 = vsel %vm614, %v596, 0.0
    %v644 = vrot.slane %v643, 4
    %v645 = vadd.f32 %v643, %v644
    %v646 = vrot.slane %v645, 2
    %v647 = vadd.f32 %v645, %v646
    %v648 = vrot.slane %v647, 1
    %v649 = vadd.f32 %v647, %v648
    %v650 = vsel %vm614, %v601, 0.0
    %v651 = vrot.slane %v650, 4
    %v652 = vadd.f32 %v650, %v651
    %v653 = vrot.slane %v652, 2
    %v654 = vadd.f32 %v652, %v653
    %v655 = vrot.slane %v654, 1
    %v656 = vadd.f32 %v654, %v655
    %v657 = vsel %vm614, %v606, 0.0
    %v658 = vrot.slane %v657, 4
    %v659 = vadd.f32 %v657, %v658
    %v660 = vrot.slane %v659, 2
    %v661 = vadd.f32 %v659, %v660
    %v662 = vrot.slane %v661, 1
    %v663 = vadd.f32 %v661, %v662
    %v664 = vsel %vm614, %v611, 0.0
    %v665 = vrot.slane %v664, 4
    %v666 = vadd.f32 %v664, %v665
    %v667 = vrot.slane %v666, 2
    %v668 = vadd.f32 %v666, %v667
    %v669 = vrot.slane %v668, 1
    %v670 = vadd.f32 %v668, %v669
    %v671 = vrcp.pop 8.0
    %v672 = vmul.f32 %v621, %v671
    %v673 = vmul.f32 %v628, %v671
    %v674 = vmul.f32 %v635, %v671
    %v675 = vmul.f32 %v642, %v671
    %v676 = vmul.f32 %v649, %v671
    %v677 = vmul.f32 %v656, %v671
    %v678 = vmul.f32 %v663, %v671
    %v679 = vmul.f32 %v670, %v671
    %v680 = vlaneseq
    %v681 = vshrl.u32 %v680, 7
    %v682 = vadd.s32 %v681, 8
    %v683 = vadd.s32 %v681, 16
    %v684 = vadd.s32 %v681, 24
    %v685 = vadd.s32 %v681, 32
    %v686 = vadd.s32 %v681, 40
    %v687 = vadd.s32 %v681, 48
    %v688 = vadd.s32 %v681, 56
    %v689 = vadd.s32 %v681, 64
    %v690 = vadd.s32 %v681, 72
    %v691 = vadd.s32 %v681, 80
    %v692 = vadd.s32 %v681, 88
    %v693 = vadd.s32 %v681, 96
    %v694 = vadd.s32 %v681, 104
    %v695 = vadd.s32 %v681, 112
    %v696 = vadd.s32 %v681, 120
    %vm697 = vcmp.lt.s32.totalorder %v681, 0
    %v698 = vsub.s32 0, %v681
    %v699 = vsel %vm697, %v698, %v681
    %v700 = vshrl.u32 %v699, 4
    %v701 = vand.u32 %v699, 15
    %v702 = vsub.s32 0, %v701
    %v703 = vsel %vm697, %v702, %v701
    %vm704 = vcmp.lt.s32.totalorder %v682, 0
    %v705 = vsub.s32 0, %v682
    %v706 = vsel %vm704, %v705, %v682
    %v707 = vshrl.u32 %v706, 4
    %v708 = vand.u32 %v706, 15
    %v709 = vsub.s32 0, %v708
    %v710 = vsel %vm704, %v709, %v708
    %vm711 = vcmp.lt.s32.totalorder %v683, 0
    %v712 = vsub.s32 0, %v683
    %v713 = vsel %vm711, %v712, %v683
    %v714 = vshrl.u32 %v713, 4
    %v715 = vand.u32 %v713, 15
    %v716 = vsub.s32 0, %v715
    %v717 = vsel %vm711, %v716, %v715
    %vm718 = vcmp.lt.s32.totalorder %v684, 0
    %v719 = vsub.s32 0, %v684
    %v720 = vsel %vm718, %v719, %v684
    %v721 = vshrl.u32 %v720, 4
    %v722 = vand.u32 %v720, 15
    %v723 = vsub.s32 0, %v722
    %v724 = vsel %vm718, %v723, %v722
    %vm725 = vcmp.lt.s32.totalorder %v685, 0
    %v726 = vsub.s32 0, %v685
    %v727 = vsel %vm725, %v726, %v685
    %v728 = vshrl.u32 %v727, 4
    %v729 = vand.u32 %v727, 15
    %v730 = vsub.s32 0, %v729
    %v731 = vsel %vm725, %v730, %v729
    %vm732 = vcmp.lt.s32.totalorder %v686, 0
    %v733 = vsub.s32 0, %v686
    %v734 = vsel %vm732, %v733, %v686
    %v735 = vshrl.u32 %v734, 4
    %v736 = vand.u32 %v734, 15
    %v737 = vsub.s32 0, %v736
    %v738 = vsel %vm732, %v737, %v736
    %vm739 = vcmp.lt.s32.totalorder %v687, 0
    %v740 = vsub.s32 0, %v687
    %v741 = vsel %vm739, %v740, %v687
    %v742 = vshrl.u32 %v741, 4
    %v743 = vand.u32 %v741, 15
    %v744 = vsub.s32 0, %v743
    %v745 = vsel %vm739, %v744, %v743
    %vm746 = vcmp.lt.s32.totalorder %v688, 0
    %v747 = vsub.s32 0, %v688
    %v748 = vsel %vm746, %v747, %v688
    %v749 = vshrl.u32 %v748, 4
    %v750 = vand.u32 %v748, 15
    %v751 = vsub.s32 0, %v750
    %v752 = vsel %vm746, %v751, %v750
    %vm753 = vcmp.lt.s32.totalorder %v689, 0
    %v754 = vsub.s32 0, %v689
    %v755 = vsel %vm753, %v754, %v689
    %v756 = vshrl.u32 %v755, 4
    %v757 = vand.u32 %v755, 15
    %v758 = vsub.s32 0, %v757
    %v759 = vsel %vm753, %v758, %v757
    %vm760 = vcmp.lt.s32.totalorder %v690, 0
    %v761 = vsub.s32 0, %v690
    %v762 = vsel %vm760, %v761, %v690
    %v763 = vshrl.u32 %v762, 4
    %v764 = vand.u32 %v762, 15
    %v765 = vsub.s32 0, %v764
    %v766 = vsel %vm760, %v765, %v764
    %vm767 = vcmp.lt.s32.totalorder %v691, 0
    %v768 = vsub.s32 0, %v691
    %v769 = vsel %vm767, %v768, %v691
    %v770 = vshrl.u32 %v769, 4
    %v771 = vand.u32 %v769, 15
    %v772 = vsub.s32 0, %v771
    %v773 = vsel %vm767, %v772, %v771
    %vm774 = vcmp.lt.s32.totalorder %v692, 0
    %v775 = vsub.s32 0, %v692
    %v776 = vsel %vm774, %v775, %v692
    %v777 = vshrl.u32 %v776, 4
    %v778 = vand.u32 %v776, 15
    %v779 = vsub.s32 0, %v778
    %v780 = vsel %vm774, %v779, %v778
    %vm781 = vcmp.lt.s32.totalorder %v693, 0
    %v782 = vsub.s32 0, %v693
    %v783 = vsel %vm781, %v782, %v693
    %v784 = vshrl.u32 %v783, 4
    %v785 = vand.u32 %v783, 15
    %v786 = vsub.s32 0, %v785
    %v787 = vsel %vm781, %v786, %v785
    %vm788 = vcmp.lt.s32.totalorder %v694, 0
    %v789 = vsub.s32 0, %v694
    %v790 = vsel %vm788, %v789, %v694
    %v791 = vshrl.u32 %v790, 4
    %v792 = vand.u32 %v790, 15
    %v793 = vsub.s32 0, %v792
    %v794 = vsel %vm788, %v793, %v792
    %vm795 = vcmp.lt.s32.totalorder %v695, 0
    %v796 = vsub.s32 0, %v695
    %v797 = vsel %vm795, %v796, %v695
    %v798 = vshrl.u32 %v797, 4
    %v799 = vand.u32 %v797, 15
    %v800 = vsub.s32 0, %v799
    %v801 = vsel %vm795, %v800, %v799
    %vm802 = vcmp.lt.s32.totalorder %v696, 0
    %v803 = vsub.s32 0, %v696
    %v804 = vsel %vm802, %v803, %v696
    %v805 = vshrl.u32 %v804, 4
    %v806 = vand.u32 %v804, 15
    %v807 = vsub.s32 0, %v806
    %v808 = vsel %vm802, %v807, %v806
    %vm809 = vcmp.ne.s32.totalorder %v703, 0
    %vm810 = vcmp.ne.s32.totalorder %v710, 0
    %vm811 = vcmp.ne.s32.totalorder %v717, 0
    %vm812 = vcmp.ne.s32.totalorder %v724, 0
    %vm813 = vcmp.ne.s32.totalorder %v731, 0
    %vm814 = vcmp.ne.s32.totalorder %v738, 0
    %vm815 = vcmp.ne.s32.totalorder %v745, 0
    %vm816 = vcmp.ne.s32.totalorder %v752, 0
    %vm817 = vcmp.ne.s32.totalorder %v759, 0
    %vm818 = vcmp.ne.s32.totalorder %v766, 0
    %vm819 = vcmp.ne.s32.totalorder %v773, 0
    %vm820 = vcmp.ne.s32.totalorder %v780, 0
    %vm821 = vcmp.ne.s32.totalorder %v787, 0
    %vm822 = vcmp.ne.s32.totalorder %v794, 0
    %vm823 = vcmp.ne.s32.totalorder %v801, 0
    %vm824 = vcmp.ne.s32.totalorder %v808, 0
    %vm825 = vcmp.lt.s32.totalorder %v703, 0
    %vm826 = vcmp.lt.s32.totalorder %v710, 0
    %vm827 = vcmp.lt.s32.totalorder %v717, 0
    %vm828 = vcmp.lt.s32.totalorder %v724, 0
    %vm829 = vcmp.lt.s32.totalorder %v731, 0
    %vm830 = vcmp.lt.s32.totalorder %v738, 0
    %vm831 = vcmp.lt.s32.totalorder %v745, 0
    %vm832 = vcmp.lt.s32.totalorder %v752, 0
    %vm833 = vcmp.lt.s32.totalorder %v759, 0
    %vm834 = vcmp.lt.s32.totalorder %v766, 0
    %vm835 = vcmp.lt.s32.totalorder %v773, 0
    %vm836 = vcmp.lt.s32.totalorder %v780, 0
    %vm837 = vcmp.lt.s32.totalorder %v787, 0
    %vm838 = vcmp.lt.s32.totalorder %v794, 0
    %vm839 = vcmp.lt.s32.totalorder %v801, 0
    %vm840 = vcmp.lt.s32.totalorder %v808, 0
    %vm841 = vmand %vm825, %vm809
    %vm842 = vmand %vm826, %vm810
    %vm843 = vmand %vm827, %vm811
    %vm844 = vmand %vm828, %vm812
    %vm845 = vmand %vm829, %vm813
    %vm846 = vmand %vm830, %vm814
    %vm847 = vmand %vm831, %vm815
    %vm848 = vmand %vm832, %vm816
    %vm849 = vmand %vm833, %vm817
    %vm850 = vmand %vm834, %vm818
    %vm851 = vmand %vm835, %vm819
    %vm852 = vmand %vm836, %vm820
    %vm853 = vmand %vm837, %vm821
    %vm854 = vmand %vm838, %vm822
    %vm855 = vmand %vm839, %vm823
    %vm856 = vmand %vm840, %vm824
    %v857 = vadd.s32 %v703, 16
    %v858 = vadd.s32 %v710, 16
    %v859 = vadd.s32 %v717, 16
    %v860 = vadd.s32 %v724, 16
    %v861 = vadd.s32 %v731, 16
    %v862 = vadd.s32 %v738, 16
    %v863 = vadd.s32 %v745, 16
    %v864 = vadd.s32 %v752, 16
    %v865 = vadd.s32 %v759, 16
    %v866 = vadd.s32 %v766, 16
    %v867 = vadd.s32 %v773, 16
    %v868 = vadd.s32 %v780, 16
    %v869 = vadd.s32 %v787, 16
    %v870 = vadd.s32 %v794, 16
    %v871 = vadd.s32 %v801, 16
    %v872 = vadd.s32 %v808, 16
    %v873 = vsel %vm841, %v857, %v703
    %v874 = vsel %vm842, %v858, %v710
    %v875 = vsel %vm843, %v859, %v717
    %v876 = vsel %vm844, %v860, %v724
    %v877 = vsel %vm845, %v861, %v731
    %v878 = vsel %vm846, %v862, %v738
    %v879 = vsel %vm847, %v863, %v745
    %v880 = vsel %vm848, %v864, %v752
    %v881 = vsel %vm849, %v865, %v759
    %v882 = vsel %vm850, %v866, %v766
    %v883 = vsel %vm851, %v867, %v773
    %v884 = vsel %vm852, %v868, %v780
    %v885 = vsel %vm853, %v869, %v787
    %v886 = vsel %vm854, %v870, %v794
    %v887 = vsel %vm855, %v871, %v801
    %v888 = vsel %vm856, %v872, %v808
    %vm889 = vcmp.eq.s32.totalorder %v873, 0
    %vm890 = vcmp.eq.s32.totalorder %v874, 0
    %vm891 = vcmp.eq.s32.totalorder %v875, 0
    %vm892 = vcmp.eq.s32.totalorder %v876, 0
    %vm893 = vcmp.eq.s32.totalorder %v877, 0
    %vm894 = vcmp.eq.s32.totalorder %v878, 0
    %vm895 = vcmp.eq.s32.totalorder %v879, 0
    %vm896 = vcmp.eq.s32.totalorder %v880, 0
    %vm897 = vcmp.eq.s32.totalorder %v881, 0
    %vm898 = vcmp.eq.s32.totalorder %v882, 0
    %vm899 = vcmp.eq.s32.totalorder %v883, 0
    %vm900 = vcmp.eq.s32.totalorder %v884, 0
    %vm901 = vcmp.eq.s32.totalorder %v885, 0
    %vm902 = vcmp.eq.s32.totalorder %v886, 0
    %vm903 = vcmp.eq.s32.totalorder %v887, 0
    %vm904 = vcmp.eq.s32.totalorder %v888, 0
    %vm905 = vcmp.eq.s32.totalorder %v873, 15
    %vm906 = vcmp.eq.s32.totalorder %v874, 15
    %vm907 = vcmp.eq.s32.totalorder %v875, 15
    %vm908 = vcmp.eq.s32.totalorder %v876, 15
    %vm909 = vcmp.eq.s32.totalorder %v877, 15
    %vm910 = vcmp.eq.s32.totalorder %v878, 15
    %vm911 = vcmp.eq.s32.totalorder %v879, 15
    %vm912 = vcmp.eq.s32.totalorder %v880, 15
    %vm913 = vcmp.eq.s32.totalorder %v881, 15
    %vm914 = vcmp.eq.s32.totalorder %v882, 15
    %vm915 = vcmp.eq.s32.totalorder %v883, 15
    %vm916 = vcmp.eq.s32.totalorder %v884, 15
    %vm917 = vcmp.eq.s32.totalorder %v885, 15
    %vm918 = vcmp.eq.s32.totalorder %v886, 15
    %vm919 = vcmp.eq.s32.totalorder %v887, 15
    %vm920 = vcmp.eq.s32.totalorder %v888, 15
    %v921 = vld [vmem:[#allocation10] sm:$0xff]
    %v922 = vld [vmem:[#allocation10 + $0x8] sm:$0xff]
    %v923 = vld [vmem:[#allocation10 + $0x10] sm:$0xff]
    %v924 = vld [vmem:[#allocation10 + $0x18] sm:$0xff]
    %v925 = vld [vmem:[#allocation10 + $0x20] sm:$0xff]
    %v926 = vld [vmem:[#allocation10 + $0x28] sm:$0xff]
    %v927 = vld [vmem:[#allocation10 + $0x30] sm:$0xff]
    %v928 = vld [vmem:[#allocation10 + $0x38] sm:$0xff]
    %v929 = vld [vmem:[#allocation10 + $0x40] sm:$0xff]
    %v930 = vld [vmem:[#allocation10 + $0x48] sm:$0xff]
    %v931 = vld [vmem:[#allocation10 + $0x50] sm:$0xff]
    %v932 = vld [vmem:[#allocation10 + $0x58] sm:$0xff]
    %v933 = vld [vmem:[#allocation10 + $0x60] sm:$0xff]
    %v934 = vld [vmem:[#allocation10 + $0x68] sm:$0xff]
    %v935 = vld [vmem:[#allocation10 + $0x70] sm:$0xff]
    %v936 = vld [vmem:[#allocation10 + $0x78] sm:$0xff]
    %v937 = vld [vmem:[#allocation15] sm:$0xff]
    %v938 = vld [vmem:[#allocation15 + $0x8] sm:$0xff]
    %v939 = vld [vmem:[#allocation15 + $0x10] sm:$0xff]
    %v940 = vld [vmem:[#allocation16] sm:$0x1]
    %v942 = vlaneseq
    %v943 = vshrl.u32 %v942, 7
    %v944 = vsub.s32 0, %v943
    %v945 = vrot.slane %v940, %v944
    %vm947 = vcmask 195584
    %v949 = vsel %vm947, %v921, 0
    %v952 = vsel %vm947, %v922, 0
    %v955 = vsel %vm947, %v923, 0
    %v958 = vsel %vm947, %v924, 0
    %v961 = vsel %vm947, %v925, 0
    %v964 = vsel %vm947, %v926, 0
    %v967 = vsel %vm947, %v927, 0
    %v970 = vsel %vm947, %v928, 0
    %v973 = vsel %vm947, %v929, 0
    %v976 = vsel %vm947, %v930, 0
    %v979 = vsel %vm947, %v931, 0
    %v982 = vsel %vm947, %v932, 0
    %v985 = vsel %vm947, %v933, 0
    %v988 = vsel %vm947, %v934, 0
    %v991 = vsel %vm947, %v935, 0
    %v994 = vsel %vm947, %v936, 0
    %996 = vmatprep.subr.mxu0 0.0
    %997 = vmatpush1.msra.mxu0 %v937
    %998 = vmatprep.subr.mxu0 0.0
    %999 = vmatpush1.msra.mxu0 %v938
    %1000 = vmatprep.subr.mxu0 0.0
    %1001 = vmatpush1.msra.mxu0 %v939
    %1002 = vmatprep.subr.mxu0 0.0
    %1003 = vmatpush1.msra.mxu0 0.0
    %1004 = vmatprep.subr.mxu0 0.0
    %1005 = vmatpush1.msra.mxu0 0.0
    %1006 = vmatprep.subr.mxu0 0.0
    %1007 = vmatpush1.msra.mxu0 0.0
    %1008 = vmatprep.subr.mxu0 0.0
    %1009 = vmatpush1.msra.mxu0 0.0
    %1010 = vmatprep.subr.mxu0 0.0
    %1011 = vmatpush1.msra.mxu0 0.0
    %1012 = vmatprep.subr.mxu0 0.0
    %1013 = vmatpush1.msra.mxu0 0.0
    %1014 = vmatprep.subr.mxu0 0.0
    %1015 = vmatpush1.msra.mxu0 0.0
    %1016 = vmatprep.subr.mxu0 0.0
    %1017 = vmatpush1.msra.mxu0 0.0
    %1018 = vmatprep.subr.mxu0 0.0
    %1019 = vmatpush1.msra.mxu0 0.0
    %1020 = vmatprep.subr.mxu0 0.0
    %1021 = vmatpush1.msra.mxu0 0.0
    %1022 = vmatprep.subr.mxu0 0.0
    %1023 = vmatpush1.msra.mxu0 0.0
    %1024 = vmatprep.subr.mxu0 0.0
    %1025 = vmatpush1.msra.mxu0 0.0
    %1026 = vmatprep.subr.mxu0 0.0
    %1027 = vmatpush1.msra.mxu0 0.0
    %1028 = vmatprep.subr.mxu0 0.0
    %1029 = vmatpush1.msra.mxu0 0.0
    %1030 = vmatprep.subr.mxu0 0.0
    %1031 = vmatpush1.msra.mxu0 0.0
    %1032 = vmatprep.subr.mxu0 0.0
    %1033 = vmatpush1.msra.mxu0 0.0
    %1034 = vmatprep.subr.mxu0 0.0
    %1035 = vmatpush1.msra.mxu0 0.0
    %1036 = vmatprep.subr.mxu0 0.0
    %1037 = vmatpush1.msra.mxu0 0.0
    %1038 = vmatprep.subr.mxu0 0.0
    %1039 = vmatpush1.msra.mxu0 0.0
    %1040 = vmatprep.subr.mxu0 0.0
    %1041 = vmatpush1.msra.mxu0 0.0
    %1042 = vmatprep.subr.mxu0 0.0
    %1043 = vmatpush1.msra.mxu0 0.0
    %1044 = vmatprep.subr.mxu0 0.0
    %1045 = vmatpush1.msra.mxu0 0.0
    %1046 = vmatprep.subr.mxu0 0.0
    %1047 = vmatpush1.msra.mxu0 0.0
    %1048 = vmatprep.subr.mxu0 0.0
    %1049 = vmatpush1.msra.mxu0 0.0
    %1050 = vmatprep.subr.mxu0 0.0
    %1051 = vmatpush1.msra.mxu0 0.0
    %1052 = vmatprep.subr.mxu0 0.0
    %1053 = vmatpush1.msra.mxu0 0.0
    %1054 = vmatprep.subr.mxu0 0.0
    %1055 = vmatpush1.msra.mxu0 0.0
    %1056 = vmatprep.subr.mxu0 0.0
    %1057 = vmatpush1.msra.mxu0 0.0
    %1058 = vmatprep.subr.mxu0 0.0
    %1059 = vmatpush1.msra.mxu0 0.0
    %1060 = vmatprep.mubr.f32.mxu0 0.0
    %1061 = vmatmul.mubr.f32.gmra.mrb[0].mxu0 %v949
    %v1062 = vpop.f32.mrb[0].mxu0
    %v1063 = vadd.f32 %v945, %v1062
    %v1064 = vpop.f32.mrb[0].mxu0
    %1065 = vmatprep.mubr.f32.mxu0 0.0
    %1066 = vmatmul.mubr.f32.gmra.mrb[0].mxu0 %v952
    %v1067 = vpop.f32.mrb[0].mxu0
    %v1068 = vadd.f32 %v945, %v1067
    %v1069 = vpop.f32.mrb[0].mxu0
    %1070 = vmatprep.mubr.f32.mxu0 0.0
    %1071 = vmatmul.mubr.f32.gmra.mrb[0].mxu0 %v955
    %v1072 = vpop.f32.mrb[0].mxu0
    %v1073 = vadd.f32 %v945, %v1072
    %v1074 = vpop.f32.mrb[0].mxu0
    %1075 = vmatprep.mubr.f32.mxu0 0.0
    %1076 = vmatmul.mubr.f32.gmra.mrb[0].mxu0 %v958
    %v1077 = vpop.f32.mrb[0].mxu0
    %v1078 = vadd.f32 %v945, %v1077
    %v1079 = vpop.f32.mrb[0].mxu0
    %1080 = vmatprep.mubr.f32.mxu0 0.0
    %1081 = vmatmul.mubr.f32.gmra.mrb[0].mxu0 %v961
    %v1082 = vpop.f32.mrb[0].mxu0
    %v1083 = vadd.f32 %v945, %v1082
    %v1084 = vpop.f32.mrb[0].mxu0
    %1085 = vmatprep.mubr.f32.mxu0 0.0
    %1086 = vmatmul.mubr.f32.gmra.mrb[0].mxu0 %v964
    %v1087 = vpop.f32.mrb[0].mxu0
    %v1088 = vadd.f32 %v945, %v1087
    %v1089 = vpop.f32.mrb[0].mxu0
    %1090 = vmatprep.mubr.f32.mxu0 0.0
    %1091 = vmatmul.mubr.f32.gmra.mrb[0].mxu0 %v967
    %v1092 = vpop.f32.mrb[0].mxu0
    %v1093 = vadd.f32 %v945, %v1092
    %v1094 = vpop.f32.mrb[0].mxu0
    %1095 = vmatprep.mubr.f32.mxu0 0.0
    %1096 = vmatmul.mubr.f32.gmra.mrb[0].mxu0 %v970
    %v1097 = vpop.f32.mrb[0].mxu0
    %v1098 = vadd.f32 %v945, %v1097
    %v1099 = vpop.f32.mrb[0].mxu0
    %1100 = vmatprep.mubr.f32.mxu0 0.0
    %1101 = vmatmul.mubr.f32.gmra.mrb[0].mxu0 %v973
    %v1102 = vpop.f32.mrb[0].mxu0
    %v1103 = vadd.f32 %v945, %v1102
    %v1104 = vpop.f32.mrb[0].mxu0
    %1105 = vmatprep.mubr.f32.mxu0 0.0
    %1106 = vmatmul.mubr.f32.gmra.mrb[0].mxu0 %v976
    %v1107 = vpop.f32.mrb[0].mxu0
    %v1108 = vadd.f32 %v945, %v1107
    %v1109 = vpop.f32.mrb[0].mxu0
    %1110 = vmatprep.mubr.f32.mxu0 0.0
    %1111 = vmatmul.mubr.f32.gmra.mrb[0].mxu0 %v979
    %v1112 = vpop.f32.mrb[0].mxu0
    %v1113 = vadd.f32 %v945, %v1112
    %v1114 = vpop.f32.mrb[0].mxu0
    %1115 = vmatprep.mubr.f32.mxu0 0.0
    %1116 = vmatmul.mubr.f32.gmra.mrb[0].mxu0 %v982
    %v1117 = vpop.f32.mrb[0].mxu0
    %v1118 = vadd.f32 %v945, %v1117
    %v1119 = vpop.f32.mrb[0].mxu0
    %1120 = vmatprep.mubr.f32.mxu0 0.0
    %1121 = vmatmul.mubr.f32.gmra.mrb[0].mxu0 %v985
    %v1122 = vpop.f32.mrb[0].mxu0
    %v1123 = vadd.f32 %v945, %v1122
    %v1124 = vpop.f32.mrb[0].mxu0
    %1125 = vmatprep.mubr.f32.mxu0 0.0
    %1126 = vmatmul.mubr.f32.gmra.mrb[0].mxu0 %v988
    %v1127 = vpop.f32.mrb[0].mxu0
    %v1128 = vadd.f32 %v945, %v1127
    %v1129 = vpop.f32.mrb[0].mxu0
    %1130 = vmatprep.mubr.f32.mxu0 0.0
    %1131 = vmatmul.mubr.f32.gmra.mrb[0].mxu0 %v991
    %v1132 = vpop.f32.mrb[0].mxu0
    %v1133 = vadd.f32 %v945, %v1132
    %v1134 = vpop.f32.mrb[0].mxu0
    %1135 = vmatprep.mubr.f32.mxu0 0.0
    %1136 = vmatmul.mubr.f32.gmra.mrb[0].mxu0 %v994
    %v1137 = vpop.f32.mrb[0].mxu0
    %v1138 = vadd.f32 %v945, %v1137
    %v1139 = vpop.f32.mrb[0].mxu0
    %1140 = vdwg.mxu0
    %v1141 = vrot.slane %v1063, 7
    %v1142 = vrot.slane %v1068, 7
    %v1143 = vrot.slane %v1073, 7
    %v1144 = vrot.slane %v1078, 7
    %v1145 = vrot.slane %v1083, 7
    %v1146 = vrot.slane %v1088, 7
    %v1147 = vrot.slane %v1093, 7
    %v1148 = vrot.slane %v1098, 7
    %v1149 = vrot.slane %v1103, 7
    %v1150 = vrot.slane %v1108, 7
    %v1151 = vrot.slane %v1113, 7
    %v1152 = vrot.slane %v1118, 7
    %v1153 = vrot.slane %v1123, 7
    %v1154 = vrot.slane %v1128, 7
    %v1155 = vrot.slane %v1133, 7
    %v1156 = vrot.slane %v1138, 7
    %vm1157 = vcmp.lt.s32.totalorder %v681, 1
    %v1158 = vsel %vm1157, %v1155, %v1156
    %v1159 = vsel %vm1157, %v1154, %v1155
    %v1160 = vsel %vm1157, %v1153, %v1154
    %v1161 = vsel %vm1157, %v1152, %v1153
    %v1162 = vsel %vm1157, %v1151, %v1152
    %v1163 = vsel %vm1157, %v1150, %v1151
    %v1164 = vsel %vm1157, %v1149, %v1150
    %v1165 = vsel %vm1157, %v1148, %v1149
    %v1166 = vsel %vm1157, %v1147, %v1148
    %v1167 = vsel %vm1157, %v1146, %v1147
    %v1168 = vsel %vm1157, %v1145, %v1146
    %v1169 = vsel %vm1157, %v1144, %v1145
    %v1170 = vsel %vm1157, %v1143, %v1144
    %v1171 = vsel %vm1157, %v1142, %v1143
    %v1172 = vsel %vm1157, %v1141, %v1142
    %v1173 = vsel %vm1157, %v1156, %v1141
    %v1174 = vsel %vm889, 1, 0
    %v1175 = vsel %vm890, 1, 0
    %v1176 = vsel %vm891, 1, 0
    %v1177 = vsel %vm892, 1, 0
    %v1178 = vsel %vm893, 1, 0
    %v1179 = vsel %vm894, 1, 0
    %v1180 = vsel %vm895, 1, 0
    %v1181 = vsel %vm896, 1, 0
    %v1182 = vsel %vm897, 1, 0
    %v1183 = vsel %vm898, 1, 0
    %v1184 = vsel %vm899, 1, 0
    %v1185 = vsel %vm900, 1, 0
    %v1186 = vsel %vm901, 1, 0
    %v1187 = vsel %vm902, 1, 0
    %v1188 = vsel %vm903, 1, 0
    %v1189 = vsel %vm904, 1, 0
    %vm1190 = vcmp.eq.s32.totalorder %v1174, 1
    %vm1191 = vcmp.eq.s32.totalorder %v1175, 1
    %vm1192 = vcmp.eq.s32.totalorder %v1176, 1
    %vm1193 = vcmp.eq.s32.totalorder %v1177, 1
    %vm1194 = vcmp.eq.s32.totalorder %v1178, 1
    %vm1195 = vcmp.eq.s32.totalorder %v1179, 1
    %vm1196 = vcmp.eq.s32.totalorder %v1180, 1
    %vm1197 = vcmp.eq.s32.totalorder %v1181, 1
    %vm1198 = vcmp.eq.s32.totalorder %v1182, 1
    %vm1199 = vcmp.eq.s32.totalorder %v1183, 1
    %vm1200 = vcmp.eq.s32.totalorder %v1184, 1
    %vm1201 = vcmp.eq.s32.totalorder %v1185, 1
    %vm1202 = vcmp.eq.s32.totalorder %v1186, 1
    %vm1203 = vcmp.eq.s32.totalorder %v1187, 1
    %vm1204 = vcmp.eq.s32.totalorder %v1188, 1
    %vm1205 = vcmp.eq.s32.totalorder %v1189, 1
    %v1206 = vsel %vm1190, 0.0, %v1173
    %v1207 = vsel %vm1191, 0.0, %v1172
    %v1208 = vsel %vm1192, 0.0, %v1171
    %v1209 = vsel %vm1193, 0.0, %v1170
    %v1210 = vsel %vm1194, 0.0, %v1169
    %v1211 = vsel %vm1195, 0.0, %v1168
    %v1212 = vsel %vm1196, 0.0, %v1167
    %v1213 = vsel %vm1197, 0.0, %v1166
    %v1214 = vsel %vm1198, 0.0, %v1165
    %v1215 = vsel %vm1199, 0.0, %v1164
    %v1216 = vsel %vm1200, 0.0, %v1163
    %v1217 = vsel %vm1201, 0.0, %v1162
    %v1218 = vsel %vm1202, 0.0, %v1161
    %v1219 = vsel %vm1203, 0.0, %v1160
    %v1220 = vsel %vm1204, 0.0, %v1159
    %v1221 = vsel %vm1205, 0.0, %v1158
    %v1222 = vrot.slane %v1063, 1
    %v1223 = vrot.slane %v1068, 1
    %v1224 = vrot.slane %v1073, 1
    %v1225 = vrot.slane %v1078, 1
    %v1226 = vrot.slane %v1083, 1
    %v1227 = vrot.slane %v1088, 1
    %v1228 = vrot.slane %v1093, 1
    %v1229 = vrot.slane %v1098, 1
    %v1230 = vrot.slane %v1103, 1
    %v1231 = vrot.slane %v1108, 1
    %v1232 = vrot.slane %v1113, 1
    %v1233 = vrot.slane %v1118, 1
    %v1234 = vrot.slane %v1123, 1
    %v1235 = vrot.slane %v1128, 1
    %v1236 = vrot.slane %v1133, 1
    %v1237 = vrot.slane %v1138, 1
    %vm1238 = vcmp.lt.s32.totalorder %v681, 7
    %v1239 = vsel %vm1238, %v1236, %v1237
    %v1240 = vsel %vm1238, %v1235, %v1236
    %v1241 = vsel %vm1238, %v1234, %v1235
    %v1242 = vsel %vm1238, %v1233, %v1234
    %v1243 = vsel %vm1238, %v1232, %v1233
    %v1244 = vsel %vm1238, %v1231, %v1232
    %v1245 = vsel %vm1238, %v1230, %v1231
    %v1246 = vsel %vm1238, %v1229, %v1230
    %v1247 = vsel %vm1238, %v1228, %v1229
    %v1248 = vsel %vm1238, %v1227, %v1228
    %v1249 = vsel %vm1238, %v1226, %v1227
    %v1250 = vsel %vm1238, %v1225, %v1226
    %v1251 = vsel %vm1238, %v1224, %v1225
    %v1252 = vsel %vm1238, %v1223, %v1224
    %v1253 = vsel %vm1238, %v1222, %v1223
    %v1254 = vsel %vm1238, %v1237, %v1222
    %v1255 = vsel %vm905, 1, 0
    %v1256 = vsel %vm906, 1, 0
    %v1257 = vsel %vm907, 1, 0
    %v1258 = vsel %vm908, 1, 0
    %v1259 = vsel %vm909, 1, 0
    %v1260 = vsel %vm910, 1, 0
    %v1261 = vsel %vm911, 1, 0
    %v1262 = vsel %vm912, 1, 0
    %v1263 = vsel %vm913, 1, 0
    %v1264 = vsel %vm914, 1, 0
    %v1265 = vsel %vm915, 1, 0
    %v1266 = vsel %vm916, 1, 0
    %v1267 = vsel %vm917, 1, 0
    %v1268 = vsel %vm918, 1, 0
    %v1269 = vsel %vm919, 1, 0
    %v1270 = vsel %vm920, 1, 0
    %vm1271 = vcmp.eq.s32.totalorder %v1255, 1
    %vm1272 = vcmp.eq.s32.totalorder %v1256, 1
    %vm1273 = vcmp.eq.s32.totalorder %v1257, 1
    %vm1274 = vcmp.eq.s32.totalorder %v1258, 1
    %vm1275 = vcmp.eq.s32.totalorder %v1259, 1
    %vm1276 = vcmp.eq.s32.totalorder %v1260, 1
    %vm1277 = vcmp.eq.s32.totalorder %v1261, 1
    %vm1278 = vcmp.eq.s32.totalorder %v1262, 1
    %vm1279 = vcmp.eq.s32.totalorder %v1263, 1
    %vm1280 = vcmp.eq.s32.totalorder %v1264, 1
    %vm1281 = vcmp.eq.s32.totalorder %v1265, 1
    %vm1282 = vcmp.eq.s32.totalorder %v1266, 1
    %vm1283 = vcmp.eq.s32.totalorder %v1267, 1
    %vm1284 = vcmp.eq.s32.totalorder %v1268, 1
    %vm1285 = vcmp.eq.s32.totalorder %v1269, 1
    %vm1286 = vcmp.eq.s32.totalorder %v1270, 1
    %v1287 = vsel %vm1271, 0.0, %v1253
    %v1288 = vsel %vm1272, 0.0, %v1252
    %v1289 = vsel %vm1273, 0.0, %v1251
    %v1290 = vsel %vm1274, 0.0, %v1250
    %v1291 = vsel %vm1275, 0.0, %v1249
    %v1292 = vsel %vm1276, 0.0, %v1248
    %v1293 = vsel %vm1277, 0.0, %v1247
    %v1294 = vsel %vm1278, 0.0, %v1246
    %v1295 = vsel %vm1279, 0.0, %v1245
    %v1296 = vsel %vm1280, 0.0, %v1244
    %v1297 = vsel %vm1281, 0.0, %v1243
    %v1298 = vsel %vm1282, 0.0, %v1242
    %v1299 = vsel %vm1283, 0.0, %v1241
    %v1300 = vsel %vm1284, 0.0, %v1240
    %v1301 = vsel %vm1285, 0.0, %v1239
    %v1302 = vsel %vm1286, 0.0, %v1254
    %v1303 = vld [vmem:[#allocation18] sm:$0xff]
    %v1304 = vld [vmem:[#allocation18 + $0x8] sm:$0xff]
    %v1305 = vld [vmem:[#allocation18 + $0x10] sm:$0xff]
    %v1306 = vld [vmem:[#allocation18 + $0x18] sm:$0xff]
    %v1307 = vld [vmem:[#allocation19] sm:$0xff]
    %v1308 = vld [vmem:[#allocation19 + $0x8] sm:$0xff]
    %v1309 = vld [vmem:[#allocation19 + $0x10] sm:$0xff]
    %v1310 = vld [vmem:[#allocation19 + $0x18] sm:$0xff]
    %v1312 = vsel %vm614, %v1063, 0
    %v1315 = vsel %vm614, %v1068, 0
    %v1318 = vsel %vm614, %v1073, 0
    %v1321 = vsel %vm614, %v1078, 0
    %v1324 = vsel %vm614, %v1083, 0
    %v1327 = vsel %vm614, %v1088, 0
    %v1330 = vsel %vm614, %v1093, 0
    %v1333 = vsel %vm614, %v1098, 0
    %v1336 = vsel %vm614, %v1103, 0
    %v1339 = vsel %vm614, %v1108, 0
    %v1342 = vsel %vm614, %v1113, 0
    %v1345 = vsel %vm614, %v1118, 0
    %v1348 = vsel %vm614, %v1123, 0
    %v1351 = vsel %vm614, %v1128, 0
    %v1354 = vsel %vm614, %v1133, 0
    %v1357 = vsel %vm614, %v1138, 0
    %1359 = vmatprep.subr.mxu0 0.0
    %1360 = vmatpush1.msra.mxu0 %v1307
    %1361 = vmatprep.subr.mxu0 0.0
    %1362 = vmatpush1.msra.mxu0 %v1308
    %1363 = vmatprep.subr.mxu0 0.0
    %1364 = vmatpush1.msra.mxu0 %v1309
    %1365 = vmatprep.subr.mxu0 0.0
    %1366 = vmatpush1.msra.mxu0 %v1310
    %1367 = vmatprep.subr.mxu0 0.0
    %1368 = vmatpush1.msra.mxu0 0.0
    %1369 = vmatprep.subr.mxu0 0.0
    %1370 = vmatpush1.msra.mxu0 0.0
    %1371 = vmatprep.subr.mxu0 0.0
    %1372 = vmatpush1.msra.mxu0 0.0
    %1373 = vmatprep.subr.mxu0 0.0
    %1374 = vmatpush1.msra.mxu0 0.0
    %1375 = vmatprep.subr.mxu0 0.0
    %1376 = vmatpush1.msra.mxu0 0.0
    %1377 = vmatprep.subr.mxu0 0.0
    %1378 = vmatpush1.msra.mxu0 0.0
    %1379 = vmatprep.subr.mxu0 0.0
    %1380 = vmatpush1.msra.mxu0 0.0
    %1381 = vmatprep.subr.mxu0 0.0
    %1382 = vmatpush1.msra.mxu0 0.0
    %1383 = vmatprep.subr.mxu0 0.0
    %1384 = vmatpush1.msra.mxu0 0.0
    %1385 = vmatprep.subr.mxu0 0.0
    %1386 = vmatpush1.msra.mxu0 0.0
    %1387 = vmatprep.subr.mxu0 0.0
    %1388 = vmatpush1.msra.mxu0 0.0
    %1389 = vmatprep.subr.mxu0 0.0
    %1390 = vmatpush1.msra.mxu0 0.0
    %1391 = vmatprep.subr.mxu0 0.0
    %1392 = vmatpush1.msra.mxu0 0.0
    %1393 = vmatprep.subr.mxu0 0.0
    %1394 = vmatpush1.msra.mxu0 0.0
    %1395 = vmatprep.subr.mxu0 0.0
    %1396 = vmatpush1.msra.mxu0 0.0
    %1397 = vmatprep.subr.mxu0 0.0
    %1398 = vmatpush1.msra.mxu0 0.0
    %1399 = vmatprep.subr.mxu0 0.0
    %1400 = vmatpush1.msra.mxu0 0.0
    %1401 = vmatprep.subr.mxu0 0.0
    %1402 = vmatpush1.msra.mxu0 0.0
    %1403 = vmatprep.subr.mxu0 0.0
    %1404 = vmatpush1.msra.mxu0 0.0
    %1405 = vmatprep.subr.mxu0 0.0
    %1406 = vmatpush1.msra.mxu0 0.0
    %1407 = vmatprep.subr.mxu0 0.0
    %1408 = vmatpush1.msra.mxu0 0.0
    %1409 = vmatprep.subr.mxu0 0.0
    %1410 = vmatpush1.msra.mxu0 0.0
    %1411 = vmatprep.subr.mxu0 0.0
    %1412 = vmatpush1.msra.mxu0 0.0
    %1413 = vmatprep.subr.mxu0 0.0
    %1414 = vmatpush1.msra.mxu0 0.0
    %1415 = vmatprep.subr.mxu0 0.0
    %1416 = vmatpush1.msra.mxu0 0.0
    %1417 = vmatprep.subr.mxu0 0.0
    %1418 = vmatpush1.msra.mxu0 0.0
    %1419 = vmatprep.subr.mxu0 0.0
    %1420 = vmatpush1.msra.mxu0 0.0
    %1421 = vmatprep.subr.mxu0 0.0
    %1422 = vmatpush1.msra.mxu0 0.0
    %1423 = vmatprep.mubr.f32.mxu0 0.0
    %1424 = vmatmul.mubr.f32.gmra.mrb[0].mxu0 %v1312
    %v1425 = vpop.f32.mrb[0].mxu0
    %v1426 = vadd.f32 0.0, %v1425
    %v1427 = vpop.f32.mrb[0].mxu0
    %1428 = vmatprep.mubr.f32.mxu0 0.0
    %1429 = vmatmul.mubr.f32.gmra.mrb[0].mxu0 %v1315
    %v1430 = vpop.f32.mrb[0].mxu0
    %v1431 = vadd.f32 0.0, %v1430
    %v1432 = vpop.f32.mrb[0].mxu0
    %1433 = vmatprep.mubr.f32.mxu0 0.0
    %1434 = vmatmul.mubr.f32.gmra.mrb[0].mxu0 %v1318
    %v1435 = vpop.f32.mrb[0].mxu0
    %v1436 = vadd.f32 0.0, %v1435
    %v1437 = vpop.f32.mrb[0].mxu0
    %1438 = vmatprep.mubr.f32.mxu0 0.0
    %1439 = vmatmul.mubr.f32.gmra.mrb[0].mxu0 %v1321
    %v1440 = vpop.f32.mrb[0].mxu0
    %v1441 = vadd.f32 0.0, %v1440
    %v1442 = vpop.f32.mrb[0].mxu0
    %1443 = vmatprep.mubr.f32.mxu0 0.0
    %1444 = vmatmul.mubr.f32.gmra.mrb[0].mxu0 %v1324
    %v1445 = vpop.f32.mrb[0].mxu0
    %v1446 = vadd.f32 0.0, %v1445
    %v1447 = vpop.f32.mrb[0].mxu0
    %1448 = vmatprep.mubr.f32.mxu0 0.0
    %1449 = vmatmul.mubr.f32.gmra.mrb[0].mxu0 %v1327
    %v1450 = vpop.f32.mrb[0].mxu0
    %v1451 = vadd.f32 0.0, %v1450
    %v1452 = vpop.f32.mrb[0].mxu0
    %1453 = vmatprep.mubr.f32.mxu0 0.0
    %1454 = vmatmul.mubr.f32.gmra.mrb[0].mxu0 %v1330
    %v1455 = vpop.f32.mrb[0].mxu0
    %v1456 = vadd.f32 0.0, %v1455
    %v1457 = vpop.f32.mrb[0].mxu0
    %1458 = vmatprep.mubr.f32.mxu0 0.0
    %1459 = vmatmul.mubr.f32.gmra.mrb[0].mxu0 %v1333
    %v1460 = vpop.f32.mrb[0].mxu0
    %v1461 = vadd.f32 0.0, %v1460
    %v1462 = vpop.f32.mrb[0].mxu0
    %1463 = vmatprep.mubr.f32.mxu0 0.0
    %1464 = vmatmul.mubr.f32.gmra.mrb[0].mxu0 %v1336
    %v1465 = vpop.f32.mrb[0].mxu0
    %v1466 = vadd.f32 0.0, %v1465
    %v1467 = vpop.f32.mrb[0].mxu0
    %1468 = vmatprep.mubr.f32.mxu0 0.0
    %1469 = vmatmul.mubr.f32.gmra.mrb[0].mxu0 %v1339
    %v1470 = vpop.f32.mrb[0].mxu0
    %v1471 = vadd.f32 0.0, %v1470
    %v1472 = vpop.f32.mrb[0].mxu0
    %1473 = vmatprep.mubr.f32.mxu0 0.0
    %1474 = vmatmul.mubr.f32.gmra.mrb[0].mxu0 %v1342
    %v1475 = vpop.f32.mrb[0].mxu0
    %v1476 = vadd.f32 0.0, %v1475
    %v1477 = vpop.f32.mrb[0].mxu0
    %1478 = vmatprep.mubr.f32.mxu0 0.0
    %1479 = vmatmul.mubr.f32.gmra.mrb[0].mxu0 %v1345
    %v1480 = vpop.f32.mrb[0].mxu0
    %v1481 = vadd.f32 0.0, %v1480
    %v1482 = vpop.f32.mrb[0].mxu0
    %1483 = vmatprep.mubr.f32.mxu0 0.0
    %1484 = vmatmul.mubr.f32.gmra.mrb[0].mxu0 %v1348
    %v1485 = vpop.f32.mrb[0].mxu0
    %v1486 = vadd.f32 0.0, %v1485
    %v1487 = vpop.f32.mrb[0].mxu0
    %1488 = vmatprep.mubr.f32.mxu0 0.0
    %1489 = vmatmul.mubr.f32.gmra.mrb[0].mxu0 %v1351
    %v1490 = vpop.f32.mrb[0].mxu0
    %v1491 = vadd.f32 0.0, %v1490
    %v1492 = vpop.f32.mrb[0].mxu0
    %1493 = vmatprep.mubr.f32.mxu0 0.0
    %1494 = vmatmul.mubr.f32.gmra.mrb[0].mxu0 %v1354
    %v1495 = vpop.f32.mrb[0].mxu0
    %v1496 = vadd.f32 0.0, %v1495
    %v1497 = vpop.f32.mrb[0].mxu0
    %1498 = vmatprep.mubr.f32.mxu0 0.0
    %1499 = vmatmul.mubr.f32.gmra.mrb[0].mxu0 %v1357
    %v1500 = vpop.f32.mrb[0].mxu0
    %v1501 = vadd.f32 0.0, %v1500
    %v1502 = vpop.f32.mrb[0].mxu0
    %1503 = vdwg.mxu0
    %v1505 = vsel %vm614, %v1206, 0
    %v1508 = vsel %vm614, %v1207, 0
    %v1511 = vsel %vm614, %v1208, 0
    %v1514 = vsel %vm614, %v1209, 0
    %v1517 = vsel %vm614, %v1210, 0
    %v1520 = vsel %vm614, %v1211, 0
    %v1523 = vsel %vm614, %v1212, 0
    %v1526 = vsel %vm614, %v1213, 0
    %v1529 = vsel %vm614, %v1214, 0
    %v1532 = vsel %vm614, %v1215, 0
    %v1535 = vsel %vm614, %v1216, 0
    %v1538 = vsel %vm614, %v1217, 0
    %v1541 = vsel %vm614, %v1218, 0
    %v1544 = vsel %vm614, %v1219, 0
    %v1547 = vsel %vm614, %v1220, 0
    %v1550 = vsel %vm614, %v1221, 0
    %1552 = vmatprep.subr.mxu0 0.0
    %1553 = vmatpush1.msra.mxu0 %v1303
    %1554 = vmatprep.subr.mxu0 0.0
    %1555 = vmatpush1.msra.mxu0 %v1304
    %1556 = vmatprep.subr.mxu0 0.0
    %1557 = vmatpush1.msra.mxu0 %v1305
    %1558 = vmatprep.subr.mxu0 0.0
    %1559 = vmatpush1.msra.mxu0 %v1306
    %1560 = vmatprep.subr.mxu0 0.0
    %1561 = vmatpush1.msra.mxu0 0.0
    %1562 = vmatprep.subr.mxu0 0.0
    %1563 = vmatpush1.msra.mxu0 0.0
    %1564 = vmatprep.subr.mxu0 0.0
    %1565 = vmatpush1.msra.mxu0 0.0
    %1566 = vmatprep.subr.mxu0 0.0
    %1567 = vmatpush1.msra.mxu0 0.0
    %1568 = vmatprep.subr.mxu0 0.0
    %1569 = vmatpush1.msra.mxu0 0.0
    %1570 = vmatprep.subr.mxu0 0.0
    %1571 = vmatpush1.msra.mxu0 0.0
    %1572 = vmatprep.subr.mxu0 0.0
    %1573 = vmatpush1.msra.mxu0 0.0
    %1574 = vmatprep.subr.mxu0 0.0
    %1575 = vmatpush1.msra.mxu0 0.0
    %1576 = vmatprep.subr.mxu0 0.0
    %1577 = vmatpush1.msra.mxu0 0.0
    %1578 = vmatprep.subr.mxu0 0.0
    %1579 = vmatpush1.msra.mxu0 0.0
    %1580 = vmatprep.subr.mxu0 0.0
    %1581 = vmatpush1.msra.mxu0 0.0
    %1582 = vmatprep.subr.mxu0 0.0
    %1583 = vmatpush1.msra.mxu0 0.0
    %1584 = vmatprep.subr.mxu0 0.0
    %1585 = vmatpush1.msra.mxu0 0.0
    %1586 = vmatprep.subr.mxu0 0.0
    %1587 = vmatpush1.msra.mxu0 0.0
    %1588 = vmatprep.subr.mxu0 0.0
    %1589 = vmatpush1.msra.mxu0 0.0
    %1590 = vmatprep.subr.mxu0 0.0
    %1591 = vmatpush1.msra.mxu0 0.0
    %1592 = vmatprep.subr.mxu0 0.0
    %1593 = vmatpush1.msra.mxu0 0.0
    %1594 = vmatprep.subr.mxu0 0.0
    %1595 = vmatpush1.msra.mxu0 0.0
    %1596 = vmatprep.subr.mxu0 0.0
    %1597 = vmatpush1.msra.mxu0 0.0
    %1598 = vmatprep.subr.mxu0 0.0
    %1599 = vmatpush1.msra.mxu0 0.0
    %1600 = vmatprep.subr.mxu0 0.0
    %1601 = vmatpush1.msra.mxu0 0.0
    %1602 = vmatprep.subr.mxu0 0.0
    %1603 = vmatpush1.msra.mxu0 0.0
    %1604 = vmatprep.subr.mxu0 0.0
    %1605 = vmatpush1.msra.mxu0 0.0
    %1606 = vmatprep.subr.mxu0 0.0
    %1607 = vmatpush1.msra.mxu0 0.0
    %1608 = vmatprep.subr.mxu0 0.0
    %1609 = vmatpush1.msra.mxu0 0.0
    %1610 = vmatprep.subr.mxu0 0.0
    %1611 = vmatpush1.msra.mxu0 0.0
    %1612 = vmatprep.subr.mxu0 0.0
    %1613 = vmatpush1.msra.mxu0 0.0
    %1614 = vmatprep.subr.mxu0 0.0
    %1615 = vmatpush1.msra.mxu0 0.0
    %1616 = vmatprep.mubr.f32.mxu0 0.0
    %1617 = vmatmul.mubr.f32.gmra.mrb[0].mxu0 %v1505
    %v1618 = vpop.f32.mrb[0].mxu0
    %v1619 = vadd.f32 %v1426, %v1618
    %v1620 = vpop.f32.mrb[0].mxu0
    %1621 = vmatprep.mubr.f32.mxu0 0.0
    %1622 = vmatmul.mubr.f32.gmra.mrb[0].mxu0 %v1508
    %v1623 = vpop.f32.mrb[0].mxu0
    %v1624 = vadd.f32 %v1431, %v1623
    %v1625 = vpop.f32.mrb[0].mxu0
    %1626 = vmatprep.mubr.f32.mxu0 0.0
    %1627 = vmatmul.mubr.f32.gmra.mrb[0].mxu0 %v1511
    %v1628 = vpop.f32.mrb[0].mxu0
    %v1629 = vadd.f32 %v1436, %v1628
    %v1630 = vpop.f32.mrb[0].mxu0
    %1631 = vmatprep.mubr.f32.mxu0 0.0
    %1632 = vmatmul.mubr.f32.gmra.mrb[0].mxu0 %v1514
    %v1633 = vpop.f32.mrb[0].mxu0
    %v1634 = vadd.f32 %v1441, %v1633
    %v1635 = vpop.f32.mrb[0].mxu0
    %1636 = vmatprep.mubr.f32.mxu0 0.0
    %1637 = vmatmul.mubr.f32.gmra.mrb[0].mxu0 %v1517
    %v1638 = vpop.f32.mrb[0].mxu0
    %v1639 = vadd.f32 %v1446, %v1638
    %v1640 = vpop.f32.mrb[0].mxu0
    %1641 = vmatprep.mubr.f32.mxu0 0.0
    %1642 = vmatmul.mubr.f32.gmra.mrb[0].mxu0 %v1520
    %v1643 = vpop.f32.mrb[0].mxu0
    %v1644 = vadd.f32 %v1451, %v1643
    %v1645 = vpop.f32.mrb[0].mxu0
    %1646 = vmatprep.mubr.f32.mxu0 0.0
    %1647 = vmatmul.mubr.f32.gmra.mrb[0].mxu0 %v1523
    %v1648 = vpop.f32.mrb[0].mxu0
    %v1649 = vadd.f32 %v1456, %v1648
    %v1650 = vpop.f32.mrb[0].mxu0
    %1651 = vmatprep.mubr.f32.mxu0 0.0
    %1652 = vmatmul.mubr.f32.gmra.mrb[0].mxu0 %v1526
    %v1653 = vpop.f32.mrb[0].mxu0
    %v1654 = vadd.f32 %v1461, %v1653
    %v1655 = vpop.f32.mrb[0].mxu0
    %1656 = vmatprep.mubr.f32.mxu0 0.0
    %1657 = vmatmul.mubr.f32.gmra.mrb[0].mxu0 %v1529
    %v1658 = vpop.f32.mrb[0].mxu0
    %v1659 = vadd.f32 %v1466, %v1658
    %v1660 = vpop.f32.mrb[0].mxu0
    %1661 = vmatprep.mubr.f32.mxu0 0.0
    %1662 = vmatmul.mubr.f32.gmra.mrb[0].mxu0 %v1532
    %v1663 = vpop.f32.mrb[0].mxu0
    %v1664 = vadd.f32 %v1471, %v1663
    %v1665 = vpop.f32.mrb[0].mxu0
    %1666 = vmatprep.mubr.f32.mxu0 0.0
    %1667 = vmatmul.mubr.f32.gmra.mrb[0].mxu0 %v1535
    %v1668 = vpop.f32.mrb[0].mxu0
    %v1669 = vadd.f32 %v1476, %v1668
    %v1670 = vpop.f32.mrb[0].mxu0
    %1671 = vmatprep.mubr.f32.mxu0 0.0
    %1672 = vmatmul.mubr.f32.gmra.mrb[0].mxu0 %v1538
    %v1673 = vpop.f32.mrb[0].mxu0
    %v1674 = vadd.f32 %v1481, %v1673
    %v1675 = vpop.f32.mrb[0].mxu0
    %1676 = vmatprep.mubr.f32.mxu0 0.0
    %1677 = vmatmul.mubr.f32.gmra.mrb[0].mxu0 %v1541
    %v1678 = vpop.f32.mrb[0].mxu0
    %v1679 = vadd.f32 %v1486, %v1678
    %v1680 = vpop.f32.mrb[0].mxu0
    %1681 = vmatprep.mubr.f32.mxu0 0.0
    %1682 = vmatmul.mubr.f32.gmra.mrb[0].mxu0 %v1544
    %v1683 = vpop.f32.mrb[0].mxu0
    %v1684 = vadd.f32 %v1491, %v1683
    %v1685 = vpop.f32.mrb[0].mxu0
    %1686 = vmatprep.mubr.f32.mxu0 0.0
    %1687 = vmatmul.mubr.f32.gmra.mrb[0].mxu0 %v1547
    %v1688 = vpop.f32.mrb[0].mxu0
    %v1689 = vadd.f32 %v1496, %v1688
    %v1690 = vpop.f32.mrb[0].mxu0
    %1691 = vmatprep.mubr.f32.mxu0 0.0
    %1692 = vmatmul.mubr.f32.gmra.mrb[0].mxu0 %v1550
    %v1693 = vpop.f32.mrb[0].mxu0
    %v1694 = vadd.f32 %v1501, %v1693
    %v1695 = vpop.f32.mrb[0].mxu0
    %1696 = vdwg.mxu0
    %v1697 = vld [vmem:[#allocation21] sm:$0xff]
    %v1698 = vld [vmem:[#allocation21 + $0x8] sm:$0xff]
    %v1699 = vld [vmem:[#allocation21 + $0x10] sm:$0xff]
    %v1700 = vld [vmem:[#allocation21 + $0x18] sm:$0xff]
    %v1702 = vsel %vm614, %v1287, 0
    %v1705 = vsel %vm614, %v1288, 0
    %v1708 = vsel %vm614, %v1289, 0
    %v1711 = vsel %vm614, %v1290, 0
    %v1714 = vsel %vm614, %v1291, 0
    %v1717 = vsel %vm614, %v1292, 0
    %v1720 = vsel %vm614, %v1293, 0
    %v1723 = vsel %vm614, %v1294, 0
    %v1726 = vsel %vm614, %v1295, 0
    %v1729 = vsel %vm614, %v1296, 0
    %v1732 = vsel %vm614, %v1297, 0
    %v1735 = vsel %vm614, %v1298, 0
    %v1738 = vsel %vm614, %v1299, 0
    %v1741 = vsel %vm614, %v1300, 0
    %v1744 = vsel %vm614, %v1301, 0
    %v1747 = vsel %vm614, %v1302, 0
    %1749 = vmatprep.subr.mxu0 0.0
    %1750 = vmatpush1.msra.mxu0 %v1697
    %1751 = vmatprep.subr.mxu0 0.0
    %1752 = vmatpush1.msra.mxu0 %v1698
    %1753 = vmatprep.subr.mxu0 0.0
    %1754 = vmatpush1.msra.mxu0 %v1699
    %1755 = vmatprep.subr.mxu0 0.0
    %1756 = vmatpush1.msra.mxu0 %v1700
    %1757 = vmatprep.subr.mxu0 0.0
    %1758 = vmatpush1.msra.mxu0 0.0
    %1759 = vmatprep.subr.mxu0 0.0
    %1760 = vmatpush1.msra.mxu0 0.0
    %1761 = vmatprep.subr.mxu0 0.0
    %1762 = vmatpush1.msra.mxu0 0.0
    %1763 = vmatprep.subr.mxu0 0.0
    %1764 = vmatpush1.msra.mxu0 0.0
    %1765 = vmatprep.subr.mxu0 0.0
    %1766 = vmatpush1.msra.mxu0 0.0
    %1767 = vmatprep.subr.mxu0 0.0
    %1768 = vmatpush1.msra.mxu0 0.0
    %1769 = vmatprep.subr.mxu0 0.0
    %1770 = vmatpush1.msra.mxu0 0.0
    %1771 = vmatprep.subr.mxu0 0.0
    %1772 = vmatpush1.msra.mxu0 0.0
    %1773 = vmatprep.subr.mxu0 0.0
    %1774 = vmatpush1.msra.mxu0 0.0
    %1775 = vmatprep.subr.mxu0 0.0
    %1776 = vmatpush1.msra.mxu0 0.0
    %1777 = vmatprep.subr.mxu0 0.0
    %1778 = vmatpush1.msra.mxu0 0.0
    %1779 = vmatprep.subr.mxu0 0.0
    %1780 = vmatpush1.msra.mxu0 0.0
    %1781 = vmatprep.subr.mxu0 0.0
    %1782 = vmatpush1.msra.mxu0 0.0
    %1783 = vmatprep.subr.mxu0 0.0
    %1784 = vmatpush1.msra.mxu0 0.0
    %1785 = vmatprep.subr.mxu0 0.0
    %1786 = vmatpush1.msra.mxu0 0.0
    %1787 = vmatprep.subr.mxu0 0.0
    %1788 = vmatpush1.msra.mxu0 0.0
    %1789 = vmatprep.subr.mxu0 0.0
    %1790 = vmatpush1.msra.mxu0 0.0
    %1791 = vmatprep.subr.mxu0 0.0
    %1792 = vmatpush1.msra.mxu0 0.0
    %1793 = vmatprep.subr.mxu0 0.0
    %1794 = vmatpush1.msra.mxu0 0.0
    %1795 = vmatprep.subr.mxu0 0.0
    %1796 = vmatpush1.msra.mxu0 0.0
    %1797 = vmatprep.subr.mxu0 0.0
    %1798 = vmatpush1.msra.mxu0 0.0
    %1799 = vmatprep.subr.mxu0 0.0
    %1800 = vmatpush1.msra.mxu0 0.0
    %1801 = vmatprep.subr.mxu0 0.0
    %1802 = vmatpush1.msra.mxu0 0.0
    %1803 = vmatprep.subr.mxu0 0.0
    %1804 = vmatpush1.msra.mxu0 0.0
    %1805 = vmatprep.subr.mxu0 0.0
    %1806 = vmatpush1.msra.mxu0 0.0
    %1807 = vmatprep.subr.mxu0 0.0
    %1808 = vmatpush1.msra.mxu0 0.0
    %1809 = vmatprep.subr.mxu0 0.0
    %1810 = vmatpush1.msra.mxu0 0.0
    %1811 = vmatprep.subr.mxu0 0.0
    %1812 = vmatpush1.msra.mxu0 0.0
    %1813 = vmatprep.mubr.f32.mxu0 0.0
    %1814 = vmatmul.mubr.f32.gmra.mrb[0].mxu0 %v1702
    %v1815 = vpop.f32.mrb[0].mxu0
    %v1816 = vadd.f32 0.0, %v1815
    %v1817 = vpop.f32.mrb[0].mxu0
    %1818 = vmatprep.mubr.f32.mxu0 0.0
    %1819 = vmatmul.mubr.f32.gmra.mrb[0].mxu0 %v1705
    %v1820 = vpop.f32.mrb[0].mxu0
    %v1821 = vadd.f32 0.0, %v1820
    %v1822 = vpop.f32.mrb[0].mxu0
    %1823 = vmatprep.mubr.f32.mxu0 0.0
    %1824 = vmatmul.mubr.f32.gmra.mrb[0].mxu0 %v1708
    %v1825 = vpop.f32.mrb[0].mxu0
    %v1826 = vadd.f32 0.0, %v1825
    %v1827 = vpop.f32.mrb[0].mxu0
    %1828 = vmatprep.mubr.f32.mxu0 0.0
    %1829 = vmatmul.mubr.f32.gmra.mrb[0].mxu0 %v1711
    %v1830 = vpop.f32.mrb[0].mxu0
    %v1831 = vadd.f32 0.0, %v1830
    %v1832 = vpop.f32.mrb[0].mxu0
    %1833 = vmatprep.mubr.f32.mxu0 0.0
    %1834 = vmatmul.mubr.f32.gmra.mrb[0].mxu0 %v1714
    %v1835 = vpop.f32.mrb[0].mxu0
    %v1836 = vadd.f32 0.0, %v1835
    %v1837 = vpop.f32.mrb[0].mxu0
    %1838 = vmatprep.mubr.f32.mxu0 0.0
    %1839 = vmatmul.mubr.f32.gmra.mrb[0].mxu0 %v1717
    %v1840 = vpop.f32.mrb[0].mxu0
    %v1841 = vadd.f32 0.0, %v1840
    %v1842 = vpop.f32.mrb[0].mxu0
    %1843 = vmatprep.mubr.f32.mxu0 0.0
    %1844 = vmatmul.mubr.f32.gmra.mrb[0].mxu0 %v1720
    %v1845 = vpop.f32.mrb[0].mxu0
    %v1846 = vadd.f32 0.0, %v1845
    %v1847 = vpop.f32.mrb[0].mxu0
    %1848 = vmatprep.mubr.f32.mxu0 0.0
    %1849 = vmatmul.mubr.f32.gmra.mrb[0].mxu0 %v1723
    %v1850 = vpop.f32.mrb[0].mxu0
    %v1851 = vadd.f32 0.0, %v1850
    %v1852 = vpop.f32.mrb[0].mxu0
    %1853 = vmatprep.mubr.f32.mxu0 0.0
    %1854 = vmatmul.mubr.f32.gmra.mrb[0].mxu0 %v1726
    %v1855 = vpop.f32.mrb[0].mxu0
    %v1856 = vadd.f32 0.0, %v1855
    %v1857 = vpop.f32.mrb[0].mxu0
    %1858 = vmatprep.mubr.f32.mxu0 0.0
    %1859 = vmatmul.mubr.f32.gmra.mrb[0].mxu0 %v1729
    %v1860 = vpop.f32.mrb[0].mxu0
    %v1861 = vadd.f32 0.0, %v1860
    %v1862 = vpop.f32.mrb[0].mxu0
    %1863 = vmatprep.mubr.f32.mxu0 0.0
    %1864 = vmatmul.mubr.f32.gmra.mrb[0].mxu0 %v1732
    %v1865 = vpop.f32.mrb[0].mxu0
    %v1866 = vadd.f32 0.0, %v1865
    %v1867 = vpop.f32.mrb[0].mxu0
    %1868 = vmatprep.mubr.f32.mxu0 0.0
    %1869 = vmatmul.mubr.f32.gmra.mrb[0].mxu0 %v1735
    %v1870 = vpop.f32.mrb[0].mxu0
    %v1871 = vadd.f32 0.0, %v1870
    %v1872 = vpop.f32.mrb[0].mxu0
    %1873 = vmatprep.mubr.f32.mxu0 0.0
    %1874 = vmatmul.mubr.f32.gmra.mrb[0].mxu0 %v1738
    %v1875 = vpop.f32.mrb[0].mxu0
    %v1876 = vadd.f32 0.0, %v1875
    %v1877 = vpop.f32.mrb[0].mxu0
    %1878 = vmatprep.mubr.f32.mxu0 0.0
    %1879 = vmatmul.mubr.f32.gmra.mrb[0].mxu0 %v1741
    %v1880 = vpop.f32.mrb[0].mxu0
    %v1881 = vadd.f32 0.0, %v1880
    %v1882 = vpop.f32.mrb[0].mxu0
    %1883 = vmatprep.mubr.f32.mxu0 0.0
    %1884 = vmatmul.mubr.f32.gmra.mrb[0].mxu0 %v1744
    %v1885 = vpop.f32.mrb[0].mxu0
    %v1886 = vadd.f32 0.0, %v1885
    %v1887 = vpop.f32.mrb[0].mxu0
    %1888 = vmatprep.mubr.f32.mxu0 0.0
    %1889 = vmatmul.mubr.f32.gmra.mrb[0].mxu0 %v1747
    %v1890 = vpop.f32.mrb[0].mxu0
    %v1891 = vadd.f32 0.0, %v1890
    %v1892 = vpop.f32.mrb[0].mxu0
    %1893 = vdwg.mxu0
    %v1894 = vadd.f32 %v1619, %v1816
    %v1895 = vadd.f32 %v1624, %v1821
    %v1896 = vadd.f32 %v1629, %v1826
    %v1897 = vadd.f32 %v1634, %v1831
    %v1898 = vadd.f32 %v1639, %v1836
    %v1899 = vadd.f32 %v1644, %v1841
    %v1900 = vadd.f32 %v1649, %v1846
    %v1901 = vadd.f32 %v1654, %v1851
    %v1902 = vadd.f32 %v1659, %v1856
    %v1903 = vadd.f32 %v1664, %v1861
    %v1904 = vadd.f32 %v1669, %v1866
    %v1905 = vadd.f32 %v1674, %v1871
    %v1906 = vadd.f32 %v1679, %v1876
    %v1907 = vadd.f32 %v1684, %v1881
    %v1908 = vadd.f32 %v1689, %v1886
    %v1909 = vadd.f32 %v1694, %v1891
    %v1910 = vld [vmem:[#allocation22] sm:$0x1]
    %v1912 = vlaneseq
    %v1913 = vshrl.u32 %v1912, 7
    %v1914 = vsub.s32 0, %v1913
    %v1915 = vrot.slane %v1910, %v1914
    %v1917 = vadd.f32 %v1894, %v1915
    %v1918 = vadd.f32 %v1895, %v1915
    %v1919 = vadd.f32 %v1896, %v1915
    %v1920 = vadd.f32 %v1897, %v1915
    %v1921 = vadd.f32 %v1898, %v1915
    %v1922 = vadd.f32 %v1899, %v1915
    %v1923 = vadd.f32 %v1900, %v1915
    %v1924 = vadd.f32 %v1901, %v1915
    %v1925 = vadd.f32 %v1902, %v1915
    %v1926 = vadd.f32 %v1903, %v1915
    %v1927 = vadd.f32 %v1904, %v1915
    %v1928 = vadd.f32 %v1905, %v1915
    %v1929 = vadd.f32 %v1906, %v1915
    %v1930 = vadd.f32 %v1907, %v1915
    %v1931 = vadd.f32 %v1908, %v1915
    %v1932 = vadd.f32 %v1909, %v1915
    %v1933 = vxor.u32 %v1917, 2147483648
    %v1934 = vxor.u32 %v1918, 2147483648
    %v1935 = vxor.u32 %v1919, 2147483648
    %v1936 = vxor.u32 %v1920, 2147483648
    %v1937 = vxor.u32 %v1921, 2147483648
    %v1938 = vxor.u32 %v1922, 2147483648
    %v1939 = vxor.u32 %v1923, 2147483648
    %v1940 = vxor.u32 %v1924, 2147483648
    %v1941 = vxor.u32 %v1925, 2147483648
    %v1942 = vxor.u32 %v1926, 2147483648
    %v1943 = vxor.u32 %v1927, 2147483648
    %v1944 = vxor.u32 %v1928, 2147483648
    %v1945 = vxor.u32 %v1929, 2147483648
    %v1946 = vxor.u32 %v1930, 2147483648
    %v1947 = vxor.u32 %v1931, 2147483648
    %v1948 = vxor.u32 %v1932, 2147483648
    %v1949 = vmul.f32 %v1933, 1.442695
    %v1950 = vpow.pop %v1949
    %v1951 = vmul.f32 %v1934, 1.442695
    %v1952 = vpow.pop %v1951
    %v1953 = vmul.f32 %v1935, 1.442695
    %v1954 = vpow.pop %v1953
    %v1955 = vmul.f32 %v1936, 1.442695
    %v1956 = vpow.pop %v1955
    %v1957 = vmul.f32 %v1937, 1.442695
    %v1958 = vpow.pop %v1957
    %v1959 = vmul.f32 %v1938, 1.442695
    %v1960 = vpow.pop %v1959
    %v1961 = vmul.f32 %v1939, 1.442695
    %v1962 = vpow.pop %v1961
    %v1963 = vmul.f32 %v1940, 1.442695
    %v1964 = vpow.pop %v1963
    %v1965 = vmul.f32 %v1941, 1.442695
    %v1966 = vpow.pop %v1965
    %v1967 = vmul.f32 %v1942, 1.442695
    %v1968 = vpow.pop %v1967
    %v1969 = vmul.f32 %v1943, 1.442695
    %v1970 = vpow.pop %v1969
    %v1971 = vmul.f32 %v1944, 1.442695
    %v1972 = vpow.pop %v1971
    %v1973 = vmul.f32 %v1945, 1.442695
    %v1974 = vpow.pop %v1973
    %v1975 = vmul.f32 %v1946, 1.442695
    %v1976 = vpow.pop %v1975
    %v1977 = vmul.f32 %v1947, 1.442695
    %v1978 = vpow.pop %v1977
    %v1979 = vmul.f32 %v1948, 1.442695
    %v1980 = vpow.pop %v1979
    %v1981 = vadd.f32 %v1950, 1.0
    %v1982 = vadd.f32 %v1952, 1.0
    %v1983 = vadd.f32 %v1954, 1.0
    %v1984 = vadd.f32 %v1956, 1.0
    %v1985 = vadd.f32 %v1958, 1.0
    %v1986 = vadd.f32 %v1960, 1.0
    %v1987 = vadd.f32 %v1962, 1.0
    %v1988 = vadd.f32 %v1964, 1.0
    %v1989 = vadd.f32 %v1966, 1.0
    %v1990 = vadd.f32 %v1968, 1.0
    %v1991 = vadd.f32 %v1970, 1.0
    %v1992 = vadd.f32 %v1972, 1.0
    %v1993 = vadd.f32 %v1974, 1.0
    %v1994 = vadd.f32 %v1976, 1.0
    %v1995 = vadd.f32 %v1978, 1.0
    %v1996 = vadd.f32 %v1980, 1.0
    %v1997 = vrcp.pop %v1981
    %v1998 = vmul.f32 1.0, %v1997
    %v1999 = vrcp.pop %v1982
    %v2000 = vmul.f32 1.0, %v1999
    %v2001 = vrcp.pop %v1983
    %v2002 = vmul.f32 1.0, %v2001
    %v2003 = vrcp.pop %v1984
    %v2004 = vmul.f32 1.0, %v2003
    %v2005 = vrcp.pop %v1985
    %v2006 = vmul.f32 1.0, %v2005
    %v2007 = vrcp.pop %v1986
    %v2008 = vmul.f32 1.0, %v2007
    %v2009 = vrcp.pop %v1987
    %v2010 = vmul.f32 1.0, %v2009
    %v2011 = vrcp.pop %v1988
    %v2012 = vmul.f32 1.0, %v2011
    %v2013 = vrcp.pop %v1989
    %v2014 = vmul.f32 1.0, %v2013
    %v2015 = vrcp.pop %v1990
    %v2016 = vmul.f32 1.0, %v2015
    %v2017 = vrcp.pop %v1991
    %v2018 = vmul.f32 1.0, %v2017
    %v2019 = vrcp.pop %v1992
    %v2020 = vmul.f32 1.0, %v2019
    %v2021 = vrcp.pop %v1993
    %v2022 = vmul.f32 1.0, %v2021
    %v2023 = vrcp.pop %v1994
    %v2024 = vmul.f32 1.0, %v2023
    %v2025 = vrcp.pop %v1995
    %v2026 = vmul.f32 1.0, %v2025
    %v2027 = vrcp.pop %v1996
    %v2028 = vmul.f32 1.0, %v2027
    %2045 = vrot.lane.b32.xlu0 %v1998, 96
    %v2046 = vpop.permute.xlu0 %2045
    %2047 = vrot.lane.b32.xlu0 %v2000, 96
    %v2048 = vpop.permute.xlu0 %2047
    %2049 = vrot.lane.b32.xlu0 %v2002, 96
    %v2050 = vpop.permute.xlu0 %2049
    %2051 = vrot.lane.b32.xlu0 %v2004, 96
    %v2052 = vpop.permute.xlu0 %2051
    %2053 = vrot.lane.b32.xlu0 %v2006, 96
    %v2054 = vpop.permute.xlu0 %2053
    %2055 = vrot.lane.b32.xlu0 %v2008, 96
    %v2056 = vpop.permute.xlu0 %2055
    %2057 = vrot.lane.b32.xlu0 %v2010, 96
    %v2058 = vpop.permute.xlu0 %2057
    %2059 = vrot.lane.b32.xlu0 %v2012, 96
    %v2060 = vpop.permute.xlu0 %2059
    %2061 = vrot.lane.b32.xlu0 %v2014, 96
    %v2062 = vpop.permute.xlu0 %2061
    %2063 = vrot.lane.b32.xlu0 %v2016, 96
    %v2064 = vpop.permute.xlu0 %2063
    %2065 = vrot.lane.b32.xlu0 %v2018, 96
    %v2066 = vpop.permute.xlu0 %2065
    %2067 = vrot.lane.b32.xlu0 %v2020, 96
    %v2068 = vpop.permute.xlu0 %2067
    %2069 = vrot.lane.b32.xlu0 %v2022, 96
    %v2070 = vpop.permute.xlu0 %2069
    %2071 = vrot.lane.b32.xlu0 %v2024, 96
    %v2072 = vpop.permute.xlu0 %2071
    %2073 = vrot.lane.b32.xlu0 %v2026, 96
    %v2074 = vpop.permute.xlu0 %2073
    %2075 = vrot.lane.b32.xlu0 %v2028, 96
    %v2076 = vpop.permute.xlu0 %2075
    %v2093 = vmul.f32 %v1917, %v2046
    %v2094 = vmul.f32 %v1918, %v2048
    %v2095 = vmul.f32 %v1919, %v2050
    %v2096 = vmul.f32 %v1920, %v2052
    %v2097 = vmul.f32 %v1921, %v2054
    %v2098 = vmul.f32 %v1922, %v2056
    %v2099 = vmul.f32 %v1923, %v2058
    %v2100 = vmul.f32 %v1924, %v2060
    %v2101 = vmul.f32 %v1925, %v2062
    %v2102 = vmul.f32 %v1926, %v2064
    %v2103 = vmul.f32 %v1927, %v2066
    %v2104 = vmul.f32 %v1928, %v2068
    %v2105 = vmul.f32 %v1929, %v2070
    %v2106 = vmul.f32 %v1930, %v2072
    %v2107 = vmul.f32 %v1931, %v2074
    %v2108 = vmul.f32 %v1932, %v2076
    %v2109 = vadd.f32 %v2093, %v1063
    %v2110 = vadd.f32 %v2094, %v1068
    %v2111 = vadd.f32 %v2095, %v1073
    %v2112 = vadd.f32 %v2096, %v1078
    %v2113 = vadd.f32 %v2097, %v1083
    %v2114 = vadd.f32 %v2098, %v1088
    %v2115 = vadd.f32 %v2099, %v1093
    %v2116 = vadd.f32 %v2100, %v1098
    %v2117 = vadd.f32 %v2101, %v1103
    %v2118 = vadd.f32 %v2102, %v1108
    %v2119 = vadd.f32 %v2103, %v1113
    %v2120 = vadd.f32 %v2104, %v1118
    %v2121 = vadd.f32 %v2105, %v1123
    %v2122 = vadd.f32 %v2106, %v1128
    %v2123 = vadd.f32 %v2107, %v1133
    %v2124 = vadd.f32 %v2108, %v1138
    %v2125 = vmul.f32 %v2109, 0.70710677
    %v2126 = vmul.f32 %v2110, 0.70710677
    %v2127 = vmul.f32 %v2111, 0.70710677
    %v2128 = vmul.f32 %v2112, 0.70710677
    %v2129 = vmul.f32 %v2113, 0.70710677
    %v2130 = vmul.f32 %v2114, 0.70710677
    %v2131 = vmul.f32 %v2115, 0.70710677
    %v2132 = vmul.f32 %v2116, 0.70710677
    %v2133 = vmul.f32 %v2117, 0.70710677
    %v2134 = vmul.f32 %v2118, 0.70710677
    %v2135 = vmul.f32 %v2119, 0.70710677
    %v2136 = vmul.f32 %v2120, 0.70710677
    %v2137 = vmul.f32 %v2121, 0.70710677
    %v2138 = vmul.f32 %v2122, 0.70710677
    %v2139 = vmul.f32 %v2123, 0.70710677
    %v2140 = vmul.f32 %v2124, 0.70710677
    %v2141 = vrot.slane %v2125, 7
    %v2142 = vrot.slane %v2126, 7
    %v2143 = vrot.slane %v2127, 7
    %v2144 = vrot.slane %v2128, 7
    %v2145 = vrot.slane %v2129, 7
    %v2146 = vrot.slane %v2130, 7
    %v2147 = vrot.slane %v2131, 7
    %v2148 = vrot.slane %v2132, 7
    %v2149 = vrot.slane %v2133, 7
    %v2150 = vrot.slane %v2134, 7
    %v2151 = vrot.slane %v2135, 7
    %v2152 = vrot.slane %v2136, 7
    %v2153 = vrot.slane %v2137, 7
    %v2154 = vrot.slane %v2138, 7
    %v2155 = vrot.slane %v2139, 7
    %v2156 = vrot.slane %v2140, 7
    %v2157 = vsel %vm1157, %v2155, %v2156
    %v2158 = vsel %vm1157, %v2154, %v2155
    %v2159 = vsel %vm1157, %v2153, %v2154
    %v2160 = vsel %vm1157, %v2152, %v2153
    %v2161 = vsel %vm1157, %v2151, %v2152
    %v2162 = vsel %vm1157, %v2150, %v2151
    %v2163 = vsel %vm1157, %v2149, %v2150
    %v2164 = vsel %vm1157, %v2148, %v2149
    %v2165 = vsel %vm1157, %v2147, %v2148
    %v2166 = vsel %vm1157, %v2146, %v2147
    %v2167 = vsel %vm1157, %v2145, %v2146
    %v2168 = vsel %vm1157, %v2144, %v2145
    %v2169 = vsel %vm1157, %v2143, %v2144
    %v2170 = vsel %vm1157, %v2142, %v2143
    %v2171 = vsel %vm1157, %v2141, %v2142
    %v2172 = vsel %vm1157, %v2156, %v2141
    %v2173 = vsel %vm1190, 0.0, %v2172
    %v2174 = vsel %vm1191, 0.0, %v2171
    %v2175 = vsel %vm1192, 0.0, %v2170
    %v2176 = vsel %vm1193, 0.0, %v2169
    %v2177 = vsel %vm1194, 0.0, %v2168
    %v2178 = vsel %vm1195, 0.0, %v2167
    %v2179 = vsel %vm1196, 0.0, %v2166
    %v2180 = vsel %vm1197, 0.0, %v2165
    %v2181 = vsel %vm1198, 0.0, %v2164
    %v2182 = vsel %vm1199, 0.0, %v2163
    %v2183 = vsel %vm1200, 0.0, %v2162
    %v2184 = vsel %vm1201, 0.0, %v2161
    %v2185 = vsel %vm1202, 0.0, %v2160
    %v2186 = vsel %vm1203, 0.0, %v2159
    %v2187 = vsel %vm1204, 0.0, %v2158
    %v2188 = vsel %vm1205, 0.0, %v2157
    %v2189 = vrot.slane %v2125, 1
    %v2190 = vrot.slane %v2126, 1
    %v2191 = vrot.slane %v2127, 1
    %v2192 = vrot.slane %v2128, 1
    %v2193 = vrot.slane %v2129, 1
    %v2194 = vrot.slane %v2130, 1
    %v2195 = vrot.slane %v2131, 1
    %v2196 = vrot.slane %v2132, 1
    %v2197 = vrot.slane %v2133, 1
    %v2198 = vrot.slane %v2134, 1
    %v2199 = vrot.slane %v2135, 1
    %v2200 = vrot.slane %v2136, 1
    %v2201 = vrot.slane %v2137, 1
    %v2202 = vrot.slane %v2138, 1
    %v2203 = vrot.slane %v2139, 1
    %v2204 = vrot.slane %v2140, 1
    %v2205 = vsel %vm1238, %v2203, %v2204
    %v2206 = vsel %vm1238, %v2202, %v2203
    %v2207 = vsel %vm1238, %v2201, %v2202
    %v2208 = vsel %vm1238, %v2200, %v2201
    %v2209 = vsel %vm1238, %v2199, %v2200
    %v2210 = vsel %vm1238, %v2198, %v2199
    %v2211 = vsel %vm1238, %v2197, %v2198
    %v2212 = vsel %vm1238, %v2196, %v2197
    %v2213 = vsel %vm1238, %v2195, %v2196
    %v2214 = vsel %vm1238, %v2194, %v2195
    %v2215 = vsel %vm1238, %v2193, %v2194
    %v2216 = vsel %vm1238, %v2192, %v2193
    %v2217 = vsel %vm1238, %v2191, %v2192
    %v2218 = vsel %vm1238, %v2190, %v2191
    %v2219 = vsel %vm1238, %v2189, %v2190
    %v2220 = vsel %vm1238, %v2204, %v2189
    %v2221 = vsel %vm1271, 0.0, %v2219
    %v2222 = vsel %vm1272, 0.0, %v2218
    %v2223 = vsel %vm1273, 0.0, %v2217
    %v2224 = vsel %vm1274, 0.0, %v2216
    %v2225 = vsel %vm1275, 0.0, %v2215
    %v2226 = vsel %vm1276, 0.0, %v2214
    %v2227 = vsel %vm1277, 0.0, %v2213
    %v2228 = vsel %vm1278, 0.0, %v2212
    %v2229 = vsel %vm1279, 0.0, %v2211
    %v2230 = vsel %vm1280, 0.0, %v2210
    %v2231 = vsel %vm1281, 0.0, %v2209
    %v2232 = vsel %vm1282, 0.0, %v2208
    %v2233 = vsel %vm1283, 0.0, %v2207
    %v2234 = vsel %vm1284, 0.0, %v2206
    %v2235 = vsel %vm1285, 0.0, %v2205
    %v2236 = vsel %vm1286, 0.0, %v2220
    %v2237 = vadd.f32 %v2125, %v2173
    %v2238 = vadd.f32 %v2126, %v2174
    %v2239 = vadd.f32 %v2127, %v2175
    %v2240 = vadd.f32 %v2128, %v2176
    %v2241 = vadd.f32 %v2129, %v2177
    %v2242 = vadd.f32 %v2130, %v2178
    %v2243 = vadd.f32 %v2131, %v2179
    %v2244 = vadd.f32 %v2132, %v2180
    %v2245 = vadd.f32 %v2133, %v2181
    %v2246 = vadd.f32 %v2134, %v2182
    %v2247 = vadd.f32 %v2135, %v2183
    %v2248 = vadd.f32 %v2136, %v2184
    %v2249 = vadd.f32 %v2137, %v2185
    %v2250 = vadd.f32 %v2138, %v2186
    %v2251 = vadd.f32 %v2139, %v2187
    %v2252 = vadd.f32 %v2140, %v2188
    %v2253 = vadd.f32 %v2237, %v2221
    %v2254 = vadd.f32 %v2238, %v2222
    %v2255 = vadd.f32 %v2239, %v2223
    %v2256 = vadd.f32 %v2240, %v2224
    %v2257 = vadd.f32 %v2241, %v2225
    %v2258 = vadd.f32 %v2242, %v2226
    %v2259 = vadd.f32 %v2243, %v2227
    %v2260 = vadd.f32 %v2244, %v2228
    %v2261 = vadd.f32 %v2245, %v2229
    %v2262 = vadd.f32 %v2246, %v2230
    %v2263 = vadd.f32 %v2247, %v2231
    %v2264 = vadd.f32 %v2248, %v2232
    %v2265 = vadd.f32 %v2249, %v2233
    %v2266 = vadd.f32 %v2250, %v2234
    %v2267 = vadd.f32 %v2251, %v2235
    %v2268 = vadd.f32 %v2252, %v2236
    %v2269 = vld [vmem:[#allocation24] sm:$0xff]
    %v2270 = vld [vmem:[#allocation24 + $0x8] sm:$0xff]
    %v2271 = vld [vmem:[#allocation24 + $0x10] sm:$0xff]
    %v2272 = vld [vmem:[#allocation24 + $0x18] sm:$0xff]
    %v2273 = vld [vmem:[#allocation25] sm:$0x1]
    %v2275 = vlaneseq
    %v2276 = vshrl.u32 %v2275, 7
    %v2277 = vsub.s32 0, %v2276
    %v2278 = vrot.slane %v2273, %v2277
    %v2281 = vsel %vm614, %v2253, 0
    %v2284 = vsel %vm614, %v2254, 0
    %v2287 = vsel %vm614, %v2255, 0
    %v2290 = vsel %vm614, %v2256, 0
    %v2293 = vsel %vm614, %v2257, 0
    %v2296 = vsel %vm614, %v2258, 0
    %v2299 = vsel %vm614, %v2259, 0
    %v2302 = vsel %vm614, %v2260, 0
    %v2305 = vsel %vm614, %v2261, 0
    %v2308 = vsel %vm614, %v2262, 0
    %v2311 = vsel %vm614, %v2263, 0
    %v2314 = vsel %vm614, %v2264, 0
    %v2317 = vsel %vm614, %v2265, 0
    %v2320 = vsel %vm614, %v2266, 0
    %v2323 = vsel %vm614, %v2267, 0
    %v2326 = vsel %vm614, %v2268, 0
    %2328 = vmatprep.subr.mxu0 0.0
    %2329 = vmatpush1.msra.mxu0 %v2269
    %2330 = vmatprep.subr.mxu0 0.0
    %2331 = vmatpush1.msra.mxu0 %v2270
    %2332 = vmatprep.subr.mxu0 0.0
    %2333 = vmatpush1.msra.mxu0 %v2271
    %2334 = vmatprep.subr.mxu0 0.0
    %2335 = vmatpush1.msra.mxu0 %v2272
    %2336 = vmatprep.subr.mxu0 0.0
    %2337 = vmatpush1.msra.mxu0 0.0
    %2338 = vmatprep.subr.mxu0 0.0
    %2339 = vmatpush1.msra.mxu0 0.0
    %2340 = vmatprep.subr.mxu0 0.0
    %2341 = vmatpush1.msra.mxu0 0.0
    %2342 = vmatprep.subr.mxu0 0.0
    %2343 = vmatpush1.msra.mxu0 0.0
    %2344 = vmatprep.subr.mxu0 0.0
    %2345 = vmatpush1.msra.mxu0 0.0
    %2346 = vmatprep.subr.mxu0 0.0
    %2347 = vmatpush1.msra.mxu0 0.0
    %2348 = vmatprep.subr.mxu0 0.0
    %2349 = vmatpush1.msra.mxu0 0.0
    %2350 = vmatprep.subr.mxu0 0.0
    %2351 = vmatpush1.msra.mxu0 0.0
    %2352 = vmatprep.subr.mxu0 0.0
    %2353 = vmatpush1.msra.mxu0 0.0
    %2354 = vmatprep.subr.mxu0 0.0
    %2355 = vmatpush1.msra.mxu0 0.0
    %2356 = vmatprep.subr.mxu0 0.0
    %2357 = vmatpush1.msra.mxu0 0.0
    %2358 = vmatprep.subr.mxu0 0.0
    %2359 = vmatpush1.msra.mxu0 0.0
    %2360 = vmatprep.subr.mxu0 0.0
    %2361 = vmatpush1.msra.mxu0 0.0
    %2362 = vmatprep.subr.mxu0 0.0
    %2363 = vmatpush1.msra.mxu0 0.0
    %2364 = vmatprep.subr.mxu0 0.0
    %2365 = vmatpush1.msra.mxu0 0.0
    %2366 = vmatprep.subr.mxu0 0.0
    %2367 = vmatpush1.msra.mxu0 0.0
    %2368 = vmatprep.subr.mxu0 0.0
    %2369 = vmatpush1.msra.mxu0 0.0
    %2370 = vmatprep.subr.mxu0 0.0
    %2371 = vmatpush1.msra.mxu0 0.0
    %2372 = vmatprep.subr.mxu0 0.0
    %2373 = vmatpush1.msra.mxu0 0.0
    %2374 = vmatprep.subr.mxu0 0.0
    %2375 = vmatpush1.msra.mxu0 0.0
    %2376 = vmatprep.subr.mxu0 0.0
    %2377 = vmatpush1.msra.mxu0 0.0
    %2378 = vmatprep.subr.mxu0 0.0
    %2379 = vmatpush1.msra.mxu0 0.0
    %2380 = vmatprep.subr.mxu0 0.0
    %2381 = vmatpush1.msra.mxu0 0.0
    %2382 = vmatprep.subr.mxu0 0.0
    %2383 = vmatpush1.msra.mxu0 0.0
    %2384 = vmatprep.subr.mxu0 0.0
    %2385 = vmatpush1.msra.mxu0 0.0
    %2386 = vmatprep.subr.mxu0 0.0
    %2387 = vmatpush1.msra.mxu0 0.0
    %2388 = vmatprep.subr.mxu0 0.0
    %2389 = vmatpush1.msra.mxu0 0.0
    %2390 = vmatprep.subr.mxu0 0.0
    %2391 = vmatpush1.msra.mxu0 0.0
    %2392 = vmatprep.mubr.f32.mxu0 0.0
    %2393 = vmatmul.mubr.f32.gmra.mrb[0].mxu0 %v2281
    %v2394 = vpop.f32.mrb[0].mxu0
    %v2395 = vadd.f32 %v2278, %v2394
    %v2396 = vpop.f32.mrb[0].mxu0
    %2397 = vmatprep.mubr.f32.mxu0 0.0
    %2398 = vmatmul.mubr.f32.gmra.mrb[0].mxu0 %v2284
    %v2399 = vpop.f32.mrb[0].mxu0
    %v2400 = vadd.f32 %v2278, %v2399
    %v2401 = vpop.f32.mrb[0].mxu0
    %2402 = vmatprep.mubr.f32.mxu0 0.0
    %2403 = vmatmul.mubr.f32.gmra.mrb[0].mxu0 %v2287
    %v2404 = vpop.f32.mrb[0].mxu0
    %v2405 = vadd.f32 %v2278, %v2404
    %v2406 = vpop.f32.mrb[0].mxu0
    %2407 = vmatprep.mubr.f32.mxu0 0.0
    %2408 = vmatmul.mubr.f32.gmra.mrb[0].mxu0 %v2290
    %v2409 = vpop.f32.mrb[0].mxu0
    %v2410 = vadd.f32 %v2278, %v2409
    %v2411 = vpop.f32.mrb[0].mxu0
    %2412 = vmatprep.mubr.f32.mxu0 0.0
    %2413 = vmatmul.mubr.f32.gmra.mrb[0].mxu0 %v2293
    %v2414 = vpop.f32.mrb[0].mxu0
    %v2415 = vadd.f32 %v2278, %v2414
    %v2416 = vpop.f32.mrb[0].mxu0
    %2417 = vmatprep.mubr.f32.mxu0 0.0
    %2418 = vmatmul.mubr.f32.gmra.mrb[0].mxu0 %v2296
    %v2419 = vpop.f32.mrb[0].mxu0
    %v2420 = vadd.f32 %v2278, %v2419
    %v2421 = vpop.f32.mrb[0].mxu0
    %2422 = vmatprep.mubr.f32.mxu0 0.0
    %2423 = vmatmul.mubr.f32.gmra.mrb[0].mxu0 %v2299
    %v2424 = vpop.f32.mrb[0].mxu0
    %v2425 = vadd.f32 %v2278, %v2424
    %v2426 = vpop.f32.mrb[0].mxu0
    %2427 = vmatprep.mubr.f32.mxu0 0.0
    %2428 = vmatmul.mubr.f32.gmra.mrb[0].mxu0 %v2302
    %v2429 = vpop.f32.mrb[0].mxu0
    %v2430 = vadd.f32 %v2278, %v2429
    %v2431 = vpop.f32.mrb[0].mxu0
    %2432 = vmatprep.mubr.f32.mxu0 0.0
    %2433 = vmatmul.mubr.f32.gmra.mrb[0].mxu0 %v2305
    %v2434 = vpop.f32.mrb[0].mxu0
    %v2435 = vadd.f32 %v2278, %v2434
    %v2436 = vpop.f32.mrb[0].mxu0
    %2437 = vmatprep.mubr.f32.mxu0 0.0
    %2438 = vmatmul.mubr.f32.gmra.mrb[0].mxu0 %v2308
    %v2439 = vpop.f32.mrb[0].mxu0
    %v2440 = vadd.f32 %v2278, %v2439
    %v2441 = vpop.f32.mrb[0].mxu0
    %2442 = vmatprep.mubr.f32.mxu0 0.0
    %2443 = vmatmul.mubr.f32.gmra.mrb[0].mxu0 %v2311
    %v2444 = vpop.f32.mrb[0].mxu0
    %v2445 = vadd.f32 %v2278, %v2444
    %v2446 = vpop.f32.mrb[0].mxu0
    %2447 = vmatprep.mubr.f32.mxu0 0.0
    %2448 = vmatmul.mubr.f32.gmra.mrb[0].mxu0 %v2314
    %v2449 = vpop.f32.mrb[0].mxu0
    %v2450 = vadd.f32 %v2278, %v2449
    %v2451 = vpop.f32.mrb[0].mxu0
    %2452 = vmatprep.mubr.f32.mxu0 0.0
    %2453 = vmatmul.mubr.f32.gmra.mrb[0].mxu0 %v2317
    %v2454 = vpop.f32.mrb[0].mxu0
    %v2455 = vadd.f32 %v2278, %v2454
    %v2456 = vpop.f32.mrb[0].mxu0
    %2457 = vmatprep.mubr.f32.mxu0 0.0
    %2458 = vmatmul.mubr.f32.gmra.mrb[0].mxu0 %v2320
    %v2459 = vpop.f32.mrb[0].mxu0
    %v2460 = vadd.f32 %v2278, %v2459
    %v2461 = vpop.f32.mrb[0].mxu0
    %2462 = vmatprep.mubr.f32.mxu0 0.0
    %2463 = vmatmul.mubr.f32.gmra.mrb[0].mxu0 %v2323
    %v2464 = vpop.f32.mrb[0].mxu0
    %v2465 = vadd.f32 %v2278, %v2464
    %v2466 = vpop.f32.mrb[0].mxu0
    %2467 = vmatprep.mubr.f32.mxu0 0.0
    %2468 = vmatmul.mubr.f32.gmra.mrb[0].mxu0 %v2326
    %v2469 = vpop.f32.mrb[0].mxu0
    %v2470 = vadd.f32 %v2278, %v2469
    %v2471 = vpop.f32.mrb[0].mxu0
    %2472 = vdwg.mxu0
    %v2473 = vmax.f32 %v2395, 0.0
    %v2474 = vmax.f32 %v2400, 0.0
    %v2475 = vmax.f32 %v2405, 0.0
    %v2476 = vmax.f32 %v2410, 0.0
    %v2477 = vmax.f32 %v2415, 0.0
    %v2478 = vmax.f32 %v2420, 0.0
    %v2479 = vmax.f32 %v2425, 0.0
    %v2480 = vmax.f32 %v2430, 0.0
    %v2481 = vmax.f32 %v2435, 0.0
    %v2482 = vmax.f32 %v2440, 0.0
    %v2483 = vmax.f32 %v2445, 0.0
    %v2484 = vmax.f32 %v2450, 0.0
    %v2485 = vmax.f32 %v2455, 0.0
    %v2486 = vmax.f32 %v2460, 0.0
    %v2487 = vmax.f32 %v2465, 0.0
    %v2488 = vmax.f32 %v2470, 0.0
    %v2489 = vld [vmem:[#allocation27] sm:$0xff]
    %v2490 = vld [vmem:[#allocation27 + $0x8] sm:$0xff]
    %v2491 = vld [vmem:[#allocation27 + $0x10] sm:$0xff]
    %v2492 = vld [vmem:[#allocation27 + $0x18] sm:$0xff]
    %v2493 = vld [vmem:[#allocation28] sm:$0x1]
    %v2495 = vlaneseq
    %v2496 = vshrl.u32 %v2495, 7
    %v2497 = vsub.s32 0, %v2496
    %v2498 = vrot.slane %v2493, %v2497
    %v2501 = vsel %vm614, %v2473, 0
    %v2504 = vsel %vm614, %v2474, 0
    %v2507 = vsel %vm614, %v2475, 0
    %v2510 = vsel %vm614, %v2476, 0
    %v2513 = vsel %vm614, %v2477, 0
    %v2516 = vsel %vm614, %v2478, 0
    %v2519 = vsel %vm614, %v2479, 0
    %v2522 = vsel %vm614, %v2480, 0
    %v2525 = vsel %vm614, %v2481, 0
    %v2528 = vsel %vm614, %v2482, 0
    %v2531 = vsel %vm614, %v2483, 0
    %v2534 = vsel %vm614, %v2484, 0
    %v2537 = vsel %vm614, %v2485, 0
    %v2540 = vsel %vm614, %v2486, 0
    %v2543 = vsel %vm614, %v2487, 0
    %v2546 = vsel %vm614, %v2488, 0
    %2548 = vmatprep.subr.mxu0 0.0
    %2549 = vmatpush1.msra.mxu0 %v2489
    %2550 = vmatprep.subr.mxu0 0.0
    %2551 = vmatpush1.msra.mxu0 %v2490
    %2552 = vmatprep.subr.mxu0 0.0
    %2553 = vmatpush1.msra.mxu0 %v2491
    %2554 = vmatprep.subr.mxu0 0.0
    %2555 = vmatpush1.msra.mxu0 %v2492
    %2556 = vmatprep.subr.mxu0 0.0
    %2557 = vmatpush1.msra.mxu0 0.0
    %2558 = vmatprep.subr.mxu0 0.0
    %2559 = vmatpush1.msra.mxu0 0.0
    %2560 = vmatprep.subr.mxu0 0.0
    %2561 = vmatpush1.msra.mxu0 0.0
    %2562 = vmatprep.subr.mxu0 0.0
    %2563 = vmatpush1.msra.mxu0 0.0
    %2564 = vmatprep.subr.mxu0 0.0
    %2565 = vmatpush1.msra.mxu0 0.0
    %2566 = vmatprep.subr.mxu0 0.0
    %2567 = vmatpush1.msra.mxu0 0.0
    %2568 = vmatprep.subr.mxu0 0.0
    %2569 = vmatpush1.msra.mxu0 0.0
    %2570 = vmatprep.subr.mxu0 0.0
    %2571 = vmatpush1.msra.mxu0 0.0
    %2572 = vmatprep.subr.mxu0 0.0
    %2573 = vmatpush1.msra.mxu0 0.0
    %2574 = vmatprep.subr.mxu0 0.0
    %2575 = vmatpush1.msra.mxu0 0.0
    %2576 = vmatprep.subr.mxu0 0.0
    %2577 = vmatpush1.msra.mxu0 0.0
    %2578 = vmatprep.subr.mxu0 0.0
    %2579 = vmatpush1.msra.mxu0 0.0
    %2580 = vmatprep.subr.mxu0 0.0
    %2581 = vmatpush1.msra.mxu0 0.0
    %2582 = vmatprep.subr.mxu0 0.0
    %2583 = vmatpush1.msra.mxu0 0.0
    %2584 = vmatprep.subr.mxu0 0.0
    %2585 = vmatpush1.msra.mxu0 0.0
    %2586 = vmatprep.subr.mxu0 0.0
    %2587 = vmatpush1.msra.mxu0 0.0
    %2588 = vmatprep.subr.mxu0 0.0
    %2589 = vmatpush1.msra.mxu0 0.0
    %2590 = vmatprep.subr.mxu0 0.0
    %2591 = vmatpush1.msra.mxu0 0.0
    %2592 = vmatprep.subr.mxu0 0.0
    %2593 = vmatpush1.msra.mxu0 0.0
    %2594 = vmatprep.subr.mxu0 0.0
    %2595 = vmatpush1.msra.mxu0 0.0
    %2596 = vmatprep.subr.mxu0 0.0
    %2597 = vmatpush1.msra.mxu0 0.0
    %2598 = vmatprep.subr.mxu0 0.0
    %2599 = vmatpush1.msra.mxu0 0.0
    %2600 = vmatprep.subr.mxu0 0.0
    %2601 = vmatpush1.msra.mxu0 0.0
    %2602 = vmatprep.subr.mxu0 0.0
    %2603 = vmatpush1.msra.mxu0 0.0
    %2604 = vmatprep.subr.mxu0 0.0
    %2605 = vmatpush1.msra.mxu0 0.0
    %2606 = vmatprep.subr.mxu0 0.0
    %2607 = vmatpush1.msra.mxu0 0.0
    %2608 = vmatprep.subr.mxu0 0.0
    %2609 = vmatpush1.msra.mxu0 0.0
    %2610 = vmatprep.subr.mxu0 0.0
    %2611 = vmatpush1.msra.mxu0 0.0
    %2612 = vmatprep.mubr.f32.mxu0 0.0
    %2613 = vmatmul.mubr.f32.gmra.mrb[0].mxu0 %v2501
    %v2614 = vpop.f32.mrb[0].mxu0
    %v2615 = vadd.f32 %v2498, %v2614
    %v2616 = vpop.f32.mrb[0].mxu0
    %2617 = vmatprep.mubr.f32.mxu0 0.0
    %2618 = vmatmul.mubr.f32.gmra.mrb[0].mxu0 %v2504
    %v2619 = vpop.f32.mrb[0].mxu0
    %v2620 = vadd.f32 %v2498, %v2619
    %v2621 = vpop.f32.mrb[0].mxu0
    %2622 = vmatprep.mubr.f32.mxu0 0.0
    %2623 = vmatmul.mubr.f32.gmra.mrb[0].mxu0 %v2507
    %v2624 = vpop.f32.mrb[0].mxu0
    %v2625 = vadd.f32 %v2498, %v2624
    %v2626 = vpop.f32.mrb[0].mxu0
    %2627 = vmatprep.mubr.f32.mxu0 0.0
    %2628 = vmatmul.mubr.f32.gmra.mrb[0].mxu0 %v2510
    %v2629 = vpop.f32.mrb[0].mxu0
    %v2630 = vadd.f32 %v2498, %v2629
    %v2631 = vpop.f32.mrb[0].mxu0
    %2632 = vmatprep.mubr.f32.mxu0 0.0
    %2633 = vmatmul.mubr.f32.gmra.mrb[0].mxu0 %v2513
    %v2634 = vpop.f32.mrb[0].mxu0
    %v2635 = vadd.f32 %v2498, %v2634
    %v2636 = vpop.f32.mrb[0].mxu0
    %2637 = vmatprep.mubr.f32.mxu0 0.0
    %2638 = vmatmul.mubr.f32.gmra.mrb[0].mxu0 %v2516
    %v2639 = vpop.f32.mrb[0].mxu0
    %v2640 = vadd.f32 %v2498, %v2639
    %v2641 = vpop.f32.mrb[0].mxu0
    %2642 = vmatprep.mubr.f32.mxu0 0.0
    %2643 = vmatmul.mubr.f32.gmra.mrb[0].mxu0 %v2519
    %v2644 = vpop.f32.mrb[0].mxu0
    %v2645 = vadd.f32 %v2498, %v2644
    %v2646 = vpop.f32.mrb[0].mxu0
    %2647 = vmatprep.mubr.f32.mxu0 0.0
    %2648 = vmatmul.mubr.f32.gmra.mrb[0].mxu0 %v2522
    %v2649 = vpop.f32.mrb[0].mxu0
    %v2650 = vadd.f32 %v2498, %v2649
    %v2651 = vpop.f32.mrb[0].mxu0
    %2652 = vmatprep.mubr.f32.mxu0 0.0
    %2653 = vmatmul.mubr.f32.gmra.mrb[0].mxu0 %v2525
    %v2654 = vpop.f32.mrb[0].mxu0
    %v2655 = vadd.f32 %v2498, %v2654
    %v2656 = vpop.f32.mrb[0].mxu0
    %2657 = vmatprep.mubr.f32.mxu0 0.0
    %2658 = vmatmul.mubr.f32.gmra.mrb[0].mxu0 %v2528
    %v2659 = vpop.f32.mrb[0].mxu0
    %v2660 = vadd.f32 %v2498, %v2659
    %v2661 = vpop.f32.mrb[0].mxu0
    %2662 = vmatprep.mubr.f32.mxu0 0.0
    %2663 = vmatmul.mubr.f32.gmra.mrb[0].mxu0 %v2531
    %v2664 = vpop.f32.mrb[0].mxu0
    %v2665 = vadd.f32 %v2498, %v2664
    %v2666 = vpop.f32.mrb[0].mxu0
    %2667 = vmatprep.mubr.f32.mxu0 0.0
    %2668 = vmatmul.mubr.f32.gmra.mrb[0].mxu0 %v2534
    %v2669 = vpop.f32.mrb[0].mxu0
    %v2670 = vadd.f32 %v2498, %v2669
    %v2671 = vpop.f32.mrb[0].mxu0
    %2672 = vmatprep.mubr.f32.mxu0 0.0
    %2673 = vmatmul.mubr.f32.gmra.mrb[0].mxu0 %v2537
    %v2674 = vpop.f32.mrb[0].mxu0
    %v2675 = vadd.f32 %v2498, %v2674
    %v2676 = vpop.f32.mrb[0].mxu0
    %2677 = vmatprep.mubr.f32.mxu0 0.0
    %2678 = vmatmul.mubr.f32.gmra.mrb[0].mxu0 %v2540
    %v2679 = vpop.f32.mrb[0].mxu0
    %v2680 = vadd.f32 %v2498, %v2679
    %v2681 = vpop.f32.mrb[0].mxu0
    %2682 = vmatprep.mubr.f32.mxu0 0.0
    %2683 = vmatmul.mubr.f32.gmra.mrb[0].mxu0 %v2543
    %v2684 = vpop.f32.mrb[0].mxu0
    %v2685 = vadd.f32 %v2498, %v2684
    %v2686 = vpop.f32.mrb[0].mxu0
    %2687 = vmatprep.mubr.f32.mxu0 0.0
    %2688 = vmatmul.mubr.f32.gmra.mrb[0].mxu0 %v2546
    %v2689 = vpop.f32.mrb[0].mxu0
    %v2690 = vadd.f32 %v2498, %v2689
    %v2691 = vpop.f32.mrb[0].mxu0
    %2692 = vdwg.mxu0
    %v2693 = vmax.f32 %v2615, 0.0
    %v2694 = vmax.f32 %v2620, 0.0
    %v2695 = vmax.f32 %v2625, 0.0
    %v2696 = vmax.f32 %v2630, 0.0
    %v2697 = vmax.f32 %v2635, 0.0
    %v2698 = vmax.f32 %v2640, 0.0
    %v2699 = vmax.f32 %v2645, 0.0
    %v2700 = vmax.f32 %v2650, 0.0
    %v2701 = vmax.f32 %v2655, 0.0
    %v2702 = vmax.f32 %v2660, 0.0
    %v2703 = vmax.f32 %v2665, 0.0
    %v2704 = vmax.f32 %v2670, 0.0
    %v2705 = vmax.f32 %v2675, 0.0
    %v2706 = vmax.f32 %v2680, 0.0
    %v2707 = vmax.f32 %v2685, 0.0
    %v2708 = vmax.f32 %v2690, 0.0
    %v2709 = vadd.f32 %v2693, %v2125
    %v2710 = vadd.f32 %v2694, %v2126
    %v2711 = vadd.f32 %v2695, %v2127
    %v2712 = vadd.f32 %v2696, %v2128
    %v2713 = vadd.f32 %v2697, %v2129
    %v2714 = vadd.f32 %v2698, %v2130
    %v2715 = vadd.f32 %v2699, %v2131
    %v2716 = vadd.f32 %v2700, %v2132
    %v2717 = vadd.f32 %v2701, %v2133
    %v2718 = vadd.f32 %v2702, %v2134
    %v2719 = vadd.f32 %v2703, %v2135
    %v2720 = vadd.f32 %v2704, %v2136
    %v2721 = vadd.f32 %v2705, %v2137
    %v2722 = vadd.f32 %v2706, %v2138
    %v2723 = vadd.f32 %v2707, %v2139
    %v2724 = vadd.f32 %v2708, %v2140
    %v2725 = vmul.f32 %v2709, 0.70710677
    %v2726 = vmul.f32 %v2710, 0.70710677
    %v2727 = vmul.f32 %v2711, 0.70710677
    %v2728 = vmul.f32 %v2712, 0.70710677
    %v2729 = vmul.f32 %v2713, 0.70710677
    %v2730 = vmul.f32 %v2714, 0.70710677
    %v2731 = vmul.f32 %v2715, 0.70710677
    %v2732 = vmul.f32 %v2716, 0.70710677
    %v2733 = vmul.f32 %v2717, 0.70710677
    %v2734 = vmul.f32 %v2718, 0.70710677
    %v2735 = vmul.f32 %v2719, 0.70710677
    %v2736 = vmul.f32 %v2720, 0.70710677
    %v2737 = vmul.f32 %v2721, 0.70710677
    %v2738 = vmul.f32 %v2722, 0.70710677
    %v2739 = vmul.f32 %v2723, 0.70710677
    %v2740 = vmul.f32 %v2724, 0.70710677
    %v2741 = vrot.slane %v2725, 1
    %v2742 = vrot.slane %v2726, 1
    %v2743 = vrot.slane %v2727, 1
    %v2744 = vrot.slane %v2728, 1
    %v2745 = vrot.slane %v2729, 1
    %v2746 = vrot.slane %v2730, 1
    %v2747 = vrot.slane %v2731, 1
    %v2748 = vrot.slane %v2732, 1
    %v2749 = vrot.slane %v2733, 1
    %v2750 = vrot.slane %v2734, 1
    %v2751 = vrot.slane %v2735, 1
    %v2752 = vrot.slane %v2736, 1
    %v2753 = vrot.slane %v2737, 1
    %v2754 = vrot.slane %v2738, 1
    %v2755 = vrot.slane %v2739, 1
    %v2756 = vrot.slane %v2740, 1
    %v2757 = vsel %vm1238, %v2755, %v2756
    %v2758 = vsel %vm1238, %v2754, %v2755
    %v2759 = vsel %vm1238, %v2753, %v2754
    %v2760 = vsel %vm1238, %v2752, %v2753
    %v2761 = vsel %vm1238, %v2751, %v2752
    %v2762 = vsel %vm1238, %v2750, %v2751
    %v2763 = vsel %vm1238, %v2749, %v2750
    %v2764 = vsel %vm1238, %v2748, %v2749
    %v2765 = vsel %vm1238, %v2747, %v2748
    %v2766 = vsel %vm1238, %v2746, %v2747
    %v2767 = vsel %vm1238, %v2745, %v2746
    %v2768 = vsel %vm1238, %v2744, %v2745
    %v2769 = vsel %vm1238, %v2743, %v2744
    %v2770 = vsel %vm1238, %v2742, %v2743
    %v2771 = vsel %vm1238, %v2741, %v2742
    %v2772 = vsel %vm1238, %v2756, %v2741
    %v2773 = vmul.f32 %v2725, %v2771
    %v2774 = vmul.f32 %v2726, %v2770
    %v2775 = vmul.f32 %v2727, %v2769
    %v2776 = vmul.f32 %v2728, %v2768
    %v2777 = vmul.f32 %v2729, %v2767
    %v2778 = vmul.f32 %v2730, %v2766
    %v2779 = vmul.f32 %v2731, %v2765
    %v2780 = vmul.f32 %v2732, %v2764
    %v2781 = vmul.f32 %v2733, %v2763
    %v2782 = vmul.f32 %v2734, %v2762
    %v2783 = vmul.f32 %v2735, %v2761
    %v2784 = vmul.f32 %v2736, %v2760
    %v2785 = vmul.f32 %v2737, %v2759
    %v2786 = vmul.f32 %v2738, %v2758
    %v2787 = vmul.f32 %v2739, %v2757
    %v2788 = vmul.f32 %v2740, %v2772
    %v2789 = vsel %vm614, %v2773, 0.0
    %2790 = vadd.xlane.f32.xlu0 %v2789
    %v2791 = vpop.xlane.xlu0 %2790
    %v2792 = vsel %vm614, %v2774, 0.0
    %2793 = vadd.xlane.f32.xlu0 %v2792
    %v2794 = vpop.xlane.xlu0 %2793
    %v2795 = vsel %vm614, %v2775, 0.0
    %2796 = vadd.xlane.f32.xlu0 %v2795
    %v2797 = vpop.xlane.xlu0 %2796
    %v2798 = vsel %vm614, %v2776, 0.0
    %2799 = vadd.xlane.f32.xlu0 %v2798
    %v2800 = vpop.xlane.xlu0 %2799
    %v2801 = vsel %vm614, %v2777, 0.0
    %2802 = vadd.xlane.f32.xlu0 %v2801
    %v2803 = vpop.xlane.xlu0 %2802
    %v2804 = vsel %vm614, %v2778, 0.0
    %2805 = vadd.xlane.f32.xlu0 %v2804
    %v2806 = vpop.xlane.xlu0 %2805
    %v2807 = vsel %vm614, %v2779, 0.0
    %2808 = vadd.xlane.f32.xlu0 %v2807
    %v2809 = vpop.xlane.xlu0 %2808
    %v2810 = vsel %vm614, %v2780, 0.0
    %2811 = vadd.xlane.f32.xlu0 %v2810
    %v2812 = vpop.xlane.xlu0 %2811
    %v2813 = vsel %vm614, %v2781, 0.0
    %2814 = vadd.xlane.f32.xlu0 %v2813
    %v2815 = vpop.xlane.xlu0 %2814
    %v2816 = vsel %vm614, %v2782, 0.0
    %2817 = vadd.xlane.f32.xlu0 %v2816
    %v2818 = vpop.xlane.xlu0 %2817
    %v2819 = vsel %vm614, %v2783, 0.0
    %2820 = vadd.xlane.f32.xlu0 %v2819
    %v2821 = vpop.xlane.xlu0 %2820
    %v2822 = vsel %vm614, %v2784, 0.0
    %2823 = vadd.xlane.f32.xlu0 %v2822
    %v2824 = vpop.xlane.xlu0 %2823
    %v2825 = vsel %vm614, %v2785, 0.0
    %2826 = vadd.xlane.f32.xlu0 %v2825
    %v2827 = vpop.xlane.xlu0 %2826
    %v2828 = vsel %vm614, %v2786, 0.0
    %2829 = vadd.xlane.f32.xlu0 %v2828
    %v2830 = vpop.xlane.xlu0 %2829
    %v2831 = vsel %vm614, %v2787, 0.0
    %2832 = vadd.xlane.f32.xlu0 %v2831
    %v2833 = vpop.xlane.xlu0 %2832
    %v2834 = vsel %vm614, %v2788, 0.0
    %2835 = vadd.xlane.f32.xlu0 %v2834
    %v2836 = vpop.xlane.xlu0 %2835
    %v2837 = vmul.f32 %v2725, %v2725
    %v2838 = vmul.f32 %v2726, %v2726
    %v2839 = vmul.f32 %v2727, %v2727
    %v2840 = vmul.f32 %v2728, %v2728
    %v2841 = vmul.f32 %v2729, %v2729
    %v2842 = vmul.f32 %v2730, %v2730
    %v2843 = vmul.f32 %v2731, %v2731
    %v2844 = vmul.f32 %v2732, %v2732
    %v2845 = vmul.f32 %v2733, %v2733
    %v2846 = vmul.f32 %v2734, %v2734
    %v2847 = vmul.f32 %v2735, %v2735
    %v2848 = vmul.f32 %v2736, %v2736
    %v2849 = vmul.f32 %v2737, %v2737
    %v2850 = vmul.f32 %v2738, %v2738
    %v2851 = vmul.f32 %v2739, %v2739
    %v2852 = vmul.f32 %v2740, %v2740
    %v2853 = vsel %vm614, %v2837, 0.0
    %2854 = vadd.xlane.f32.xlu0 %v2853
    %v2855 = vpop.xlane.xlu0 %2854
    %v2856 = vsel %vm614, %v2838, 0.0
    %2857 = vadd.xlane.f32.xlu0 %v2856
    %v2858 = vpop.xlane.xlu0 %2857
    %v2859 = vsel %vm614, %v2839, 0.0
    %2860 = vadd.xlane.f32.xlu0 %v2859
    %v2861 = vpop.xlane.xlu0 %2860
    %v2862 = vsel %vm614, %v2840, 0.0
    %2863 = vadd.xlane.f32.xlu0 %v2862
    %v2864 = vpop.xlane.xlu0 %2863
    %v2865 = vsel %vm614, %v2841, 0.0
    %2866 = vadd.xlane.f32.xlu0 %v2865
    %v2867 = vpop.xlane.xlu0 %2866
    %v2868 = vsel %vm614, %v2842, 0.0
    %2869 = vadd.xlane.f32.xlu0 %v2868
    %v2870 = vpop.xlane.xlu0 %2869
    %v2871 = vsel %vm614, %v2843, 0.0
    %2872 = vadd.xlane.f32.xlu0 %v2871
    %v2873 = vpop.xlane.xlu0 %2872
    %v2874 = vsel %vm614, %v2844, 0.0
    %2875 = vadd.xlane.f32.xlu0 %v2874
    %v2876 = vpop.xlane.xlu0 %2875
    %v2877 = vsel %vm614, %v2845, 0.0
    %2878 = vadd.xlane.f32.xlu0 %v2877
    %v2879 = vpop.xlane.xlu0 %2878
    %v2880 = vsel %vm614, %v2846, 0.0
    %2881 = vadd.xlane.f32.xlu0 %v2880
    %v2882 = vpop.xlane.xlu0 %2881
    %v2883 = vsel %vm614, %v2847, 0.0
    %2884 = vadd.xlane.f32.xlu0 %v2883
    %v2885 = vpop.xlane.xlu0 %2884
    %v2886 = vsel %vm614, %v2848, 0.0
    %2887 = vadd.xlane.f32.xlu0 %v2886
    %v2888 = vpop.xlane.xlu0 %2887
    %v2889 = vsel %vm614, %v2849, 0.0
    %2890 = vadd.xlane.f32.xlu0 %v2889
    %v2891 = vpop.xlane.xlu0 %2890
    %v2892 = vsel %vm614, %v2850, 0.0
    %2893 = vadd.xlane.f32.xlu0 %v2892
    %v2894 = vpop.xlane.xlu0 %2893
    %v2895 = vsel %vm614, %v2851, 0.0
    %2896 = vadd.xlane.f32.xlu0 %v2895
    %v2897 = vpop.xlane.xlu0 %2896
    %v2898 = vsel %vm614, %v2852, 0.0
    %2899 = vadd.xlane.f32.xlu0 %v2898
    %v2900 = vpop.xlane.xlu0 %2899
    %v2901 = vrsqrt.pop %v2855
    %v2902 = vmul.f32 %v2855, %v2901
    %vm2903 = vcmp.eq.f32.partialorder %v2855, inf
    %v2904 = vsel %vm2903, %v2855, %v2902
    %vm2905 = vcmp.eq.f32.partialorder %v2855, 0.0
    %v2906 = vand.u32 %v2855, 2147483648
    %v2907 = vsel %vm2905, %v2906, %v2904
    %v2908 = vrsqrt.pop %v2858
    %v2909 = vmul.f32 %v2858, %v2908
    %vm2910 = vcmp.eq.f32.partialorder %v2858, inf
    %v2911 = vsel %vm2910, %v2858, %v2909
    %vm2912 = vcmp.eq.f32.partialorder %v2858, 0.0
    %v2913 = vand.u32 %v2858, 2147483648
    %v2914 = vsel %vm2912, %v2913, %v2911
    %v2915 = vrsqrt.pop %v2861
    %v2916 = vmul.f32 %v2861, %v2915
    %vm2917 = vcmp.eq.f32.partialorder %v2861, inf
    %v2918 = vsel %vm2917, %v2861, %v2916
    %vm2919 = vcmp.eq.f32.partialorder %v2861, 0.0
    %v2920 = vand.u32 %v2861, 2147483648
    %v2921 = vsel %vm2919, %v2920, %v2918
    %v2922 = vrsqrt.pop %v2864
    %v2923 = vmul.f32 %v2864, %v2922
    %vm2924 = vcmp.eq.f32.partialorder %v2864, inf
    %v2925 = vsel %vm2924, %v2864, %v2923
    %vm2926 = vcmp.eq.f32.partialorder %v2864, 0.0
    %v2927 = vand.u32 %v2864, 2147483648
    %v2928 = vsel %vm2926, %v2927, %v2925
    %v2929 = vrsqrt.pop %v2867
    %v2930 = vmul.f32 %v2867, %v2929
    %vm2931 = vcmp.eq.f32.partialorder %v2867, inf
    %v2932 = vsel %vm2931, %v2867, %v2930
    %vm2933 = vcmp.eq.f32.partialorder %v2867, 0.0
    %v2934 = vand.u32 %v2867, 2147483648
    %v2935 = vsel %vm2933, %v2934, %v2932
    %v2936 = vrsqrt.pop %v2870
    %v2937 = vmul.f32 %v2870, %v2936
    %vm2938 = vcmp.eq.f32.partialorder %v2870, inf
    %v2939 = vsel %vm2938, %v2870, %v2937
    %vm2940 = vcmp.eq.f32.partialorder %v2870, 0.0
    %v2941 = vand.u32 %v2870, 2147483648
    %v2942 = vsel %vm2940, %v2941, %v2939
    %v2943 = vrsqrt.pop %v2873
    %v2944 = vmul.f32 %v2873, %v2943
    %vm2945 = vcmp.eq.f32.partialorder %v2873, inf
    %v2946 = vsel %vm2945, %v2873, %v2944
    %vm2947 = vcmp.eq.f32.partialorder %v2873, 0.0
    %v2948 = vand.u32 %v2873, 2147483648
    %v2949 = vsel %vm2947, %v2948, %v2946
    %v2950 = vrsqrt.pop %v2876
    %v2951 = vmul.f32 %v2876, %v2950
    %vm2952 = vcmp.eq.f32.partialorder %v2876, inf
    %v2953 = vsel %vm2952, %v2876, %v2951
    %vm2954 = vcmp.eq.f32.partialorder %v2876, 0.0
    %v2955 = vand.u32 %v2876, 2147483648
    %v2956 = vsel %vm2954, %v2955, %v2953
    %v2957 = vrsqrt.pop %v2879
    %v2958 = vmul.f32 %v2879, %v2957
    %vm2959 = vcmp.eq.f32.partialorder %v2879, inf
    %v2960 = vsel %vm2959, %v2879, %v2958
    %vm2961 = vcmp.eq.f32.partialorder %v2879, 0.0
    %v2962 = vand.u32 %v2879, 2147483648
    %v2963 = vsel %vm2961, %v2962, %v2960
    %v2964 = vrsqrt.pop %v2882
    %v2965 = vmul.f32 %v2882, %v2964
    %vm2966 = vcmp.eq.f32.partialorder %v2882, inf
    %v2967 = vsel %vm2966, %v2882, %v2965
    %vm2968 = vcmp.eq.f32.partialorder %v2882, 0.0
    %v2969 = vand.u32 %v2882, 2147483648
    %v2970 = vsel %vm2968, %v2969, %v2967
    %v2971 = vrsqrt.pop %v2885
    %v2972 = vmul.f32 %v2885, %v2971
    %vm2973 = vcmp.eq.f32.partialorder %v2885, inf
    %v2974 = vsel %vm2973, %v2885, %v2972
    %vm2975 = vcmp.eq.f32.partialorder %v2885, 0.0
    %v2976 = vand.u32 %v2885, 2147483648
    %v2977 = vsel %vm2975, %v2976, %v2974
    %v2978 = vrsqrt.pop %v2888
    %v2979 = vmul.f32 %v2888, %v2978
    %vm2980 = vcmp.eq.f32.partialorder %v2888, inf
    %v2981 = vsel %vm2980, %v2888, %v2979
    %vm2982 = vcmp.eq.f32.partialorder %v2888, 0.0
    %v2983 = vand.u32 %v2888, 2147483648
    %v2984 = vsel %vm2982, %v2983, %v2981
    %v2985 = vrsqrt.pop %v2891
    %v2986 = vmul.f32 %v2891, %v2985
    %vm2987 = vcmp.eq.f32.partialorder %v2891, inf
    %v2988 = vsel %vm2987, %v2891, %v2986
    %vm2989 = vcmp.eq.f32.partialorder %v2891, 0.0
    %v2990 = vand.u32 %v2891, 2147483648
    %v2991 = vsel %vm2989, %v2990, %v2988
    %v2992 = vrsqrt.pop %v2894
    %v2993 = vmul.f32 %v2894, %v2992
    %vm2994 = vcmp.eq.f32.partialorder %v2894, inf
    %v2995 = vsel %vm2994, %v2894, %v2993
    %vm2996 = vcmp.eq.f32.partialorder %v2894, 0.0
    %v2997 = vand.u32 %v2894, 2147483648
    %v2998 = vsel %vm2996, %v2997, %v2995
    %v2999 = vrsqrt.pop %v2897
    %v3000 = vmul.f32 %v2897, %v2999
    %vm3001 = vcmp.eq.f32.partialorder %v2897, inf
    %v3002 = vsel %vm3001, %v2897, %v3000
    %vm3003 = vcmp.eq.f32.partialorder %v2897, 0.0
    %v3004 = vand.u32 %v2897, 2147483648
    %v3005 = vsel %vm3003, %v3004, %v3002
    %v3006 = vrsqrt.pop %v2900
    %v3007 = vmul.f32 %v2900, %v3006
    %vm3008 = vcmp.eq.f32.partialorder %v2900, inf
    %v3009 = vsel %vm3008, %v2900, %v3007
    %vm3010 = vcmp.eq.f32.partialorder %v2900, 0.0
    %v3011 = vand.u32 %v2900, 2147483648
    %v3012 = vsel %vm3010, %v3011, %v3009
    %v3013 = vmax.f32 %v2907, 1e-08
    %v3014 = vmax.f32 %v2914, 1e-08
    %v3015 = vmax.f32 %v2921, 1e-08
    %v3016 = vmax.f32 %v2928, 1e-08
    %v3017 = vmax.f32 %v2935, 1e-08
    %v3018 = vmax.f32 %v2942, 1e-08
    %v3019 = vmax.f32 %v2949, 1e-08
    %v3020 = vmax.f32 %v2956, 1e-08
    %v3021 = vmax.f32 %v2963, 1e-08
    %v3022 = vmax.f32 %v2970, 1e-08
    %v3023 = vmax.f32 %v2977, 1e-08
    %v3024 = vmax.f32 %v2984, 1e-08
    %v3025 = vmax.f32 %v2991, 1e-08
    %v3026 = vmax.f32 %v2998, 1e-08
    %v3027 = vmax.f32 %v3005, 1e-08
    %v3028 = vmax.f32 %v3012, 1e-08
    %v3029 = vmul.f32 %v2771, %v2771
    %v3030 = vmul.f32 %v2770, %v2770
    %v3031 = vmul.f32 %v2769, %v2769
    %v3032 = vmul.f32 %v2768, %v2768
    %v3033 = vmul.f32 %v2767, %v2767
    %v3034 = vmul.f32 %v2766, %v2766
    %v3035 = vmul.f32 %v2765, %v2765
    %v3036 = vmul.f32 %v2764, %v2764
    %v3037 = vmul.f32 %v2763, %v2763
    %v3038 = vmul.f32 %v2762, %v2762
    %v3039 = vmul.f32 %v2761, %v2761
    %v3040 = vmul.f32 %v2760, %v2760
    %v3041 = vmul.f32 %v2759, %v2759
    %v3042 = vmul.f32 %v2758, %v2758
    %v3043 = vmul.f32 %v2757, %v2757
    %v3044 = vmul.f32 %v2772, %v2772
    %v3045 = vsel %vm614, %v3029, 0.0
    %3046 = vadd.xlane.f32.xlu0 %v3045
    %v3047 = vpop.xlane.xlu0 %3046
    %v3048 = vsel %vm614, %v3030, 0.0
    %3049 = vadd.xlane.f32.xlu0 %v3048
    %v3050 = vpop.xlane.xlu0 %3049
    %v3051 = vsel %vm614, %v3031, 0.0
    %3052 = vadd.xlane.f32.xlu0 %v3051
    %v3053 = vpop.xlane.xlu0 %3052
    %v3054 = vsel %vm614, %v3032, 0.0
    %3055 = vadd.xlane.f32.xlu0 %v3054
    %v3056 = vpop.xlane.xlu0 %3055
    %v3057 = vsel %vm614, %v3033, 0.0
    %3058 = vadd.xlane.f32.xlu0 %v3057
    %v3059 = vpop.xlane.xlu0 %3058
    %v3060 = vsel %vm614, %v3034, 0.0
    %3061 = vadd.xlane.f32.xlu0 %v3060
    %v3062 = vpop.xlane.xlu0 %3061
    %v3063 = vsel %vm614, %v3035, 0.0
    %3064 = vadd.xlane.f32.xlu0 %v3063
    %v3065 = vpop.xlane.xlu0 %3064
    %v3066 = vsel %vm614, %v3036, 0.0
    %3067 = vadd.xlane.f32.xlu0 %v3066
    %v3068 = vpop.xlane.xlu0 %3067
    %v3069 = vsel %vm614, %v3037, 0.0
    %3070 = vadd.xlane.f32.xlu0 %v3069
    %v3071 = vpop.xlane.xlu0 %3070
    %v3072 = vsel %vm614, %v3038, 0.0
    %3073 = vadd.xlane.f32.xlu0 %v3072
    %v3074 = vpop.xlane.xlu0 %3073
    %v3075 = vsel %vm614, %v3039, 0.0
    %3076 = vadd.xlane.f32.xlu0 %v3075
    %v3077 = vpop.xlane.xlu0 %3076
    %v3078 = vsel %vm614, %v3040, 0.0
    %3079 = vadd.xlane.f32.xlu0 %v3078
    %v3080 = vpop.xlane.xlu0 %3079
    %v3081 = vsel %vm614, %v3041, 0.0
    %3082 = vadd.xlane.f32.xlu0 %v3081
    %v3083 = vpop.xlane.xlu0 %3082
    %v3084 = vsel %vm614, %v3042, 0.0
    %3085 = vadd.xlane.f32.xlu0 %v3084
    %v3086 = vpop.xlane.xlu0 %3085
    %v3087 = vsel %vm614, %v3043, 0.0
    %3088 = vadd.xlane.f32.xlu0 %v3087
    %v3089 = vpop.xlane.xlu0 %3088
    %v3090 = vsel %vm614, %v3044, 0.0
    %3091 = vadd.xlane.f32.xlu0 %v3090
    %v3092 = vpop.xlane.xlu0 %3091
    %v3093 = vrsqrt.pop %v3047
    %v3094 = vmul.f32 %v3047, %v3093
    %vm3095 = vcmp.eq.f32.partialorder %v3047, inf
    %v3096 = vsel %vm3095, %v3047, %v3094
    %vm3097 = vcmp.eq.f32.partialorder %v3047, 0.0
    %v3098 = vand.u32 %v3047, 2147483648
    %v3099 = vsel %vm3097, %v3098, %v3096
    %v3100 = vrsqrt.pop %v3050
    %v3101 = vmul.f32 %v3050, %v3100
    %vm3102 = vcmp.eq.f32.partialorder %v3050, inf
    %v3103 = vsel %vm3102, %v3050, %v3101
    %vm3104 = vcmp.eq.f32.partialorder %v3050, 0.0
    %v3105 = vand.u32 %v3050, 2147483648
    %v3106 = vsel %vm3104, %v3105, %v3103
    %v3107 = vrsqrt.pop %v3053
    %v3108 = vmul.f32 %v3053, %v3107
    %vm3109 = vcmp.eq.f32.partialorder %v3053, inf
    %v3110 = vsel %vm3109, %v3053, %v3108
    %vm3111 = vcmp.eq.f32.partialorder %v3053, 0.0
    %v3112 = vand.u32 %v3053, 2147483648
    %v3113 = vsel %vm3111, %v3112, %v3110
    %v3114 = vrsqrt.pop %v3056
    %v3115 = vmul.f32 %v3056, %v3114
    %vm3116 = vcmp.eq.f32.partialorder %v3056, inf
    %v3117 = vsel %vm3116, %v3056, %v3115
    %vm3118 = vcmp.eq.f32.partialorder %v3056, 0.0
    %v3119 = vand.u32 %v3056, 2147483648
    %v3120 = vsel %vm3118, %v3119, %v3117
    %v3121 = vrsqrt.pop %v3059
    %v3122 = vmul.f32 %v3059, %v3121
    %vm3123 = vcmp.eq.f32.partialorder %v3059, inf
    %v3124 = vsel %vm3123, %v3059, %v3122
    %vm3125 = vcmp.eq.f32.partialorder %v3059, 0.0
    %v3126 = vand.u32 %v3059, 2147483648
    %v3127 = vsel %vm3125, %v3126, %v3124
    %v3128 = vrsqrt.pop %v3062
    %v3129 = vmul.f32 %v3062, %v3128
    %vm3130 = vcmp.eq.f32.partialorder %v3062, inf
    %v3131 = vsel %vm3130, %v3062, %v3129
    %vm3132 = vcmp.eq.f32.partialorder %v3062, 0.0
    %v3133 = vand.u32 %v3062, 2147483648
    %v3134 = vsel %vm3132, %v3133, %v3131
    %v3135 = vrsqrt.pop %v3065
    %v3136 = vmul.f32 %v3065, %v3135
    %vm3137 = vcmp.eq.f32.partialorder %v3065, inf
    %v3138 = vsel %vm3137, %v3065, %v3136
    %vm3139 = vcmp.eq.f32.partialorder %v3065, 0.0
    %v3140 = vand.u32 %v3065, 2147483648
    %v3141 = vsel %vm3139, %v3140, %v3138
    %v3142 = vrsqrt.pop %v3068
    %v3143 = vmul.f32 %v3068, %v3142
    %vm3144 = vcmp.eq.f32.partialorder %v3068, inf
    %v3145 = vsel %vm3144, %v3068, %v3143
    %vm3146 = vcmp.eq.f32.partialorder %v3068, 0.0
    %v3147 = vand.u32 %v3068, 2147483648
    %v3148 = vsel %vm3146, %v3147, %v3145
    %v3149 = vrsqrt.pop %v3071
    %v3150 = vmul.f32 %v3071, %v3149
    %vm3151 = vcmp.eq.f32.partialorder %v3071, inf
    %v3152 = vsel %vm3151, %v3071, %v3150
    %vm3153 = vcmp.eq.f32.partialorder %v3071, 0.0
    %v3154 = vand.u32 %v3071, 2147483648
    %v3155 = vsel %vm3153, %v3154, %v3152
    %v3156 = vrsqrt.pop %v3074
    %v3157 = vmul.f32 %v3074, %v3156
    %vm3158 = vcmp.eq.f32.partialorder %v3074, inf
    %v3159 = vsel %vm3158, %v3074, %v3157
    %vm3160 = vcmp.eq.f32.partialorder %v3074, 0.0
    %v3161 = vand.u32 %v3074, 2147483648
    %v3162 = vsel %vm3160, %v3161, %v3159
    %v3163 = vrsqrt.pop %v3077
    %v3164 = vmul.f32 %v3077, %v3163
    %vm3165 = vcmp.eq.f32.partialorder %v3077, inf
    %v3166 = vsel %vm3165, %v3077, %v3164
    %vm3167 = vcmp.eq.f32.partialorder %v3077, 0.0
    %v3168 = vand.u32 %v3077, 2147483648
    %v3169 = vsel %vm3167, %v3168, %v3166
    %v3170 = vrsqrt.pop %v3080
    %v3171 = vmul.f32 %v3080, %v3170
    %vm3172 = vcmp.eq.f32.partialorder %v3080, inf
    %v3173 = vsel %vm3172, %v3080, %v3171
    %vm3174 = vcmp.eq.f32.partialorder %v3080, 0.0
    %v3175 = vand.u32 %v3080, 2147483648
    %v3176 = vsel %vm3174, %v3175, %v3173
    %v3177 = vrsqrt.pop %v3083
    %v3178 = vmul.f32 %v3083, %v3177
    %vm3179 = vcmp.eq.f32.partialorder %v3083, inf
    %v3180 = vsel %vm3179, %v3083, %v3178
    %vm3181 = vcmp.eq.f32.partialorder %v3083, 0.0
    %v3182 = vand.u32 %v3083, 2147483648
    %v3183 = vsel %vm3181, %v3182, %v3180
    %v3184 = vrsqrt.pop %v3086
    %v3185 = vmul.f32 %v3086, %v3184
    %vm3186 = vcmp.eq.f32.partialorder %v3086, inf
    %v3187 = vsel %vm3186, %v3086, %v3185
    %vm3188 = vcmp.eq.f32.partialorder %v3086, 0.0
    %v3189 = vand.u32 %v3086, 2147483648
    %v3190 = vsel %vm3188, %v3189, %v3187
    %v3191 = vrsqrt.pop %v3089
    %v3192 = vmul.f32 %v3089, %v3191
    %vm3193 = vcmp.eq.f32.partialorder %v3089, inf
    %v3194 = vsel %vm3193, %v3089, %v3192
    %vm3195 = vcmp.eq.f32.partialorder %v3089, 0.0
    %v3196 = vand.u32 %v3089, 2147483648
    %v3197 = vsel %vm3195, %v3196, %v3194
    %v3198 = vrsqrt.pop %v3092
    %v3199 = vmul.f32 %v3092, %v3198
    %vm3200 = vcmp.eq.f32.partialorder %v3092, inf
    %v3201 = vsel %vm3200, %v3092, %v3199
    %vm3202 = vcmp.eq.f32.partialorder %v3092, 0.0
    %v3203 = vand.u32 %v3092, 2147483648
    %v3204 = vsel %vm3202, %v3203, %v3201
    %v3205 = vmax.f32 %v3099, 1e-08
    %v3206 = vmax.f32 %v3106, 1e-08
    %v3207 = vmax.f32 %v3113, 1e-08
    %v3208 = vmax.f32 %v3120, 1e-08
    %v3209 = vmax.f32 %v3127, 1e-08
    %v3210 = vmax.f32 %v3134, 1e-08
    %v3211 = vmax.f32 %v3141, 1e-08
    %v3212 = vmax.f32 %v3148, 1e-08
    %v3213 = vmax.f32 %v3155, 1e-08
    %v3214 = vmax.f32 %v3162, 1e-08
    %v3215 = vmax.f32 %v3169, 1e-08
    %v3216 = vmax.f32 %v3176, 1e-08
    %v3217 = vmax.f32 %v3183, 1e-08
    %v3218 = vmax.f32 %v3190, 1e-08
    %v3219 = vmax.f32 %v3197, 1e-08
    %v3220 = vmax.f32 %v3204, 1e-08
    %v3221 = vmul.f32 %v3013, %v3205
    %v3222 = vmul.f32 %v3014, %v3206
    %v3223 = vmul.f32 %v3015, %v3207
    %v3224 = vmul.f32 %v3016, %v3208
    %v3225 = vmul.f32 %v3017, %v3209
    %v3226 = vmul.f32 %v3018, %v3210
    %v3227 = vmul.f32 %v3019, %v3211
    %v3228 = vmul.f32 %v3020, %v3212
    %v3229 = vmul.f32 %v3021, %v3213
    %v3230 = vmul.f32 %v3022, %v3214
    %v3231 = vmul.f32 %v3023, %v3215
    %v3232 = vmul.f32 %v3024, %v3216
    %v3233 = vmul.f32 %v3025, %v3217
    %v3234 = vmul.f32 %v3026, %v3218
    %v3235 = vmul.f32 %v3027, %v3219
    %v3236 = vmul.f32 %v3028, %v3220
    %v3237 = vrcp.pop %v3221
    %v3238 = vmul.f32 %v2791, %v3237
    %v3239 = vrcp.pop %v3222
    %v3240 = vmul.f32 %v2794, %v3239
    %v3241 = vrcp.pop %v3223
    %v3242 = vmul.f32 %v2797, %v3241
    %v3243 = vrcp.pop %v3224
    %v3244 = vmul.f32 %v2800, %v3243
    %v3245 = vrcp.pop %v3225
    %v3246 = vmul.f32 %v2803, %v3245
    %v3247 = vrcp.pop %v3226
    %v3248 = vmul.f32 %v2806, %v3247
    %v3249 = vrcp.pop %v3227
    %v3250 = vmul.f32 %v2809, %v3249
    %v3251 = vrcp.pop %v3228
    %v3252 = vmul.f32 %v2812, %v3251
    %v3253 = vrcp.pop %v3229
    %v3254 = vmul.f32 %v2815, %v3253
    %v3255 = vrcp.pop %v3230
    %v3256 = vmul.f32 %v2818, %v3255
    %v3257 = vrcp.pop %v3231
    %v3258 = vmul.f32 %v2821, %v3257
    %v3259 = vrcp.pop %v3232
    %v3260 = vmul.f32 %v2824, %v3259
    %v3261 = vrcp.pop %v3233
    %v3262 = vmul.f32 %v2827, %v3261
    %v3263 = vrcp.pop %v3234
    %v3264 = vmul.f32 %v2830, %v3263
    %v3265 = vrcp.pop %v3235
    %v3266 = vmul.f32 %v2833, %v3265
    %v3267 = vrcp.pop %v3236
    %v3268 = vmul.f32 %v2836, %v3267
    %vm3269 = vcmp.gt.f32.partialorder %v3238, 0.8
    %vm3270 = vcmp.gt.f32.partialorder %v3240, 0.8
    %vm3271 = vcmp.gt.f32.partialorder %v3242, 0.8
    %vm3272 = vcmp.gt.f32.partialorder %v3244, 0.8
    %vm3273 = vcmp.gt.f32.partialorder %v3246, 0.8
    %vm3274 = vcmp.gt.f32.partialorder %v3248, 0.8
    %vm3275 = vcmp.gt.f32.partialorder %v3250, 0.8
    %vm3276 = vcmp.gt.f32.partialorder %v3252, 0.8
    %vm3277 = vcmp.gt.f32.partialorder %v3254, 0.8
    %vm3278 = vcmp.gt.f32.partialorder %v3256, 0.8
    %vm3279 = vcmp.gt.f32.partialorder %v3258, 0.8
    %vm3280 = vcmp.gt.f32.partialorder %v3260, 0.8
    %vm3281 = vcmp.gt.f32.partialorder %v3262, 0.8
    %vm3282 = vcmp.gt.f32.partialorder %v3264, 0.8
    %vm3283 = vcmp.gt.f32.partialorder %v3266, 0.8
    %vm3284 = vcmp.gt.f32.partialorder %v3268, 0.8
    %v3285 = vsel %vm3269, 0.0, %v3238
    %v3286 = vsel %vm3270, 0.0, %v3240
    %v3287 = vsel %vm3271, 0.0, %v3242
    %v3288 = vsel %vm3272, 0.0, %v3244
    %v3289 = vsel %vm3273, 0.0, %v3246
    %v3290 = vsel %vm3274, 0.0, %v3248
    %v3291 = vsel %vm3275, 0.0, %v3250
    %v3292 = vsel %vm3276, 0.0, %v3252
    %v3293 = vsel %vm3277, 0.0, %v3254
    %v3294 = vsel %vm3278, 0.0, %v3256
    %v3295 = vsel %vm3279, 0.0, %v3258
    %v3296 = vsel %vm3280, 0.0, %v3260
    %v3297 = vsel %vm3281, 0.0, %v3262
    %v3298 = vsel %vm3282, 0.0, %v3264
    %v3299 = vsel %vm3283, 0.0, %v3266
    %v3300 = vsel %vm3284, 0.0, %v3268
    %vm3301 = vmxor %vm905, 1
    %vm3302 = vmxor %vm906, 1
    %vm3303 = vmxor %vm907, 1
    %vm3304 = vmxor %vm908, 1
    %vm3305 = vmxor %vm909, 1
    %vm3306 = vmxor %vm910, 1
    %vm3307 = vmxor %vm911, 1
    %vm3308 = vmxor %vm912, 1
    %vm3309 = vmxor %vm913, 1
    %vm3310 = vmxor %vm914, 1
    %vm3311 = vmxor %vm915, 1
    %vm3312 = vmxor %vm916, 1
    %vm3313 = vmxor %vm917, 1
    %vm3314 = vmxor %vm918, 1
    %vm3315 = vmxor %vm919, 1
    %vm3316 = vmxor %vm920, 1
    %vm3317 = vcmp.gt.f32.partialorder %v3285, 0.0
    %vm3318 = vcmp.gt.f32.partialorder %v3286, 0.0
    %vm3319 = vcmp.gt.f32.partialorder %v3287, 0.0
    %vm3320 = vcmp.gt.f32.partialorder %v3288, 0.0
    %vm3321 = vcmp.gt.f32.partialorder %v3289, 0.0
    %vm3322 = vcmp.gt.f32.partialorder %v3290, 0.0
    %vm3323 = vcmp.gt.f32.partialorder %v3291, 0.0
    %vm3324 = vcmp.gt.f32.partialorder %v3292, 0.0
    %vm3325 = vcmp.gt.f32.partialorder %v3293, 0.0
    %vm3326 = vcmp.gt.f32.partialorder %v3294, 0.0
    %vm3327 = vcmp.gt.f32.partialorder %v3295, 0.0
    %vm3328 = vcmp.gt.f32.partialorder %v3296, 0.0
    %vm3329 = vcmp.gt.f32.partialorder %v3297, 0.0
    %vm3330 = vcmp.gt.f32.partialorder %v3298, 0.0
    %vm3331 = vcmp.gt.f32.partialorder %v3299, 0.0
    %vm3332 = vcmp.gt.f32.partialorder %v3300, 0.0
    %vm3333 = vmand %vm3301, %vm3317
    %vm3334 = vmand %vm3302, %vm3318
    %vm3335 = vmand %vm3303, %vm3319
    %vm3336 = vmand %vm3304, %vm3320
    %vm3337 = vmand %vm3305, %vm3321
    %vm3338 = vmand %vm3306, %vm3322
    %vm3339 = vmand %vm3307, %vm3323
    %vm3340 = vmand %vm3308, %vm3324
    %vm3341 = vmand %vm3309, %vm3325
    %vm3342 = vmand %vm3310, %vm3326
    %vm3343 = vmand %vm3311, %vm3327
    %vm3344 = vmand %vm3312, %vm3328
    %vm3345 = vmand %vm3313, %vm3329
    %vm3346 = vmand %vm3314, %vm3330
    %vm3347 = vmand %vm3315, %vm3331
    %vm3348 = vmand %vm3316, %vm3332
    %v3349 = vsub.f32 0.0, %v3285
    %v3350 = vsub.f32 0.0, %v3286
    %v3351 = vsub.f32 0.0, %v3287
    %v3352 = vsub.f32 0.0, %v3288
    %v3353 = vsub.f32 0.0, %v3289
    %v3354 = vsub.f32 0.0, %v3290
    %v3355 = vsub.f32 0.0, %v3291
    %v3356 = vsub.f32 0.0, %v3292
    %v3357 = vsub.f32 0.0, %v3293
    %v3358 = vsub.f32 0.0, %v3294
    %v3359 = vsub.f32 0.0, %v3295
    %v3360 = vsub.f32 0.0, %v3296
    %v3361 = vsub.f32 0.0, %v3297
    %v3362 = vsub.f32 0.0, %v3298
    %v3363 = vsub.f32 0.0, %v3299
    %v3364 = vsub.f32 0.0, %v3300
    %v3365 = vmul.f32 %v3349, 1.442695
    %v3366 = vpow.pop %v3365
    %v3367 = vmul.f32 %v3350, 1.442695
    %v3368 = vpow.pop %v3367
    %v3369 = vmul.f32 %v3351, 1.442695
    %v3370 = vpow.pop %v3369
    %v3371 = vmul.f32 %v3352, 1.442695
    %v3372 = vpow.pop %v3371
    %v3373 = vmul.f32 %v3353, 1.442695
    %v3374 = vpow.pop %v3373
    %v3375 = vmul.f32 %v3354, 1.442695
    %v3376 = vpow.pop %v3375
    %v3377 = vmul.f32 %v3355, 1.442695
    %v3378 = vpow.pop %v3377
    %v3379 = vmul.f32 %v3356, 1.442695
    %v3380 = vpow.pop %v3379
    %v3381 = vmul.f32 %v3357, 1.442695
    %v3382 = vpow.pop %v3381
    %v3383 = vmul.f32 %v3358, 1.442695
    %v3384 = vpow.pop %v3383
    %v3385 = vmul.f32 %v3359, 1.442695
    %v3386 = vpow.pop %v3385
    %v3387 = vmul.f32 %v3360, 1.442695
    %v3388 = vpow.pop %v3387
    %v3389 = vmul.f32 %v3361, 1.442695
    %v3390 = vpow.pop %v3389
    %v3391 = vmul.f32 %v3362, 1.442695
    %v3392 = vpow.pop %v3391
    %v3393 = vmul.f32 %v3363, 1.442695
    %v3394 = vpow.pop %v3393
    %v3395 = vmul.f32 %v3364, 1.442695
    %v3396 = vpow.pop %v3395
    %v3397 = vsel %vm3333, %v3366, 0.0
    %v3398 = vsel %vm3334, %v3368, 0.0
    %v3399 = vsel %vm3335, %v3370, 0.0
    %v3400 = vsel %vm3336, %v3372, 0.0
    %v3401 = vsel %vm3337, %v3374, 0.0
    %v3402 = vsel %vm3338, %v3376, 0.0
    %v3403 = vsel %vm3339, %v3378, 0.0
    %v3404 = vsel %vm3340, %v3380, 0.0
    %v3405 = vsel %vm3341, %v3382, 0.0
    %v3406 = vsel %vm3342, %v3384, 0.0
    %v3407 = vsel %vm3343, %v3386, 0.0
    %v3408 = vsel %vm3344, %v3388, 0.0
    %v3409 = vsel %vm3345, %v3390, 0.0
    %v3410 = vsel %vm3346, %v3392, 0.0
    %v3411 = vsel %vm3347, %v3394, 0.0
    %v3412 = vsel %vm3348, %v3396, 0.0
    %v3413 = vadd.f32 %v3397, %v3398
    %v3414 = vadd.f32 %v3413, %v3399
    %v3415 = vadd.f32 %v3414, %v3400
    %v3416 = vadd.f32 %v3415, %v3401
    %v3417 = vadd.f32 %v3416, %v3402
    %v3418 = vadd.f32 %v3417, %v3403
    %v3419 = vadd.f32 %v3418, %v3404
    %v3420 = vadd.f32 %v3419, %v3405
    %v3421 = vadd.f32 %v3420, %v3406
    %v3422 = vadd.f32 %v3421, %v3407
    %v3423 = vadd.f32 %v3422, %v3408
    %v3424 = vadd.f32 %v3423, %v3409
    %v3425 = vadd.f32 %v3424, %v3410
    %v3426 = vadd.f32 %v3425, %v3411
    %v3427 = vadd.f32 %v3426, %v3412
    %v3428 = vrot.slane %v3427, 4
    %v3429 = vadd.f32 %v3427, %v3428
    %v3430 = vrot.slane %v3429, 2
    %v3431 = vadd.f32 %v3429, %v3430
    %v3432 = vrot.slane %v3431, 1
    %v3433 = vadd.f32 %v3431, %v3432
    %v3434 = vsel %vm3333, 1, 0
    %v3435 = vsel %vm3334, 1, 0
    %v3436 = vsel %vm3335, 1, 0
    %v3437 = vsel %vm3336, 1, 0
    %v3438 = vsel %vm3337, 1, 0
    %v3439 = vsel %vm3338, 1, 0
    %v3440 = vsel %vm3339, 1, 0
    %v3441 = vsel %vm3340, 1, 0
    %v3442 = vsel %vm3341, 1, 0
    %v3443 = vsel %vm3342, 1, 0
    %v3444 = vsel %vm3343, 1, 0
    %v3445 = vsel %vm3344, 1, 0
    %v3446 = vsel %vm3345, 1, 0
    %v3447 = vsel %vm3346, 1, 0
    %v3448 = vsel %vm3347, 1, 0
    %v3449 = vsel %vm3348, 1, 0
    %v3450 = vcvt.s32.f32 %v3434
    %v3451 = vcvt.s32.f32 %v3435
    %v3452 = vcvt.s32.f32 %v3436
    %v3453 = vcvt.s32.f32 %v3437
    %v3454 = vcvt.s32.f32 %v3438
    %v3455 = vcvt.s32.f32 %v3439
    %v3456 = vcvt.s32.f32 %v3440
    %v3457 = vcvt.s32.f32 %v3441
    %v3458 = vcvt.s32.f32 %v3442
    %v3459 = vcvt.s32.f32 %v3443
    %v3460 = vcvt.s32.f32 %v3444
    %v3461 = vcvt.s32.f32 %v3445
    %v3462 = vcvt.s32.f32 %v3446
    %v3463 = vcvt.s32.f32 %v3447
    %v3464 = vcvt.s32.f32 %v3448
    %v3465 = vcvt.s32.f32 %v3449
    %v3466 = vadd.f32 %v3450, %v3451
    %v3467 = vadd.f32 %v3466, %v3452
    %v3468 = vadd.f32 %v3467, %v3453
    %v3469 = vadd.f32 %v3468, %v3454
    %v3470 = vadd.f32 %v3469, %v3455
    %v3471 = vadd.f32 %v3470, %v3456
    %v3472 = vadd.f32 %v3471, %v3457
    %v3473 = vadd.f32 %v3472, %v3458
    %v3474 = vadd.f32 %v3473, %v3459
    %v3475 = vadd.f32 %v3474, %v3460
    %v3476 = vadd.f32 %v3475, %v3461
    %v3477 = vadd.f32 %v3476, %v3462
    %v3478 = vadd.f32 %v3477, %v3463
    %v3479 = vadd.f32 %v3478, %v3464
    %v3480 = vadd.f32 %v3479, %v3465
    %v3481 = vrot.slane %v3480, 4
    %v3482 = vadd.f32 %v3480, %v3481
    %v3483 = vrot.slane %v3482, 2
    %v3484 = vadd.f32 %v3482, %v3483
    %v3485 = vrot.slane %v3484, 1
    %v3486 = vadd.f32 %v3484, %v3485
    %v3487 = vadd.f32 %v3486, 1e-06
    %v3488 = vrcp.pop %v3487
    %v3489 = vmul.f32 %v3433, %v3488
    %vm3490 = vcmask 0
    %3491 = vst.msk [vmem:[#allocation42] sm:$0x1] %vm3490, %v3489
    %v3492 = vld [vmem:[#allocation30] sm:$0xff]
    %v3493 = vld [vmem:[#allocation30 + $0x8] sm:$0xff]
    %v3494 = vld [vmem:[#allocation30 + $0x10] sm:$0xff]
    %v3495 = vld [vmem:[#allocation30 + $0x18] sm:$0xff]
    %vm3504 = vcmask 1041409
    %v3505 = vsel %vm3504, %v673, %v672
    %vm3506 = vcmask 1042434
    %v3507 = vsel %vm3506, %v674, %v3505
    %vm3508 = vcmask 1043459
    %v3509 = vsel %vm3508, %v675, %v3507
    %vm3510 = vcmask 1044484
    %v3511 = vsel %vm3510, %v676, %v3509
    %vm3512 = vcmask 1045509
    %v3513 = vsel %vm3512, %v677, %v3511
    %vm3514 = vcmask 1046534
    %v3515 = vsel %vm3514, %v678, %v3513
    %vm3516 = vcmask 1047559
    %v3517 = vsel %vm3516, %v679, %v3515
    %v3518 = vsel %vm614, %v3517, 0
    %3520 = vmatprep.subr.mxu0 0.0
    %3521 = vmatpush1.msra.mxu0 %v3492
    %3522 = vmatprep.subr.mxu0 0.0
    %3523 = vmatpush1.msra.mxu0 %v3493
    %3524 = vmatprep.subr.mxu0 0.0
    %3525 = vmatpush1.msra.mxu0 %v3494
    %3526 = vmatprep.subr.mxu0 0.0
    %3527 = vmatpush1.msra.mxu0 %v3495
    %3528 = vmatprep.subr.mxu0 0.0
    %3529 = vmatpush1.msra.mxu0 0.0
    %3530 = vmatprep.subr.mxu0 0.0
    %3531 = vmatpush1.msra.mxu0 0.0
    %3532 = vmatprep.subr.mxu0 0.0
    %3533 = vmatpush1.msra.mxu0 0.0
    %3534 = vmatprep.subr.mxu0 0.0
    %3535 = vmatpush1.msra.mxu0 0.0
    %3536 = vmatprep.subr.mxu0 0.0
    %3537 = vmatpush1.msra.mxu0 0.0
    %3538 = vmatprep.subr.mxu0 0.0
    %3539 = vmatpush1.msra.mxu0 0.0
    %3540 = vmatprep.subr.mxu0 0.0
    %3541 = vmatpush1.msra.mxu0 0.0
    %3542 = vmatprep.subr.mxu0 0.0
    %3543 = vmatpush1.msra.mxu0 0.0
    %3544 = vmatprep.subr.mxu0 0.0
    %3545 = vmatpush1.msra.mxu0 0.0
    %3546 = vmatprep.subr.mxu0 0.0
    %3547 = vmatpush1.msra.mxu0 0.0
    %3548 = vmatprep.subr.mxu0 0.0
    %3549 = vmatpush1.msra.mxu0 0.0
    %3550 = vmatprep.subr.mxu0 0.0
    %3551 = vmatpush1.msra.mxu0 0.0
    %3552 = vmatprep.subr.mxu0 0.0
    %3553 = vmatpush1.msra.mxu0 0.0
    %3554 = vmatprep.subr.mxu0 0.0
    %3555 = vmatpush1.msra.mxu0 0.0
    %3556 = vmatprep.subr.mxu0 0.0
    %3557 = vmatpush1.msra.mxu0 0.0
    %3558 = vmatprep.subr.mxu0 0.0
    %3559 = vmatpush1.msra.mxu0 0.0
    %3560 = vmatprep.subr.mxu0 0.0
    %3561 = vmatpush1.msra.mxu0 0.0
    %3562 = vmatprep.subr.mxu0 0.0
    %3563 = vmatpush1.msra.mxu0 0.0
    %3564 = vmatprep.subr.mxu0 0.0
    %3565 = vmatpush1.msra.mxu0 0.0
    %3566 = vmatprep.subr.mxu0 0.0
    %3567 = vmatpush1.msra.mxu0 0.0
    %3568 = vmatprep.subr.mxu0 0.0
    %3569 = vmatpush1.msra.mxu0 0.0
    %3570 = vmatprep.subr.mxu0 0.0
    %3571 = vmatpush1.msra.mxu0 0.0
    %3572 = vmatprep.subr.mxu0 0.0
    %3573 = vmatpush1.msra.mxu0 0.0
    %3574 = vmatprep.subr.mxu0 0.0
    %3575 = vmatpush1.msra.mxu0 0.0
    %3576 = vmatprep.subr.mxu0 0.0
    %3577 = vmatpush1.msra.mxu0 0.0
    %3578 = vmatprep.subr.mxu0 0.0
    %3579 = vmatpush1.msra.mxu0 0.0
    %3580 = vmatprep.subr.mxu0 0.0
    %3581 = vmatpush1.msra.mxu0 0.0
    %3582 = vmatprep.subr.mxu0 0.0
    %3583 = vmatpush1.msra.mxu0 0.0
    %3584 = vmatprep.mubr.f32.mxu0 0.0
    %3585 = vmatmul.mubr.f32.gmra.mrb[0].mxu0 %v3518
    %v3586 = vpop.f32.mrb[0].mxu0
    %v3587 = vadd.f32 0.0, %v3586
    %v3588 = vpop.f32.mrb[0].mxu0
    %3589 = vdwg.mxu0
    %v3590 = vld [vmem:[#allocation31] sm:$0xff]
    %v3591 = vld [vmem:[#allocation31 + $0x8] sm:$0xff]
    %v3592 = vld [vmem:[#allocation31 + $0x10] sm:$0xff]
    %v3593 = vld [vmem:[#allocation31 + $0x18] sm:$0xff]
    %v3595 = vsel %vm614, %v2725, 0
    %v3598 = vsel %vm614, %v2726, 0
    %v3601 = vsel %vm614, %v2727, 0
    %v3604 = vsel %vm614, %v2728, 0
    %v3607 = vsel %vm614, %v2729, 0
    %v3610 = vsel %vm614, %v2730, 0
    %v3613 = vsel %vm614, %v2731, 0
    %v3616 = vsel %vm614, %v2732, 0
    %v3619 = vsel %vm614, %v2733, 0
    %v3622 = vsel %vm614, %v2734, 0
    %v3625 = vsel %vm614, %v2735, 0
    %v3628 = vsel %vm614, %v2736, 0
    %v3631 = vsel %vm614, %v2737, 0
    %v3634 = vsel %vm614, %v2738, 0
    %v3637 = vsel %vm614, %v2739, 0
    %v3640 = vsel %vm614, %v2740, 0
    %3642 = vmatprep.subr.mxu0 0.0
    %3643 = vmatpush1.msra.mxu0 %v3590
    %3644 = vmatprep.subr.mxu0 0.0
    %3645 = vmatpush1.msra.mxu0 %v3591
    %3646 = vmatprep.subr.mxu0 0.0
    %3647 = vmatpush1.msra.mxu0 %v3592
    %3648 = vmatprep.subr.mxu0 0.0
    %3649 = vmatpush1.msra.mxu0 %v3593
    %3650 = vmatprep.subr.mxu0 0.0
    %3651 = vmatpush1.msra.mxu0 0.0
    %3652 = vmatprep.subr.mxu0 0.0
    %3653 = vmatpush1.msra.mxu0 0.0
    %3654 = vmatprep.subr.mxu0 0.0
    %3655 = vmatpush1.msra.mxu0 0.0
    %3656 = vmatprep.subr.mxu0 0.0
    %3657 = vmatpush1.msra.mxu0 0.0
    %3658 = vmatprep.subr.mxu0 0.0
    %3659 = vmatpush1.msra.mxu0 0.0
    %3660 = vmatprep.subr.mxu0 0.0
    %3661 = vmatpush1.msra.mxu0 0.0
    %3662 = vmatprep.subr.mxu0 0.0
    %3663 = vmatpush1.msra.mxu0 0.0
    %3664 = vmatprep.subr.mxu0 0.0
    %3665 = vmatpush1.msra.mxu0 0.0
    %3666 = vmatprep.subr.mxu0 0.0
    %3667 = vmatpush1.msra.mxu0 0.0
    %3668 = vmatprep.subr.mxu0 0.0
    %3669 = vmatpush1.msra.mxu0 0.0
    %3670 = vmatprep.subr.mxu0 0.0
    %3671 = vmatpush1.msra.mxu0 0.0
    %3672 = vmatprep.subr.mxu0 0.0
    %3673 = vmatpush1.msra.mxu0 0.0
    %3674 = vmatprep.subr.mxu0 0.0
    %3675 = vmatpush1.msra.mxu0 0.0
    %3676 = vmatprep.subr.mxu0 0.0
    %3677 = vmatpush1.msra.mxu0 0.0
    %3678 = vmatprep.subr.mxu0 0.0
    %3679 = vmatpush1.msra.mxu0 0.0
    %3680 = vmatprep.subr.mxu0 0.0
    %3681 = vmatpush1.msra.mxu0 0.0
    %3682 = vmatprep.subr.mxu0 0.0
    %3683 = vmatpush1.msra.mxu0 0.0
    %3684 = vmatprep.subr.mxu0 0.0
    %3685 = vmatpush1.msra.mxu0 0.0
    %3686 = vmatprep.subr.mxu0 0.0
    %3687 = vmatpush1.msra.mxu0 0.0
    %3688 = vmatprep.subr.mxu0 0.0
    %3689 = vmatpush1.msra.mxu0 0.0
    %3690 = vmatprep.subr.mxu0 0.0
    %3691 = vmatpush1.msra.mxu0 0.0
    %3692 = vmatprep.subr.mxu0 0.0
    %3693 = vmatpush1.msra.mxu0 0.0
    %3694 = vmatprep.subr.mxu0 0.0
    %3695 = vmatpush1.msra.mxu0 0.0
    %3696 = vmatprep.subr.mxu0 0.0
    %3697 = vmatpush1.msra.mxu0 0.0
    %3698 = vmatprep.subr.mxu0 0.0
    %3699 = vmatpush1.msra.mxu0 0.0
    %3700 = vmatprep.subr.mxu0 0.0
    %3701 = vmatpush1.msra.mxu0 0.0
    %3702 = vmatprep.subr.mxu0 0.0
    %3703 = vmatpush1.msra.mxu0 0.0
    %3704 = vmatprep.subr.mxu0 0.0
    %3705 = vmatpush1.msra.mxu0 0.0
    %3706 = vmatprep.mubr.f32.mxu0 0.0
    %3707 = vmatmul.mubr.f32.gmra.mrb[0].mxu0 %v3595
    %v3708 = vpop.f32.mrb[0].mxu0
    %v3709 = vadd.f32 0.0, %v3708
    %v3710 = vpop.f32.mrb[0].mxu0
    %3711 = vmatprep.mubr.f32.mxu0 0.0
    %3712 = vmatmul.mubr.f32.gmra.mrb[0].mxu0 %v3598
    %v3713 = vpop.f32.mrb[0].mxu0
    %v3714 = vadd.f32 0.0, %v3713
    %v3715 = vpop.f32.mrb[0].mxu0
    %3716 = vmatprep.mubr.f32.mxu0 0.0
    %3717 = vmatmul.mubr.f32.gmra.mrb[0].mxu0 %v3601
    %v3718 = vpop.f32.mrb[0].mxu0
    %v3719 = vadd.f32 0.0, %v3718
    %v3720 = vpop.f32.mrb[0].mxu0
    %3721 = vmatprep.mubr.f32.mxu0 0.0
    %3722 = vmatmul.mubr.f32.gmra.mrb[0].mxu0 %v3604
    %v3723 = vpop.f32.mrb[0].mxu0
    %v3724 = vadd.f32 0.0, %v3723
    %v3725 = vpop.f32.mrb[0].mxu0
    %3726 = vmatprep.mubr.f32.mxu0 0.0
    %3727 = vmatmul.mubr.f32.gmra.mrb[0].mxu0 %v3607
    %v3728 = vpop.f32.mrb[0].mxu0
    %v3729 = vadd.f32 0.0, %v3728
    %v3730 = vpop.f32.mrb[0].mxu0
    %3731 = vmatprep.mubr.f32.mxu0 0.0
    %3732 = vmatmul.mubr.f32.gmra.mrb[0].mxu0 %v3610
    %v3733 = vpop.f32.mrb[0].mxu0
    %v3734 = vadd.f32 0.0, %v3733
    %v3735 = vpop.f32.mrb[0].mxu0
    %3736 = vmatprep.mubr.f32.mxu0 0.0
    %3737 = vmatmul.mubr.f32.gmra.mrb[0].mxu0 %v3613
    %v3738 = vpop.f32.mrb[0].mxu0
    %v3739 = vadd.f32 0.0, %v3738
    %v3740 = vpop.f32.mrb[0].mxu0
    %3741 = vmatprep.mubr.f32.mxu0 0.0
    %3742 = vmatmul.mubr.f32.gmra.mrb[0].mxu0 %v3616
    %v3743 = vpop.f32.mrb[0].mxu0
    %v3744 = vadd.f32 0.0, %v3743
    %v3745 = vpop.f32.mrb[0].mxu0
    %3746 = vmatprep.mubr.f32.mxu0 0.0
    %3747 = vmatmul.mubr.f32.gmra.mrb[0].mxu0 %v3619
    %v3748 = vpop.f32.mrb[0].mxu0
    %v3749 = vadd.f32 0.0, %v3748
    %v3750 = vpop.f32.mrb[0].mxu0
    %3751 = vmatprep.mubr.f32.mxu0 0.0
    %3752 = vmatmul.mubr.f32.gmra.mrb[0].mxu0 %v3622
    %v3753 = vpop.f32.mrb[0].mxu0
    %v3754 = vadd.f32 0.0, %v3753
    %v3755 = vpop.f32.mrb[0].mxu0
    %3756 = vmatprep.mubr.f32.mxu0 0.0
    %3757 = vmatmul.mubr.f32.gmra.mrb[0].mxu0 %v3625
    %v3758 = vpop.f32.mrb[0].mxu0
    %v3759 = vadd.f32 0.0, %v3758
    %v3760 = vpop.f32.mrb[0].mxu0
    %3761 = vmatprep.mubr.f32.mxu0 0.0
    %3762 = vmatmul.mubr.f32.gmra.mrb[0].mxu0 %v3628
    %v3763 = vpop.f32.mrb[0].mxu0
    %v3764 = vadd.f32 0.0, %v3763
    %v3765 = vpop.f32.mrb[0].mxu0
    %3766 = vmatprep.mubr.f32.mxu0 0.0
    %3767 = vmatmul.mubr.f32.gmra.mrb[0].mxu0 %v3631
    %v3768 = vpop.f32.mrb[0].mxu0
    %v3769 = vadd.f32 0.0, %v3768
    %v3770 = vpop.f32.mrb[0].mxu0
    %3771 = vmatprep.mubr.f32.mxu0 0.0
    %3772 = vmatmul.mubr.f32.gmra.mrb[0].mxu0 %v3634
    %v3773 = vpop.f32.mrb[0].mxu0
    %v3774 = vadd.f32 0.0, %v3773
    %v3775 = vpop.f32.mrb[0].mxu0
    %3776 = vmatprep.mubr.f32.mxu0 0.0
    %3777 = vmatmul.mubr.f32.gmra.mrb[0].mxu0 %v3637
    %v3778 = vpop.f32.mrb[0].mxu0
    %v3779 = vadd.f32 0.0, %v3778
    %v3780 = vpop.f32.mrb[0].mxu0
    %3781 = vmatprep.mubr.f32.mxu0 0.0
    %3782 = vmatmul.mubr.f32.gmra.mrb[0].mxu0 %v3640
    %v3783 = vpop.f32.mrb[0].mxu0
    %v3784 = vadd.f32 0.0, %v3783
    %v3785 = vpop.f32.mrb[0].mxu0
    %3786 = vdwg.mxu0
    %v3788 = vcombine.high %v3587, %v3587
    %v3790 = vunpack.c.l.s4 1966171168
    %v3791 = vunpack.c.0.s8 %v3790
    %v3792 = vlaneseq
    %v3793 = vshrl.u32 %v3792, 7
    %v3794 = vsub.s32 %v3791, %v3793
    %v3795 = vrot.slane %v3587, %v3794
    %v3797 = vunpack.c.l.s4 1966171168
    %v3798 = vunpack.c.0.s8 %v3797
    %v3799 = vlaneseq
    %v3800 = vshrl.u32 %v3799, 7
    %v3801 = vsub.s32 %v3798, %v3800
    %v3802 = vrot.slane %v3788, %v3801
    %v3803 = vcombine.high %v3795, %v3795
    %v3804 = vcombine.high %v3802, %v3802
    %v3806 = vunpack.c.l.s4 1966171168
    %v3807 = vunpack.c.0.s8 %v3806
    %v3808 = vlaneseq
    %v3809 = vshrl.u32 %v3808, 7
    %v3810 = vsub.s32 %v3807, %v3809
    %v3811 = vrot.slane %v3795, %v3810
    %v3813 = vunpack.c.l.s4 1966171168
    %v3814 = vunpack.c.0.s8 %v3813
    %v3815 = vlaneseq
    %v3816 = vshrl.u32 %v3815, 7
    %v3817 = vsub.s32 %v3814, %v3816
    %v3818 = vrot.slane %v3802, %v3817
    %v3820 = vunpack.c.l.s4 1966171168
    %v3821 = vunpack.c.0.s8 %v3820
    %v3822 = vlaneseq
    %v3823 = vshrl.u32 %v3822, 7
    %v3824 = vsub.s32 %v3821, %v3823
    %v3825 = vrot.slane %v3803, %v3824
    %v3827 = vunpack.c.l.s4 1966171168
    %v3828 = vunpack.c.0.s8 %v3827
    %v3829 = vlaneseq
    %v3830 = vshrl.u32 %v3829, 7
    %v3831 = vsub.s32 %v3828, %v3830
    %v3832 = vrot.slane %v3804, %v3831
    %v3833 = vcombine.high %v3811, %v3811
    %v3834 = vcombine.high %v3818, %v3818
    %v3835 = vcombine.high %v3825, %v3825
    %v3836 = vcombine.high %v3832, %v3832
    %v3837 = vlaneseq
    %v3838 = vshrl.u32 %v3837, 7
    %v3839 = vsub.s32 0, %v3838
    %v3840 = vrot.slane %v3811, %v3839
    %v3841 = vlaneseq
    %v3842 = vshrl.u32 %v3841, 7
    %v3843 = vsub.s32 0, %v3842
    %v3844 = vrot.slane %v3825, %v3843
    %v3845 = vlaneseq
    %v3846 = vshrl.u32 %v3845, 7
    %v3847 = vsub.s32 0, %v3846
    %v3848 = vrot.slane %v3833, %v3847
    %v3849 = vlaneseq
    %v3850 = vshrl.u32 %v3849, 7
    %v3851 = vsub.s32 0, %v3850
    %v3852 = vrot.slane %v3835, %v3851
    %v3853 = vlaneseq
    %v3854 = vshrl.u32 %v3853, 7
    %v3855 = vsub.s32 0, %v3854
    %v3856 = vrot.slane %v3818, %v3855
    %v3857 = vlaneseq
    %v3858 = vshrl.u32 %v3857, 7
    %v3859 = vsub.s32 0, %v3858
    %v3860 = vrot.slane %v3832, %v3859
    %v3861 = vlaneseq
    %v3862 = vshrl.u32 %v3861, 7
    %v3863 = vsub.s32 0, %v3862
    %v3864 = vrot.slane %v3834, %v3863
    %v3865 = vlaneseq
    %v3866 = vshrl.u32 %v3865, 7
    %v3867 = vsub.s32 0, %v3866
    %v3868 = vrot.slane %v3836, %v3867
    %v3877 = vadd.f32 %v3709, %v3840
    %v3878 = vadd.f32 %v3714, %v3840
    %v3879 = vadd.f32 %v3719, %v3844
    %v3880 = vadd.f32 %v3724, %v3844
    %v3881 = vadd.f32 %v3729, %v3848
    %v3882 = vadd.f32 %v3734, %v3848
    %v3883 = vadd.f32 %v3739, %v3852
    %v3884 = vadd.f32 %v3744, %v3852
    %v3885 = vadd.f32 %v3749, %v3856
    %v3886 = vadd.f32 %v3754, %v3856
    %v3887 = vadd.f32 %v3759, %v3860
    %v3888 = vadd.f32 %v3764, %v3860
    %v3889 = vadd.f32 %v3769, %v3864
    %v3890 = vadd.f32 %v3774, %v3864
    %v3891 = vadd.f32 %v3779, %v3868
    %v3892 = vadd.f32 %v3784, %v3868
    %v3893 = vld [vmem:[#allocation33] sm:$0x1]
    %v3895 = vlaneseq
    %v3896 = vshrl.u32 %v3895, 7
    %v3897 = vsub.s32 0, %v3896
    %v3898 = vrot.slane %v3893, %v3897
    %v3900 = vadd.f32 %v3877, %v3898
    %v3901 = vadd.f32 %v3878, %v3898
    %v3902 = vadd.f32 %v3879, %v3898
    %v3903 = vadd.f32 %v3880, %v3898
    %v3904 = vadd.f32 %v3881, %v3898
    %v3905 = vadd.f32 %v3882, %v3898
    %v3906 = vadd.f32 %v3883, %v3898
    %v3907 = vadd.f32 %v3884, %v3898
    %v3908 = vadd.f32 %v3885, %v3898
    %v3909 = vadd.f32 %v3886, %v3898
    %v3910 = vadd.f32 %v3887, %v3898
    %v3911 = vadd.f32 %v3888, %v3898
    %v3912 = vadd.f32 %v3889, %v3898
    %v3913 = vadd.f32 %v3890, %v3898
    %v3914 = vadd.f32 %v3891, %v3898
    %v3915 = vadd.f32 %v3892, %v3898
    %v3916 = vxor.u32 %v3900, 2147483648
    %v3917 = vxor.u32 %v3901, 2147483648
    %v3918 = vxor.u32 %v3902, 2147483648
    %v3919 = vxor.u32 %v3903, 2147483648
    %v3920 = vxor.u32 %v3904, 2147483648
    %v3921 = vxor.u32 %v3905, 2147483648
    %v3922 = vxor.u32 %v3906, 2147483648
    %v3923 = vxor.u32 %v3907, 2147483648
    %v3924 = vxor.u32 %v3908, 2147483648
    %v3925 = vxor.u32 %v3909, 2147483648
    %v3926 = vxor.u32 %v3910, 2147483648
    %v3927 = vxor.u32 %v3911, 2147483648
    %v3928 = vxor.u32 %v3912, 2147483648
    %v3929 = vxor.u32 %v3913, 2147483648
    %v3930 = vxor.u32 %v3914, 2147483648
    %v3931 = vxor.u32 %v3915, 2147483648
    %v3932 = vmul.f32 %v3916, 1.442695
    %v3933 = vpow.pop %v3932
    %v3934 = vmul.f32 %v3917, 1.442695
    %v3935 = vpow.pop %v3934
    %v3936 = vmul.f32 %v3918, 1.442695
    %v3937 = vpow.pop %v3936
    %v3938 = vmul.f32 %v3919, 1.442695
    %v3939 = vpow.pop %v3938
    %v3940 = vmul.f32 %v3920, 1.442695
    %v3941 = vpow.pop %v3940
    %v3942 = vmul.f32 %v3921, 1.442695
    %v3943 = vpow.pop %v3942
    %v3944 = vmul.f32 %v3922, 1.442695
    %v3945 = vpow.pop %v3944
    %v3946 = vmul.f32 %v3923, 1.442695
    %v3947 = vpow.pop %v3946
    %v3948 = vmul.f32 %v3924, 1.442695
    %v3949 = vpow.pop %v3948
    %v3950 = vmul.f32 %v3925, 1.442695
    %v3951 = vpow.pop %v3950
    %v3952 = vmul.f32 %v3926, 1.442695
    %v3953 = vpow.pop %v3952
    %v3954 = vmul.f32 %v3927, 1.442695
    %v3955 = vpow.pop %v3954
    %v3956 = vmul.f32 %v3928, 1.442695
    %v3957 = vpow.pop %v3956
    %v3958 = vmul.f32 %v3929, 1.442695
    %v3959 = vpow.pop %v3958
    %v3960 = vmul.f32 %v3930, 1.442695
    %v3961 = vpow.pop %v3960
    %v3962 = vmul.f32 %v3931, 1.442695
    %v3963 = vpow.pop %v3962
    %v3964 = vadd.f32 %v3933, 1.0
    %v3965 = vadd.f32 %v3935, 1.0
    %v3966 = vadd.f32 %v3937, 1.0
    %v3967 = vadd.f32 %v3939, 1.0
    %v3968 = vadd.f32 %v3941, 1.0
    %v3969 = vadd.f32 %v3943, 1.0
    %v3970 = vadd.f32 %v3945, 1.0
    %v3971 = vadd.f32 %v3947, 1.0
    %v3972 = vadd.f32 %v3949, 1.0
    %v3973 = vadd.f32 %v3951, 1.0
    %v3974 = vadd.f32 %v3953, 1.0
    %v3975 = vadd.f32 %v3955, 1.0
    %v3976 = vadd.f32 %v3957, 1.0
    %v3977 = vadd.f32 %v3959, 1.0
    %v3978 = vadd.f32 %v3961, 1.0
    %v3979 = vadd.f32 %v3963, 1.0
    %v3980 = vrcp.pop %v3964
    %v3981 = vmul.f32 1.0, %v3980
    %v3982 = vrcp.pop %v3965
    %v3983 = vmul.f32 1.0, %v3982
    %v3984 = vrcp.pop %v3966
    %v3985 = vmul.f32 1.0, %v3984
    %v3986 = vrcp.pop %v3967
    %v3987 = vmul.f32 1.0, %v3986
    %v3988 = vrcp.pop %v3968
    %v3989 = vmul.f32 1.0, %v3988
    %v3990 = vrcp.pop %v3969
    %v3991 = vmul.f32 1.0, %v3990
    %v3992 = vrcp.pop %v3970
    %v3993 = vmul.f32 1.0, %v3992
    %v3994 = vrcp.pop %v3971
    %v3995 = vmul.f32 1.0, %v3994
    %v3996 = vrcp.pop %v3972
    %v3997 = vmul.f32 1.0, %v3996
    %v3998 = vrcp.pop %v3973
    %v3999 = vmul.f32 1.0, %v3998
    %v4000 = vrcp.pop %v3974
    %v4001 = vmul.f32 1.0, %v4000
    %v4002 = vrcp.pop %v3975
    %v4003 = vmul.f32 1.0, %v4002
    %v4004 = vrcp.pop %v3976
    %v4005 = vmul.f32 1.0, %v4004
    %v4006 = vrcp.pop %v3977
    %v4007 = vmul.f32 1.0, %v4006
    %v4008 = vrcp.pop %v3978
    %v4009 = vmul.f32 1.0, %v4008
    %v4010 = vrcp.pop %v3979
    %v4011 = vmul.f32 1.0, %v4010
    %4028 = vrot.lane.b32.xlu0 %v3981, 96
    %v4029 = vpop.permute.xlu0 %4028
    %4030 = vrot.lane.b32.xlu0 %v3983, 96
    %v4031 = vpop.permute.xlu0 %4030
    %4032 = vrot.lane.b32.xlu0 %v3985, 96
    %v4033 = vpop.permute.xlu0 %4032
    %4034 = vrot.lane.b32.xlu0 %v3987, 96
    %v4035 = vpop.permute.xlu0 %4034
    %4036 = vrot.lane.b32.xlu0 %v3989, 96
    %v4037 = vpop.permute.xlu0 %4036
    %4038 = vrot.lane.b32.xlu0 %v3991, 96
    %v4039 = vpop.permute.xlu0 %4038
    %4040 = vrot.lane.b32.xlu0 %v3993, 96
    %v4041 = vpop.permute.xlu0 %4040
    %4042 = vrot.lane.b32.xlu0 %v3995, 96
    %v4043 = vpop.permute.xlu0 %4042
    %4044 = vrot.lane.b32.xlu0 %v3997, 96
    %v4045 = vpop.permute.xlu0 %4044
    %4046 = vrot.lane.b32.xlu0 %v3999, 96
    %v4047 = vpop.permute.xlu0 %4046
    %4048 = vrot.lane.b32.xlu0 %v4001, 96
    %v4049 = vpop.permute.xlu0 %4048
    %4050 = vrot.lane.b32.xlu0 %v4003, 96
    %v4051 = vpop.permute.xlu0 %4050
    %4052 = vrot.lane.b32.xlu0 %v4005, 96
    %v4053 = vpop.permute.xlu0 %4052
    %4054 = vrot.lane.b32.xlu0 %v4007, 96
    %v4055 = vpop.permute.xlu0 %4054
    %4056 = vrot.lane.b32.xlu0 %v4009, 96
    %v4057 = vpop.permute.xlu0 %4056
    %4058 = vrot.lane.b32.xlu0 %v4011, 96
    %v4059 = vpop.permute.xlu0 %4058
    %v4076 = vmul.f32 %v3900, %v4029
    %v4077 = vmul.f32 %v3901, %v4031
    %v4078 = vmul.f32 %v3902, %v4033
    %v4079 = vmul.f32 %v3903, %v4035
    %v4080 = vmul.f32 %v3904, %v4037
    %v4081 = vmul.f32 %v3905, %v4039
    %v4082 = vmul.f32 %v3906, %v4041
    %v4083 = vmul.f32 %v3907, %v4043
    %v4084 = vmul.f32 %v3908, %v4045
    %v4085 = vmul.f32 %v3909, %v4047
    %v4086 = vmul.f32 %v3910, %v4049
    %v4087 = vmul.f32 %v3911, %v4051
    %v4088 = vmul.f32 %v3912, %v4053
    %v4089 = vmul.f32 %v3913, %v4055
    %v4090 = vmul.f32 %v3914, %v4057
    %v4091 = vmul.f32 %v3915, %v4059
    %v4092 = vld [vmem:[#allocation34] sm:$0x1]
    %v4094 = vlaneseq
    %v4095 = vshrl.u32 %v4094, 7
    %v4096 = vsub.s32 0, %v4095
    %v4097 = vrot.slane %v4092, %v4096
    %v4099 = vmul.f32 %v4076, %v4097
    %v4100 = vmul.f32 %v4077, %v4097
    %v4101 = vmul.f32 %v4078, %v4097
    %v4102 = vmul.f32 %v4079, %v4097
    %v4103 = vmul.f32 %v4080, %v4097
    %v4104 = vmul.f32 %v4081, %v4097
    %v4105 = vmul.f32 %v4082, %v4097
    %v4106 = vmul.f32 %v4083, %v4097
    %v4107 = vmul.f32 %v4084, %v4097
    %v4108 = vmul.f32 %v4085, %v4097
    %v4109 = vmul.f32 %v4086, %v4097
    %v4110 = vmul.f32 %v4087, %v4097
    %v4111 = vmul.f32 %v4088, %v4097
    %v4112 = vmul.f32 %v4089, %v4097
    %v4113 = vmul.f32 %v4090, %v4097
    %v4114 = vmul.f32 %v4091, %v4097
    %v4115 = vsel %vm614, %v4099, 0.0
    %4116 = vadd.xlane.f32.xlu0 %v4115
    %v4117 = vpop.xlane.xlu0 %4116
    %v4118 = vsel %vm614, %v4100, 0.0
    %4119 = vadd.xlane.f32.xlu0 %v4118
    %v4120 = vpop.xlane.xlu0 %4119
    %v4121 = vsel %vm614, %v4101, 0.0
    %4122 = vadd.xlane.f32.xlu0 %v4121
    %v4123 = vpop.xlane.xlu0 %4122
    %v4124 = vsel %vm614, %v4102, 0.0
    %4125 = vadd.xlane.f32.xlu0 %v4124
    %v4126 = vpop.xlane.xlu0 %4125
    %v4127 = vsel %vm614, %v4103, 0.0
    %4128 = vadd.xlane.f32.xlu0 %v4127
    %v4129 = vpop.xlane.xlu0 %4128
    %v4130 = vsel %vm614, %v4104, 0.0
    %4131 = vadd.xlane.f32.xlu0 %v4130
    %v4132 = vpop.xlane.xlu0 %4131
    %v4133 = vsel %vm614, %v4105, 0.0
    %4134 = vadd.xlane.f32.xlu0 %v4133
    %v4135 = vpop.xlane.xlu0 %4134
    %v4136 = vsel %vm614, %v4106, 0.0
    %4137 = vadd.xlane.f32.xlu0 %v4136
    %v4138 = vpop.xlane.xlu0 %4137
    %v4139 = vsel %vm614, %v4107, 0.0
    %4140 = vadd.xlane.f32.xlu0 %v4139
    %v4141 = vpop.xlane.xlu0 %4140
    %v4142 = vsel %vm614, %v4108, 0.0
    %4143 = vadd.xlane.f32.xlu0 %v4142
    %v4144 = vpop.xlane.xlu0 %4143
    %v4145 = vsel %vm614, %v4109, 0.0
    %4146 = vadd.xlane.f32.xlu0 %v4145
    %v4147 = vpop.xlane.xlu0 %4146
    %v4148 = vsel %vm614, %v4110, 0.0
    %4149 = vadd.xlane.f32.xlu0 %v4148
    %v4150 = vpop.xlane.xlu0 %4149
    %v4151 = vsel %vm614, %v4111, 0.0
    %4152 = vadd.xlane.f32.xlu0 %v4151
    %v4153 = vpop.xlane.xlu0 %4152
    %v4154 = vsel %vm614, %v4112, 0.0
    %4155 = vadd.xlane.f32.xlu0 %v4154
    %v4156 = vpop.xlane.xlu0 %4155
    %v4157 = vsel %vm614, %v4113, 0.0
    %4158 = vadd.xlane.f32.xlu0 %v4157
    %v4159 = vpop.xlane.xlu0 %4158
    %v4160 = vsel %vm614, %v4114, 0.0
    %4161 = vadd.xlane.f32.xlu0 %v4160
    %v4162 = vpop.xlane.xlu0 %4161
    %v4163 = vld [vmem:[#allocation6] sm:$0x1]
    %v4165 = vlaneseq
    %v4166 = vshrl.u32 %v4165, 7
    %v4167 = vsub.s32 0, %v4166
    %v4168 = vrot.slane %v4163, %v4167
    %v4170 = vadd.f32 %v4117, %v4168
    %v4171 = vadd.f32 %v4120, %v4168
    %v4172 = vadd.f32 %v4123, %v4168
    %v4173 = vadd.f32 %v4126, %v4168
    %v4174 = vadd.f32 %v4129, %v4168
    %v4175 = vadd.f32 %v4132, %v4168
    %v4176 = vadd.f32 %v4135, %v4168
    %v4177 = vadd.f32 %v4138, %v4168
    %v4178 = vadd.f32 %v4141, %v4168
    %v4179 = vadd.f32 %v4144, %v4168
    %v4180 = vadd.f32 %v4147, %v4168
    %v4181 = vadd.f32 %v4150, %v4168
    %v4182 = vadd.f32 %v4153, %v4168
    %v4183 = vadd.f32 %v4156, %v4168
    %v4184 = vadd.f32 %v4159, %v4168
    %v4185 = vadd.f32 %v4162, %v4168
    %v4186 = vxor.u32 %v4170, 2147483648
    %v4187 = vxor.u32 %v4171, 2147483648
    %v4188 = vxor.u32 %v4172, 2147483648
    %v4189 = vxor.u32 %v4173, 2147483648
    %v4190 = vxor.u32 %v4174, 2147483648
    %v4191 = vxor.u32 %v4175, 2147483648
    %v4192 = vxor.u32 %v4176, 2147483648
    %v4193 = vxor.u32 %v4177, 2147483648
    %v4194 = vxor.u32 %v4178, 2147483648
    %v4195 = vxor.u32 %v4179, 2147483648
    %v4196 = vxor.u32 %v4180, 2147483648
    %v4197 = vxor.u32 %v4181, 2147483648
    %v4198 = vxor.u32 %v4182, 2147483648
    %v4199 = vxor.u32 %v4183, 2147483648
    %v4200 = vxor.u32 %v4184, 2147483648
    %v4201 = vxor.u32 %v4185, 2147483648
    %v4202 = vmul.f32 %v4186, 1.442695
    %v4203 = vpow.pop %v4202
    %v4204 = vmul.f32 %v4187, 1.442695
    %v4205 = vpow.pop %v4204
    %v4206 = vmul.f32 %v4188, 1.442695
    %v4207 = vpow.pop %v4206
    %v4208 = vmul.f32 %v4189, 1.442695
    %v4209 = vpow.pop %v4208
    %v4210 = vmul.f32 %v4190, 1.442695
    %v4211 = vpow.pop %v4210
    %v4212 = vmul.f32 %v4191, 1.442695
    %v4213 = vpow.pop %v4212
    %v4214 = vmul.f32 %v4192, 1.442695
    %v4215 = vpow.pop %v4214
    %v4216 = vmul.f32 %v4193, 1.442695
    %v4217 = vpow.pop %v4216
    %v4218 = vmul.f32 %v4194, 1.442695
    %v4219 = vpow.pop %v4218
    %v4220 = vmul.f32 %v4195, 1.442695
    %v4221 = vpow.pop %v4220
    %v4222 = vmul.f32 %v4196, 1.442695
    %v4223 = vpow.pop %v4222
    %v4224 = vmul.f32 %v4197, 1.442695
    %v4225 = vpow.pop %v4224
    %v4226 = vmul.f32 %v4198, 1.442695
    %v4227 = vpow.pop %v4226
    %v4228 = vmul.f32 %v4199, 1.442695
    %v4229 = vpow.pop %v4228
    %v4230 = vmul.f32 %v4200, 1.442695
    %v4231 = vpow.pop %v4230
    %v4232 = vmul.f32 %v4201, 1.442695
    %v4233 = vpow.pop %v4232
    %v4234 = vadd.f32 %v4203, 1.0
    %v4235 = vadd.f32 %v4205, 1.0
    %v4236 = vadd.f32 %v4207, 1.0
    %v4237 = vadd.f32 %v4209, 1.0
    %v4238 = vadd.f32 %v4211, 1.0
    %v4239 = vadd.f32 %v4213, 1.0
    %v4240 = vadd.f32 %v4215, 1.0
    %v4241 = vadd.f32 %v4217, 1.0
    %v4242 = vadd.f32 %v4219, 1.0
    %v4243 = vadd.f32 %v4221, 1.0
    %v4244 = vadd.f32 %v4223, 1.0
    %v4245 = vadd.f32 %v4225, 1.0
    %v4246 = vadd.f32 %v4227, 1.0
    %v4247 = vadd.f32 %v4229, 1.0
    %v4248 = vadd.f32 %v4231, 1.0
    %v4249 = vadd.f32 %v4233, 1.0
    %v4250 = vrcp.pop %v4234
    %v4251 = vmul.f32 1.0, %v4250
    %v4252 = vrcp.pop %v4235
    %v4253 = vmul.f32 1.0, %v4252
    %v4254 = vrcp.pop %v4236
    %v4255 = vmul.f32 1.0, %v4254
    %v4256 = vrcp.pop %v4237
    %v4257 = vmul.f32 1.0, %v4256
    %v4258 = vrcp.pop %v4238
    %v4259 = vmul.f32 1.0, %v4258
    %v4260 = vrcp.pop %v4239
    %v4261 = vmul.f32 1.0, %v4260
    %v4262 = vrcp.pop %v4240
    %v4263 = vmul.f32 1.0, %v4262
    %v4264 = vrcp.pop %v4241
    %v4265 = vmul.f32 1.0, %v4264
    %v4266 = vrcp.pop %v4242
    %v4267 = vmul.f32 1.0, %v4266
    %v4268 = vrcp.pop %v4243
    %v4269 = vmul.f32 1.0, %v4268
    %v4270 = vrcp.pop %v4244
    %v4271 = vmul.f32 1.0, %v4270
    %v4272 = vrcp.pop %v4245
    %v4273 = vmul.f32 1.0, %v4272
    %v4274 = vrcp.pop %v4246
    %v4275 = vmul.f32 1.0, %v4274
    %v4276 = vrcp.pop %v4247
    %v4277 = vmul.f32 1.0, %v4276
    %v4278 = vrcp.pop %v4248
    %v4279 = vmul.f32 1.0, %v4278
    %v4280 = vrcp.pop %v4249
    %v4281 = vmul.f32 1.0, %v4280
    %4283 = vset.pattern.permute.xlu0 0
    %4284 = vperm.xlu0 %4283, %v4251
    %v4285 = vpop.permute.xlu0 %4284
    %4288 = vset.pattern.permute.xlu0 0
    %4289 = vperm.xlu0 %4288, %v4253
    %v4290 = vpop.permute.xlu0 %4289
    %4293 = vset.pattern.permute.xlu0 0
    %4294 = vperm.xlu0 %4293, %v4255
    %v4295 = vpop.permute.xlu0 %4294
    %4298 = vset.pattern.permute.xlu0 0
    %4299 = vperm.xlu0 %4298, %v4257
    %v4300 = vpop.permute.xlu0 %4299
    %4303 = vset.pattern.permute.xlu0 0
    %4304 = vperm.xlu0 %4303, %v4259
    %v4305 = vpop.permute.xlu0 %4304
    %4308 = vset.pattern.permute.xlu0 0
    %4309 = vperm.xlu0 %4308, %v4261
    %v4310 = vpop.permute.xlu0 %4309
    %4313 = vset.pattern.permute.xlu0 0
    %4314 = vperm.xlu0 %4313, %v4263
    %v4315 = vpop.permute.xlu0 %4314
    %4318 = vset.pattern.permute.xlu0 0
    %4319 = vperm.xlu0 %4318, %v4265
    %v4320 = vpop.permute.xlu0 %4319
    %4323 = vset.pattern.permute.xlu0 0
    %4324 = vperm.xlu0 %4323, %v4267
    %v4325 = vpop.permute.xlu0 %4324
    %4328 = vset.pattern.permute.xlu0 0
    %4329 = vperm.xlu0 %4328, %v4269
    %v4330 = vpop.permute.xlu0 %4329
    %4333 = vset.pattern.permute.xlu0 0
    %4334 = vperm.xlu0 %4333, %v4271
    %v4335 = vpop.permute.xlu0 %4334
    %4338 = vset.pattern.permute.xlu0 0
    %4339 = vperm.xlu0 %4338, %v4273
    %v4340 = vpop.permute.xlu0 %4339
    %4343 = vset.pattern.permute.xlu0 0
    %4344 = vperm.xlu0 %4343, %v4275
    %v4345 = vpop.permute.xlu0 %4344
    %4348 = vset.pattern.permute.xlu0 0
    %4349 = vperm.xlu0 %4348, %v4277
    %v4350 = vpop.permute.xlu0 %4349
    %4353 = vset.pattern.permute.xlu0 0
    %4354 = vperm.xlu0 %4353, %v4279
    %v4355 = vpop.permute.xlu0 %4354
    %4358 = vset.pattern.permute.xlu0 0
    %4359 = vperm.xlu0 %4358, %v4281
    %v4360 = vpop.permute.xlu0 %4359
    %v4362 = vmul.f32 %v4285, %v2725
    %v4363 = vmul.f32 %v4290, %v2726
    %v4364 = vmul.f32 %v4295, %v2727
    %v4365 = vmul.f32 %v4300, %v2728
    %v4366 = vmul.f32 %v4305, %v2729
    %v4367 = vmul.f32 %v4310, %v2730
    %v4368 = vmul.f32 %v4315, %v2731
    %v4369 = vmul.f32 %v4320, %v2732
    %v4370 = vmul.f32 %v4325, %v2733
    %v4371 = vmul.f32 %v4330, %v2734
    %v4372 = vmul.f32 %v4335, %v2735
    %v4373 = vmul.f32 %v4340, %v2736
    %v4374 = vmul.f32 %v4345, %v2737
    %v4375 = vmul.f32 %v4350, %v2738
    %v4376 = vmul.f32 %v4355, %v2739
    %v4377 = vmul.f32 %v4360, %v2740
    %v4378 = vmul.f32 %v4362, 0.5
    %v4379 = vmul.f32 %v4363, 0.5
    %v4380 = vmul.f32 %v4364, 0.5
    %v4381 = vmul.f32 %v4365, 0.5
    %v4382 = vmul.f32 %v4366, 0.5
    %v4383 = vmul.f32 %v4367, 0.5
    %v4384 = vmul.f32 %v4368, 0.5
    %v4385 = vmul.f32 %v4369, 0.5
    %v4386 = vmul.f32 %v4370, 0.5
    %v4387 = vmul.f32 %v4371, 0.5
    %v4388 = vmul.f32 %v4372, 0.5
    %v4389 = vmul.f32 %v4373, 0.5
    %v4390 = vmul.f32 %v4374, 0.5
    %v4391 = vmul.f32 %v4375, 0.5
    %v4392 = vmul.f32 %v4376, 0.5
    %v4393 = vmul.f32 %v4377, 0.5
    %v4394 = vmul.f32 %v2725, 0.5
    %v4395 = vmul.f32 %v2726, 0.5
    %v4396 = vmul.f32 %v2727, 0.5
    %v4397 = vmul.f32 %v2728, 0.5
    %v4398 = vmul.f32 %v2729, 0.5
    %v4399 = vmul.f32 %v2730, 0.5
    %v4400 = vmul.f32 %v2731, 0.5
    %v4401 = vmul.f32 %v2732, 0.5
    %v4402 = vmul.f32 %v2733, 0.5
    %v4403 = vmul.f32 %v2734, 0.5
    %v4404 = vmul.f32 %v2735, 0.5
    %v4405 = vmul.f32 %v2736, 0.5
    %v4406 = vmul.f32 %v2737, 0.5
    %v4407 = vmul.f32 %v2738, 0.5
    %v4408 = vmul.f32 %v2739, 0.5
    %v4409 = vmul.f32 %v2740, 0.5
    %v4410 = vadd.f32 %v4378, %v4394
    %v4411 = vadd.f32 %v4379, %v4395
    %v4412 = vadd.f32 %v4380, %v4396
    %v4413 = vadd.f32 %v4381, %v4397
    %v4414 = vadd.f32 %v4382, %v4398
    %v4415 = vadd.f32 %v4383, %v4399
    %v4416 = vadd.f32 %v4384, %v4400
    %v4417 = vadd.f32 %v4385, %v4401
    %v4418 = vadd.f32 %v4386, %v4402
    %v4419 = vadd.f32 %v4387, %v4403
    %v4420 = vadd.f32 %v4388, %v4404
    %v4421 = vadd.f32 %v4389, %v4405
    %v4422 = vadd.f32 %v4390, %v4406
    %v4423 = vadd.f32 %v4391, %v4407
    %v4424 = vadd.f32 %v4392, %v4408
    %v4425 = vadd.f32 %v4393, %v4409
    %v4426 = vsel %vm614, %v4410, -inf
    %v4427 = vsel %vm614, %v4411, -inf
    %v4428 = vmax.f32 %v4426, %v4427
    %v4429 = vrot.slane %v4428, 4
    %v4430 = vmax.f32 %v4428, %v4429
    %v4431 = vrot.slane %v4430, 2
    %v4432 = vmax.f32 %v4430, %v4431
    %v4433 = vrot.slane %v4432, 1
    %v4434 = vmax.f32 %v4432, %v4433
    %v4435 = vsel %vm614, %v4412, -inf
    %v4436 = vsel %vm614, %v4413, -inf
    %v4437 = vmax.f32 %v4435, %v4436
    %v4438 = vrot.slane %v4437, 4
    %v4439 = vmax.f32 %v4437, %v4438
    %v4440 = vrot.slane %v4439, 2
    %v4441 = vmax.f32 %v4439, %v4440
    %v4442 = vrot.slane %v4441, 1
    %v4443 = vmax.f32 %v4441, %v4442
    %v4444 = vsel %vm614, %v4414, -inf
    %v4445 = vsel %vm614, %v4415, -inf
    %v4446 = vmax.f32 %v4444, %v4445
    %v4447 = vrot.slane %v4446, 4
    %v4448 = vmax.f32 %v4446, %v4447
    %v4449 = vrot.slane %v4448, 2
    %v4450 = vmax.f32 %v4448, %v4449
    %v4451 = vrot.slane %v4450, 1
    %v4452 = vmax.f32 %v4450, %v4451
    %v4453 = vsel %vm614, %v4416, -inf
    %v4454 = vsel %vm614, %v4417, -inf
    %v4455 = vmax.f32 %v4453, %v4454
    %v4456 = vrot.slane %v4455, 4
    %v4457 = vmax.f32 %v4455, %v4456
    %v4458 = vrot.slane %v4457, 2
    %v4459 = vmax.f32 %v4457, %v4458
    %v4460 = vrot.slane %v4459, 1
    %v4461 = vmax.f32 %v4459, %v4460
    %v4462 = vsel %vm614, %v4418, -inf
    %v4463 = vsel %vm614, %v4419, -inf
    %v4464 = vmax.f32 %v4462, %v4463
    %v4465 = vrot.slane %v4464, 4
    %v4466 = vmax.f32 %v4464, %v4465
    %v4467 = vrot.slane %v4466, 2
    %v4468 = vmax.f32 %v4466, %v4467
    %v4469 = vrot.slane %v4468, 1
    %v4470 = vmax.f32 %v4468, %v4469
    %v4471 = vsel %vm614, %v4420, -inf
    %v4472 = vsel %vm614, %v4421, -inf
    %v4473 = vmax.f32 %v4471, %v4472
    %v4474 = vrot.slane %v4473, 4
    %v4475 = vmax.f32 %v4473, %v4474
    %v4476 = vrot.slane %v4475, 2
    %v4477 = vmax.f32 %v4475, %v4476
    %v4478 = vrot.slane %v4477, 1
    %v4479 = vmax.f32 %v4477, %v4478
    %v4480 = vsel %vm614, %v4422, -inf
    %v4481 = vsel %vm614, %v4423, -inf
    %v4482 = vmax.f32 %v4480, %v4481
    %v4483 = vrot.slane %v4482, 4
    %v4484 = vmax.f32 %v4482, %v4483
    %v4485 = vrot.slane %v4484, 2
    %v4486 = vmax.f32 %v4484, %v4485
    %v4487 = vrot.slane %v4486, 1
    %v4488 = vmax.f32 %v4486, %v4487
    %v4489 = vsel %vm614, %v4424, -inf
    %v4490 = vsel %vm614, %v4425, -inf
    %v4491 = vmax.f32 %v4489, %v4490
    %v4492 = vrot.slane %v4491, 4
    %v4493 = vmax.f32 %v4491, %v4492
    %v4494 = vrot.slane %v4493, 2
    %v4495 = vmax.f32 %v4493, %v4494
    %v4496 = vrot.slane %v4495, 1
    %v4497 = vmax.f32 %v4495, %v4496
    %s4498 = smul.u32 4, 8
    %s4499 = smul.u32 %s4498, 8
    %s4500 = sshll.u32 %s4499, 4
    %4501 = dma.done [#allocation5], %s4500
    %v4502 = vld [vmem:[#allocation2] sm:$0xff]
    %v4503 = vld [vmem:[#allocation2 + $0x8] sm:$0xff]
    %v4504 = vld [vmem:[#allocation2 + $0x10] sm:$0xff]
    %v4505 = vld [vmem:[#allocation2 + $0x18] sm:$0xff]
    %v4506 = vld [vmem:[#allocation2 + $0x20] sm:$0xff]
    %v4507 = vld [vmem:[#allocation2 + $0x28] sm:$0xff]
    %v4508 = vld [vmem:[#allocation2 + $0x30] sm:$0xff]
    %v4509 = vld [vmem:[#allocation2 + $0x38] sm:$0xff]
    %v4510 = vld [vmem:[#allocation2 + $0x40] sm:$0xff]
    %v4511 = vld [vmem:[#allocation2 + $0x48] sm:$0xff]
    %v4512 = vld [vmem:[#allocation2 + $0x50] sm:$0xff]
    %v4513 = vld [vmem:[#allocation2 + $0x58] sm:$0xff]
    %v4514 = vld [vmem:[#allocation2 + $0x60] sm:$0xff]
    %v4515 = vld [vmem:[#allocation2 + $0x68] sm:$0xff]
    %v4516 = vld [vmem:[#allocation2 + $0x70] sm:$0xff]
    %v4517 = vld [vmem:[#allocation2 + $0x78] sm:$0xff]
    %v4518 = vld [vmem:[#allocation2 + $0x80] sm:$0xff]
    %v4519 = vld [vmem:[#allocation2 + $0x88] sm:$0xff]
    %v4520 = vld [vmem:[#allocation2 + $0x90] sm:$0xff]
    %v4521 = vld [vmem:[#allocation2 + $0x98] sm:$0xff]
    %v4522 = vld [vmem:[#allocation2 + $0xa0] sm:$0xff]
    %v4523 = vld [vmem:[#allocation2 + $0xa8] sm:$0xff]
    %v4524 = vld [vmem:[#allocation2 + $0xb0] sm:$0xff]
    %v4525 = vld [vmem:[#allocation2 + $0xb8] sm:$0xff]
    %v4526 = vld [vmem:[#allocation2 + $0xc0] sm:$0xff]
    %v4527 = vld [vmem:[#allocation2 + $0xc8] sm:$0xff]
    %v4528 = vld [vmem:[#allocation2 + $0xd0] sm:$0xff]
    %v4529 = vld [vmem:[#allocation2 + $0xd8] sm:$0xff]
    %v4530 = vld [vmem:[#allocation2 + $0xe0] sm:$0xff]
    %v4531 = vld [vmem:[#allocation2 + $0xe8] sm:$0xff]
    %v4532 = vld [vmem:[#allocation2 + $0xf0] sm:$0xff]
    %v4533 = vld [vmem:[#allocation2 + $0xf8] sm:$0xff]
    %v4534 = vpack.c.bf16 %v672, %v672
    %v4535 = vpack.c.bf16 %v673, %v673
    %v4536 = vpack.c.bf16 %v674, %v674
    %v4537 = vpack.c.bf16 %v675, %v675
    %v4538 = vpack.c.bf16 %v676, %v676
    %v4539 = vpack.c.bf16 %v677, %v677
    %v4540 = vpack.c.bf16 %v678, %v678
    %v4541 = vpack.c.bf16 %v679, %v679
    %v4542 = vpack.c.bf16 %v4434, %v4434
    %v4543 = vpack.c.bf16 %v4443, %v4443
    %v4544 = vpack.c.bf16 %v4452, %v4452
    %v4545 = vpack.c.bf16 %v4461, %v4461
    %v4546 = vpack.c.bf16 %v4470, %v4470
    %v4547 = vpack.c.bf16 %v4479, %v4479
    %v4548 = vpack.c.bf16 %v4488, %v4488
    %v4549 = vpack.c.bf16 %v4497, %v4497
    %v4558 = vunpack.c.l.b16 %v4542
    %v4559 = vunpack.c.l.b16 %v4543
    %v4560 = vunpack.c.l.b16 %v4544
    %v4561 = vunpack.c.l.b16 %v4545
    %v4562 = vunpack.c.l.b16 %v4546
    %v4563 = vunpack.c.l.b16 %v4547
    %v4564 = vunpack.c.l.b16 %v4548
    %v4565 = vunpack.c.l.b16 %v4549
    %v4566 = vsel %vm3504, %v4559, %v4558
    %v4567 = vsel %vm3506, %v4560, %v4566
    %v4568 = vsel %vm3508, %v4561, %v4567
    %v4569 = vsel %vm3510, %v4562, %v4568
    %v4570 = vsel %vm3512, %v4563, %v4569
    %v4571 = vsel %vm3514, %v4564, %v4570
    %v4572 = vsel %vm3516, %v4565, %v4571
    %v4573 = vpack.c.b16 %v4572, %v4572
    %v4575 = vsel %vm614, %v4573, 0
    %4577 = vmatprep.subr.bf16.mxu0 %v4519
    %4578 = vmatpush1.bf16.msra.mxu0 %v4518
    %4579 = vmatprep.subr.bf16.mxu0 %v4527
    %4580 = vmatpush1.bf16.msra.mxu0 %v4526
    %4581 = vmatprep.subr.bf16.mxu0 0
    %4582 = vmatpush1.bf16.msra.mxu0 0
    %4583 = vmatprep.subr.bf16.mxu0 0
    %4584 = vmatpush1.bf16.msra.mxu0 0
    %4585 = vmatprep.subr.bf16.mxu0 0
    %4586 = vmatpush1.bf16.msra.mxu0 0
    %4587 = vmatprep.subr.bf16.mxu0 0
    %4588 = vmatpush1.bf16.msra.mxu0 0
    %4589 = vmatprep.subr.bf16.mxu0 0
    %4590 = vmatpush1.bf16.msra.mxu0 0
    %4591 = vmatprep.subr.bf16.mxu0 0
    %4592 = vmatpush1.bf16.msra.mxu0 0
    %4593 = vmatprep.subr.bf16.mxu0 0
    %4594 = vmatpush1.bf16.msra.mxu0 0
    %4595 = vmatprep.subr.bf16.mxu0 0
    %4596 = vmatpush1.bf16.msra.mxu0 0
    %4597 = vmatprep.subr.bf16.mxu0 0
    %4598 = vmatpush1.bf16.msra.mxu0 0
    %4599 = vmatprep.subr.bf16.mxu0 0
    %4600 = vmatpush1.bf16.msra.mxu0 0
    %4601 = vmatprep.subr.bf16.mxu0 0
    %4602 = vmatpush1.bf16.msra.mxu0 0
    %4603 = vmatprep.subr.bf16.mxu0 0
    %4604 = vmatpush1.bf16.msra.mxu0 0
    %4605 = vmatprep.subr.bf16.mxu0 0
    %4606 = vmatpush1.bf16.msra.mxu0 0
    %4607 = vmatprep.subr.bf16.mxu0 0
    %4608 = vmatpush1.bf16.msra.mxu0 0
    %4609 = vmatprep.mubr.bf16.mxu0 0
    %4610 = vmatmul.mubr.bf16.gmra.mrb[0].mxu0 %v4575
    %v4611 = vpop.f32.mrb[0].mxu0
    %v4612 = vadd.f32 0.0, %v4611
    %v4613 = vpop.f32.mrb[0].mxu0
    %v4614 = vadd.f32 0.0, %v4613
    %v4615 = vpop.f32.mrb[0].mxu0
    %v4616 = vpop.f32.mrb[0].mxu0
    %4617 = vdwg.mxu0
    %4618 = vmatprep.subr.bf16.mxu0 %v4521
    %4619 = vmatpush1.bf16.msra.mxu0 %v4520
    %4620 = vmatprep.subr.bf16.mxu0 %v4529
    %4621 = vmatpush1.bf16.msra.mxu0 %v4528
    %4622 = vmatprep.subr.bf16.mxu0 0
    %4623 = vmatpush1.bf16.msra.mxu0 0
    %4624 = vmatprep.subr.bf16.mxu0 0
    %4625 = vmatpush1.bf16.msra.mxu0 0
    %4626 = vmatprep.subr.bf16.mxu0 0
    %4627 = vmatpush1.bf16.msra.mxu0 0
    %4628 = vmatprep.subr.bf16.mxu0 0
    %4629 = vmatpush1.bf16.msra.mxu0 0
    %4630 = vmatprep.subr.bf16.mxu0 0
    %4631 = vmatpush1.bf16.msra.mxu0 0
    %4632 = vmatprep.subr.bf16.mxu0 0
    %4633 = vmatpush1.bf16.msra.mxu0 0
    %4634 = vmatprep.subr.bf16.mxu0 0
    %4635 = vmatpush1.bf16.msra.mxu0 0
    %4636 = vmatprep.subr.bf16.mxu0 0
    %4637 = vmatpush1.bf16.msra.mxu0 0
    %4638 = vmatprep.subr.bf16.mxu0 0
    %4639 = vmatpush1.bf16.msra.mxu0 0
    %4640 = vmatprep.subr.bf16.mxu0 0
    %4641 = vmatpush1.bf16.msra.mxu0 0
    %4642 = vmatprep.subr.bf16.mxu0 0
    %4643 = vmatpush1.bf16.msra.mxu0 0
    %4644 = vmatprep.subr.bf16.mxu0 0
    %4645 = vmatpush1.bf16.msra.mxu0 0
    %4646 = vmatprep.subr.bf16.mxu0 0
    %4647 = vmatpush1.bf16.msra.mxu0 0
    %4648 = vmatprep.subr.bf16.mxu0 0
    %4649 = vmatpush1.bf16.msra.mxu0 0
    %4650 = vmatprep.mubr.bf16.mxu0 0
    %4651 = vmatmul.mubr.bf16.gmra.mrb[0].mxu0 %v4575
    %v4652 = vpop.f32.mrb[0].mxu0
    %v4653 = vadd.f32 0.0, %v4652
    %v4654 = vpop.f32.mrb[0].mxu0
    %v4655 = vadd.f32 0.0, %v4654
    %v4656 = vpop.f32.mrb[0].mxu0
    %v4657 = vpop.f32.mrb[0].mxu0
    %4658 = vdwg.mxu0
    %4659 = vmatprep.subr.bf16.mxu0 %v4523
    %4660 = vmatpush1.bf16.msra.mxu0 %v4522
    %4661 = vmatprep.subr.bf16.mxu0 %v4531
    %4662 = vmatpush1.bf16.msra.mxu0 %v4530
    %4663 = vmatprep.subr.bf16.mxu0 0
    %4664 = vmatpush1.bf16.msra.mxu0 0
    %4665 = vmatprep.subr.bf16.mxu0 0
    %4666 = vmatpush1.bf16.msra.mxu0 0
    %4667 = vmatprep.subr.bf16.mxu0 0
    %4668 = vmatpush1.bf16.msra.mxu0 0
    %4669 = vmatprep.subr.bf16.mxu0 0
    %4670 = vmatpush1.bf16.msra.mxu0 0
    %4671 = vmatprep.subr.bf16.mxu0 0
    %4672 = vmatpush1.bf16.msra.mxu0 0
    %4673 = vmatprep.subr.bf16.mxu0 0
    %4674 = vmatpush1.bf16.msra.mxu0 0
    %4675 = vmatprep.subr.bf16.mxu0 0
    %4676 = vmatpush1.bf16.msra.mxu0 0
    %4677 = vmatprep.subr.bf16.mxu0 0
    %4678 = vmatpush1.bf16.msra.mxu0 0
    %4679 = vmatprep.subr.bf16.mxu0 0
    %4680 = vmatpush1.bf16.msra.mxu0 0
    %4681 = vmatprep.subr.bf16.mxu0 0
    %4682 = vmatpush1.bf16.msra.mxu0 0
    %4683 = vmatprep.subr.bf16.mxu0 0
    %4684 = vmatpush1.bf16.msra.mxu0 0
    %4685 = vmatprep.subr.bf16.mxu0 0
    %4686 = vmatpush1.bf16.msra.mxu0 0
    %4687 = vmatprep.subr.bf16.mxu0 0
    %4688 = vmatpush1.bf16.msra.mxu0 0
    %4689 = vmatprep.subr.bf16.mxu0 0
    %4690 = vmatpush1.bf16.msra.mxu0 0
    %4691 = vmatprep.mubr.bf16.mxu0 0
    %4692 = vmatmul.mubr.bf16.gmra.mrb[0].mxu0 %v4575
    %v4693 = vpop.f32.mrb[0].mxu0
    %v4694 = vadd.f32 0.0, %v4693
    %v4695 = vpop.f32.mrb[0].mxu0
    %v4696 = vadd.f32 0.0, %v4695
    %v4697 = vpop.f32.mrb[0].mxu0
    %v4698 = vpop.f32.mrb[0].mxu0
    %4699 = vdwg.mxu0
    %4700 = vmatprep.subr.bf16.mxu0 %v4525
    %4701 = vmatpush1.bf16.msra.mxu0 %v4524
    %4702 = vmatprep.subr.bf16.mxu0 %v4533
    %4703 = vmatpush1.bf16.msra.mxu0 %v4532
    %4704 = vmatprep.subr.bf16.mxu0 0
    %4705 = vmatpush1.bf16.msra.mxu0 0
    %4706 = vmatprep.subr.bf16.mxu0 0
    %4707 = vmatpush1.bf16.msra.mxu0 0
    %4708 = vmatprep.subr.bf16.mxu0 0
    %4709 = vmatpush1.bf16.msra.mxu0 0
    %4710 = vmatprep.subr.bf16.mxu0 0
    %4711 = vmatpush1.bf16.msra.mxu0 0
    %4712 = vmatprep.subr.bf16.mxu0 0
    %4713 = vmatpush1.bf16.msra.mxu0 0
    %4714 = vmatprep.subr.bf16.mxu0 0
    %4715 = vmatpush1.bf16.msra.mxu0 0
    %4716 = vmatprep.subr.bf16.mxu0 0
    %4717 = vmatpush1.bf16.msra.mxu0 0
    %4718 = vmatprep.subr.bf16.mxu0 0
    %4719 = vmatpush1.bf16.msra.mxu0 0
    %4720 = vmatprep.subr.bf16.mxu0 0
    %4721 = vmatpush1.bf16.msra.mxu0 0
    %4722 = vmatprep.subr.bf16.mxu0 0
    %4723 = vmatpush1.bf16.msra.mxu0 0
    %4724 = vmatprep.subr.bf16.mxu0 0
    %4725 = vmatpush1.bf16.msra.mxu0 0
    %4726 = vmatprep.subr.bf16.mxu0 0
    %4727 = vmatpush1.bf16.msra.mxu0 0
    %4728 = vmatprep.subr.bf16.mxu0 0
    %4729 = vmatpush1.bf16.msra.mxu0 0
    %4730 = vmatprep.subr.bf16.mxu0 0
    %4731 = vmatpush1.bf16.msra.mxu0 0
    %4732 = vmatprep.mubr.bf16.mxu0 0
    %4733 = vmatmul.mubr.bf16.gmra.mrb[0].mxu0 %v4575
    %v4734 = vpop.f32.mrb[0].mxu0
    %v4735 = vadd.f32 0.0, %v4734
    %v4736 = vpop.f32.mrb[0].mxu0
    %v4737 = vadd.f32 0.0, %v4736
    %v4738 = vpop.f32.mrb[0].mxu0
    %v4739 = vpop.f32.mrb[0].mxu0
    %4740 = vdwg.mxu0
    %v4749 = vunpack.c.l.b16 %v4534
    %v4750 = vunpack.c.l.b16 %v4535
    %v4751 = vunpack.c.l.b16 %v4536
    %v4752 = vunpack.c.l.b16 %v4537
    %v4753 = vunpack.c.l.b16 %v4538
    %v4754 = vunpack.c.l.b16 %v4539
    %v4755 = vunpack.c.l.b16 %v4540
    %v4756 = vunpack.c.l.b16 %v4541
    %v4757 = vsel %vm3504, %v4750, %v4749
    %v4758 = vsel %vm3506, %v4751, %v4757
    %v4759 = vsel %vm3508, %v4752, %v4758
    %v4760 = vsel %vm3510, %v4753, %v4759
    %v4761 = vsel %vm3512, %v4754, %v4760
    %v4762 = vsel %vm3514, %v4755, %v4761
    %v4763 = vsel %vm3516, %v4756, %v4762
    %v4764 = vpack.c.b16 %v4763, %v4763
    %v4766 = vsel %vm614, %v4764, 0
    %4768 = vmatprep.subr.bf16.mxu0 %v4503
    %4769 = vmatpush1.bf16.msra.mxu0 %v4502
    %4770 = vmatprep.subr.bf16.mxu0 %v4511
    %4771 = vmatpush1.bf16.msra.mxu0 %v4510
    %4772 = vmatprep.subr.bf16.mxu0 0
    %4773 = vmatpush1.bf16.msra.mxu0 0
    %4774 = vmatprep.subr.bf16.mxu0 0
    %4775 = vmatpush1.bf16.msra.mxu0 0
    %4776 = vmatprep.subr.bf16.mxu0 0
    %4777 = vmatpush1.bf16.msra.mxu0 0
    %4778 = vmatprep.subr.bf16.mxu0 0
    %4779 = vmatpush1.bf16.msra.mxu0 0
    %4780 = vmatprep.subr.bf16.mxu0 0
    %4781 = vmatpush1.bf16.msra.mxu0 0
    %4782 = vmatprep.subr.bf16.mxu0 0
    %4783 = vmatpush1.bf16.msra.mxu0 0
    %4784 = vmatprep.subr.bf16.mxu0 0
    %4785 = vmatpush1.bf16.msra.mxu0 0
    %4786 = vmatprep.subr.bf16.mxu0 0
    %4787 = vmatpush1.bf16.msra.mxu0 0
    %4788 = vmatprep.subr.bf16.mxu0 0
    %4789 = vmatpush1.bf16.msra.mxu0 0
    %4790 = vmatprep.subr.bf16.mxu0 0
    %4791 = vmatpush1.bf16.msra.mxu0 0
    %4792 = vmatprep.subr.bf16.mxu0 0
    %4793 = vmatpush1.bf16.msra.mxu0 0
    %4794 = vmatprep.subr.bf16.mxu0 0
    %4795 = vmatpush1.bf16.msra.mxu0 0
    %4796 = vmatprep.subr.bf16.mxu0 0
    %4797 = vmatpush1.bf16.msra.mxu0 0
    %4798 = vmatprep.subr.bf16.mxu0 0
    %4799 = vmatpush1.bf16.msra.mxu0 0
    %4800 = vmatprep.mubr.bf16.mxu0 0
    %4801 = vmatmul.mubr.bf16.gmra.mrb[0].mxu0 %v4766
    %v4802 = vpop.f32.mrb[0].mxu0
    %v4803 = vadd.f32 %v4612, %v4802
    %v4804 = vpop.f32.mrb[0].mxu0
    %v4805 = vadd.f32 %v4614, %v4804
    %v4806 = vpop.f32.mrb[0].mxu0
    %v4807 = vpop.f32.mrb[0].mxu0
    %4808 = vdwg.mxu0
    %4809 = vmatprep.subr.bf16.mxu0 %v4505
    %4810 = vmatpush1.bf16.msra.mxu0 %v4504
    %4811 = vmatprep.subr.bf16.mxu0 %v4513
    %4812 = vmatpush1.bf16.msra.mxu0 %v4512
    %4813 = vmatprep.subr.bf16.mxu0 0
    %4814 = vmatpush1.bf16.msra.mxu0 0
    %4815 = vmatprep.subr.bf16.mxu0 0
    %4816 = vmatpush1.bf16.msra.mxu0 0
    %4817 = vmatprep.subr.bf16.mxu0 0
    %4818 = vmatpush1.bf16.msra.mxu0 0
    %4819 = vmatprep.subr.bf16.mxu0 0
    %4820 = vmatpush1.bf16.msra.mxu0 0
    %4821 = vmatprep.subr.bf16.mxu0 0
    %4822 = vmatpush1.bf16.msra.mxu0 0
    %4823 = vmatprep.subr.bf16.mxu0 0
    %4824 = vmatpush1.bf16.msra.mxu0 0
    %4825 = vmatprep.subr.bf16.mxu0 0
    %4826 = vmatpush1.bf16.msra.mxu0 0
    %4827 = vmatprep.subr.bf16.mxu0 0
    %4828 = vmatpush1.bf16.msra.mxu0 0
    %4829 = vmatprep.subr.bf16.mxu0 0
    %4830 = vmatpush1.bf16.msra.mxu0 0
    %4831 = vmatprep.subr.bf16.mxu0 0
    %4832 = vmatpush1.bf16.msra.mxu0 0
    %4833 = vmatprep.subr.bf16.mxu0 0
    %4834 = vmatpush1.bf16.msra.mxu0 0
    %4835 = vmatprep.subr.bf16.mxu0 0
    %4836 = vmatpush1.bf16.msra.mxu0 0
    %4837 = vmatprep.subr.bf16.mxu0 0
    %4838 = vmatpush1.bf16.msra.mxu0 0
    %4839 = vmatprep.subr.bf16.mxu0 0
    %4840 = vmatpush1.bf16.msra.mxu0 0
    %4841 = vmatprep.mubr.bf16.mxu0 0
    %4842 = vmatmul.mubr.bf16.gmra.mrb[0].mxu0 %v4766
    %v4843 = vpop.f32.mrb[0].mxu0
    %v4844 = vadd.f32 %v4653, %v4843
    %v4845 = vpop.f32.mrb[0].mxu0
    %v4846 = vadd.f32 %v4655, %v4845
    %v4847 = vpop.f32.mrb[0].mxu0
    %v4848 = vpop.f32.mrb[0].mxu0
    %4849 = vdwg.mxu0
    %4850 = vmatprep.subr.bf16.mxu0 %v4507
    %4851 = vmatpush1.bf16.msra.mxu0 %v4506
    %4852 = vmatprep.subr.bf16.mxu0 %v4515
    %4853 = vmatpush1.bf16.msra.mxu0 %v4514
    %4854 = vmatprep.subr.bf16.mxu0 0
    %4855 = vmatpush1.bf16.msra.mxu0 0
    %4856 = vmatprep.subr.bf16.mxu0 0
    %4857 = vmatpush1.bf16.msra.mxu0 0
    %4858 = vmatprep.subr.bf16.mxu0 0
    %4859 = vmatpush1.bf16.msra.mxu0 0
    %4860 = vmatprep.subr.bf16.mxu0 0
    %4861 = vmatpush1.bf16.msra.mxu0 0
    %4862 = vmatprep.subr.bf16.mxu0 0
    %4863 = vmatpush1.bf16.msra.mxu0 0
    %4864 = vmatprep.subr.bf16.mxu0 0
    %4865 = vmatpush1.bf16.msra.mxu0 0
    %4866 = vmatprep.subr.bf16.mxu0 0
    %4867 = vmatpush1.bf16.msra.mxu0 0
    %4868 = vmatprep.subr.bf16.mxu0 0
    %4869 = vmatpush1.bf16.msra.mxu0 0
    %4870 = vmatprep.subr.bf16.mxu0 0
    %4871 = vmatpush1.bf16.msra.mxu0 0
    %4872 = vmatprep.subr.bf16.mxu0 0
    %4873 = vmatpush1.bf16.msra.mxu0 0
    %4874 = vmatprep.subr.bf16.mxu0 0
    %4875 = vmatpush1.bf16.msra.mxu0 0
    %4876 = vmatprep.subr.bf16.mxu0 0
    %4877 = vmatpush1.bf16.msra.mxu0 0
    %4878 = vmatprep.subr.bf16.mxu0 0
    %4879 = vmatpush1.bf16.msra.mxu0 0
    %4880 = vmatprep.subr.bf16.mxu0 0
    %4881 = vmatpush1.bf16.msra.mxu0 0
    %4882 = vmatprep.mubr.bf16.mxu0 0
    %4883 = vmatmul.mubr.bf16.gmra.mrb[0].mxu0 %v4766
    %v4884 = vpop.f32.mrb[0].mxu0
    %v4885 = vadd.f32 %v4694, %v4884
    %v4886 = vpop.f32.mrb[0].mxu0
    %v4887 = vadd.f32 %v4696, %v4886
    %v4888 = vpop.f32.mrb[0].mxu0
    %v4889 = vpop.f32.mrb[0].mxu0
    %4890 = vdwg.mxu0
    %4891 = vmatprep.subr.bf16.mxu0 %v4509
    %4892 = vmatpush1.bf16.msra.mxu0 %v4508
    %4893 = vmatprep.subr.bf16.mxu0 %v4517
    %4894 = vmatpush1.bf16.msra.mxu0 %v4516
    %4895 = vmatprep.subr.bf16.mxu0 0
    %4896 = vmatpush1.bf16.msra.mxu0 0
    %4897 = vmatprep.subr.bf16.mxu0 0
    %4898 = vmatpush1.bf16.msra.mxu0 0
    %4899 = vmatprep.subr.bf16.mxu0 0
    %4900 = vmatpush1.bf16.msra.mxu0 0
    %4901 = vmatprep.subr.bf16.mxu0 0
    %4902 = vmatpush1.bf16.msra.mxu0 0
    %4903 = vmatprep.subr.bf16.mxu0 0
    %4904 = vmatpush1.bf16.msra.mxu0 0
    %4905 = vmatprep.subr.bf16.mxu0 0
    %4906 = vmatpush1.bf16.msra.mxu0 0
    %4907 = vmatprep.subr.bf16.mxu0 0
    %4908 = vmatpush1.bf16.msra.mxu0 0
    %4909 = vmatprep.subr.bf16.mxu0 0
    %4910 = vmatpush1.bf16.msra.mxu0 0
    %4911 = vmatprep.subr.bf16.mxu0 0
    %4912 = vmatpush1.bf16.msra.mxu0 0
    %4913 = vmatprep.subr.bf16.mxu0 0
    %4914 = vmatpush1.bf16.msra.mxu0 0
    %4915 = vmatprep.subr.bf16.mxu0 0
    %4916 = vmatpush1.bf16.msra.mxu0 0
    %4917 = vmatprep.subr.bf16.mxu0 0
    %4918 = vmatpush1.bf16.msra.mxu0 0
    %4919 = vmatprep.subr.bf16.mxu0 0
    %4920 = vmatpush1.bf16.msra.mxu0 0
    %4921 = vmatprep.subr.bf16.mxu0 0
    %4922 = vmatpush1.bf16.msra.mxu0 0
    %4923 = vmatprep.mubr.bf16.mxu0 0
    %4924 = vmatmul.mubr.bf16.gmra.mrb[0].mxu0 %v4766
    %v4925 = vpop.f32.mrb[0].mxu0
    %v4926 = vadd.f32 %v4735, %v4925
    %v4927 = vpop.f32.mrb[0].mxu0
    %v4928 = vadd.f32 %v4737, %v4927
    %v4929 = vpop.f32.mrb[0].mxu0
    %v4930 = vpop.f32.mrb[0].mxu0
    %4931 = vdwg.mxu0
    %v4932 = vld [vmem:[#allocation36] sm:$0xff]
    %v4934 = vlaneseq
    %v4935 = vshrl.u32 %v4934, 7
    %v4936 = vsub.s32 0, %v4935
    %v4937 = vrot.slane %v4932, %v4936
    %v4938 = vlaneseq
    %v4939 = vshrl.u32 %v4938, 7
    %v4940 = vsub.s32 1, %v4939
    %v4941 = vrot.slane %v4932, %v4940
    %v4942 = vlaneseq
    %v4943 = vshrl.u32 %v4942, 7
    %v4944 = vsub.s32 2, %v4943
    %v4945 = vrot.slane %v4932, %v4944
    %v4946 = vlaneseq
    %v4947 = vshrl.u32 %v4946, 7
    %v4948 = vsub.s32 3, %v4947
    %v4949 = vrot.slane %v4932, %v4948
    %v4950 = vlaneseq
    %v4951 = vshrl.u32 %v4950, 7
    %v4952 = vsub.s32 4, %v4951
    %v4953 = vrot.slane %v4932, %v4952
    %v4954 = vlaneseq
    %v4955 = vshrl.u32 %v4954, 7
    %v4956 = vsub.s32 5, %v4955
    %v4957 = vrot.slane %v4932, %v4956
    %v4958 = vlaneseq
    %v4959 = vshrl.u32 %v4958, 7
    %v4960 = vsub.s32 6, %v4959
    %v4961 = vrot.slane %v4932, %v4960
    %v4962 = vlaneseq
    %v4963 = vshrl.u32 %v4962, 7
    %v4964 = vsub.s32 7, %v4963
    %v4965 = vrot.slane %v4932, %v4964
    %v4974 = vadd.f32 %v4803, %v4937
    %v4975 = vadd.f32 %v4805, %v4941
    %v4976 = vadd.f32 %v4844, %v4945
    %v4977 = vadd.f32 %v4846, %v4949
    %v4978 = vadd.f32 %v4885, %v4953
    %v4979 = vadd.f32 %v4887, %v4957
    %v4980 = vadd.f32 %v4926, %v4961
    %v4981 = vadd.f32 %v4928, %v4965
    %vm4982 = vcmp.gt.f32.partialorder %v4974, 0.0
    %vm4983 = vcmp.gt.f32.partialorder %v4975, 0.0
    %vm4984 = vcmp.gt.f32.partialorder %v4976, 0.0
    %vm4985 = vcmp.gt.f32.partialorder %v4977, 0.0
    %vm4986 = vcmp.gt.f32.partialorder %v4978, 0.0
    %vm4987 = vcmp.gt.f32.partialorder %v4979, 0.0
    %vm4988 = vcmp.gt.f32.partialorder %v4980, 0.0
    %vm4989 = vcmp.gt.f32.partialorder %v4981, 0.0
    %v4990 = vmul.f32 %v4974, 0.01
    %v4991 = vmul.f32 %v4975, 0.01
    %v4992 = vmul.f32 %v4976, 0.01
    %v4993 = vmul.f32 %v4977, 0.01
    %v4994 = vmul.f32 %v4978, 0.01
    %v4995 = vmul.f32 %v4979, 0.01
    %v4996 = vmul.f32 %v4980, 0.01
    %v4997 = vmul.f32 %v4981, 0.01
    %v4998 = vsel %vm4982, %v4974, %v4990
    %v4999 = vsel %vm4983, %v4975, %v4991
    %v5000 = vsel %vm4984, %v4976, %v4992
    %v5001 = vsel %vm4985, %v4977, %v4993
    %v5002 = vsel %vm4986, %v4978, %v4994
    %v5003 = vsel %vm4987, %v4979, %v4995
    %v5004 = vsel %vm4988, %v4980, %v4996
    %v5005 = vsel %vm4989, %v4981, %v4997
    %s5006 = smul.u32 4, 128
    %s5007 = smul.u32 %s5006, 8
    %s5008 = sshll.u32 %s5007, 4
    %5009 = dma.done %s397, %s5008
    %v5010 = vpack.c.bf16 %v4998, %v4998
    %v5011 = vpack.c.bf16 %v4999, %v4999
    %v5012 = vpack.c.bf16 %v5000, %v5000
    %v5013 = vpack.c.bf16 %v5001, %v5001
    %v5014 = vpack.c.bf16 %v5002, %v5002
    %v5015 = vpack.c.bf16 %v5003, %v5003
    %v5016 = vpack.c.bf16 %v5004, %v5004
    %v5017 = vpack.c.bf16 %v5005, %v5005
    %v5018 = vld [vmem:[#allocation3] sm:$0xff]
    %v5019 = vld [vmem:[#allocation3 + $0x8] sm:$0xff]
    %v5020 = vld [vmem:[#allocation3 + $0x10] sm:$0xff]
    %v5021 = vld [vmem:[#allocation3 + $0x18] sm:$0xff]
    %v5022 = vld [vmem:[#allocation3 + $0x20] sm:$0xff]
    %v5023 = vld [vmem:[#allocation3 + $0x28] sm:$0xff]
    %v5024 = vld [vmem:[#allocation3 + $0x30] sm:$0xff]
    %v5025 = vld [vmem:[#allocation3 + $0x38] sm:$0xff]
    %v5026 = vld [vmem:[#allocation3 + $0x40] sm:$0xff]
    %v5027 = vld [vmem:[#allocation3 + $0x48] sm:$0xff]
    %v5028 = vld [vmem:[#allocation3 + $0x50] sm:$0xff]
    %v5029 = vld [vmem:[#allocation3 + $0x58] sm:$0xff]
    %v5030 = vld [vmem:[#allocation3 + $0x60] sm:$0xff]
    %v5031 = vld [vmem:[#allocation3 + $0x68] sm:$0xff]
    %v5032 = vld [vmem:[#allocation3 + $0x70] sm:$0xff]
    %v5033 = vld [vmem:[#allocation3 + $0x78] sm:$0xff]
    %v5034 = vld [vmem:[#allocation3 + $0x80] sm:$0xff]
    %v5035 = vld [vmem:[#allocation3 + $0x88] sm:$0xff]
    %v5036 = vld [vmem:[#allocation3 + $0x90] sm:$0xff]
    %v5037 = vld [vmem:[#allocation3 + $0x98] sm:$0xff]
    %v5038 = vld [vmem:[#allocation3 + $0xa0] sm:$0xff]
    %v5039 = vld [vmem:[#allocation3 + $0xa8] sm:$0xff]
    %v5040 = vld [vmem:[#allocation3 + $0xb0] sm:$0xff]
    %v5041 = vld [vmem:[#allocation3 + $0xb8] sm:$0xff]
    %v5042 = vld [vmem:[#allocation3 + $0xc0] sm:$0xff]
    %v5043 = vld [vmem:[#allocation3 + $0xc8] sm:$0xff]
    %v5044 = vld [vmem:[#allocation3 + $0xd0] sm:$0xff]
    %v5045 = vld [vmem:[#allocation3 + $0xd8] sm:$0xff]
    %v5046 = vld [vmem:[#allocation3 + $0xe0] sm:$0xff]
    %v5047 = vld [vmem:[#allocation3 + $0xe8] sm:$0xff]
    %v5048 = vld [vmem:[#allocation3 + $0xf0] sm:$0xff]
    %v5049 = vld [vmem:[#allocation3 + $0xf8] sm:$0xff]
    %v5050 = vld [vmem:[#allocation3 + $0x100] sm:$0xff]
    %v5051 = vld [vmem:[#allocation3 + $0x108] sm:$0xff]
    %v5052 = vld [vmem:[#allocation3 + $0x110] sm:$0xff]
    %v5053 = vld [vmem:[#allocation3 + $0x118] sm:$0xff]
    %v5054 = vld [vmem:[#allocation3 + $0x120] sm:$0xff]
    %v5055 = vld [vmem:[#allocation3 + $0x128] sm:$0xff]
    %v5056 = vld [vmem:[#allocation3 + $0x130] sm:$0xff]
    %v5057 = vld [vmem:[#allocation3 + $0x138] sm:$0xff]
    %v5058 = vld [vmem:[#allocation3 + $0x140] sm:$0xff]
    %v5059 = vld [vmem:[#allocation3 + $0x148] sm:$0xff]
    %v5060 = vld [vmem:[#allocation3 + $0x150] sm:$0xff]
    %v5061 = vld [vmem:[#allocation3 + $0x158] sm:$0xff]
    %v5062 = vld [vmem:[#allocation3 + $0x160] sm:$0xff]
    %v5063 = vld [vmem:[#allocation3 + $0x168] sm:$0xff]
    %v5064 = vld [vmem:[#allocation3 + $0x170] sm:$0xff]
    %v5065 = vld [vmem:[#allocation3 + $0x178] sm:$0xff]
    %v5066 = vld [vmem:[#allocation3 + $0x180] sm:$0xff]
    %v5067 = vld [vmem:[#allocation3 + $0x188] sm:$0xff]
    %v5068 = vld [vmem:[#allocation3 + $0x190] sm:$0xff]
    %v5069 = vld [vmem:[#allocation3 + $0x198] sm:$0xff]
    %v5070 = vld [vmem:[#allocation3 + $0x1a0] sm:$0xff]
    %v5071 = vld [vmem:[#allocation3 + $0x1a8] sm:$0xff]
    %v5072 = vld [vmem:[#allocation3 + $0x1b0] sm:$0xff]
    %v5073 = vld [vmem:[#allocation3 + $0x1b8] sm:$0xff]
    %v5074 = vld [vmem:[#allocation3 + $0x1c0] sm:$0xff]
    %v5075 = vld [vmem:[#allocation3 + $0x1c8] sm:$0xff]
    %v5076 = vld [vmem:[#allocation3 + $0x1d0] sm:$0xff]
    %v5077 = vld [vmem:[#allocation3 + $0x1d8] sm:$0xff]
    %v5078 = vld [vmem:[#allocation3 + $0x1e0] sm:$0xff]
    %v5079 = vld [vmem:[#allocation3 + $0x1e8] sm:$0xff]
    %v5080 = vld [vmem:[#allocation3 + $0x1f0] sm:$0xff]
    %v5081 = vld [vmem:[#allocation3 + $0x1f8] sm:$0xff]
    %v5082 = vld [vmem:[#allocation3 + $0x200] sm:$0xff]
    %v5083 = vld [vmem:[#allocation3 + $0x208] sm:$0xff]
    %v5084 = vld [vmem:[#allocation3 + $0x210] sm:$0xff]
    %v5085 = vld [vmem:[#allocation3 + $0x218] sm:$0xff]
    %v5086 = vld [vmem:[#allocation3 + $0x220] sm:$0xff]
    %v5087 = vld [vmem:[#allocation3 + $0x228] sm:$0xff]
    %v5088 = vld [vmem:[#allocation3 + $0x230] sm:$0xff]
    %v5089 = vld [vmem:[#allocation3 + $0x238] sm:$0xff]
    %v5090 = vld [vmem:[#allocation3 + $0x240] sm:$0xff]
    %v5091 = vld [vmem:[#allocation3 + $0x248] sm:$0xff]
    %v5092 = vld [vmem:[#allocation3 + $0x250] sm:$0xff]
    %v5093 = vld [vmem:[#allocation3 + $0x258] sm:$0xff]
    %v5094 = vld [vmem:[#allocation3 + $0x260] sm:$0xff]
    %v5095 = vld [vmem:[#allocation3 + $0x268] sm:$0xff]
    %v5096 = vld [vmem:[#allocation3 + $0x270] sm:$0xff]
    %v5097 = vld [vmem:[#allocation3 + $0x278] sm:$0xff]
    %v5098 = vld [vmem:[#allocation3 + $0x280] sm:$0xff]
    %v5099 = vld [vmem:[#allocation3 + $0x288] sm:$0xff]
    %v5100 = vld [vmem:[#allocation3 + $0x290] sm:$0xff]
    %v5101 = vld [vmem:[#allocation3 + $0x298] sm:$0xff]
    %v5102 = vld [vmem:[#allocation3 + $0x2a0] sm:$0xff]
    %v5103 = vld [vmem:[#allocation3 + $0x2a8] sm:$0xff]
    %v5104 = vld [vmem:[#allocation3 + $0x2b0] sm:$0xff]
    %v5105 = vld [vmem:[#allocation3 + $0x2b8] sm:$0xff]
    %v5106 = vld [vmem:[#allocation3 + $0x2c0] sm:$0xff]
    %v5107 = vld [vmem:[#allocation3 + $0x2c8] sm:$0xff]
    %v5108 = vld [vmem:[#allocation3 + $0x2d0] sm:$0xff]
    %v5109 = vld [vmem:[#allocation3 + $0x2d8] sm:$0xff]
    %v5110 = vld [vmem:[#allocation3 + $0x2e0] sm:$0xff]
    %v5111 = vld [vmem:[#allocation3 + $0x2e8] sm:$0xff]
    %v5112 = vld [vmem:[#allocation3 + $0x2f0] sm:$0xff]
    %v5113 = vld [vmem:[#allocation3 + $0x2f8] sm:$0xff]
    %v5114 = vld [vmem:[#allocation3 + $0x300] sm:$0xff]
    %v5115 = vld [vmem:[#allocation3 + $0x308] sm:$0xff]
    %v5116 = vld [vmem:[#allocation3 + $0x310] sm:$0xff]
    %v5117 = vld [vmem:[#allocation3 + $0x318] sm:$0xff]
    %v5118 = vld [vmem:[#allocation3 + $0x320] sm:$0xff]
    %v5119 = vld [vmem:[#allocation3 + $0x328] sm:$0xff]
    %v5120 = vld [vmem:[#allocation3 + $0x330] sm:$0xff]
    %v5121 = vld [vmem:[#allocation3 + $0x338] sm:$0xff]
    %v5122 = vld [vmem:[#allocation3 + $0x340] sm:$0xff]
    %v5123 = vld [vmem:[#allocation3 + $0x348] sm:$0xff]
    %v5124 = vld [vmem:[#allocation3 + $0x350] sm:$0xff]
    %v5125 = vld [vmem:[#allocation3 + $0x358] sm:$0xff]
    %v5126 = vld [vmem:[#allocation3 + $0x360] sm:$0xff]
    %v5127 = vld [vmem:[#allocation3 + $0x368] sm:$0xff]
    %v5128 = vld [vmem:[#allocation3 + $0x370] sm:$0xff]
    %v5129 = vld [vmem:[#allocation3 + $0x378] sm:$0xff]
    %v5130 = vld [vmem:[#allocation3 + $0x380] sm:$0xff]
    %v5131 = vld [vmem:[#allocation3 + $0x388] sm:$0xff]
    %v5132 = vld [vmem:[#allocation3 + $0x390] sm:$0xff]
    %v5133 = vld [vmem:[#allocation3 + $0x398] sm:$0xff]
    %v5134 = vld [vmem:[#allocation3 + $0x3a0] sm:$0xff]
    %v5135 = vld [vmem:[#allocation3 + $0x3a8] sm:$0xff]
    %v5136 = vld [vmem:[#allocation3 + $0x3b0] sm:$0xff]
    %v5137 = vld [vmem:[#allocation3 + $0x3b8] sm:$0xff]
    %v5138 = vld [vmem:[#allocation3 + $0x3c0] sm:$0xff]
    %v5139 = vld [vmem:[#allocation3 + $0x3c8] sm:$0xff]
    %v5140 = vld [vmem:[#allocation3 + $0x3d0] sm:$0xff]
    %v5141 = vld [vmem:[#allocation3 + $0x3d8] sm:$0xff]
    %v5142 = vld [vmem:[#allocation3 + $0x3e0] sm:$0xff]
    %v5143 = vld [vmem:[#allocation3 + $0x3e8] sm:$0xff]
    %v5144 = vld [vmem:[#allocation3 + $0x3f0] sm:$0xff]
    %v5145 = vld [vmem:[#allocation3 + $0x3f8] sm:$0xff]
    %v5146 = vld [vmem:[#allocation3 + $0x400] sm:$0xff]
    %v5147 = vld [vmem:[#allocation3 + $0x408] sm:$0xff]
    %v5148 = vld [vmem:[#allocation3 + $0x410] sm:$0xff]
    %v5149 = vld [vmem:[#allocation3 + $0x418] sm:$0xff]
    %v5150 = vld [vmem:[#allocation3 + $0x420] sm:$0xff]
    %v5151 = vld [vmem:[#allocation3 + $0x428] sm:$0xff]
    %v5152 = vld [vmem:[#allocation3 + $0x430] sm:$0xff]
    %v5153 = vld [vmem:[#allocation3 + $0x438] sm:$0xff]
    %v5154 = vld [vmem:[#allocation3 + $0x440] sm:$0xff]
    %v5155 = vld [vmem:[#allocation3 + $0x448] sm:$0xff]
    %v5156 = vld [vmem:[#allocation3 + $0x450] sm:$0xff]
    %v5157 = vld [vmem:[#allocation3 + $0x458] sm:$0xff]
    %v5158 = vld [vmem:[#allocation3 + $0x460] sm:$0xff]
    %v5159 = vld [vmem:[#allocation3 + $0x468] sm:$0xff]
    %v5160 = vld [vmem:[#allocation3 + $0x470] sm:$0xff]
    %v5161 = vld [vmem:[#allocation3 + $0x478] sm:$0xff]
    %v5162 = vld [vmem:[#allocation3 + $0x480] sm:$0xff]
    %v5163 = vld [vmem:[#allocation3 + $0x488] sm:$0xff]
    %v5164 = vld [vmem:[#allocation3 + $0x490] sm:$0xff]
    %v5165 = vld [vmem:[#allocation3 + $0x498] sm:$0xff]
    %v5166 = vld [vmem:[#allocation3 + $0x4a0] sm:$0xff]
    %v5167 = vld [vmem:[#allocation3 + $0x4a8] sm:$0xff]
    %v5168 = vld [vmem:[#allocation3 + $0x4b0] sm:$0xff]
    %v5169 = vld [vmem:[#allocation3 + $0x4b8] sm:$0xff]
    %v5170 = vld [vmem:[#allocation3 + $0x4c0] sm:$0xff]
    %v5171 = vld [vmem:[#allocation3 + $0x4c8] sm:$0xff]
    %v5172 = vld [vmem:[#allocation3 + $0x4d0] sm:$0xff]
    %v5173 = vld [vmem:[#allocation3 + $0x4d8] sm:$0xff]
    %v5174 = vld [vmem:[#allocation3 + $0x4e0] sm:$0xff]
    %v5175 = vld [vmem:[#allocation3 + $0x4e8] sm:$0xff]
    %v5176 = vld [vmem:[#allocation3 + $0x4f0] sm:$0xff]
    %v5177 = vld [vmem:[#allocation3 + $0x4f8] sm:$0xff]
    %v5178 = vld [vmem:[#allocation3 + $0x500] sm:$0xff]
    %v5179 = vld [vmem:[#allocation3 + $0x508] sm:$0xff]
    %v5180 = vld [vmem:[#allocation3 + $0x510] sm:$0xff]
    %v5181 = vld [vmem:[#allocation3 + $0x518] sm:$0xff]
    %v5182 = vld [vmem:[#allocation3 + $0x520] sm:$0xff]
    %v5183 = vld [vmem:[#allocation3 + $0x528] sm:$0xff]
    %v5184 = vld [vmem:[#allocation3 + $0x530] sm:$0xff]
    %v5185 = vld [vmem:[#allocation3 + $0x538] sm:$0xff]
    %v5186 = vld [vmem:[#allocation3 + $0x540] sm:$0xff]
    %v5187 = vld [vmem:[#allocation3 + $0x548] sm:$0xff]
    %v5188 = vld [vmem:[#allocation3 + $0x550] sm:$0xff]
    %v5189 = vld [vmem:[#allocation3 + $0x558] sm:$0xff]
    %v5190 = vld [vmem:[#allocation3 + $0x560] sm:$0xff]
    %v5191 = vld [vmem:[#allocation3 + $0x568] sm:$0xff]
    %v5192 = vld [vmem:[#allocation3 + $0x570] sm:$0xff]
    %v5193 = vld [vmem:[#allocation3 + $0x578] sm:$0xff]
    %v5194 = vld [vmem:[#allocation3 + $0x580] sm:$0xff]
    %v5195 = vld [vmem:[#allocation3 + $0x588] sm:$0xff]
    %v5196 = vld [vmem:[#allocation3 + $0x590] sm:$0xff]
    %v5197 = vld [vmem:[#allocation3 + $0x598] sm:$0xff]
    %v5198 = vld [vmem:[#allocation3 + $0x5a0] sm:$0xff]
    %v5199 = vld [vmem:[#allocation3 + $0x5a8] sm:$0xff]
    %v5200 = vld [vmem:[#allocation3 + $0x5b0] sm:$0xff]
    %v5201 = vld [vmem:[#allocation3 + $0x5b8] sm:$0xff]
    %v5202 = vld [vmem:[#allocation3 + $0x5c0] sm:$0xff]
    %v5203 = vld [vmem:[#allocation3 + $0x5c8] sm:$0xff]
    %v5204 = vld [vmem:[#allocation3 + $0x5d0] sm:$0xff]
    %v5205 = vld [vmem:[#allocation3 + $0x5d8] sm:$0xff]
    %v5206 = vld [vmem:[#allocation3 + $0x5e0] sm:$0xff]
    %v5207 = vld [vmem:[#allocation3 + $0x5e8] sm:$0xff]
    %v5208 = vld [vmem:[#allocation3 + $0x5f0] sm:$0xff]
    %v5209 = vld [vmem:[#allocation3 + $0x5f8] sm:$0xff]
    %v5210 = vld [vmem:[#allocation3 + $0x600] sm:$0xff]
    %v5211 = vld [vmem:[#allocation3 + $0x608] sm:$0xff]
    %v5212 = vld [vmem:[#allocation3 + $0x610] sm:$0xff]
    %v5213 = vld [vmem:[#allocation3 + $0x618] sm:$0xff]
    %v5214 = vld [vmem:[#allocation3 + $0x620] sm:$0xff]
    %v5215 = vld [vmem:[#allocation3 + $0x628] sm:$0xff]
    %v5216 = vld [vmem:[#allocation3 + $0x630] sm:$0xff]
    %v5217 = vld [vmem:[#allocation3 + $0x638] sm:$0xff]
    %v5218 = vld [vmem:[#allocation3 + $0x640] sm:$0xff]
    %v5219 = vld [vmem:[#allocation3 + $0x648] sm:$0xff]
    %v5220 = vld [vmem:[#allocation3 + $0x650] sm:$0xff]
    %v5221 = vld [vmem:[#allocation3 + $0x658] sm:$0xff]
    %v5222 = vld [vmem:[#allocation3 + $0x660] sm:$0xff]
    %v5223 = vld [vmem:[#allocation3 + $0x668] sm:$0xff]
    %v5224 = vld [vmem:[#allocation3 + $0x670] sm:$0xff]
    %v5225 = vld [vmem:[#allocation3 + $0x678] sm:$0xff]
    %v5226 = vld [vmem:[#allocation3 + $0x680] sm:$0xff]
    %v5227 = vld [vmem:[#allocation3 + $0x688] sm:$0xff]
    %v5228 = vld [vmem:[#allocation3 + $0x690] sm:$0xff]
    %v5229 = vld [vmem:[#allocation3 + $0x698] sm:$0xff]
    %v5230 = vld [vmem:[#allocation3 + $0x6a0] sm:$0xff]
    %v5231 = vld [vmem:[#allocation3 + $0x6a8] sm:$0xff]
    %v5232 = vld [vmem:[#allocation3 + $0x6b0] sm:$0xff]
    %v5233 = vld [vmem:[#allocation3 + $0x6b8] sm:$0xff]
    %v5234 = vld [vmem:[#allocation3 + $0x6c0] sm:$0xff]
    %v5235 = vld [vmem:[#allocation3 + $0x6c8] sm:$0xff]
    %v5236 = vld [vmem:[#allocation3 + $0x6d0] sm:$0xff]
    %v5237 = vld [vmem:[#allocation3 + $0x6d8] sm:$0xff]
    %v5238 = vld [vmem:[#allocation3 + $0x6e0] sm:$0xff]
    %v5239 = vld [vmem:[#allocation3 + $0x6e8] sm:$0xff]
    %v5240 = vld [vmem:[#allocation3 + $0x6f0] sm:$0xff]
    %v5241 = vld [vmem:[#allocation3 + $0x6f8] sm:$0xff]
    %v5242 = vld [vmem:[#allocation3 + $0x700] sm:$0xff]
    %v5243 = vld [vmem:[#allocation3 + $0x708] sm:$0xff]
    %v5244 = vld [vmem:[#allocation3 + $0x710] sm:$0xff]
    %v5245 = vld [vmem:[#allocation3 + $0x718] sm:$0xff]
    %v5246 = vld [vmem:[#allocation3 + $0x720] sm:$0xff]
    %v5247 = vld [vmem:[#allocation3 + $0x728] sm:$0xff]
    %v5248 = vld [vmem:[#allocation3 + $0x730] sm:$0xff]
    %v5249 = vld [vmem:[#allocation3 + $0x738] sm:$0xff]
    %v5250 = vld [vmem:[#allocation3 + $0x740] sm:$0xff]
    %v5251 = vld [vmem:[#allocation3 + $0x748] sm:$0xff]
    %v5252 = vld [vmem:[#allocation3 + $0x750] sm:$0xff]
    %v5253 = vld [vmem:[#allocation3 + $0x758] sm:$0xff]
    %v5254 = vld [vmem:[#allocation3 + $0x760] sm:$0xff]
    %v5255 = vld [vmem:[#allocation3 + $0x768] sm:$0xff]
    %v5256 = vld [vmem:[#allocation3 + $0x770] sm:$0xff]
    %v5257 = vld [vmem:[#allocation3 + $0x778] sm:$0xff]
    %v5258 = vld [vmem:[#allocation3 + $0x780] sm:$0xff]
    %v5259 = vld [vmem:[#allocation3 + $0x788] sm:$0xff]
    %v5260 = vld [vmem:[#allocation3 + $0x790] sm:$0xff]
    %v5261 = vld [vmem:[#allocation3 + $0x798] sm:$0xff]
    %v5262 = vld [vmem:[#allocation3 + $0x7a0] sm:$0xff]
    %v5263 = vld [vmem:[#allocation3 + $0x7a8] sm:$0xff]
    %v5264 = vld [vmem:[#allocation3 + $0x7b0] sm:$0xff]
    %v5265 = vld [vmem:[#allocation3 + $0x7b8] sm:$0xff]
    %v5266 = vld [vmem:[#allocation3 + $0x7c0] sm:$0xff]
    %v5267 = vld [vmem:[#allocation3 + $0x7c8] sm:$0xff]
    %v5268 = vld [vmem:[#allocation3 + $0x7d0] sm:$0xff]
    %v5269 = vld [vmem:[#allocation3 + $0x7d8] sm:$0xff]
    %v5270 = vld [vmem:[#allocation3 + $0x7e0] sm:$0xff]
    %v5271 = vld [vmem:[#allocation3 + $0x7e8] sm:$0xff]
    %v5272 = vld [vmem:[#allocation3 + $0x7f0] sm:$0xff]
    %v5273 = vld [vmem:[#allocation3 + $0x7f8] sm:$0xff]
    %v5274 = vld [vmem:[#allocation3 + $0x800] sm:$0xff]
    %v5275 = vld [vmem:[#allocation3 + $0x808] sm:$0xff]
    %v5276 = vld [vmem:[#allocation3 + $0x810] sm:$0xff]
    %v5277 = vld [vmem:[#allocation3 + $0x818] sm:$0xff]
    %v5278 = vld [vmem:[#allocation3 + $0x820] sm:$0xff]
    %v5279 = vld [vmem:[#allocation3 + $0x828] sm:$0xff]
    %v5280 = vld [vmem:[#allocation3 + $0x830] sm:$0xff]
    %v5281 = vld [vmem:[#allocation3 + $0x838] sm:$0xff]
    %v5282 = vld [vmem:[#allocation3 + $0x840] sm:$0xff]
    %v5283 = vld [vmem:[#allocation3 + $0x848] sm:$0xff]
    %v5284 = vld [vmem:[#allocation3 + $0x850] sm:$0xff]
    %v5285 = vld [vmem:[#allocation3 + $0x858] sm:$0xff]
    %v5286 = vld [vmem:[#allocation3 + $0x860] sm:$0xff]
    %v5287 = vld [vmem:[#allocation3 + $0x868] sm:$0xff]
    %v5288 = vld [vmem:[#allocation3 + $0x870] sm:$0xff]
    %v5289 = vld [vmem:[#allocation3 + $0x878] sm:$0xff]
    %v5290 = vld [vmem:[#allocation3 + $0x880] sm:$0xff]
    %v5291 = vld [vmem:[#allocation3 + $0x888] sm:$0xff]
    %v5292 = vld [vmem:[#allocation3 + $0x890] sm:$0xff]
    %v5293 = vld [vmem:[#allocation3 + $0x898] sm:$0xff]
    %v5294 = vld [vmem:[#allocation3 + $0x8a0] sm:$0xff]
    %v5295 = vld [vmem:[#allocation3 + $0x8a8] sm:$0xff]
    %v5296 = vld [vmem:[#allocation3 + $0x8b0] sm:$0xff]
    %v5297 = vld [vmem:[#allocation3 + $0x8b8] sm:$0xff]
    %v5298 = vld [vmem:[#allocation3 + $0x8c0] sm:$0xff]
    %v5299 = vld [vmem:[#allocation3 + $0x8c8] sm:$0xff]
    %v5300 = vld [vmem:[#allocation3 + $0x8d0] sm:$0xff]
    %v5301 = vld [vmem:[#allocation3 + $0x8d8] sm:$0xff]
    %v5302 = vld [vmem:[#allocation3 + $0x8e0] sm:$0xff]
    %v5303 = vld [vmem:[#allocation3 + $0x8e8] sm:$0xff]
    %v5304 = vld [vmem:[#allocation3 + $0x8f0] sm:$0xff]
    %v5305 = vld [vmem:[#allocation3 + $0x8f8] sm:$0xff]
    %v5306 = vld [vmem:[#allocation3 + $0x900] sm:$0xff]
    %v5307 = vld [vmem:[#allocation3 + $0x908] sm:$0xff]
    %v5308 = vld [vmem:[#allocation3 + $0x910] sm:$0xff]
    %v5309 = vld [vmem:[#allocation3 + $0x918] sm:$0xff]
    %v5310 = vld [vmem:[#allocation3 + $0x920] sm:$0xff]
    %v5311 = vld [vmem:[#allocation3 + $0x928] sm:$0xff]
    %v5312 = vld [vmem:[#allocation3 + $0x930] sm:$0xff]
    %v5313 = vld [vmem:[#allocation3 + $0x938] sm:$0xff]
    %v5314 = vld [vmem:[#allocation3 + $0x940] sm:$0xff]
    %v5315 = vld [vmem:[#allocation3 + $0x948] sm:$0xff]
    %v5316 = vld [vmem:[#allocation3 + $0x950] sm:$0xff]
    %v5317 = vld [vmem:[#allocation3 + $0x958] sm:$0xff]
    %v5318 = vld [vmem:[#allocation3 + $0x960] sm:$0xff]
    %v5319 = vld [vmem:[#allocation3 + $0x968] sm:$0xff]
    %v5320 = vld [vmem:[#allocation3 + $0x970] sm:$0xff]
    %v5321 = vld [vmem:[#allocation3 + $0x978] sm:$0xff]
    %v5322 = vld [vmem:[#allocation3 + $0x980] sm:$0xff]
    %v5323 = vld [vmem:[#allocation3 + $0x988] sm:$0xff]
    %v5324 = vld [vmem:[#allocation3 + $0x990] sm:$0xff]
    %v5325 = vld [vmem:[#allocation3 + $0x998] sm:$0xff]
    %v5326 = vld [vmem:[#allocation3 + $0x9a0] sm:$0xff]
    %v5327 = vld [vmem:[#allocation3 + $0x9a8] sm:$0xff]
    %v5328 = vld [vmem:[#allocation3 + $0x9b0] sm:$0xff]
    %v5329 = vld [vmem:[#allocation3 + $0x9b8] sm:$0xff]
    %v5330 = vld [vmem:[#allocation3 + $0x9c0] sm:$0xff]
    %v5331 = vld [vmem:[#allocation3 + $0x9c8] sm:$0xff]
    %v5332 = vld [vmem:[#allocation3 + $0x9d0] sm:$0xff]
    %v5333 = vld [vmem:[#allocation3 + $0x9d8] sm:$0xff]
    %v5334 = vld [vmem:[#allocation3 + $0x9e0] sm:$0xff]
    %v5335 = vld [vmem:[#allocation3 + $0x9e8] sm:$0xff]
    %v5336 = vld [vmem:[#allocation3 + $0x9f0] sm:$0xff]
    %v5337 = vld [vmem:[#allocation3 + $0x9f8] sm:$0xff]
    %v5338 = vld [vmem:[#allocation3 + $0xa00] sm:$0xff]
    %v5339 = vld [vmem:[#allocation3 + $0xa08] sm:$0xff]
    %v5340 = vld [vmem:[#allocation3 + $0xa10] sm:$0xff]
    %v5341 = vld [vmem:[#allocation3 + $0xa18] sm:$0xff]
    %v5342 = vld [vmem:[#allocation3 + $0xa20] sm:$0xff]
    %v5343 = vld [vmem:[#allocation3 + $0xa28] sm:$0xff]
    %v5344 = vld [vmem:[#allocation3 + $0xa30] sm:$0xff]
    %v5345 = vld [vmem:[#allocation3 + $0xa38] sm:$0xff]
    %v5346 = vld [vmem:[#allocation3 + $0xa40] sm:$0xff]
    %v5347 = vld [vmem:[#allocation3 + $0xa48] sm:$0xff]
    %v5348 = vld [vmem:[#allocation3 + $0xa50] sm:$0xff]
    %v5349 = vld [vmem:[#allocation3 + $0xa58] sm:$0xff]
    %v5350 = vld [vmem:[#allocation3 + $0xa60] sm:$0xff]
    %v5351 = vld [vmem:[#allocation3 + $0xa68] sm:$0xff]
    %v5352 = vld [vmem:[#allocation3 + $0xa70] sm:$0xff]
    %v5353 = vld [vmem:[#allocation3 + $0xa78] sm:$0xff]
    %v5354 = vld [vmem:[#allocation3 + $0xa80] sm:$0xff]
    %v5355 = vld [vmem:[#allocation3 + $0xa88] sm:$0xff]
    %v5356 = vld [vmem:[#allocation3 + $0xa90] sm:$0xff]
    %v5357 = vld [vmem:[#allocation3 + $0xa98] sm:$0xff]
    %v5358 = vld [vmem:[#allocation3 + $0xaa0] sm:$0xff]
    %v5359 = vld [vmem:[#allocation3 + $0xaa8] sm:$0xff]
    %v5360 = vld [vmem:[#allocation3 + $0xab0] sm:$0xff]
    %v5361 = vld [vmem:[#allocation3 + $0xab8] sm:$0xff]
    %v5362 = vld [vmem:[#allocation3 + $0xac0] sm:$0xff]
    %v5363 = vld [vmem:[#allocation3 + $0xac8] sm:$0xff]
    %v5364 = vld [vmem:[#allocation3 + $0xad0] sm:$0xff]
    %v5365 = vld [vmem:[#allocation3 + $0xad8] sm:$0xff]
    %v5366 = vld [vmem:[#allocation3 + $0xae0] sm:$0xff]
    %v5367 = vld [vmem:[#allocation3 + $0xae8] sm:$0xff]
    %v5368 = vld [vmem:[#allocation3 + $0xaf0] sm:$0xff]
    %v5369 = vld [vmem:[#allocation3 + $0xaf8] sm:$0xff]
    %v5370 = vld [vmem:[#allocation3 + $0xb00] sm:$0xff]
    %v5371 = vld [vmem:[#allocation3 + $0xb08] sm:$0xff]
    %v5372 = vld [vmem:[#allocation3 + $0xb10] sm:$0xff]
    %v5373 = vld [vmem:[#allocation3 + $0xb18] sm:$0xff]
    %v5374 = vld [vmem:[#allocation3 + $0xb20] sm:$0xff]
    %v5375 = vld [vmem:[#allocation3 + $0xb28] sm:$0xff]
    %v5376 = vld [vmem:[#allocation3 + $0xb30] sm:$0xff]
    %v5377 = vld [vmem:[#allocation3 + $0xb38] sm:$0xff]
    %v5378 = vld [vmem:[#allocation3 + $0xb40] sm:$0xff]
    %v5379 = vld [vmem:[#allocation3 + $0xb48] sm:$0xff]
    %v5380 = vld [vmem:[#allocation3 + $0xb50] sm:$0xff]
    %v5381 = vld [vmem:[#allocation3 + $0xb58] sm:$0xff]
    %v5382 = vld [vmem:[#allocation3 + $0xb60] sm:$0xff]
    %v5383 = vld [vmem:[#allocation3 + $0xb68] sm:$0xff]
    %v5384 = vld [vmem:[#allocation3 + $0xb70] sm:$0xff]
    %v5385 = vld [vmem:[#allocation3 + $0xb78] sm:$0xff]
    %v5386 = vld [vmem:[#allocation3 + $0xb80] sm:$0xff]
    %v5387 = vld [vmem:[#allocation3 + $0xb88] sm:$0xff]
    %v5388 = vld [vmem:[#allocation3 + $0xb90] sm:$0xff]
    %v5389 = vld [vmem:[#allocation3 + $0xb98] sm:$0xff]
    %v5390 = vld [vmem:[#allocation3 + $0xba0] sm:$0xff]
    %v5391 = vld [vmem:[#allocation3 + $0xba8] sm:$0xff]
    %v5392 = vld [vmem:[#allocation3 + $0xbb0] sm:$0xff]
    %v5393 = vld [vmem:[#allocation3 + $0xbb8] sm:$0xff]
    %v5394 = vld [vmem:[#allocation3 + $0xbc0] sm:$0xff]
    %v5395 = vld [vmem:[#allocation3 + $0xbc8] sm:$0xff]
    %v5396 = vld [vmem:[#allocation3 + $0xbd0] sm:$0xff]
    %v5397 = vld [vmem:[#allocation3 + $0xbd8] sm:$0xff]
    %v5398 = vld [vmem:[#allocation3 + $0xbe0] sm:$0xff]
    %v5399 = vld [vmem:[#allocation3 + $0xbe8] sm:$0xff]
    %v5400 = vld [vmem:[#allocation3 + $0xbf0] sm:$0xff]
    %v5401 = vld [vmem:[#allocation3 + $0xbf8] sm:$0xff]
    %v5402 = vld [vmem:[#allocation3 + $0xc00] sm:$0xff]
    %v5403 = vld [vmem:[#allocation3 + $0xc08] sm:$0xff]
    %v5404 = vld [vmem:[#allocation3 + $0xc10] sm:$0xff]
    %v5405 = vld [vmem:[#allocation3 + $0xc18] sm:$0xff]
    %v5406 = vld [vmem:[#allocation3 + $0xc20] sm:$0xff]
    %v5407 = vld [vmem:[#allocation3 + $0xc28] sm:$0xff]
    %v5408 = vld [vmem:[#allocation3 + $0xc30] sm:$0xff]
    %v5409 = vld [vmem:[#allocation3 + $0xc38] sm:$0xff]
    %v5410 = vld [vmem:[#allocation3 + $0xc40] sm:$0xff]
    %v5411 = vld [vmem:[#allocation3 + $0xc48] sm:$0xff]
    %v5412 = vld [vmem:[#allocation3 + $0xc50] sm:$0xff]
    %v5413 = vld [vmem:[#allocation3 + $0xc58] sm:$0xff]
    %v5414 = vld [vmem:[#allocation3 + $0xc60] sm:$0xff]
    %v5415 = vld [vmem:[#allocation3 + $0xc68] sm:$0xff]
    %v5416 = vld [vmem:[#allocation3 + $0xc70] sm:$0xff]
    %v5417 = vld [vmem:[#allocation3 + $0xc78] sm:$0xff]
    %v5418 = vld [vmem:[#allocation3 + $0xc80] sm:$0xff]
    %v5419 = vld [vmem:[#allocation3 + $0xc88] sm:$0xff]
    %v5420 = vld [vmem:[#allocation3 + $0xc90] sm:$0xff]
    %v5421 = vld [vmem:[#allocation3 + $0xc98] sm:$0xff]
    %v5422 = vld [vmem:[#allocation3 + $0xca0] sm:$0xff]
    %v5423 = vld [vmem:[#allocation3 + $0xca8] sm:$0xff]
    %v5424 = vld [vmem:[#allocation3 + $0xcb0] sm:$0xff]
    %v5425 = vld [vmem:[#allocation3 + $0xcb8] sm:$0xff]
    %v5426 = vld [vmem:[#allocation3 + $0xcc0] sm:$0xff]
    %v5427 = vld [vmem:[#allocation3 + $0xcc8] sm:$0xff]
    %v5428 = vld [vmem:[#allocation3 + $0xcd0] sm:$0xff]
    %v5429 = vld [vmem:[#allocation3 + $0xcd8] sm:$0xff]
    %v5430 = vld [vmem:[#allocation3 + $0xce0] sm:$0xff]
    %v5431 = vld [vmem:[#allocation3 + $0xce8] sm:$0xff]
    %v5432 = vld [vmem:[#allocation3 + $0xcf0] sm:$0xff]
    %v5433 = vld [vmem:[#allocation3 + $0xcf8] sm:$0xff]
    %v5434 = vld [vmem:[#allocation3 + $0xd00] sm:$0xff]
    %v5435 = vld [vmem:[#allocation3 + $0xd08] sm:$0xff]
    %v5436 = vld [vmem:[#allocation3 + $0xd10] sm:$0xff]
    %v5437 = vld [vmem:[#allocation3 + $0xd18] sm:$0xff]
    %v5438 = vld [vmem:[#allocation3 + $0xd20] sm:$0xff]
    %v5439 = vld [vmem:[#allocation3 + $0xd28] sm:$0xff]
    %v5440 = vld [vmem:[#allocation3 + $0xd30] sm:$0xff]
    %v5441 = vld [vmem:[#allocation3 + $0xd38] sm:$0xff]
    %v5442 = vld [vmem:[#allocation3 + $0xd40] sm:$0xff]
    %v5443 = vld [vmem:[#allocation3 + $0xd48] sm:$0xff]
    %v5444 = vld [vmem:[#allocation3 + $0xd50] sm:$0xff]
    %v5445 = vld [vmem:[#allocation3 + $0xd58] sm:$0xff]
    %v5446 = vld [vmem:[#allocation3 + $0xd60] sm:$0xff]
    %v5447 = vld [vmem:[#allocation3 + $0xd68] sm:$0xff]
    %v5448 = vld [vmem:[#allocation3 + $0xd70] sm:$0xff]
    %v5449 = vld [vmem:[#allocation3 + $0xd78] sm:$0xff]
    %v5450 = vld [vmem:[#allocation3 + $0xd80] sm:$0xff]
    %v5451 = vld [vmem:[#allocation3 + $0xd88] sm:$0xff]
    %v5452 = vld [vmem:[#allocation3 + $0xd90] sm:$0xff]
    %v5453 = vld [vmem:[#allocation3 + $0xd98] sm:$0xff]
    %v5454 = vld [vmem:[#allocation3 + $0xda0] sm:$0xff]
    %v5455 = vld [vmem:[#allocation3 + $0xda8] sm:$0xff]
    %v5456 = vld [vmem:[#allocation3 + $0xdb0] sm:$0xff]
    %v5457 = vld [vmem:[#allocation3 + $0xdb8] sm:$0xff]
    %v5458 = vld [vmem:[#allocation3 + $0xdc0] sm:$0xff]
    %v5459 = vld [vmem:[#allocation3 + $0xdc8] sm:$0xff]
    %v5460 = vld [vmem:[#allocation3 + $0xdd0] sm:$0xff]
    %v5461 = vld [vmem:[#allocation3 + $0xdd8] sm:$0xff]
    %v5462 = vld [vmem:[#allocation3 + $0xde0] sm:$0xff]
    %v5463 = vld [vmem:[#allocation3 + $0xde8] sm:$0xff]
    %v5464 = vld [vmem:[#allocation3 + $0xdf0] sm:$0xff]
    %v5465 = vld [vmem:[#allocation3 + $0xdf8] sm:$0xff]
    %v5466 = vld [vmem:[#allocation3 + $0xe00] sm:$0xff]
    %v5467 = vld [vmem:[#allocation3 + $0xe08] sm:$0xff]
    %v5468 = vld [vmem:[#allocation3 + $0xe10] sm:$0xff]
    %v5469 = vld [vmem:[#allocation3 + $0xe18] sm:$0xff]
    %v5470 = vld [vmem:[#allocation3 + $0xe20] sm:$0xff]
    %v5471 = vld [vmem:[#allocation3 + $0xe28] sm:$0xff]
    %v5472 = vld [vmem:[#allocation3 + $0xe30] sm:$0xff]
    %v5473 = vld [vmem:[#allocation3 + $0xe38] sm:$0xff]
    %v5474 = vld [vmem:[#allocation3 + $0xe40] sm:$0xff]
    %v5475 = vld [vmem:[#allocation3 + $0xe48] sm:$0xff]
    %v5476 = vld [vmem:[#allocation3 + $0xe50] sm:$0xff]
    %v5477 = vld [vmem:[#allocation3 + $0xe58] sm:$0xff]
    %v5478 = vld [vmem:[#allocation3 + $0xe60] sm:$0xff]
    %v5479 = vld [vmem:[#allocation3 + $0xe68] sm:$0xff]
    %v5480 = vld [vmem:[#allocation3 + $0xe70] sm:$0xff]
    %v5481 = vld [vmem:[#allocation3 + $0xe78] sm:$0xff]
    %v5482 = vld [vmem:[#allocation3 + $0xe80] sm:$0xff]
    %v5483 = vld [vmem:[#allocation3 + $0xe88] sm:$0xff]
    %v5484 = vld [vmem:[#allocation3 + $0xe90] sm:$0xff]
    %v5485 = vld [vmem:[#allocation3 + $0xe98] sm:$0xff]
    %v5486 = vld [vmem:[#allocation3 + $0xea0] sm:$0xff]
    %v5487 = vld [vmem:[#allocation3 + $0xea8] sm:$0xff]
    %v5488 = vld [vmem:[#allocation3 + $0xeb0] sm:$0xff]
    %v5489 = vld [vmem:[#allocation3 + $0xeb8] sm:$0xff]
    %v5490 = vld [vmem:[#allocation3 + $0xec0] sm:$0xff]
    %v5491 = vld [vmem:[#allocation3 + $0xec8] sm:$0xff]
    %v5492 = vld [vmem:[#allocation3 + $0xed0] sm:$0xff]
    %v5493 = vld [vmem:[#allocation3 + $0xed8] sm:$0xff]
    %v5494 = vld [vmem:[#allocation3 + $0xee0] sm:$0xff]
    %v5495 = vld [vmem:[#allocation3 + $0xee8] sm:$0xff]
    %v5496 = vld [vmem:[#allocation3 + $0xef0] sm:$0xff]
    %v5497 = vld [vmem:[#allocation3 + $0xef8] sm:$0xff]
    %v5498 = vld [vmem:[#allocation3 + $0xf00] sm:$0xff]
    %v5499 = vld [vmem:[#allocation3 + $0xf08] sm:$0xff]
    %v5500 = vld [vmem:[#allocation3 + $0xf10] sm:$0xff]
    %v5501 = vld [vmem:[#allocation3 + $0xf18] sm:$0xff]
    %v5502 = vld [vmem:[#allocation3 + $0xf20] sm:$0xff]
    %v5503 = vld [vmem:[#allocation3 + $0xf28] sm:$0xff]
    %v5504 = vld [vmem:[#allocation3 + $0xf30] sm:$0xff]
    %v5505 = vld [vmem:[#allocation3 + $0xf38] sm:$0xff]
    %v5506 = vld [vmem:[#allocation3 + $0xf40] sm:$0xff]
    %v5507 = vld [vmem:[#allocation3 + $0xf48] sm:$0xff]
    %v5508 = vld [vmem:[#allocation3 + $0xf50] sm:$0xff]
    %v5509 = vld [vmem:[#allocation3 + $0xf58] sm:$0xff]
    %v5510 = vld [vmem:[#allocation3 + $0xf60] sm:$0xff]
    %v5511 = vld [vmem:[#allocation3 + $0xf68] sm:$0xff]
    %v5512 = vld [vmem:[#allocation3 + $0xf70] sm:$0xff]
    %v5513 = vld [vmem:[#allocation3 + $0xf78] sm:$0xff]
    %v5514 = vld [vmem:[#allocation3 + $0xf80] sm:$0xff]
    %v5515 = vld [vmem:[#allocation3 + $0xf88] sm:$0xff]
    %v5516 = vld [vmem:[#allocation3 + $0xf90] sm:$0xff]
    %v5517 = vld [vmem:[#allocation3 + $0xf98] sm:$0xff]
    %v5518 = vld [vmem:[#allocation3 + $0xfa0] sm:$0xff]
    %v5519 = vld [vmem:[#allocation3 + $0xfa8] sm:$0xff]
    %v5520 = vld [vmem:[#allocation3 + $0xfb0] sm:$0xff]
    %v5521 = vld [vmem:[#allocation3 + $0xfb8] sm:$0xff]
    %v5522 = vld [vmem:[#allocation3 + $0xfc0] sm:$0xff]
    %v5523 = vld [vmem:[#allocation3 + $0xfc8] sm:$0xff]
    %v5524 = vld [vmem:[#allocation3 + $0xfd0] sm:$0xff]
    %v5525 = vld [vmem:[#allocation3 + $0xfd8] sm:$0xff]
    %v5526 = vld [vmem:[#allocation3 + $0xfe0] sm:$0xff]
    %v5527 = vld [vmem:[#allocation3 + $0xfe8] sm:$0xff]
    %v5528 = vld [vmem:[#allocation3 + $0xff0] sm:$0xff]
    %v5529 = vld [vmem:[#allocation3 + $0xff8] sm:$0xff]
    %v5530 = vld [vmem:[#allocation37] sm:$0xff]
    %v5532 = vlaneseq
    %v5533 = vshrl.u32 %v5532, 7
    %v5534 = vsub.s32 0, %v5533
    %v5535 = vrot.slane %v5530, %v5534
    %v5536 = vlaneseq
    %v5537 = vshrl.u32 %v5536, 7
    %v5538 = vsub.s32 1, %v5537
    %v5539 = vrot.slane %v5530, %v5538
    %v5540 = vlaneseq
    %v5541 = vshrl.u32 %v5540, 7
    %v5542 = vsub.s32 2, %v5541
    %v5543 = vrot.slane %v5530, %v5542
    %v5544 = vlaneseq
    %v5545 = vshrl.u32 %v5544, 7
    %v5546 = vsub.s32 3, %v5545
    %v5547 = vrot.slane %v5530, %v5546
    %v5548 = vlaneseq
    %v5549 = vshrl.u32 %v5548, 7
    %v5550 = vsub.s32 4, %v5549
    %v5551 = vrot.slane %v5530, %v5550
    %v5552 = vlaneseq
    %v5553 = vshrl.u32 %v5552, 7
    %v5554 = vsub.s32 5, %v5553
    %v5555 = vrot.slane %v5530, %v5554
    %v5556 = vlaneseq
    %v5557 = vshrl.u32 %v5556, 7
    %v5558 = vsub.s32 6, %v5557
    %v5559 = vrot.slane %v5530, %v5558
    %v5560 = vlaneseq
    %v5561 = vshrl.u32 %v5560, 7
    %v5562 = vsub.s32 7, %v5561
    %v5563 = vrot.slane %v5530, %v5562
    %5572 = vmatprep.subr.bf16.mxu0 %v5019
    %5573 = vmatpush1.bf16.msra.mxu0 %v5018
    %5574 = vmatprep.subr.bf16.mxu0 %v5027
    %5575 = vmatpush1.bf16.msra.mxu0 %v5026
    %5576 = vmatprep.subr.bf16.mxu0 %v5035
    %5577 = vmatpush1.bf16.msra.mxu0 %v5034
    %5578 = vmatprep.subr.bf16.mxu0 %v5043
    %5579 = vmatpush1.bf16.msra.mxu0 %v5042
    %5580 = vmatprep.subr.bf16.mxu0 %v5051
    %5581 = vmatpush1.bf16.msra.mxu0 %v5050
    %5582 = vmatprep.subr.bf16.mxu0 %v5059
    %5583 = vmatpush1.bf16.msra.mxu0 %v5058
    %5584 = vmatprep.subr.bf16.mxu0 %v5067
    %5585 = vmatpush1.bf16.msra.mxu0 %v5066
    %5586 = vmatprep.subr.bf16.mxu0 %v5075
    %5587 = vmatpush1.bf16.msra.mxu0 %v5074
    %5588 = vmatprep.subr.bf16.mxu0 %v5083
    %5589 = vmatpush1.bf16.msra.mxu0 %v5082
    %5590 = vmatprep.subr.bf16.mxu0 %v5091
    %5591 = vmatpush1.bf16.msra.mxu0 %v5090
    %5592 = vmatprep.subr.bf16.mxu0 %v5099
    %5593 = vmatpush1.bf16.msra.mxu0 %v5098
    %5594 = vmatprep.subr.bf16.mxu0 %v5107
    %5595 = vmatpush1.bf16.msra.mxu0 %v5106
    %5596 = vmatprep.subr.bf16.mxu0 %v5115
    %5597 = vmatpush1.bf16.msra.mxu0 %v5114
    %5598 = vmatprep.subr.bf16.mxu0 %v5123
    %5599 = vmatpush1.bf16.msra.mxu0 %v5122
    %5600 = vmatprep.subr.bf16.mxu0 %v5131
    %5601 = vmatpush1.bf16.msra.mxu0 %v5130
    %5602 = vmatprep.subr.bf16.mxu0 %v5139
    %5603 = vmatpush1.bf16.msra.mxu0 %v5138
    %5604 = vmatprep.mubr.bf16.mxu0 %v5011
    %5605 = vmatmul.mubr.bf16.gmra.mrb[0].mxu0 %v5010
    %v5606 = vpop.f32.mrb[0].mxu0
    %v5607 = vadd.f32 %v5535, %v5606
    %v5608 = vpop.f32.mrb[0].mxu0
    %v5609 = vadd.f32 %v5539, %v5608
    %v5610 = vpop.f32.mrb[0].mxu0
    %v5611 = vpop.f32.mrb[0].mxu0
    %5612 = vdwg.mxu0
    %5613 = vmatprep.subr.bf16.mxu0 %v5147
    %5614 = vmatpush1.bf16.msra.mxu0 %v5146
    %5615 = vmatprep.subr.bf16.mxu0 %v5155
    %5616 = vmatpush1.bf16.msra.mxu0 %v5154
    %5617 = vmatprep.subr.bf16.mxu0 %v5163
    %5618 = vmatpush1.bf16.msra.mxu0 %v5162
    %5619 = vmatprep.subr.bf16.mxu0 %v5171
    %5620 = vmatpush1.bf16.msra.mxu0 %v5170
    %5621 = vmatprep.subr.bf16.mxu0 %v5179
    %5622 = vmatpush1.bf16.msra.mxu0 %v5178
    %5623 = vmatprep.subr.bf16.mxu0 %v5187
    %5624 = vmatpush1.bf16.msra.mxu0 %v5186
    %5625 = vmatprep.subr.bf16.mxu0 %v5195
    %5626 = vmatpush1.bf16.msra.mxu0 %v5194
    %5627 = vmatprep.subr.bf16.mxu0 %v5203
    %5628 = vmatpush1.bf16.msra.mxu0 %v5202
    %5629 = vmatprep.subr.bf16.mxu0 %v5211
    %5630 = vmatpush1.bf16.msra.mxu0 %v5210
    %5631 = vmatprep.subr.bf16.mxu0 %v5219
    %5632 = vmatpush1.bf16.msra.mxu0 %v5218
    %5633 = vmatprep.subr.bf16.mxu0 %v5227
    %5634 = vmatpush1.bf16.msra.mxu0 %v5226
    %5635 = vmatprep.subr.bf16.mxu0 %v5235
    %5636 = vmatpush1.bf16.msra.mxu0 %v5234
    %5637 = vmatprep.subr.bf16.mxu0 %v5243
    %5638 = vmatpush1.bf16.msra.mxu0 %v5242
    %5639 = vmatprep.subr.bf16.mxu0 %v5251
    %5640 = vmatpush1.bf16.msra.mxu0 %v5250
    %5641 = vmatprep.subr.bf16.mxu0 %v5259
    %5642 = vmatpush1.bf16.msra.mxu0 %v5258
    %5643 = vmatprep.subr.bf16.mxu0 %v5267
    %5644 = vmatpush1.bf16.msra.mxu0 %v5266
    %5645 = vmatprep.mubr.bf16.mxu0 %v5013
    %5646 = vmatmul.mubr.bf16.gmra.mrb[0].mxu0 %v5012
    %v5647 = vpop.f32.mrb[0].mxu0
    %v5648 = vadd.f32 %v5607, %v5647
    %v5649 = vpop.f32.mrb[0].mxu0
    %v5650 = vadd.f32 %v5609, %v5649
    %v5651 = vpop.f32.mrb[0].mxu0
    %v5652 = vpop.f32.mrb[0].mxu0
    %5653 = vdwg.mxu0
    %5654 = vmatprep.subr.bf16.mxu0 %v5275
    %5655 = vmatpush1.bf16.msra.mxu0 %v5274
    %5656 = vmatprep.subr.bf16.mxu0 %v5283
    %5657 = vmatpush1.bf16.msra.mxu0 %v5282
    %5658 = vmatprep.subr.bf16.mxu0 %v5291
    %5659 = vmatpush1.bf16.msra.mxu0 %v5290
    %5660 = vmatprep.subr.bf16.mxu0 %v5299
    %5661 = vmatpush1.bf16.msra.mxu0 %v5298
    %5662 = vmatprep.subr.bf16.mxu0 %v5307
    %5663 = vmatpush1.bf16.msra.mxu0 %v5306
    %5664 = vmatprep.subr.bf16.mxu0 %v5315
    %5665 = vmatpush1.bf16.msra.mxu0 %v5314
    %5666 = vmatprep.subr.bf16.mxu0 %v5323
    %5667 = vmatpush1.bf16.msra.mxu0 %v5322
    %5668 = vmatprep.subr.bf16.mxu0 %v5331
    %5669 = vmatpush1.bf16.msra.mxu0 %v5330
    %5670 = vmatprep.subr.bf16.mxu0 %v5339
    %5671 = vmatpush1.bf16.msra.mxu0 %v5338
    %5672 = vmatprep.subr.bf16.mxu0 %v5347
    %5673 = vmatpush1.bf16.msra.mxu0 %v5346
    %5674 = vmatprep.subr.bf16.mxu0 %v5355
    %5675 = vmatpush1.bf16.msra.mxu0 %v5354
    %5676 = vmatprep.subr.bf16.mxu0 %v5363
    %5677 = vmatpush1.bf16.msra.mxu0 %v5362
    %5678 = vmatprep.subr.bf16.mxu0 %v5371
    %5679 = vmatpush1.bf16.msra.mxu0 %v5370
    %5680 = vmatprep.subr.bf16.mxu0 %v5379
    %5681 = vmatpush1.bf16.msra.mxu0 %v5378
    %5682 = vmatprep.subr.bf16.mxu0 %v5387
    %5683 = vmatpush1.bf16.msra.mxu0 %v5386
    %5684 = vmatprep.subr.bf16.mxu0 %v5395
    %5685 = vmatpush1.bf16.msra.mxu0 %v5394
    %5686 = vmatprep.mubr.bf16.mxu0 %v5015
    %5687 = vmatmul.mubr.bf16.gmra.mrb[0].mxu0 %v5014
    %v5688 = vpop.f32.mrb[0].mxu0
    %v5689 = vadd.f32 %v5648, %v5688
    %v5690 = vpop.f32.mrb[0].mxu0
    %v5691 = vadd.f32 %v5650, %v5690
    %v5692 = vpop.f32.mrb[0].mxu0
    %v5693 = vpop.f32.mrb[0].mxu0
    %5694 = vdwg.mxu0
    %5695 = vmatprep.subr.bf16.mxu0 %v5403
    %5696 = vmatpush1.bf16.msra.mxu0 %v5402
    %5697 = vmatprep.subr.bf16.mxu0 %v5411
    %5698 = vmatpush1.bf16.msra.mxu0 %v5410
    %5699 = vmatprep.subr.bf16.mxu0 %v5419
    %5700 = vmatpush1.bf16.msra.mxu0 %v5418
    %5701 = vmatprep.subr.bf16.mxu0 %v5427
    %5702 = vmatpush1.bf16.msra.mxu0 %v5426
    %5703 = vmatprep.subr.bf16.mxu0 %v5435
    %5704 = vmatpush1.bf16.msra.mxu0 %v5434
    %5705 = vmatprep.subr.bf16.mxu0 %v5443
    %5706 = vmatpush1.bf16.msra.mxu0 %v5442
    %5707 = vmatprep.subr.bf16.mxu0 %v5451
    %5708 = vmatpush1.bf16.msra.mxu0 %v5450
    %5709 = vmatprep.subr.bf16.mxu0 %v5459
    %5710 = vmatpush1.bf16.msra.mxu0 %v5458
    %5711 = vmatprep.subr.bf16.mxu0 %v5467
    %5712 = vmatpush1.bf16.msra.mxu0 %v5466
    %5713 = vmatprep.subr.bf16.mxu0 %v5475
    %5714 = vmatpush1.bf16.msra.mxu0 %v5474
    %5715 = vmatprep.subr.bf16.mxu0 %v5483
    %5716 = vmatpush1.bf16.msra.mxu0 %v5482
    %5717 = vmatprep.subr.bf16.mxu0 %v5491
    %5718 = vmatpush1.bf16.msra.mxu0 %v5490
    %5719 = vmatprep.subr.bf16.mxu0 %v5499
    %5720 = vmatpush1.bf16.msra.mxu0 %v5498
    %5721 = vmatprep.subr.bf16.mxu0 %v5507
    %5722 = vmatpush1.bf16.msra.mxu0 %v5506
    %5723 = vmatprep.subr.bf16.mxu0 %v5515
    %5724 = vmatpush1.bf16.msra.mxu0 %v5514
    %5725 = vmatprep.subr.bf16.mxu0 %v5523
    %5726 = vmatpush1.bf16.msra.mxu0 %v5522
    %5727 = vmatprep.mubr.bf16.mxu0 %v5017
    %5728 = vmatmul.mubr.bf16.gmra.mrb[0].mxu0 %v5016
    %v5729 = vpop.f32.mrb[0].mxu0
    %v5730 = vadd.f32 %v5689, %v5729
    %v5731 = vpop.f32.mrb[0].mxu0
    %v5732 = vadd.f32 %v5691, %v5731
    %v5733 = vpop.f32.mrb[0].mxu0
    %v5734 = vpop.f32.mrb[0].mxu0
    %5735 = vdwg.mxu0
    %5736 = vmatprep.subr.bf16.mxu0 %v5021
    %5737 = vmatpush1.bf16.msra.mxu0 %v5020
    %5738 = vmatprep.subr.bf16.mxu0 %v5029
    %5739 = vmatpush1.bf16.msra.mxu0 %v5028
    %5740 = vmatprep.subr.bf16.mxu0 %v5037
    %5741 = vmatpush1.bf16.msra.mxu0 %v5036
    %5742 = vmatprep.subr.bf16.mxu0 %v5045
    %5743 = vmatpush1.bf16.msra.mxu0 %v5044
    %5744 = vmatprep.subr.bf16.mxu0 %v5053
    %5745 = vmatpush1.bf16.msra.mxu0 %v5052
    %5746 = vmatprep.subr.bf16.mxu0 %v5061
    %5747 = vmatpush1.bf16.msra.mxu0 %v5060
    %5748 = vmatprep.subr.bf16.mxu0 %v5069
    %5749 = vmatpush1.bf16.msra.mxu0 %v5068
    %5750 = vmatprep.subr.bf16.mxu0 %v5077
    %5751 = vmatpush1.bf16.msra.mxu0 %v5076
    %5752 = vmatprep.subr.bf16.mxu0 %v5085
    %5753 = vmatpush1.bf16.msra.mxu0 %v5084
    %5754 = vmatprep.subr.bf16.mxu0 %v5093
    %5755 = vmatpush1.bf16.msra.mxu0 %v5092
    %5756 = vmatprep.subr.bf16.mxu0 %v5101
    %5757 = vmatpush1.bf16.msra.mxu0 %v5100
    %5758 = vmatprep.subr.bf16.mxu0 %v5109
    %5759 = vmatpush1.bf16.msra.mxu0 %v5108
    %5760 = vmatprep.subr.bf16.mxu0 %v5117
    %5761 = vmatpush1.bf16.msra.mxu0 %v5116
    %5762 = vmatprep.subr.bf16.mxu0 %v5125
    %5763 = vmatpush1.bf16.msra.mxu0 %v5124
    %5764 = vmatprep.subr.bf16.mxu0 %v5133
    %5765 = vmatpush1.bf16.msra.mxu0 %v5132
    %5766 = vmatprep.subr.bf16.mxu0 %v5141
    %5767 = vmatpush1.bf16.msra.mxu0 %v5140
    %5768 = vmatprep.mubr.bf16.mxu0 %v5011
    %5769 = vmatmul.mubr.bf16.gmra.mrb[0].mxu0 %v5010
    %v5770 = vpop.f32.mrb[0].mxu0
    %v5771 = vadd.f32 %v5543, %v5770
    %v5772 = vpop.f32.mrb[0].mxu0
    %v5773 = vadd.f32 %v5547, %v5772
    %v5774 = vpop.f32.mrb[0].mxu0
    %v5775 = vpop.f32.mrb[0].mxu0
    %5776 = vdwg.mxu0
    %5777 = vmatprep.subr.bf16.mxu0 %v5149
    %5778 = vmatpush1.bf16.msra.mxu0 %v5148
    %5779 = vmatprep.subr.bf16.mxu0 %v5157
    %5780 = vmatpush1.bf16.msra.mxu0 %v5156
    %5781 = vmatprep.subr.bf16.mxu0 %v5165
    %5782 = vmatpush1.bf16.msra.mxu0 %v5164
    %5783 = vmatprep.subr.bf16.mxu0 %v5173
    %5784 = vmatpush1.bf16.msra.mxu0 %v5172
    %5785 = vmatprep.subr.bf16.mxu0 %v5181
    %5786 = vmatpush1.bf16.msra.mxu0 %v5180
    %5787 = vmatprep.subr.bf16.mxu0 %v5189
    %5788 = vmatpush1.bf16.msra.mxu0 %v5188
    %5789 = vmatprep.subr.bf16.mxu0 %v5197
    %5790 = vmatpush1.bf16.msra.mxu0 %v5196
    %5791 = vmatprep.subr.bf16.mxu0 %v5205
    %5792 = vmatpush1.bf16.msra.mxu0 %v5204
    %5793 = vmatprep.subr.bf16.mxu0 %v5213
    %5794 = vmatpush1.bf16.msra.mxu0 %v5212
    %5795 = vmatprep.subr.bf16.mxu0 %v5221
    %5796 = vmatpush1.bf16.msra.mxu0 %v5220
    %5797 = vmatprep.subr.bf16.mxu0 %v5229
    %5798 = vmatpush1.bf16.msra.mxu0 %v5228
    %5799 = vmatprep.subr.bf16.mxu0 %v5237
    %5800 = vmatpush1.bf16.msra.mxu0 %v5236
    %5801 = vmatprep.subr.bf16.mxu0 %v5245
    %5802 = vmatpush1.bf16.msra.mxu0 %v5244
    %5803 = vmatprep.subr.bf16.mxu0 %v5253
    %5804 = vmatpush1.bf16.msra.mxu0 %v5252
    %5805 = vmatprep.subr.bf16.mxu0 %v5261
    %5806 = vmatpush1.bf16.msra.mxu0 %v5260
    %5807 = vmatprep.subr.bf16.mxu0 %v5269
    %5808 = vmatpush1.bf16.msra.mxu0 %v5268
    %5809 = vmatprep.mubr.bf16.mxu0 %v5013
    %5810 = vmatmul.mubr.bf16.gmra.mrb[0].mxu0 %v5012
    %v5811 = vpop.f32.mrb[0].mxu0
    %v5812 = vadd.f32 %v5771, %v5811
    %v5813 = vpop.f32.mrb[0].mxu0
    %v5814 = vadd.f32 %v5773, %v5813
    %v5815 = vpop.f32.mrb[0].mxu0
    %v5816 = vpop.f32.mrb[0].mxu0
    %5817 = vdwg.mxu0
    %5818 = vmatprep.subr.bf16.mxu0 %v5277
    %5819 = vmatpush1.bf16.msra.mxu0 %v5276
    %5820 = vmatprep.subr.bf16.mxu0 %v5285
    %5821 = vmatpush1.bf16.msra.mxu0 %v5284
    %5822 = vmatprep.subr.bf16.mxu0 %v5293
    %5823 = vmatpush1.bf16.msra.mxu0 %v5292
    %5824 = vmatprep.subr.bf16.mxu0 %v5301
    %5825 = vmatpush1.bf16.msra.mxu0 %v5300
    %5826 = vmatprep.subr.bf16.mxu0 %v5309
    %5827 = vmatpush1.bf16.msra.mxu0 %v5308
    %5828 = vmatprep.subr.bf16.mxu0 %v5317
    %5829 = vmatpush1.bf16.msra.mxu0 %v5316
    %5830 = vmatprep.subr.bf16.mxu0 %v5325
    %5831 = vmatpush1.bf16.msra.mxu0 %v5324
    %5832 = vmatprep.subr.bf16.mxu0 %v5333
    %5833 = vmatpush1.bf16.msra.mxu0 %v5332
    %5834 = vmatprep.subr.bf16.mxu0 %v5341
    %5835 = vmatpush1.bf16.msra.mxu0 %v5340
    %5836 = vmatprep.subr.bf16.mxu0 %v5349
    %5837 = vmatpush1.bf16.msra.mxu0 %v5348
    %5838 = vmatprep.subr.bf16.mxu0 %v5357
    %5839 = vmatpush1.bf16.msra.mxu0 %v5356
    %5840 = vmatprep.subr.bf16.mxu0 %v5365
    %5841 = vmatpush1.bf16.msra.mxu0 %v5364
    %5842 = vmatprep.subr.bf16.mxu0 %v5373
    %5843 = vmatpush1.bf16.msra.mxu0 %v5372
    %5844 = vmatprep.subr.bf16.mxu0 %v5381
    %5845 = vmatpush1.bf16.msra.mxu0 %v5380
    %5846 = vmatprep.subr.bf16.mxu0 %v5389
    %5847 = vmatpush1.bf16.msra.mxu0 %v5388
    %5848 = vmatprep.subr.bf16.mxu0 %v5397
    %5849 = vmatpush1.bf16.msra.mxu0 %v5396
    %5850 = vmatprep.mubr.bf16.mxu0 %v5015
    %5851 = vmatmul.mubr.bf16.gmra.mrb[0].mxu0 %v5014
    %v5852 = vpop.f32.mrb[0].mxu0
    %v5853 = vadd.f32 %v5812, %v5852
    %v5854 = vpop.f32.mrb[0].mxu0
    %v5855 = vadd.f32 %v5814, %v5854
    %v5856 = vpop.f32.mrb[0].mxu0
    %v5857 = vpop.f32.mrb[0].mxu0
    %5858 = vdwg.mxu0
    %5859 = vmatprep.subr.bf16.mxu0 %v5405
    %5860 = vmatpush1.bf16.msra.mxu0 %v5404
    %5861 = vmatprep.subr.bf16.mxu0 %v5413
    %5862 = vmatpush1.bf16.msra.mxu0 %v5412
    %5863 = vmatprep.subr.bf16.mxu0 %v5421
    %5864 = vmatpush1.bf16.msra.mxu0 %v5420
    %5865 = vmatprep.subr.bf16.mxu0 %v5429
    %5866 = vmatpush1.bf16.msra.mxu0 %v5428
    %5867 = vmatprep.subr.bf16.mxu0 %v5437
    %5868 = vmatpush1.bf16.msra.mxu0 %v5436
    %5869 = vmatprep.subr.bf16.mxu0 %v5445
    %5870 = vmatpush1.bf16.msra.mxu0 %v5444
    %5871 = vmatprep.subr.bf16.mxu0 %v5453
    %5872 = vmatpush1.bf16.msra.mxu0 %v5452
    %5873 = vmatprep.subr.bf16.mxu0 %v5461
    %5874 = vmatpush1.bf16.msra.mxu0 %v5460
    %5875 = vmatprep.subr.bf16.mxu0 %v5469
    %5876 = vmatpush1.bf16.msra.mxu0 %v5468
    %5877 = vmatprep.subr.bf16.mxu0 %v5477
    %5878 = vmatpush1.bf16.msra.mxu0 %v5476
    %5879 = vmatprep.subr.bf16.mxu0 %v5485
    %5880 = vmatpush1.bf16.msra.mxu0 %v5484
    %5881 = vmatprep.subr.bf16.mxu0 %v5493
    %5882 = vmatpush1.bf16.msra.mxu0 %v5492
    %5883 = vmatprep.subr.bf16.mxu0 %v5501
    %5884 = vmatpush1.bf16.msra.mxu0 %v5500
    %5885 = vmatprep.subr.bf16.mxu0 %v5509
    %5886 = vmatpush1.bf16.msra.mxu0 %v5508
    %5887 = vmatprep.subr.bf16.mxu0 %v5517
    %5888 = vmatpush1.bf16.msra.mxu0 %v5516
    %5889 = vmatprep.subr.bf16.mxu0 %v5525
    %5890 = vmatpush1.bf16.msra.mxu0 %v5524
    %5891 = vmatprep.mubr.bf16.mxu0 %v5017
    %5892 = vmatmul.mubr.bf16.gmra.mrb[0].mxu0 %v5016
    %v5893 = vpop.f32.mrb[0].mxu0
    %v5894 = vadd.f32 %v5853, %v5893
    %v5895 = vpop.f32.mrb[0].mxu0
    %v5896 = vadd.f32 %v5855, %v5895
    %v5897 = vpop.f32.mrb[0].mxu0
    %v5898 = vpop.f32.mrb[0].mxu0
    %5899 = vdwg.mxu0
    %5900 = vmatprep.subr.bf16.mxu0 %v5023
    %5901 = vmatpush1.bf16.msra.mxu0 %v5022
    %5902 = vmatprep.subr.bf16.mxu0 %v5031
    %5903 = vmatpush1.bf16.msra.mxu0 %v5030
    %5904 = vmatprep.subr.bf16.mxu0 %v5039
    %5905 = vmatpush1.bf16.msra.mxu0 %v5038
    %5906 = vmatprep.subr.bf16.mxu0 %v5047
    %5907 = vmatpush1.bf16.msra.mxu0 %v5046
    %5908 = vmatprep.subr.bf16.mxu0 %v5055
    %5909 = vmatpush1.bf16.msra.mxu0 %v5054
    %5910 = vmatprep.subr.bf16.mxu0 %v5063
    %5911 = vmatpush1.bf16.msra.mxu0 %v5062
    %5912 = vmatprep.subr.bf16.mxu0 %v5071
    %5913 = vmatpush1.bf16.msra.mxu0 %v5070
    %5914 = vmatprep.subr.bf16.mxu0 %v5079
    %5915 = vmatpush1.bf16.msra.mxu0 %v5078
    %5916 = vmatprep.subr.bf16.mxu0 %v5087
    %5917 = vmatpush1.bf16.msra.mxu0 %v5086
    %5918 = vmatprep.subr.bf16.mxu0 %v5095
    %5919 = vmatpush1.bf16.msra.mxu0 %v5094
    %5920 = vmatprep.subr.bf16.mxu0 %v5103
    %5921 = vmatpush1.bf16.msra.mxu0 %v5102
    %5922 = vmatprep.subr.bf16.mxu0 %v5111
    %5923 = vmatpush1.bf16.msra.mxu0 %v5110
    %5924 = vmatprep.subr.bf16.mxu0 %v5119
    %5925 = vmatpush1.bf16.msra.mxu0 %v5118
    %5926 = vmatprep.subr.bf16.mxu0 %v5127
    %5927 = vmatpush1.bf16.msra.mxu0 %v5126
    %5928 = vmatprep.subr.bf16.mxu0 %v5135
    %5929 = vmatpush1.bf16.msra.mxu0 %v5134
    %5930 = vmatprep.subr.bf16.mxu0 %v5143
    %5931 = vmatpush1.bf16.msra.mxu0 %v5142
    %5932 = vmatprep.mubr.bf16.mxu0 %v5011
    %5933 = vmatmul.mubr.bf16.gmra.mrb[0].mxu0 %v5010
    %v5934 = vpop.f32.mrb[0].mxu0
    %v5935 = vadd.f32 %v5551, %v5934
    %v5936 = vpop.f32.mrb[0].mxu0
    %v5937 = vadd.f32 %v5555, %v5936
    %v5938 = vpop.f32.mrb[0].mxu0
    %v5939 = vpop.f32.mrb[0].mxu0
    %5940 = vdwg.mxu0
    %5941 = vmatprep.subr.bf16.mxu0 %v5151
    %5942 = vmatpush1.bf16.msra.mxu0 %v5150
    %5943 = vmatprep.subr.bf16.mxu0 %v5159
    %5944 = vmatpush1.bf16.msra.mxu0 %v5158
    %5945 = vmatprep.subr.bf16.mxu0 %v5167
    %5946 = vmatpush1.bf16.msra.mxu0 %v5166
    %5947 = vmatprep.subr.bf16.mxu0 %v5175
    %5948 = vmatpush1.bf16.msra.mxu0 %v5174
    %5949 = vmatprep.subr.bf16.mxu0 %v5183
    %5950 = vmatpush1.bf16.msra.mxu0 %v5182
    %5951 = vmatprep.subr.bf16.mxu0 %v5191
    %5952 = vmatpush1.bf16.msra.mxu0 %v5190
    %5953 = vmatprep.subr.bf16.mxu0 %v5199
    %5954 = vmatpush1.bf16.msra.mxu0 %v5198
    %5955 = vmatprep.subr.bf16.mxu0 %v5207
    %5956 = vmatpush1.bf16.msra.mxu0 %v5206
    %5957 = vmatprep.subr.bf16.mxu0 %v5215
    %5958 = vmatpush1.bf16.msra.mxu0 %v5214
    %5959 = vmatprep.subr.bf16.mxu0 %v5223
    %5960 = vmatpush1.bf16.msra.mxu0 %v5222
    %5961 = vmatprep.subr.bf16.mxu0 %v5231
    %5962 = vmatpush1.bf16.msra.mxu0 %v5230
    %5963 = vmatprep.subr.bf16.mxu0 %v5239
    %5964 = vmatpush1.bf16.msra.mxu0 %v5238
    %5965 = vmatprep.subr.bf16.mxu0 %v5247
    %5966 = vmatpush1.bf16.msra.mxu0 %v5246
    %5967 = vmatprep.subr.bf16.mxu0 %v5255
    %5968 = vmatpush1.bf16.msra.mxu0 %v5254
    %5969 = vmatprep.subr.bf16.mxu0 %v5263
    %5970 = vmatpush1.bf16.msra.mxu0 %v5262
    %5971 = vmatprep.subr.bf16.mxu0 %v5271
    %5972 = vmatpush1.bf16.msra.mxu0 %v5270
    %5973 = vmatprep.mubr.bf16.mxu0 %v5013
    %5974 = vmatmul.mubr.bf16.gmra.mrb[0].mxu0 %v5012
    %v5975 = vpop.f32.mrb[0].mxu0
    %v5976 = vadd.f32 %v5935, %v5975
    %v5977 = vpop.f32.mrb[0].mxu0
    %v5978 = vadd.f32 %v5937, %v5977
    %v5979 = vpop.f32.mrb[0].mxu0
    %v5980 = vpop.f32.mrb[0].mxu0
    %5981 = vdwg.mxu0
    %5982 = vmatprep.subr.bf16.mxu0 %v5279
    %5983 = vmatpush1.bf16.msra.mxu0 %v5278
    %5984 = vmatprep.subr.bf16.mxu0 %v5287
    %5985 = vmatpush1.bf16.msra.mxu0 %v5286
    %5986 = vmatprep.subr.bf16.mxu0 %v5295
    %5987 = vmatpush1.bf16.msra.mxu0 %v5294
    %5988 = vmatprep.subr.bf16.mxu0 %v5303
    %5989 = vmatpush1.bf16.msra.mxu0 %v5302
    %5990 = vmatprep.subr.bf16.mxu0 %v5311
    %5991 = vmatpush1.bf16.msra.mxu0 %v5310
    %5992 = vmatprep.subr.bf16.mxu0 %v5319
    %5993 = vmatpush1.bf16.msra.mxu0 %v5318
    %5994 = vmatprep.subr.bf16.mxu0 %v5327
    %5995 = vmatpush1.bf16.msra.mxu0 %v5326
    %5996 = vmatprep.subr.bf16.mxu0 %v5335
    %5997 = vmatpush1.bf16.msra.mxu0 %v5334
    %5998 = vmatprep.subr.bf16.mxu0 %v5343
    %5999 = vmatpush1.bf16.msra.mxu0 %v5342
    %6000 = vmatprep.subr.bf16.mxu0 %v5351
    %6001 = vmatpush1.bf16.msra.mxu0 %v5350
    %6002 = vmatprep.subr.bf16.mxu0 %v5359
    %6003 = vmatpush1.bf16.msra.mxu0 %v5358
    %6004 = vmatprep.subr.bf16.mxu0 %v5367
    %6005 = vmatpush1.bf16.msra.mxu0 %v5366
    %6006 = vmatprep.subr.bf16.mxu0 %v5375
    %6007 = vmatpush1.bf16.msra.mxu0 %v5374
    %6008 = vmatprep.subr.bf16.mxu0 %v5383
    %6009 = vmatpush1.bf16.msra.mxu0 %v5382
    %6010 = vmatprep.subr.bf16.mxu0 %v5391
    %6011 = vmatpush1.bf16.msra.mxu0 %v5390
    %6012 = vmatprep.subr.bf16.mxu0 %v5399
    %6013 = vmatpush1.bf16.msra.mxu0 %v5398
    %6014 = vmatprep.mubr.bf16.mxu0 %v5015
    %6015 = vmatmul.mubr.bf16.gmra.mrb[0].mxu0 %v5014
    %v6016 = vpop.f32.mrb[0].mxu0
    %v6017 = vadd.f32 %v5976, %v6016
    %v6018 = vpop.f32.mrb[0].mxu0
    %v6019 = vadd.f32 %v5978, %v6018
    %v6020 = vpop.f32.mrb[0].mxu0
    %v6021 = vpop.f32.mrb[0].mxu0
    %6022 = vdwg.mxu0
    %6023 = vmatprep.subr.bf16.mxu0 %v5407
    %6024 = vmatpush1.bf16.msra.mxu0 %v5406
    %6025 = vmatprep.subr.bf16.mxu0 %v5415
    %6026 = vmatpush1.bf16.msra.mxu0 %v5414
    %6027 = vmatprep.subr.bf16.mxu0 %v5423
    %6028 = vmatpush1.bf16.msra.mxu0 %v5422
    %6029 = vmatprep.subr.bf16.mxu0 %v5431
    %6030 = vmatpush1.bf16.msra.mxu0 %v5430
    %6031 = vmatprep.subr.bf16.mxu0 %v5439
    %6032 = vmatpush1.bf16.msra.mxu0 %v5438
    %6033 = vmatprep.subr.bf16.mxu0 %v5447
    %6034 = vmatpush1.bf16.msra.mxu0 %v5446
    %6035 = vmatprep.subr.bf16.mxu0 %v5455
    %6036 = vmatpush1.bf16.msra.mxu0 %v5454
    %6037 = vmatprep.subr.bf16.mxu0 %v5463
    %6038 = vmatpush1.bf16.msra.mxu0 %v5462
    %6039 = vmatprep.subr.bf16.mxu0 %v5471
    %6040 = vmatpush1.bf16.msra.mxu0 %v5470
    %6041 = vmatprep.subr.bf16.mxu0 %v5479
    %6042 = vmatpush1.bf16.msra.mxu0 %v5478
    %6043 = vmatprep.subr.bf16.mxu0 %v5487
    %6044 = vmatpush1.bf16.msra.mxu0 %v5486
    %6045 = vmatprep.subr.bf16.mxu0 %v5495
    %6046 = vmatpush1.bf16.msra.mxu0 %v5494
    %6047 = vmatprep.subr.bf16.mxu0 %v5503
    %6048 = vmatpush1.bf16.msra.mxu0 %v5502
    %6049 = vmatprep.subr.bf16.mxu0 %v5511
    %6050 = vmatpush1.bf16.msra.mxu0 %v5510
    %6051 = vmatprep.subr.bf16.mxu0 %v5519
    %6052 = vmatpush1.bf16.msra.mxu0 %v5518
    %6053 = vmatprep.subr.bf16.mxu0 %v5527
    %6054 = vmatpush1.bf16.msra.mxu0 %v5526
    %6055 = vmatprep.mubr.bf16.mxu0 %v5017
    %6056 = vmatmul.mubr.bf16.gmra.mrb[0].mxu0 %v5016
    %v6057 = vpop.f32.mrb[0].mxu0
    %v6058 = vadd.f32 %v6017, %v6057
    %v6059 = vpop.f32.mrb[0].mxu0
    %v6060 = vadd.f32 %v6019, %v6059
    %v6061 = vpop.f32.mrb[0].mxu0
    %v6062 = vpop.f32.mrb[0].mxu0
    %6063 = vdwg.mxu0
    %6064 = vmatprep.subr.bf16.mxu0 %v5025
    %6065 = vmatpush1.bf16.msra.mxu0 %v5024
    %6066 = vmatprep.subr.bf16.mxu0 %v5033
    %6067 = vmatpush1.bf16.msra.mxu0 %v5032
    %6068 = vmatprep.subr.bf16.mxu0 %v5041
    %6069 = vmatpush1.bf16.msra.mxu0 %v5040
    %6070 = vmatprep.subr.bf16.mxu0 %v5049
    %6071 = vmatpush1.bf16.msra.mxu0 %v5048
    %6072 = vmatprep.subr.bf16.mxu0 %v5057
    %6073 = vmatpush1.bf16.msra.mxu0 %v5056
    %6074 = vmatprep.subr.bf16.mxu0 %v5065
    %6075 = vmatpush1.bf16.msra.mxu0 %v5064
    %6076 = vmatprep.subr.bf16.mxu0 %v5073
    %6077 = vmatpush1.bf16.msra.mxu0 %v5072
    %6078 = vmatprep.subr.bf16.mxu0 %v5081
    %6079 = vmatpush1.bf16.msra.mxu0 %v5080
    %6080 = vmatprep.subr.bf16.mxu0 %v5089
    %6081 = vmatpush1.bf16.msra.mxu0 %v5088
    %6082 = vmatprep.subr.bf16.mxu0 %v5097
    %6083 = vmatpush1.bf16.msra.mxu0 %v5096
    %6084 = vmatprep.subr.bf16.mxu0 %v5105
    %6085 = vmatpush1.bf16.msra.mxu0 %v5104
    %6086 = vmatprep.subr.bf16.mxu0 %v5113
    %6087 = vmatpush1.bf16.msra.mxu0 %v5112
    %6088 = vmatprep.subr.bf16.mxu0 %v5121
    %6089 = vmatpush1.bf16.msra.mxu0 %v5120
    %6090 = vmatprep.subr.bf16.mxu0 %v5129
    %6091 = vmatpush1.bf16.msra.mxu0 %v5128
    %6092 = vmatprep.subr.bf16.mxu0 %v5137
    %6093 = vmatpush1.bf16.msra.mxu0 %v5136
    %6094 = vmatprep.subr.bf16.mxu0 %v5145
    %6095 = vmatpush1.bf16.msra.mxu0 %v5144
    %6096 = vmatprep.mubr.bf16.mxu0 %v5011
    %6097 = vmatmul.mubr.bf16.gmra.mrb[0].mxu0 %v5010
    %v6098 = vpop.f32.mrb[0].mxu0
    %v6099 = vadd.f32 %v5559, %v6098
    %v6100 = vpop.f32.mrb[0].mxu0
    %v6101 = vadd.f32 %v5563, %v6100
    %v6102 = vpop.f32.mrb[0].mxu0
    %v6103 = vpop.f32.mrb[0].mxu0
    %6104 = vdwg.mxu0
    %6105 = vmatprep.subr.bf16.mxu0 %v5153
    %6106 = vmatpush1.bf16.msra.mxu0 %v5152
    %6107 = vmatprep.subr.bf16.mxu0 %v5161
    %6108 = vmatpush1.bf16.msra.mxu0 %v5160
    %6109 = vmatprep.subr.bf16.mxu0 %v5169
    %6110 = vmatpush1.bf16.msra.mxu0 %v5168
    %6111 = vmatprep.subr.bf16.mxu0 %v5177
    %6112 = vmatpush1.bf16.msra.mxu0 %v5176
    %6113 = vmatprep.subr.bf16.mxu0 %v5185
    %6114 = vmatpush1.bf16.msra.mxu0 %v5184
    %6115 = vmatprep.subr.bf16.mxu0 %v5193
    %6116 = vmatpush1.bf16.msra.mxu0 %v5192
    %6117 = vmatprep.subr.bf16.mxu0 %v5201
    %6118 = vmatpush1.bf16.msra.mxu0 %v5200
    %6119 = vmatprep.subr.bf16.mxu0 %v5209
    %6120 = vmatpush1.bf16.msra.mxu0 %v5208
    %6121 = vmatprep.subr.bf16.mxu0 %v5217
    %6122 = vmatpush1.bf16.msra.mxu0 %v5216
    %6123 = vmatprep.subr.bf16.mxu0 %v5225
    %6124 = vmatpush1.bf16.msra.mxu0 %v5224
    %6125 = vmatprep.subr.bf16.mxu0 %v5233
    %6126 = vmatpush1.bf16.msra.mxu0 %v5232
    %6127 = vmatprep.subr.bf16.mxu0 %v5241
    %6128 = vmatpush1.bf16.msra.mxu0 %v5240
    %6129 = vmatprep.subr.bf16.mxu0 %v5249
    %6130 = vmatpush1.bf16.msra.mxu0 %v5248
    %6131 = vmatprep.subr.bf16.mxu0 %v5257
    %6132 = vmatpush1.bf16.msra.mxu0 %v5256
    %6133 = vmatprep.subr.bf16.mxu0 %v5265
    %6134 = vmatpush1.bf16.msra.mxu0 %v5264
    %6135 = vmatprep.subr.bf16.mxu0 %v5273
    %6136 = vmatpush1.bf16.msra.mxu0 %v5272
    %6137 = vmatprep.mubr.bf16.mxu0 %v5013
    %6138 = vmatmul.mubr.bf16.gmra.mrb[0].mxu0 %v5012
    %v6139 = vpop.f32.mrb[0].mxu0
    %v6140 = vadd.f32 %v6099, %v6139
    %v6141 = vpop.f32.mrb[0].mxu0
    %v6142 = vadd.f32 %v6101, %v6141
    %v6143 = vpop.f32.mrb[0].mxu0
    %v6144 = vpop.f32.mrb[0].mxu0
    %6145 = vdwg.mxu0
    %6146 = vmatprep.subr.bf16.mxu0 %v5281
    %6147 = vmatpush1.bf16.msra.mxu0 %v5280
    %6148 = vmatprep.subr.bf16.mxu0 %v5289
    %6149 = vmatpush1.bf16.msra.mxu0 %v5288
    %6150 = vmatprep.subr.bf16.mxu0 %v5297
    %6151 = vmatpush1.bf16.msra.mxu0 %v5296
    %6152 = vmatprep.subr.bf16.mxu0 %v5305
    %6153 = vmatpush1.bf16.msra.mxu0 %v5304
    %6154 = vmatprep.subr.bf16.mxu0 %v5313
    %6155 = vmatpush1.bf16.msra.mxu0 %v5312
    %6156 = vmatprep.subr.bf16.mxu0 %v5321
    %6157 = vmatpush1.bf16.msra.mxu0 %v5320
    %6158 = vmatprep.subr.bf16.mxu0 %v5329
    %6159 = vmatpush1.bf16.msra.mxu0 %v5328
    %6160 = vmatprep.subr.bf16.mxu0 %v5337
    %6161 = vmatpush1.bf16.msra.mxu0 %v5336
    %6162 = vmatprep.subr.bf16.mxu0 %v5345
    %6163 = vmatpush1.bf16.msra.mxu0 %v5344
    %6164 = vmatprep.subr.bf16.mxu0 %v5353
    %6165 = vmatpush1.bf16.msra.mxu0 %v5352
    %6166 = vmatprep.subr.bf16.mxu0 %v5361
    %6167 = vmatpush1.bf16.msra.mxu0 %v5360
    %6168 = vmatprep.subr.bf16.mxu0 %v5369
    %6169 = vmatpush1.bf16.msra.mxu0 %v5368
    %6170 = vmatprep.subr.bf16.mxu0 %v5377
    %6171 = vmatpush1.bf16.msra.mxu0 %v5376
    %6172 = vmatprep.subr.bf16.mxu0 %v5385
    %6173 = vmatpush1.bf16.msra.mxu0 %v5384
    %6174 = vmatprep.subr.bf16.mxu0 %v5393
    %6175 = vmatpush1.bf16.msra.mxu0 %v5392
    %6176 = vmatprep.subr.bf16.mxu0 %v5401
    %6177 = vmatpush1.bf16.msra.mxu0 %v5400
    %6178 = vmatprep.mubr.bf16.mxu0 %v5015
    %6179 = vmatmul.mubr.bf16.gmra.mrb[0].mxu0 %v5014
    %v6180 = vpop.f32.mrb[0].mxu0
    %v6181 = vadd.f32 %v6140, %v6180
    %v6182 = vpop.f32.mrb[0].mxu0
    %v6183 = vadd.f32 %v6142, %v6182
    %v6184 = vpop.f32.mrb[0].mxu0
    %v6185 = vpop.f32.mrb[0].mxu0
    %6186 = vdwg.mxu0
    %6187 = vmatprep.subr.bf16.mxu0 %v5409
    %6188 = vmatpush1.bf16.msra.mxu0 %v5408
    %6189 = vmatprep.subr.bf16.mxu0 %v5417
    %6190 = vmatpush1.bf16.msra.mxu0 %v5416
    %6191 = vmatprep.subr.bf16.mxu0 %v5425
    %6192 = vmatpush1.bf16.msra.mxu0 %v5424
    %6193 = vmatprep.subr.bf16.mxu0 %v5433
    %6194 = vmatpush1.bf16.msra.mxu0 %v5432
    %6195 = vmatprep.subr.bf16.mxu0 %v5441
    %6196 = vmatpush1.bf16.msra.mxu0 %v5440
    %6197 = vmatprep.subr.bf16.mxu0 %v5449
    %6198 = vmatpush1.bf16.msra.mxu0 %v5448
    %6199 = vmatprep.subr.bf16.mxu0 %v5457
    %6200 = vmatpush1.bf16.msra.mxu0 %v5456
    %6201 = vmatprep.subr.bf16.mxu0 %v5465
    %6202 = vmatpush1.bf16.msra.mxu0 %v5464
    %6203 = vmatprep.subr.bf16.mxu0 %v5473
    %6204 = vmatpush1.bf16.msra.mxu0 %v5472
    %6205 = vmatprep.subr.bf16.mxu0 %v5481
    %6206 = vmatpush1.bf16.msra.mxu0 %v5480
    %6207 = vmatprep.subr.bf16.mxu0 %v5489
    %6208 = vmatpush1.bf16.msra.mxu0 %v5488
    %6209 = vmatprep.subr.bf16.mxu0 %v5497
    %6210 = vmatpush1.bf16.msra.mxu0 %v5496
    %6211 = vmatprep.subr.bf16.mxu0 %v5505
    %6212 = vmatpush1.bf16.msra.mxu0 %v5504
    %6213 = vmatprep.subr.bf16.mxu0 %v5513
    %6214 = vmatpush1.bf16.msra.mxu0 %v5512
    %6215 = vmatprep.subr.bf16.mxu0 %v5521
    %6216 = vmatpush1.bf16.msra.mxu0 %v5520
    %6217 = vmatprep.subr.bf16.mxu0 %v5529
    %6218 = vmatpush1.bf16.msra.mxu0 %v5528
    %6219 = vmatprep.mubr.bf16.mxu0 %v5017
    %6220 = vmatmul.mubr.bf16.gmra.mrb[0].mxu0 %v5016
    %v6221 = vpop.f32.mrb[0].mxu0
    %v6222 = vadd.f32 %v6181, %v6221
    %v6223 = vpop.f32.mrb[0].mxu0
    %v6224 = vadd.f32 %v6183, %v6223
    %v6225 = vpop.f32.mrb[0].mxu0
    %v6226 = vpop.f32.mrb[0].mxu0
    %6227 = vdwg.mxu0
    %vm6228 = vcmp.gt.f32.partialorder %v5730, 0.0
    %vm6229 = vcmp.gt.f32.partialorder %v5732, 0.0
    %vm6230 = vcmp.gt.f32.partialorder %v5894, 0.0
    %vm6231 = vcmp.gt.f32.partialorder %v5896, 0.0
    %vm6232 = vcmp.gt.f32.partialorder %v6058, 0.0
    %vm6233 = vcmp.gt.f32.partialorder %v6060, 0.0
    %vm6234 = vcmp.gt.f32.partialorder %v6222, 0.0
    %vm6235 = vcmp.gt.f32.partialorder %v6224, 0.0
    %v6236 = vmul.f32 %v5730, 0.01
    %v6237 = vmul.f32 %v5732, 0.01
    %v6238 = vmul.f32 %v5894, 0.01
    %v6239 = vmul.f32 %v5896, 0.01
    %v6240 = vmul.f32 %v6058, 0.01
    %v6241 = vmul.f32 %v6060, 0.01
    %v6242 = vmul.f32 %v6222, 0.01
    %v6243 = vmul.f32 %v6224, 0.01
    %v6244 = vsel %vm6228, %v5730, %v6236
    %v6245 = vsel %vm6229, %v5732, %v6237
    %v6246 = vsel %vm6230, %v5894, %v6238
    %v6247 = vsel %vm6231, %v5896, %v6239
    %v6248 = vsel %vm6232, %v6058, %v6240
    %v6249 = vsel %vm6233, %v6060, %v6241
    %v6250 = vsel %vm6234, %v6222, %v6242
    %v6251 = vsel %vm6235, %v6224, %v6243
    %s6252 = smul.u32 %s5006, 4
    %s6253 = sshll.u32 %s6252, 4
    %6254 = dma.done %s432, %s6253
    %v6255 = vpack.c.bf16 %v6244, %v6244
    %v6256 = vpack.c.bf16 %v6245, %v6245
    %v6257 = vpack.c.bf16 %v6246, %v6246
    %v6258 = vpack.c.bf16 %v6247, %v6247
    %v6259 = vpack.c.bf16 %v6248, %v6248
    %v6260 = vpack.c.bf16 %v6249, %v6249
    %v6261 = vpack.c.bf16 %v6250, %v6250
    %v6262 = vpack.c.bf16 %v6251, %v6251
    %v6263 = vld [vmem:[#allocation4] sm:$0xff]
    %v6264 = vld [vmem:[#allocation4 + $0x8] sm:$0xff]
    %v6265 = vld [vmem:[#allocation4 + $0x10] sm:$0xff]
    %v6266 = vld [vmem:[#allocation4 + $0x18] sm:$0xff]
    %v6267 = vld [vmem:[#allocation4 + $0x20] sm:$0xff]
    %v6268 = vld [vmem:[#allocation4 + $0x28] sm:$0xff]
    %v6269 = vld [vmem:[#allocation4 + $0x30] sm:$0xff]
    %v6270 = vld [vmem:[#allocation4 + $0x38] sm:$0xff]
    %v6271 = vld [vmem:[#allocation4 + $0x40] sm:$0xff]
    %v6272 = vld [vmem:[#allocation4 + $0x48] sm:$0xff]
    %v6273 = vld [vmem:[#allocation4 + $0x50] sm:$0xff]
    %v6274 = vld [vmem:[#allocation4 + $0x58] sm:$0xff]
    %v6275 = vld [vmem:[#allocation4 + $0x60] sm:$0xff]
    %v6276 = vld [vmem:[#allocation4 + $0x68] sm:$0xff]
    %v6277 = vld [vmem:[#allocation4 + $0x70] sm:$0xff]
    %v6278 = vld [vmem:[#allocation4 + $0x78] sm:$0xff]
    %v6279 = vld [vmem:[#allocation4 + $0x80] sm:$0xff]
    %v6280 = vld [vmem:[#allocation4 + $0x88] sm:$0xff]
    %v6281 = vld [vmem:[#allocation4 + $0x90] sm:$0xff]
    %v6282 = vld [vmem:[#allocation4 + $0x98] sm:$0xff]
    %v6283 = vld [vmem:[#allocation4 + $0xa0] sm:$0xff]
    %v6284 = vld [vmem:[#allocation4 + $0xa8] sm:$0xff]
    %v6285 = vld [vmem:[#allocation4 + $0xb0] sm:$0xff]
    %v6286 = vld [vmem:[#allocation4 + $0xb8] sm:$0xff]
    %v6287 = vld [vmem:[#allocation4 + $0xc0] sm:$0xff]
    %v6288 = vld [vmem:[#allocation4 + $0xc8] sm:$0xff]
    %v6289 = vld [vmem:[#allocation4 + $0xd0] sm:$0xff]
    %v6290 = vld [vmem:[#allocation4 + $0xd8] sm:$0xff]
    %v6291 = vld [vmem:[#allocation4 + $0xe0] sm:$0xff]
    %v6292 = vld [vmem:[#allocation4 + $0xe8] sm:$0xff]
    %v6293 = vld [vmem:[#allocation4 + $0xf0] sm:$0xff]
    %v6294 = vld [vmem:[#allocation4 + $0xf8] sm:$0xff]
    %v6295 = vld [vmem:[#allocation4 + $0x100] sm:$0xff]
    %v6296 = vld [vmem:[#allocation4 + $0x108] sm:$0xff]
    %v6297 = vld [vmem:[#allocation4 + $0x110] sm:$0xff]
    %v6298 = vld [vmem:[#allocation4 + $0x118] sm:$0xff]
    %v6299 = vld [vmem:[#allocation4 + $0x120] sm:$0xff]
    %v6300 = vld [vmem:[#allocation4 + $0x128] sm:$0xff]
    %v6301 = vld [vmem:[#allocation4 + $0x130] sm:$0xff]
    %v6302 = vld [vmem:[#allocation4 + $0x138] sm:$0xff]
    %v6303 = vld [vmem:[#allocation4 + $0x140] sm:$0xff]
    %v6304 = vld [vmem:[#allocation4 + $0x148] sm:$0xff]
    %v6305 = vld [vmem:[#allocation4 + $0x150] sm:$0xff]
    %v6306 = vld [vmem:[#allocation4 + $0x158] sm:$0xff]
    %v6307 = vld [vmem:[#allocation4 + $0x160] sm:$0xff]
    %v6308 = vld [vmem:[#allocation4 + $0x168] sm:$0xff]
    %v6309 = vld [vmem:[#allocation4 + $0x170] sm:$0xff]
    %v6310 = vld [vmem:[#allocation4 + $0x178] sm:$0xff]
    %v6311 = vld [vmem:[#allocation4 + $0x180] sm:$0xff]
    %v6312 = vld [vmem:[#allocation4 + $0x188] sm:$0xff]
    %v6313 = vld [vmem:[#allocation4 + $0x190] sm:$0xff]
    %v6314 = vld [vmem:[#allocation4 + $0x198] sm:$0xff]
    %v6315 = vld [vmem:[#allocation4 + $0x1a0] sm:$0xff]
    %v6316 = vld [vmem:[#allocation4 + $0x1a8] sm:$0xff]
    %v6317 = vld [vmem:[#allocation4 + $0x1b0] sm:$0xff]
    %v6318 = vld [vmem:[#allocation4 + $0x1b8] sm:$0xff]
    %v6319 = vld [vmem:[#allocation4 + $0x1c0] sm:$0xff]
    %v6320 = vld [vmem:[#allocation4 + $0x1c8] sm:$0xff]
    %v6321 = vld [vmem:[#allocation4 + $0x1d0] sm:$0xff]
    %v6322 = vld [vmem:[#allocation4 + $0x1d8] sm:$0xff]
    %v6323 = vld [vmem:[#allocation4 + $0x1e0] sm:$0xff]
    %v6324 = vld [vmem:[#allocation4 + $0x1e8] sm:$0xff]
    %v6325 = vld [vmem:[#allocation4 + $0x1f0] sm:$0xff]
    %v6326 = vld [vmem:[#allocation4 + $0x1f8] sm:$0xff]
    %v6327 = vld [vmem:[#allocation4 + $0x200] sm:$0xff]
    %v6328 = vld [vmem:[#allocation4 + $0x208] sm:$0xff]
    %v6329 = vld [vmem:[#allocation4 + $0x210] sm:$0xff]
    %v6330 = vld [vmem:[#allocation4 + $0x218] sm:$0xff]
    %v6331 = vld [vmem:[#allocation4 + $0x220] sm:$0xff]
    %v6332 = vld [vmem:[#allocation4 + $0x228] sm:$0xff]
    %v6333 = vld [vmem:[#allocation4 + $0x230] sm:$0xff]
    %v6334 = vld [vmem:[#allocation4 + $0x238] sm:$0xff]
    %v6335 = vld [vmem:[#allocation4 + $0x240] sm:$0xff]
    %v6336 = vld [vmem:[#allocation4 + $0x248] sm:$0xff]
    %v6337 = vld [vmem:[#allocation4 + $0x250] sm:$0xff]
    %v6338 = vld [vmem:[#allocation4 + $0x258] sm:$0xff]
    %v6339 = vld [vmem:[#allocation4 + $0x260] sm:$0xff]
    %v6340 = vld [vmem:[#allocation4 + $0x268] sm:$0xff]
    %v6341 = vld [vmem:[#allocation4 + $0x270] sm:$0xff]
    %v6342 = vld [vmem:[#allocation4 + $0x278] sm:$0xff]
    %v6343 = vld [vmem:[#allocation4 + $0x280] sm:$0xff]
    %v6344 = vld [vmem:[#allocation4 + $0x288] sm:$0xff]
    %v6345 = vld [vmem:[#allocation4 + $0x290] sm:$0xff]
    %v6346 = vld [vmem:[#allocation4 + $0x298] sm:$0xff]
    %v6347 = vld [vmem:[#allocation4 + $0x2a0] sm:$0xff]
    %v6348 = vld [vmem:[#allocation4 + $0x2a8] sm:$0xff]
    %v6349 = vld [vmem:[#allocation4 + $0x2b0] sm:$0xff]
    %v6350 = vld [vmem:[#allocation4 + $0x2b8] sm:$0xff]
    %v6351 = vld [vmem:[#allocation4 + $0x2c0] sm:$0xff]
    %v6352 = vld [vmem:[#allocation4 + $0x2c8] sm:$0xff]
    %v6353 = vld [vmem:[#allocation4 + $0x2d0] sm:$0xff]
    %v6354 = vld [vmem:[#allocation4 + $0x2d8] sm:$0xff]
    %v6355 = vld [vmem:[#allocation4 + $0x2e0] sm:$0xff]
    %v6356 = vld [vmem:[#allocation4 + $0x2e8] sm:$0xff]
    %v6357 = vld [vmem:[#allocation4 + $0x2f0] sm:$0xff]
    %v6358 = vld [vmem:[#allocation4 + $0x2f8] sm:$0xff]
    %v6359 = vld [vmem:[#allocation4 + $0x300] sm:$0xff]
    %v6360 = vld [vmem:[#allocation4 + $0x308] sm:$0xff]
    %v6361 = vld [vmem:[#allocation4 + $0x310] sm:$0xff]
    %v6362 = vld [vmem:[#allocation4 + $0x318] sm:$0xff]
    %v6363 = vld [vmem:[#allocation4 + $0x320] sm:$0xff]
    %v6364 = vld [vmem:[#allocation4 + $0x328] sm:$0xff]
    %v6365 = vld [vmem:[#allocation4 + $0x330] sm:$0xff]
    %v6366 = vld [vmem:[#allocation4 + $0x338] sm:$0xff]
    %v6367 = vld [vmem:[#allocation4 + $0x340] sm:$0xff]
    %v6368 = vld [vmem:[#allocation4 + $0x348] sm:$0xff]
    %v6369 = vld [vmem:[#allocation4 + $0x350] sm:$0xff]
    %v6370 = vld [vmem:[#allocation4 + $0x358] sm:$0xff]
    %v6371 = vld [vmem:[#allocation4 + $0x360] sm:$0xff]
    %v6372 = vld [vmem:[#allocation4 + $0x368] sm:$0xff]
    %v6373 = vld [vmem:[#allocation4 + $0x370] sm:$0xff]
    %v6374 = vld [vmem:[#allocation4 + $0x378] sm:$0xff]
    %v6375 = vld [vmem:[#allocation4 + $0x380] sm:$0xff]
    %v6376 = vld [vmem:[#allocation4 + $0x388] sm:$0xff]
    %v6377 = vld [vmem:[#allocation4 + $0x390] sm:$0xff]
    %v6378 = vld [vmem:[#allocation4 + $0x398] sm:$0xff]
    %v6379 = vld [vmem:[#allocation4 + $0x3a0] sm:$0xff]
    %v6380 = vld [vmem:[#allocation4 + $0x3a8] sm:$0xff]
    %v6381 = vld [vmem:[#allocation4 + $0x3b0] sm:$0xff]
    %v6382 = vld [vmem:[#allocation4 + $0x3b8] sm:$0xff]
    %v6383 = vld [vmem:[#allocation4 + $0x3c0] sm:$0xff]
    %v6384 = vld [vmem:[#allocation4 + $0x3c8] sm:$0xff]
    %v6385 = vld [vmem:[#allocation4 + $0x3d0] sm:$0xff]
    %v6386 = vld [vmem:[#allocation4 + $0x3d8] sm:$0xff]
    %v6387 = vld [vmem:[#allocation4 + $0x3e0] sm:$0xff]
    %v6388 = vld [vmem:[#allocation4 + $0x3e8] sm:$0xff]
    %v6389 = vld [vmem:[#allocation4 + $0x3f0] sm:$0xff]
    %v6390 = vld [vmem:[#allocation4 + $0x3f8] sm:$0xff]
    %v6391 = vld [vmem:[#allocation4 + $0x400] sm:$0xff]
    %v6392 = vld [vmem:[#allocation4 + $0x408] sm:$0xff]
    %v6393 = vld [vmem:[#allocation4 + $0x410] sm:$0xff]
    %v6394 = vld [vmem:[#allocation4 + $0x418] sm:$0xff]
    %v6395 = vld [vmem:[#allocation4 + $0x420] sm:$0xff]
    %v6396 = vld [vmem:[#allocation4 + $0x428] sm:$0xff]
    %v6397 = vld [vmem:[#allocation4 + $0x430] sm:$0xff]
    %v6398 = vld [vmem:[#allocation4 + $0x438] sm:$0xff]
    %v6399 = vld [vmem:[#allocation4 + $0x440] sm:$0xff]
    %v6400 = vld [vmem:[#allocation4 + $0x448] sm:$0xff]
    %v6401 = vld [vmem:[#allocation4 + $0x450] sm:$0xff]
    %v6402 = vld [vmem:[#allocation4 + $0x458] sm:$0xff]
    %v6403 = vld [vmem:[#allocation4 + $0x460] sm:$0xff]
    %v6404 = vld [vmem:[#allocation4 + $0x468] sm:$0xff]
    %v6405 = vld [vmem:[#allocation4 + $0x470] sm:$0xff]
    %v6406 = vld [vmem:[#allocation4 + $0x478] sm:$0xff]
    %v6407 = vld [vmem:[#allocation4 + $0x480] sm:$0xff]
    %v6408 = vld [vmem:[#allocation4 + $0x488] sm:$0xff]
    %v6409 = vld [vmem:[#allocation4 + $0x490] sm:$0xff]
    %v6410 = vld [vmem:[#allocation4 + $0x498] sm:$0xff]
    %v6411 = vld [vmem:[#allocation4 + $0x4a0] sm:$0xff]
    %v6412 = vld [vmem:[#allocation4 + $0x4a8] sm:$0xff]
    %v6413 = vld [vmem:[#allocation4 + $0x4b0] sm:$0xff]
    %v6414 = vld [vmem:[#allocation4 + $0x4b8] sm:$0xff]
    %v6415 = vld [vmem:[#allocation4 + $0x4c0] sm:$0xff]
    %v6416 = vld [vmem:[#allocation4 + $0x4c8] sm:$0xff]
    %v6417 = vld [vmem:[#allocation4 + $0x4d0] sm:$0xff]
    %v6418 = vld [vmem:[#allocation4 + $0x4d8] sm:$0xff]
    %v6419 = vld [vmem:[#allocation4 + $0x4e0] sm:$0xff]
    %v6420 = vld [vmem:[#allocation4 + $0x4e8] sm:$0xff]
    %v6421 = vld [vmem:[#allocation4 + $0x4f0] sm:$0xff]
    %v6422 = vld [vmem:[#allocation4 + $0x4f8] sm:$0xff]
    %v6423 = vld [vmem:[#allocation4 + $0x500] sm:$0xff]
    %v6424 = vld [vmem:[#allocation4 + $0x508] sm:$0xff]
    %v6425 = vld [vmem:[#allocation4 + $0x510] sm:$0xff]
    %v6426 = vld [vmem:[#allocation4 + $0x518] sm:$0xff]
    %v6427 = vld [vmem:[#allocation4 + $0x520] sm:$0xff]
    %v6428 = vld [vmem:[#allocation4 + $0x528] sm:$0xff]
    %v6429 = vld [vmem:[#allocation4 + $0x530] sm:$0xff]
    %v6430 = vld [vmem:[#allocation4 + $0x538] sm:$0xff]
    %v6431 = vld [vmem:[#allocation4 + $0x540] sm:$0xff]
    %v6432 = vld [vmem:[#allocation4 + $0x548] sm:$0xff]
    %v6433 = vld [vmem:[#allocation4 + $0x550] sm:$0xff]
    %v6434 = vld [vmem:[#allocation4 + $0x558] sm:$0xff]
    %v6435 = vld [vmem:[#allocation4 + $0x560] sm:$0xff]
    %v6436 = vld [vmem:[#allocation4 + $0x568] sm:$0xff]
    %v6437 = vld [vmem:[#allocation4 + $0x570] sm:$0xff]
    %v6438 = vld [vmem:[#allocation4 + $0x578] sm:$0xff]
    %v6439 = vld [vmem:[#allocation4 + $0x580] sm:$0xff]
    %v6440 = vld [vmem:[#allocation4 + $0x588] sm:$0xff]
    %v6441 = vld [vmem:[#allocation4 + $0x590] sm:$0xff]
    %v6442 = vld [vmem:[#allocation4 + $0x598] sm:$0xff]
    %v6443 = vld [vmem:[#allocation4 + $0x5a0] sm:$0xff]
    %v6444 = vld [vmem:[#allocation4 + $0x5a8] sm:$0xff]
    %v6445 = vld [vmem:[#allocation4 + $0x5b0] sm:$0xff]
    %v6446 = vld [vmem:[#allocation4 + $0x5b8] sm:$0xff]
    %v6447 = vld [vmem:[#allocation4 + $0x5c0] sm:$0xff]
    %v6448 = vld [vmem:[#allocation4 + $0x5c8] sm:$0xff]
    %v6449 = vld [vmem:[#allocation4 + $0x5d0] sm:$0xff]
    %v6450 = vld [vmem:[#allocation4 + $0x5d8] sm:$0xff]
    %v6451 = vld [vmem:[#allocation4 + $0x5e0] sm:$0xff]
    %v6452 = vld [vmem:[#allocation4 + $0x5e8] sm:$0xff]
    %v6453 = vld [vmem:[#allocation4 + $0x5f0] sm:$0xff]
    %v6454 = vld [vmem:[#allocation4 + $0x5f8] sm:$0xff]
    %v6455 = vld [vmem:[#allocation4 + $0x600] sm:$0xff]
    %v6456 = vld [vmem:[#allocation4 + $0x608] sm:$0xff]
    %v6457 = vld [vmem:[#allocation4 + $0x610] sm:$0xff]
    %v6458 = vld [vmem:[#allocation4 + $0x618] sm:$0xff]
    %v6459 = vld [vmem:[#allocation4 + $0x620] sm:$0xff]
    %v6460 = vld [vmem:[#allocation4 + $0x628] sm:$0xff]
    %v6461 = vld [vmem:[#allocation4 + $0x630] sm:$0xff]
    %v6462 = vld [vmem:[#allocation4 + $0x638] sm:$0xff]
    %v6463 = vld [vmem:[#allocation4 + $0x640] sm:$0xff]
    %v6464 = vld [vmem:[#allocation4 + $0x648] sm:$0xff]
    %v6465 = vld [vmem:[#allocation4 + $0x650] sm:$0xff]
    %v6466 = vld [vmem:[#allocation4 + $0x658] sm:$0xff]
    %v6467 = vld [vmem:[#allocation4 + $0x660] sm:$0xff]
    %v6468 = vld [vmem:[#allocation4 + $0x668] sm:$0xff]
    %v6469 = vld [vmem:[#allocation4 + $0x670] sm:$0xff]
    %v6470 = vld [vmem:[#allocation4 + $0x678] sm:$0xff]
    %v6471 = vld [vmem:[#allocation4 + $0x680] sm:$0xff]
    %v6472 = vld [vmem:[#allocation4 + $0x688] sm:$0xff]
    %v6473 = vld [vmem:[#allocation4 + $0x690] sm:$0xff]
    %v6474 = vld [vmem:[#allocation4 + $0x698] sm:$0xff]
    %v6475 = vld [vmem:[#allocation4 + $0x6a0] sm:$0xff]
    %v6476 = vld [vmem:[#allocation4 + $0x6a8] sm:$0xff]
    %v6477 = vld [vmem:[#allocation4 + $0x6b0] sm:$0xff]
    %v6478 = vld [vmem:[#allocation4 + $0x6b8] sm:$0xff]
    %v6479 = vld [vmem:[#allocation4 + $0x6c0] sm:$0xff]
    %v6480 = vld [vmem:[#allocation4 + $0x6c8] sm:$0xff]
    %v6481 = vld [vmem:[#allocation4 + $0x6d0] sm:$0xff]
    %v6482 = vld [vmem:[#allocation4 + $0x6d8] sm:$0xff]
    %v6483 = vld [vmem:[#allocation4 + $0x6e0] sm:$0xff]
    %v6484 = vld [vmem:[#allocation4 + $0x6e8] sm:$0xff]
    %v6485 = vld [vmem:[#allocation4 + $0x6f0] sm:$0xff]
    %v6486 = vld [vmem:[#allocation4 + $0x6f8] sm:$0xff]
    %v6487 = vld [vmem:[#allocation4 + $0x700] sm:$0xff]
    %v6488 = vld [vmem:[#allocation4 + $0x708] sm:$0xff]
    %v6489 = vld [vmem:[#allocation4 + $0x710] sm:$0xff]
    %v6490 = vld [vmem:[#allocation4 + $0x718] sm:$0xff]
    %v6491 = vld [vmem:[#allocation4 + $0x720] sm:$0xff]
    %v6492 = vld [vmem:[#allocation4 + $0x728] sm:$0xff]
    %v6493 = vld [vmem:[#allocation4 + $0x730] sm:$0xff]
    %v6494 = vld [vmem:[#allocation4 + $0x738] sm:$0xff]
    %v6495 = vld [vmem:[#allocation4 + $0x740] sm:$0xff]
    %v6496 = vld [vmem:[#allocation4 + $0x748] sm:$0xff]
    %v6497 = vld [vmem:[#allocation4 + $0x750] sm:$0xff]
    %v6498 = vld [vmem:[#allocation4 + $0x758] sm:$0xff]
    %v6499 = vld [vmem:[#allocation4 + $0x760] sm:$0xff]
    %v6500 = vld [vmem:[#allocation4 + $0x768] sm:$0xff]
    %v6501 = vld [vmem:[#allocation4 + $0x770] sm:$0xff]
    %v6502 = vld [vmem:[#allocation4 + $0x778] sm:$0xff]
    %v6503 = vld [vmem:[#allocation4 + $0x780] sm:$0xff]
    %v6504 = vld [vmem:[#allocation4 + $0x788] sm:$0xff]
    %v6505 = vld [vmem:[#allocation4 + $0x790] sm:$0xff]
    %v6506 = vld [vmem:[#allocation4 + $0x798] sm:$0xff]
    %v6507 = vld [vmem:[#allocation4 + $0x7a0] sm:$0xff]
    %v6508 = vld [vmem:[#allocation4 + $0x7a8] sm:$0xff]
    %v6509 = vld [vmem:[#allocation4 + $0x7b0] sm:$0xff]
    %v6510 = vld [vmem:[#allocation4 + $0x7b8] sm:$0xff]
    %v6511 = vld [vmem:[#allocation4 + $0x7c0] sm:$0xff]
    %v6512 = vld [vmem:[#allocation4 + $0x7c8] sm:$0xff]
    %v6513 = vld [vmem:[#allocation4 + $0x7d0] sm:$0xff]
    %v6514 = vld [vmem:[#allocation4 + $0x7d8] sm:$0xff]
    %v6515 = vld [vmem:[#allocation4 + $0x7e0] sm:$0xff]
    %v6516 = vld [vmem:[#allocation4 + $0x7e8] sm:$0xff]
    %v6517 = vld [vmem:[#allocation4 + $0x7f0] sm:$0xff]
    %v6518 = vld [vmem:[#allocation4 + $0x7f8] sm:$0xff]
    %v6519 = vld [vmem:[#allocation39] sm:$0xf]
    %v6521 = vlaneseq
    %v6522 = vshrl.u32 %v6521, 7
    %v6523 = vsub.s32 0, %v6522
    %v6524 = vrot.slane %v6519, %v6523
    %v6525 = vlaneseq
    %v6526 = vshrl.u32 %v6525, 7
    %v6527 = vsub.s32 1, %v6526
    %v6528 = vrot.slane %v6519, %v6527
    %v6529 = vlaneseq
    %v6530 = vshrl.u32 %v6529, 7
    %v6531 = vsub.s32 2, %v6530
    %v6532 = vrot.slane %v6519, %v6531
    %v6533 = vlaneseq
    %v6534 = vshrl.u32 %v6533, 7
    %v6535 = vsub.s32 3, %v6534
    %v6536 = vrot.slane %v6519, %v6535
    %6541 = vmatprep.subr.bf16.mxu0 %v6264
    %6542 = vmatpush1.bf16.msra.mxu0 %v6263
    %6543 = vmatprep.subr.bf16.mxu0 %v6268
    %6544 = vmatpush1.bf16.msra.mxu0 %v6267
    %6545 = vmatprep.subr.bf16.mxu0 %v6272
    %6546 = vmatpush1.bf16.msra.mxu0 %v6271
    %6547 = vmatprep.subr.bf16.mxu0 %v6276
    %6548 = vmatpush1.bf16.msra.mxu0 %v6275
    %6549 = vmatprep.subr.bf16.mxu0 %v6280
    %6550 = vmatpush1.bf16.msra.mxu0 %v6279
    %6551 = vmatprep.subr.bf16.mxu0 %v6284
    %6552 = vmatpush1.bf16.msra.mxu0 %v6283
    %6553 = vmatprep.subr.bf16.mxu0 %v6288
    %6554 = vmatpush1.bf16.msra.mxu0 %v6287
    %6555 = vmatprep.subr.bf16.mxu0 %v6292
    %6556 = vmatpush1.bf16.msra.mxu0 %v6291
    %6557 = vmatprep.subr.bf16.mxu0 %v6296
    %6558 = vmatpush1.bf16.msra.mxu0 %v6295
    %6559 = vmatprep.subr.bf16.mxu0 %v6300
    %6560 = vmatpush1.bf16.msra.mxu0 %v6299
    %6561 = vmatprep.subr.bf16.mxu0 %v6304
    %6562 = vmatpush1.bf16.msra.mxu0 %v6303
    %6563 = vmatprep.subr.bf16.mxu0 %v6308
    %6564 = vmatpush1.bf16.msra.mxu0 %v6307
    %6565 = vmatprep.subr.bf16.mxu0 %v6312
    %6566 = vmatpush1.bf16.msra.mxu0 %v6311
    %6567 = vmatprep.subr.bf16.mxu0 %v6316
    %6568 = vmatpush1.bf16.msra.mxu0 %v6315
    %6569 = vmatprep.subr.bf16.mxu0 %v6320
    %6570 = vmatpush1.bf16.msra.mxu0 %v6319
    %6571 = vmatprep.subr.bf16.mxu0 %v6324
    %6572 = vmatpush1.bf16.msra.mxu0 %v6323
    %6573 = vmatprep.mubr.bf16.mxu0 %v6256
    %6574 = vmatmul.mubr.bf16.gmra.mrb[0].mxu0 %v6255
    %v6575 = vpop.f32.mrb[0].mxu0
    %v6576 = vadd.f32 %v6524, %v6575
    %v6577 = vpop.f32.mrb[0].mxu0
    %v6578 = vadd.f32 %v6528, %v6577
    %v6579 = vpop.f32.mrb[0].mxu0
    %v6580 = vpop.f32.mrb[0].mxu0
    %6581 = vdwg.mxu0
    %6582 = vmatprep.subr.bf16.mxu0 %v6328
    %6583 = vmatpush1.bf16.msra.mxu0 %v6327
    %6584 = vmatprep.subr.bf16.mxu0 %v6332
    %6585 = vmatpush1.bf16.msra.mxu0 %v6331
    %6586 = vmatprep.subr.bf16.mxu0 %v6336
    %6587 = vmatpush1.bf16.msra.mxu0 %v6335
    %6588 = vmatprep.subr.bf16.mxu0 %v6340
    %6589 = vmatpush1.bf16.msra.mxu0 %v6339
    %6590 = vmatprep.subr.bf16.mxu0 %v6344
    %6591 = vmatpush1.bf16.msra.mxu0 %v6343
    %6592 = vmatprep.subr.bf16.mxu0 %v6348
    %6593 = vmatpush1.bf16.msra.mxu0 %v6347
    %6594 = vmatprep.subr.bf16.mxu0 %v6352
    %6595 = vmatpush1.bf16.msra.mxu0 %v6351
    %6596 = vmatprep.subr.bf16.mxu0 %v6356
    %6597 = vmatpush1.bf16.msra.mxu0 %v6355
    %6598 = vmatprep.subr.bf16.mxu0 %v6360
    %6599 = vmatpush1.bf16.msra.mxu0 %v6359
    %6600 = vmatprep.subr.bf16.mxu0 %v6364
    %6601 = vmatpush1.bf16.msra.mxu0 %v6363
    %6602 = vmatprep.subr.bf16.mxu0 %v6368
    %6603 = vmatpush1.bf16.msra.mxu0 %v6367
    %6604 = vmatprep.subr.bf16.mxu0 %v6372
    %6605 = vmatpush1.bf16.msra.mxu0 %v6371
    %6606 = vmatprep.subr.bf16.mxu0 %v6376
    %6607 = vmatpush1.bf16.msra.mxu0 %v6375
    %6608 = vmatprep.subr.bf16.mxu0 %v6380
    %6609 = vmatpush1.bf16.msra.mxu0 %v6379
    %6610 = vmatprep.subr.bf16.mxu0 %v6384
    %6611 = vmatpush1.bf16.msra.mxu0 %v6383
    %6612 = vmatprep.subr.bf16.mxu0 %v6388
    %6613 = vmatpush1.bf16.msra.mxu0 %v6387
    %6614 = vmatprep.mubr.bf16.mxu0 %v6258
    %6615 = vmatmul.mubr.bf16.gmra.mrb[0].mxu0 %v6257
    %v6616 = vpop.f32.mrb[0].mxu0
    %v6617 = vadd.f32 %v6576, %v6616
    %v6618 = vpop.f32.mrb[0].mxu0
    %v6619 = vadd.f32 %v6578, %v6618
    %v6620 = vpop.f32.mrb[0].mxu0
    %v6621 = vpop.f32.mrb[0].mxu0
    %6622 = vdwg.mxu0
    %6623 = vmatprep.subr.bf16.mxu0 %v6392
    %6624 = vmatpush1.bf16.msra.mxu0 %v6391
    %6625 = vmatprep.subr.bf16.mxu0 %v6396
    %6626 = vmatpush1.bf16.msra.mxu0 %v6395
    %6627 = vmatprep.subr.bf16.mxu0 %v6400
    %6628 = vmatpush1.bf16.msra.mxu0 %v6399
    %6629 = vmatprep.subr.bf16.mxu0 %v6404
    %6630 = vmatpush1.bf16.msra.mxu0 %v6403
    %6631 = vmatprep.subr.bf16.mxu0 %v6408
    %6632 = vmatpush1.bf16.msra.mxu0 %v6407
    %6633 = vmatprep.subr.bf16.mxu0 %v6412
    %6634 = vmatpush1.bf16.msra.mxu0 %v6411
    %6635 = vmatprep.subr.bf16.mxu0 %v6416
    %6636 = vmatpush1.bf16.msra.mxu0 %v6415
    %6637 = vmatprep.subr.bf16.mxu0 %v6420
    %6638 = vmatpush1.bf16.msra.mxu0 %v6419
    %6639 = vmatprep.subr.bf16.mxu0 %v6424
    %6640 = vmatpush1.bf16.msra.mxu0 %v6423
    %6641 = vmatprep.subr.bf16.mxu0 %v6428
    %6642 = vmatpush1.bf16.msra.mxu0 %v6427
    %6643 = vmatprep.subr.bf16.mxu0 %v6432
    %6644 = vmatpush1.bf16.msra.mxu0 %v6431
    %6645 = vmatprep.subr.bf16.mxu0 %v6436
    %6646 = vmatpush1.bf16.msra.mxu0 %v6435
    %6647 = vmatprep.subr.bf16.mxu0 %v6440
    %6648 = vmatpush1.bf16.msra.mxu0 %v6439
    %6649 = vmatprep.subr.bf16.mxu0 %v6444
    %6650 = vmatpush1.bf16.msra.mxu0 %v6443
    %6651 = vmatprep.subr.bf16.mxu0 %v6448
    %6652 = vmatpush1.bf16.msra.mxu0 %v6447
    %6653 = vmatprep.subr.bf16.mxu0 %v6452
    %6654 = vmatpush1.bf16.msra.mxu0 %v6451
    %6655 = vmatprep.mubr.bf16.mxu0 %v6260
    %6656 = vmatmul.mubr.bf16.gmra.mrb[0].mxu0 %v6259
    %v6657 = vpop.f32.mrb[0].mxu0
    %v6658 = vadd.f32 %v6617, %v6657
    %v6659 = vpop.f32.mrb[0].mxu0
    %v6660 = vadd.f32 %v6619, %v6659
    %v6661 = vpop.f32.mrb[0].mxu0
    %v6662 = vpop.f32.mrb[0].mxu0
    %6663 = vdwg.mxu0
    %6664 = vmatprep.subr.bf16.mxu0 %v6456
    %6665 = vmatpush1.bf16.msra.mxu0 %v6455
    %6666 = vmatprep.subr.bf16.mxu0 %v6460
    %6667 = vmatpush1.bf16.msra.mxu0 %v6459
    %6668 = vmatprep.subr.bf16.mxu0 %v6464
    %6669 = vmatpush1.bf16.msra.mxu0 %v6463
    %6670 = vmatprep.subr.bf16.mxu0 %v6468
    %6671 = vmatpush1.bf16.msra.mxu0 %v6467
    %6672 = vmatprep.subr.bf16.mxu0 %v6472
    %6673 = vmatpush1.bf16.msra.mxu0 %v6471
    %6674 = vmatprep.subr.bf16.mxu0 %v6476
    %6675 = vmatpush1.bf16.msra.mxu0 %v6475
    %6676 = vmatprep.subr.bf16.mxu0 %v6480
    %6677 = vmatpush1.bf16.msra.mxu0 %v6479
    %6678 = vmatprep.subr.bf16.mxu0 %v6484
    %6679 = vmatpush1.bf16.msra.mxu0 %v6483
    %6680 = vmatprep.subr.bf16.mxu0 %v6488
    %6681 = vmatpush1.bf16.msra.mxu0 %v6487
    %6682 = vmatprep.subr.bf16.mxu0 %v6492
    %6683 = vmatpush1.bf16.msra.mxu0 %v6491
    %6684 = vmatprep.subr.bf16.mxu0 %v6496
    %6685 = vmatpush1.bf16.msra.mxu0 %v6495
    %6686 = vmatprep.subr.bf16.mxu0 %v6500
    %6687 = vmatpush1.bf16.msra.mxu0 %v6499
    %6688 = vmatprep.subr.bf16.mxu0 %v6504
    %6689 = vmatpush1.bf16.msra.mxu0 %v6503
    %6690 = vmatprep.subr.bf16.mxu0 %v6508
    %6691 = vmatpush1.bf16.msra.mxu0 %v6507
    %6692 = vmatprep.subr.bf16.mxu0 %v6512
    %6693 = vmatpush1.bf16.msra.mxu0 %v6511
    %6694 = vmatprep.subr.bf16.mxu0 %v6516
    %6695 = vmatpush1.bf16.msra.mxu0 %v6515
    %6696 = vmatprep.mubr.bf16.mxu0 %v6262
    %6697 = vmatmul.mubr.bf16.gmra.mrb[0].mxu0 %v6261
    %v6698 = vpop.f32.mrb[0].mxu0
    %v6699 = vadd.f32 %v6658, %v6698
    %v6700 = vpop.f32.mrb[0].mxu0
    %v6701 = vadd.f32 %v6660, %v6700
    %v6702 = vpop.f32.mrb[0].mxu0
    %v6703 = vpop.f32.mrb[0].mxu0
    %6704 = vdwg.mxu0
    %6705 = vmatprep.subr.bf16.mxu0 %v6266
    %6706 = vmatpush1.bf16.msra.mxu0 %v6265
    %6707 = vmatprep.subr.bf16.mxu0 %v6270
    %6708 = vmatpush1.bf16.msra.mxu0 %v6269
    %6709 = vmatprep.subr.bf16.mxu0 %v6274
    %6710 = vmatpush1.bf16.msra.mxu0 %v6273
    %6711 = vmatprep.subr.bf16.mxu0 %v6278
    %6712 = vmatpush1.bf16.msra.mxu0 %v6277
    %6713 = vmatprep.subr.bf16.mxu0 %v6282
    %6714 = vmatpush1.bf16.msra.mxu0 %v6281
    %6715 = vmatprep.subr.bf16.mxu0 %v6286
    %6716 = vmatpush1.bf16.msra.mxu0 %v6285
    %6717 = vmatprep.subr.bf16.mxu0 %v6290
    %6718 = vmatpush1.bf16.msra.mxu0 %v6289
    %6719 = vmatprep.subr.bf16.mxu0 %v6294
    %6720 = vmatpush1.bf16.msra.mxu0 %v6293
    %6721 = vmatprep.subr.bf16.mxu0 %v6298
    %6722 = vmatpush1.bf16.msra.mxu0 %v6297
    %6723 = vmatprep.subr.bf16.mxu0 %v6302
    %6724 = vmatpush1.bf16.msra.mxu0 %v6301
    %6725 = vmatprep.subr.bf16.mxu0 %v6306
    %6726 = vmatpush1.bf16.msra.mxu0 %v6305
    %6727 = vmatprep.subr.bf16.mxu0 %v6310
    %6728 = vmatpush1.bf16.msra.mxu0 %v6309
    %6729 = vmatprep.subr.bf16.mxu0 %v6314
    %6730 = vmatpush1.bf16.msra.mxu0 %v6313
    %6731 = vmatprep.subr.bf16.mxu0 %v6318
    %6732 = vmatpush1.bf16.msra.mxu0 %v6317
    %6733 = vmatprep.subr.bf16.mxu0 %v6322
    %6734 = vmatpush1.bf16.msra.mxu0 %v6321
    %6735 = vmatprep.subr.bf16.mxu0 %v6326
    %6736 = vmatpush1.bf16.msra.mxu0 %v6325
    %6737 = vmatprep.mubr.bf16.mxu0 %v6256
    %6738 = vmatmul.mubr.bf16.gmra.mrb[0].mxu0 %v6255
    %v6739 = vpop.f32.mrb[0].mxu0
    %v6740 = vadd.f32 %v6532, %v6739
    %v6741 = vpop.f32.mrb[0].mxu0
    %v6742 = vadd.f32 %v6536, %v6741
    %v6743 = vpop.f32.mrb[0].mxu0
    %v6744 = vpop.f32.mrb[0].mxu0
    %6745 = vdwg.mxu0
    %6746 = vmatprep.subr.bf16.mxu0 %v6330
    %6747 = vmatpush1.bf16.msra.mxu0 %v6329
    %6748 = vmatprep.subr.bf16.mxu0 %v6334
    %6749 = vmatpush1.bf16.msra.mxu0 %v6333
    %6750 = vmatprep.subr.bf16.mxu0 %v6338
    %6751 = vmatpush1.bf16.msra.mxu0 %v6337
    %6752 = vmatprep.subr.bf16.mxu0 %v6342
    %6753 = vmatpush1.bf16.msra.mxu0 %v6341
    %6754 = vmatprep.subr.bf16.mxu0 %v6346
    %6755 = vmatpush1.bf16.msra.mxu0 %v6345
    %6756 = vmatprep.subr.bf16.mxu0 %v6350
    %6757 = vmatpush1.bf16.msra.mxu0 %v6349
    %6758 = vmatprep.subr.bf16.mxu0 %v6354
    %6759 = vmatpush1.bf16.msra.mxu0 %v6353
    %6760 = vmatprep.subr.bf16.mxu0 %v6358
    %6761 = vmatpush1.bf16.msra.mxu0 %v6357
    %6762 = vmatprep.subr.bf16.mxu0 %v6362
    %6763 = vmatpush1.bf16.msra.mxu0 %v6361
    %6764 = vmatprep.subr.bf16.mxu0 %v6366
    %6765 = vmatpush1.bf16.msra.mxu0 %v6365
    %6766 = vmatprep.subr.bf16.mxu0 %v6370
    %6767 = vmatpush1.bf16.msra.mxu0 %v6369
    %6768 = vmatprep.subr.bf16.mxu0 %v6374
    %6769 = vmatpush1.bf16.msra.mxu0 %v6373
    %6770 = vmatprep.subr.bf16.mxu0 %v6378
    %6771 = vmatpush1.bf16.msra.mxu0 %v6377
    %6772 = vmatprep.subr.bf16.mxu0 %v6382
    %6773 = vmatpush1.bf16.msra.mxu0 %v6381
    %6774 = vmatprep.subr.bf16.mxu0 %v6386
    %6775 = vmatpush1.bf16.msra.mxu0 %v6385
    %6776 = vmatprep.subr.bf16.mxu0 %v6390
    %6777 = vmatpush1.bf16.msra.mxu0 %v6389
    %6778 = vmatprep.mubr.bf16.mxu0 %v6258
    %6779 = vmatmul.mubr.bf16.gmra.mrb[0].mxu0 %v6257
    %v6780 = vpop.f32.mrb[0].mxu0
    %v6781 = vadd.f32 %v6740, %v6780
    %v6782 = vpop.f32.mrb[0].mxu0
    %v6783 = vadd.f32 %v6742, %v6782
    %v6784 = vpop.f32.mrb[0].mxu0
    %v6785 = vpop.f32.mrb[0].mxu0
    %6786 = vdwg.mxu0
    %6787 = vmatprep.subr.bf16.mxu0 %v6394
    %6788 = vmatpush1.bf16.msra.mxu0 %v6393
    %6789 = vmatprep.subr.bf16.mxu0 %v6398
    %6790 = vmatpush1.bf16.msra.mxu0 %v6397
    %6791 = vmatprep.subr.bf16.mxu0 %v6402
    %6792 = vmatpush1.bf16.msra.mxu0 %v6401
    %6793 = vmatprep.subr.bf16.mxu0 %v6406
    %6794 = vmatpush1.bf16.msra.mxu0 %v6405
    %6795 = vmatprep.subr.bf16.mxu0 %v6410
    %6796 = vmatpush1.bf16.msra.mxu0 %v6409
    %6797 = vmatprep.subr.bf16.mxu0 %v6414
    %6798 = vmatpush1.bf16.msra.mxu0 %v6413
    %6799 = vmatprep.subr.bf16.mxu0 %v6418
    %6800 = vmatpush1.bf16.msra.mxu0 %v6417
    %6801 = vmatprep.subr.bf16.mxu0 %v6422
    %6802 = vmatpush1.bf16.msra.mxu0 %v6421
    %6803 = vmatprep.subr.bf16.mxu0 %v6426
    %6804 = vmatpush1.bf16.msra.mxu0 %v6425
    %6805 = vmatprep.subr.bf16.mxu0 %v6430
    %6806 = vmatpush1.bf16.msra.mxu0 %v6429
    %6807 = vmatprep.subr.bf16.mxu0 %v6434
    %6808 = vmatpush1.bf16.msra.mxu0 %v6433
    %6809 = vmatprep.subr.bf16.mxu0 %v6438
    %6810 = vmatpush1.bf16.msra.mxu0 %v6437
    %6811 = vmatprep.subr.bf16.mxu0 %v6442
    %6812 = vmatpush1.bf16.msra.mxu0 %v6441
    %6813 = vmatprep.subr.bf16.mxu0 %v6446
    %6814 = vmatpush1.bf16.msra.mxu0 %v6445
    %6815 = vmatprep.subr.bf16.mxu0 %v6450
    %6816 = vmatpush1.bf16.msra.mxu0 %v6449
    %6817 = vmatprep.subr.bf16.mxu0 %v6454
    %6818 = vmatpush1.bf16.msra.mxu0 %v6453
    %6819 = vmatprep.mubr.bf16.mxu0 %v6260
    %6820 = vmatmul.mubr.bf16.gmra.mrb[0].mxu0 %v6259
    %v6821 = vpop.f32.mrb[0].mxu0
    %v6822 = vadd.f32 %v6781, %v6821
    %v6823 = vpop.f32.mrb[0].mxu0
    %v6824 = vadd.f32 %v6783, %v6823
    %v6825 = vpop.f32.mrb[0].mxu0
    %v6826 = vpop.f32.mrb[0].mxu0
    %6827 = vdwg.mxu0
    %6828 = vmatprep.subr.bf16.mxu0 %v6458
    %6829 = vmatpush1.bf16.msra.mxu0 %v6457
    %6830 = vmatprep.subr.bf16.mxu0 %v6462
    %6831 = vmatpush1.bf16.msra.mxu0 %v6461
    %6832 = vmatprep.subr.bf16.mxu0 %v6466
    %6833 = vmatpush1.bf16.msra.mxu0 %v6465
    %6834 = vmatprep.subr.bf16.mxu0 %v6470
    %6835 = vmatpush1.bf16.msra.mxu0 %v6469
    %6836 = vmatprep.subr.bf16.mxu0 %v6474
    %6837 = vmatpush1.bf16.msra.mxu0 %v6473
    %6838 = vmatprep.subr.bf16.mxu0 %v6478
    %6839 = vmatpush1.bf16.msra.mxu0 %v6477
    %6840 = vmatprep.subr.bf16.mxu0 %v6482
    %6841 = vmatpush1.bf16.msra.mxu0 %v6481
    %6842 = vmatprep.subr.bf16.mxu0 %v6486
    %6843 = vmatpush1.bf16.msra.mxu0 %v6485
    %6844 = vmatprep.subr.bf16.mxu0 %v6490
    %6845 = vmatpush1.bf16.msra.mxu0 %v6489
    %6846 = vmatprep.subr.bf16.mxu0 %v6494
    %6847 = vmatpush1.bf16.msra.mxu0 %v6493
    %6848 = vmatprep.subr.bf16.mxu0 %v6498
    %6849 = vmatpush1.bf16.msra.mxu0 %v6497
    %6850 = vmatprep.subr.bf16.mxu0 %v6502
    %6851 = vmatpush1.bf16.msra.mxu0 %v6501
    %6852 = vmatprep.subr.bf16.mxu0 %v6506
    %6853 = vmatpush1.bf16.msra.mxu0 %v6505
    %6854 = vmatprep.subr.bf16.mxu0 %v6510
    %6855 = vmatpush1.bf16.msra.mxu0 %v6509
    %6856 = vmatprep.subr.bf16.mxu0 %v6514
    %6857 = vmatpush1.bf16.msra.mxu0 %v6513
    %6858 = vmatprep.subr.bf16.mxu0 %v6518
    %6859 = vmatpush1.bf16.msra.mxu0 %v6517
    %6860 = vmatprep.mubr.bf16.mxu0 %v6262
    %6861 = vmatmul.mubr.bf16.gmra.mrb[0].mxu0 %v6261
    %v6862 = vpop.f32.mrb[0].mxu0
    %v6863 = vadd.f32 %v6822, %v6862
    %v6864 = vpop.f32.mrb[0].mxu0
    %v6865 = vadd.f32 %v6824, %v6864
    %v6866 = vpop.f32.mrb[0].mxu0
    %v6867 = vpop.f32.mrb[0].mxu0
    %6868 = vdwg.mxu0
    %vm6869 = vcmp.gt.f32.partialorder %v6699, 0.0
    %vm6870 = vcmp.gt.f32.partialorder %v6701, 0.0
    %vm6871 = vcmp.gt.f32.partialorder %v6863, 0.0
    %vm6872 = vcmp.gt.f32.partialorder %v6865, 0.0
    %v6873 = vmul.f32 %v6699, 0.01
    %v6874 = vmul.f32 %v6701, 0.01
    %v6875 = vmul.f32 %v6863, 0.01
    %v6876 = vmul.f32 %v6865, 0.01
    %v6877 = vsel %vm6869, %v6699, %v6873
    %v6878 = vsel %vm6870, %v6701, %v6874
    %v6879 = vsel %vm6871, %v6863, %v6875
    %v6880 = vsel %vm6872, %v6865, %v6876
    %v6881 = vpack.c.bf16 %v6877, %v6877
    %v6882 = vpack.c.bf16 %v6878, %v6878
    %v6883 = vpack.c.bf16 %v6879, %v6879
    %v6884 = vpack.c.bf16 %v6880, %v6880
    %v6885 = vld [vmem:[%s25] sm:$0xf]
    %v6886 = vld [vmem:[%s25 + $0x4] sm:$0xf]
    %v6887 = vld [vmem:[%s25 + $0x8] sm:$0xf]
    %v6888 = vld [vmem:[%s25 + $0xc] sm:$0xf]
    %v6889 = vld [vmem:[%s25 + $0x10] sm:$0xf]
    %v6890 = vld [vmem:[%s25 + $0x14] sm:$0xf]
    %v6891 = vld [vmem:[%s25 + $0x18] sm:$0xf]
    %v6892 = vld [vmem:[%s25 + $0x1c] sm:$0xf]
    %v6893 = vld [vmem:[%s25 + $0x20] sm:$0xf]
    %v6894 = vld [vmem:[%s25 + $0x24] sm:$0xf]
    %v6895 = vld [vmem:[%s25 + $0x28] sm:$0xf]
    %v6896 = vld [vmem:[%s25 + $0x2c] sm:$0xf]
    %v6897 = vld [vmem:[%s25 + $0x30] sm:$0xf]
    %v6898 = vld [vmem:[%s25 + $0x34] sm:$0xf]
    %v6899 = vld [vmem:[%s25 + $0x38] sm:$0xf]
    %v6900 = vld [vmem:[%s25 + $0x3c] sm:$0xf]
    %v6901 = vld [vmem:[%s25 + $0x40] sm:$0xf]
    %v6902 = vld [vmem:[%s25 + $0x44] sm:$0xf]
    %v6903 = vld [vmem:[%s25 + $0x48] sm:$0xf]
    %v6904 = vld [vmem:[%s25 + $0x4c] sm:$0xf]
    %v6905 = vld [vmem:[%s25 + $0x50] sm:$0xf]
    %v6906 = vld [vmem:[%s25 + $0x54] sm:$0xf]
    %v6907 = vld [vmem:[%s25 + $0x58] sm:$0xf]
    %v6908 = vld [vmem:[%s25 + $0x5c] sm:$0xf]
    %v6909 = vld [vmem:[%s25 + $0x60] sm:$0xf]
    %v6910 = vld [vmem:[%s25 + $0x64] sm:$0xf]
    %v6911 = vld [vmem:[%s25 + $0x68] sm:$0xf]
    %v6912 = vld [vmem:[%s25 + $0x6c] sm:$0xf]
    %v6913 = vld [vmem:[%s25 + $0x70] sm:$0xf]
    %v6914 = vld [vmem:[%s25 + $0x74] sm:$0xf]
    %v6915 = vld [vmem:[%s25 + $0x78] sm:$0xf]
    %v6916 = vld [vmem:[%s25 + $0x7c] sm:$0xf]
    %v6917 = vld [vmem:[%s25 + $0x80] sm:$0xf]
    %v6918 = vld [vmem:[%s25 + $0x84] sm:$0xf]
    %v6919 = vld [vmem:[%s25 + $0x88] sm:$0xf]
    %v6920 = vld [vmem:[%s25 + $0x8c] sm:$0xf]
    %v6921 = vld [vmem:[%s25 + $0x90] sm:$0xf]
    %v6922 = vld [vmem:[%s25 + $0x94] sm:$0xf]
    %v6923 = vld [vmem:[%s25 + $0x98] sm:$0xf]
    %v6924 = vld [vmem:[%s25 + $0x9c] sm:$0xf]
    %v6925 = vld [vmem:[%s25 + $0xa0] sm:$0xf]
    %v6926 = vld [vmem:[%s25 + $0xa4] sm:$0xf]
    %v6927 = vld [vmem:[%s25 + $0xa8] sm:$0xf]
    %v6928 = vld [vmem:[%s25 + $0xac] sm:$0xf]
    %v6929 = vld [vmem:[%s25 + $0xb0] sm:$0xf]
    %v6930 = vld [vmem:[%s25 + $0xb4] sm:$0xf]
    %v6931 = vld [vmem:[%s25 + $0xb8] sm:$0xf]
    %v6932 = vld [vmem:[%s25 + $0xbc] sm:$0xf]
    %v6933 = vld [vmem:[%s25 + $0xc0] sm:$0xf]
    %v6934 = vld [vmem:[%s25 + $0xc4] sm:$0xf]
    %v6935 = vld [vmem:[%s25 + $0xc8] sm:$0xf]
    %v6936 = vld [vmem:[%s25 + $0xcc] sm:$0xf]
    %v6937 = vld [vmem:[%s25 + $0xd0] sm:$0xf]
    %v6938 = vld [vmem:[%s25 + $0xd4] sm:$0xf]
    %v6939 = vld [vmem:[%s25 + $0xd8] sm:$0xf]
    %v6940 = vld [vmem:[%s25 + $0xdc] sm:$0xf]
    %v6941 = vld [vmem:[%s25 + $0xe0] sm:$0xf]
    %v6942 = vld [vmem:[%s25 + $0xe4] sm:$0xf]
    %v6943 = vld [vmem:[%s25 + $0xe8] sm:$0xf]
    %v6944 = vld [vmem:[%s25 + $0xec] sm:$0xf]
    %v6945 = vld [vmem:[%s25 + $0xf0] sm:$0xf]
    %v6946 = vld [vmem:[%s25 + $0xf4] sm:$0xf]
    %v6947 = vld [vmem:[%s25 + $0xf8] sm:$0xf]
    %v6948 = vld [vmem:[%s25 + $0xfc] sm:$0xf]
    %v6949 = vld [vmem:[#allocation40] sm:$0x1]
    %v6951 = vlaneseq
    %v6952 = vshrl.u32 %v6951, 7
    %v6953 = vsub.s32 0, %v6952
    %v6954 = vrot.slane %v6949, %v6953
    %v7020 = vunpack.c.l.b16 %v6885
    %v7021 = vunpack.c.l.b16 %v6886
    %v7022 = vunpack.c.l.b16 %v6887
    %v7023 = vunpack.c.l.b16 %v6888
    %v7024 = vunpack.c.l.b16 %v6889
    %v7025 = vunpack.c.l.b16 %v6890
    %v7026 = vunpack.c.l.b16 %v6891
    %v7027 = vunpack.c.l.b16 %v6892
    %v7028 = vunpack.c.l.b16 %v6893
    %v7029 = vunpack.c.l.b16 %v6894
    %v7030 = vunpack.c.l.b16 %v6895
    %v7031 = vunpack.c.l.b16 %v6896
    %v7032 = vunpack.c.l.b16 %v6897
    %v7033 = vunpack.c.l.b16 %v6898
    %v7034 = vunpack.c.l.b16 %v6899
    %v7035 = vunpack.c.l.b16 %v6900
    %v7036 = vunpack.c.l.b16 %v6901
    %v7037 = vunpack.c.l.b16 %v6902
    %v7038 = vunpack.c.l.b16 %v6903
    %v7039 = vunpack.c.l.b16 %v6904
    %v7040 = vunpack.c.l.b16 %v6905
    %v7041 = vunpack.c.l.b16 %v6906
    %v7042 = vunpack.c.l.b16 %v6907
    %v7043 = vunpack.c.l.b16 %v6908
    %v7044 = vunpack.c.l.b16 %v6909
    %v7045 = vunpack.c.l.b16 %v6910
    %v7046 = vunpack.c.l.b16 %v6911
    %v7047 = vunpack.c.l.b16 %v6912
    %v7048 = vunpack.c.l.b16 %v6913
    %v7049 = vunpack.c.l.b16 %v6914
    %v7050 = vunpack.c.l.b16 %v6915
    %v7051 = vunpack.c.l.b16 %v6916
    %v7052 = vunpack.c.l.b16 %v6917
    %v7053 = vunpack.c.l.b16 %v6918
    %v7054 = vunpack.c.l.b16 %v6919
    %v7055 = vunpack.c.l.b16 %v6920
    %v7056 = vunpack.c.l.b16 %v6921
    %v7057 = vunpack.c.l.b16 %v6922
    %v7058 = vunpack.c.l.b16 %v6923
    %v7059 = vunpack.c.l.b16 %v6924
    %v7060 = vunpack.c.l.b16 %v6925
    %v7061 = vunpack.c.l.b16 %v6926
    %v7062 = vunpack.c.l.b16 %v6927
    %v7063 = vunpack.c.l.b16 %v6928
    %v7064 = vunpack.c.l.b16 %v6929
    %v7065 = vunpack.c.l.b16 %v6930
    %v7066 = vunpack.c.l.b16 %v6931
    %v7067 = vunpack.c.l.b16 %v6932
    %v7068 = vunpack.c.l.b16 %v6933
    %v7069 = vunpack.c.l.b16 %v6934
    %v7070 = vunpack.c.l.b16 %v6935
    %v7071 = vunpack.c.l.b16 %v6936
    %v7072 = vunpack.c.l.b16 %v6937
    %v7073 = vunpack.c.l.b16 %v6938
    %v7074 = vunpack.c.l.b16 %v6939
    %v7075 = vunpack.c.l.b16 %v6940
    %v7076 = vunpack.c.l.b16 %v6941
    %v7077 = vunpack.c.l.b16 %v6942
    %v7078 = vunpack.c.l.b16 %v6943
    %v7079 = vunpack.c.l.b16 %v6944
    %v7080 = vunpack.c.l.b16 %v6945
    %v7081 = vunpack.c.l.b16 %v6946
    %v7082 = vunpack.c.l.b16 %v6947
    %v7083 = vunpack.c.l.b16 %v6948
    %v7084 = vpack.c.b16 %v7021, %v7020
    %v7085 = vpack.c.b16 %v7023, %v7022
    %v7086 = vpack.c.b16 %v7025, %v7024
    %v7087 = vpack.c.b16 %v7027, %v7026
    %v7088 = vpack.c.b16 %v7029, %v7028
    %v7089 = vpack.c.b16 %v7031, %v7030
    %v7090 = vpack.c.b16 %v7033, %v7032
    %v7091 = vpack.c.b16 %v7035, %v7034
    %v7092 = vpack.c.b16 %v7037, %v7036
    %v7093 = vpack.c.b16 %v7039, %v7038
    %v7094 = vpack.c.b16 %v7041, %v7040
    %v7095 = vpack.c.b16 %v7043, %v7042
    %v7096 = vpack.c.b16 %v7045, %v7044
    %v7097 = vpack.c.b16 %v7047, %v7046
    %v7098 = vpack.c.b16 %v7049, %v7048
    %v7099 = vpack.c.b16 %v7051, %v7050
    %v7100 = vpack.c.b16 %v7053, %v7052
    %v7101 = vpack.c.b16 %v7055, %v7054
    %v7102 = vpack.c.b16 %v7057, %v7056
    %v7103 = vpack.c.b16 %v7059, %v7058
    %v7104 = vpack.c.b16 %v7061, %v7060
    %v7105 = vpack.c.b16 %v7063, %v7062
    %v7106 = vpack.c.b16 %v7065, %v7064
    %v7107 = vpack.c.b16 %v7067, %v7066
    %v7108 = vpack.c.b16 %v7069, %v7068
    %v7109 = vpack.c.b16 %v7071, %v7070
    %v7110 = vpack.c.b16 %v7073, %v7072
    %v7111 = vpack.c.b16 %v7075, %v7074
    %v7112 = vpack.c.b16 %v7077, %v7076
    %v7113 = vpack.c.b16 %v7079, %v7078
    %v7114 = vpack.c.b16 %v7081, %v7080
    %v7115 = vpack.c.b16 %v7083, %v7082
    %7148 = vmatprep.subr.bf16.mxu0 0
    %7149 = vmatpush1.bf16.msra.mxu0 %v7084
    %7150 = vmatprep.subr.bf16.mxu0 0
    %7151 = vmatpush1.bf16.msra.mxu0 %v7085
    %7152 = vmatprep.subr.bf16.mxu0 0
    %7153 = vmatpush1.bf16.msra.mxu0 %v7086
    %7154 = vmatprep.subr.bf16.mxu0 0
    %7155 = vmatpush1.bf16.msra.mxu0 %v7087
    %7156 = vmatprep.subr.bf16.mxu0 0
    %7157 = vmatpush1.bf16.msra.mxu0 %v7088
    %7158 = vmatprep.subr.bf16.mxu0 0
    %7159 = vmatpush1.bf16.msra.mxu0 %v7089
    %7160 = vmatprep.subr.bf16.mxu0 0
    %7161 = vmatpush1.bf16.msra.mxu0 %v7090
    %7162 = vmatprep.subr.bf16.mxu0 0
    %7163 = vmatpush1.bf16.msra.mxu0 %v7091
    %7164 = vmatprep.subr.bf16.mxu0 0
    %7165 = vmatpush1.bf16.msra.mxu0 %v7092
    %7166 = vmatprep.subr.bf16.mxu0 0
    %7167 = vmatpush1.bf16.msra.mxu0 %v7093
    %7168 = vmatprep.subr.bf16.mxu0 0
    %7169 = vmatpush1.bf16.msra.mxu0 %v7094
    %7170 = vmatprep.subr.bf16.mxu0 0
    %7171 = vmatpush1.bf16.msra.mxu0 %v7095
    %7172 = vmatprep.subr.bf16.mxu0 0
    %7173 = vmatpush1.bf16.msra.mxu0 %v7096
    %7174 = vmatprep.subr.bf16.mxu0 0
    %7175 = vmatpush1.bf16.msra.mxu0 %v7097
    %7176 = vmatprep.subr.bf16.mxu0 0
    %7177 = vmatpush1.bf16.msra.mxu0 %v7098
    %7178 = vmatprep.subr.bf16.mxu0 0
    %7179 = vmatpush1.bf16.msra.mxu0 %v7099
    %7180 = vmatprep.mubr.bf16.mxu0 %v6882
    %7181 = vmatmul.mubr.bf16.gmra.mrb[0].mxu0 %v6881
    %v7182 = vpop.f32.mrb[0].mxu0
    %v7183 = vadd.f32 %v6954, %v7182
    %v7184 = vpop.f32.mrb[0].mxu0
    %v7185 = vpop.f32.mrb[0].mxu0
    %v7186 = vpop.f32.mrb[0].mxu0
    %7187 = vdwg.mxu0
    %7188 = vmatprep.subr.bf16.mxu0 0
    %7189 = vmatpush1.bf16.msra.mxu0 %v7100
    %7190 = vmatprep.subr.bf16.mxu0 0
    %7191 = vmatpush1.bf16.msra.mxu0 %v7101
    %7192 = vmatprep.subr.bf16.mxu0 0
    %7193 = vmatpush1.bf16.msra.mxu0 %v7102
    %7194 = vmatprep.subr.bf16.mxu0 0
    %7195 = vmatpush1.bf16.msra.mxu0 %v7103
    %7196 = vmatprep.subr.bf16.mxu0 0
    %7197 = vmatpush1.bf16.msra.mxu0 %v7104
    %7198 = vmatprep.subr.bf16.mxu0 0
    %7199 = vmatpush1.bf16.msra.mxu0 %v7105
    %7200 = vmatprep.subr.bf16.mxu0 0
    %7201 = vmatpush1.bf16.msra.mxu0 %v7106
    %7202 = vmatprep.subr.bf16.mxu0 0
    %7203 = vmatpush1.bf16.msra.mxu0 %v7107
    %7204 = vmatprep.subr.bf16.mxu0 0
    %7205 = vmatpush1.bf16.msra.mxu0 %v7108
    %7206 = vmatprep.subr.bf16.mxu0 0
    %7207 = vmatpush1.bf16.msra.mxu0 %v7109
    %7208 = vmatprep.subr.bf16.mxu0 0
    %7209 = vmatpush1.bf16.msra.mxu0 %v7110
    %7210 = vmatprep.subr.bf16.mxu0 0
    %7211 = vmatpush1.bf16.msra.mxu0 %v7111
    %7212 = vmatprep.subr.bf16.mxu0 0
    %7213 = vmatpush1.bf16.msra.mxu0 %v7112
    %7214 = vmatprep.subr.bf16.mxu0 0
    %7215 = vmatpush1.bf16.msra.mxu0 %v7113
    %7216 = vmatprep.subr.bf16.mxu0 0
    %7217 = vmatpush1.bf16.msra.mxu0 %v7114
    %7218 = vmatprep.subr.bf16.mxu0 0
    %7219 = vmatpush1.bf16.msra.mxu0 %v7115
    %7220 = vmatprep.mubr.bf16.mxu0 %v6884
    %7221 = vmatmul.mubr.bf16.gmra.mrb[0].mxu0 %v6883
    %v7222 = vpop.f32.mrb[0].mxu0
    %v7223 = vadd.f32 %v7183, %v7222
    %v7224 = vpop.f32.mrb[0].mxu0
    %v7225 = vpop.f32.mrb[0].mxu0
    %v7226 = vpop.f32.mrb[0].mxu0
    %7227 = vdwg.mxu0
    %vm7228 = vcmask 15360
    %7229 = vst.msk [vmem:[%s27] sm:$0xff] %vm7228, %v7223
    // Predicated region
    $region186: #{geodti_forward.1} parent=1 // pred_check
      _
    $region187: #{geodti_forward.1} parent=1 // pred_check_branch
      %7231 = sbr.rel (0) target = $region189
    $region188: #{geodti_forward.1} parent=1 // pred_region
      _
    $region189: #{geodti_forward.1} parent=1 // pred_fallthru
      _
    // Predicated region
    $region190: #{geodti_forward.1} parent=1 // pred_check
      _
    $region191: #{geodti_forward.1} parent=1 // pred_check_branch
      %7233 = sbr.rel (0) target = $region193
    $region192: #{geodti_forward.1} parent=1 // pred_region
      %s7235 = ssub.s32 16, 16
      %7236 = vsyncadd [#allocation9], %s7235
      %s7238 = sshll.u32 [#allocation42], 4
      %s7239 = int_to_ptr.vmem [resolvable:$true] %s7238
      %7241 = dma.vmem_to_hbm [thread:$0]  %s7239, 16, %s28, [#allocation9]
    $region193: #{geodti_forward.1} parent=1 // pred_fallthru
      _
    // Predicated region
    $region194: #{geodti_forward.1} parent=1 // pred_check
      _
    $region195: #{geodti_forward.1} parent=1 // pred_check_branch
      %7243 = sbr.rel (0) target = $region197
    $region196: #{geodti_forward.1} parent=1 // pred_region
      _
    $region197: #{geodti_forward.1} parent=1 // pred_fallthru
      _
    // Predicated region
    $region198: #{geodti_forward.1} parent=1 // pred_check
      _
    $region199: #{geodti_forward.1} parent=1 // pred_check_branch
      %7245 = sbr.rel (0) target = $region201
    $region200: #{geodti_forward.1} parent=1 // pred_region
      %7246 = dma.done [#allocation9], 16
    $region201: #{geodti_forward.1} parent=1 // pred_fallthru
      _
    %7247 = vsyncpa [#allocation8], 1
    %7248 = vsyncpa [#allocation11], 1
    %7249 = vsyncpa [#allocation14], 1
    %7250 = vsyncpa [#allocation17], 1
    %7251 = vsyncpa [#allocation20], 1
    %7252 = vsyncpa [#allocation23], 1
    %7253 = vsyncpa [#allocation26], 1
    %7254 = vsyncpa [#allocation29], 1
    %7255 = vsyncpa [#allocation32], 1
    %7256 = vsyncpa [#allocation35], 1
    %7257 = vsyncpa [#allocation38], 1
    %7258 = vsyncpa [#allocation41], 1
    %7259 = vsyncpa [#allocation9], 1
  %7260 = vsyncmov [#allocation5]
  %s7261 = vpop.sfrf %7260
  %p7262 = scmp.eq.s32.totalorder %s7261, 0
  %p7263 = pneg %p7262
  %7265 = shalt.err (%p7263)
  %s7266 = scalar_lea.sflag [#allocation5], 1
  %7267 = vsyncmov %s7266
  %s7268 = vpop.sfrf %7267
  %p7269 = scmp.eq.s32.totalorder %s7268, 0
  %p7270 = pneg %p7269
  %7272 = shalt.err (%p7270)
  %s7273 = scalar_lea.sflag [#allocation5], 2
  %7274 = vsyncmov %s7273
  %s7275 = vpop.sfrf %7274
  %p7276 = scmp.eq.s32.totalorder %s7275, 0
  %p7277 = pneg %p7276
  %7279 = shalt.err (%p7277)

</llo_original>
